<compile_context>
chip_gen: v6e
topology: v6e:2x2x1
jax: 0.10.0
libtpu: 0.0.40
codegen_flags: <defaults>
</compile_context>

<pallas_src>
import jax
import jax.numpy as jnp
from jax.experimental import pallas as pl
from jax.experimental.pallas import tpu as pltpu

L = 100
N = 25
NUM_LABELS = 3
N1 = 840          # module hidden sizes (PyTorch spec)
N2 = 420
N1_PAD = 896      # 7 * 128  (lane-aligned)
N2_PAD = 512      # 4 * 128
BN_EPS = 1e-5


def _bn_relu(h, gamma, beta):
    """Training-mode BatchNorm1d + ReLU in scale/shift (single-FMA) form."""
    mean = jnp.mean(h, axis=0, keepdims=True)
    c = h - mean
    var = jnp.mean(c * c, axis=0, keepdims=True)         # biased variance (PyTorch fwd)
    scale = gamma * jax.lax.rsqrt(var + BN_EPS)           # cheap per-feature prologue
    shift = beta - mean * scale
    return jnp.maximum(h * scale + shift, 0.0)            # one FMA + relu per element


def mlp_kernel(
    x_ref,
    w1_ref, g1_ref, be1_ref,
    w2_ref, g2_ref, be2_ref,
    w3_ref, g3_ref, be3_ref,
    w4_ref, b4_ref,
    out_ref,
):
    x = x_ref[...]                                                         # [B, 2500] f32

    # fc1 -> bn1 -> relu   (bias folded away: it cancels under batch-stat BN)
    h = jnp.dot(x, w1_ref[...].astype(jnp.float32),
                preferred_element_type=jnp.float32)
    h = _bn_relu(h, g1_ref[...], be1_ref[...])                             # [B, 896]

    # fc2 -> bn2 -> relu
    h = jnp.dot(h, w2_ref[...].astype(jnp.float32),
                preferred_element_type=jnp.float32)
    h = _bn_relu(h, g2_ref[...], be2_ref[...])                             # [B, 896]

    # fc3 -> bn3 -> relu
    h = jnp.dot(h, w3_ref[...].astype(jnp.float32),
                preferred_element_type=jnp.float32)
    h = _bn_relu(h, g3_ref[...], be3_ref[...])                             # [B, 512]

    # fc4 -> log_softmax(dim=1)
    logits = jnp.dot(h, w4_ref[...].astype(jnp.float32),
                     preferred_element_type=jnp.float32) + b4_ref[...]     # [B, 3]
    m = jnp.max(logits, axis=1, keepdims=True)
    z = logits - m
    out_ref[...] = z - jnp.log(jnp.sum(jnp.exp(z), axis=1, keepdims=True))


@jax.jit
def mlp_forward(x, params):
    x2d = x.reshape(-1, L * N)                     # x.view(-1, l*n)
    batch = x2d.shape[0]
    vmem = pl.BlockSpec(memory_space=pltpu.MemorySpace.VMEM)
    return pl.pallas_call(
        mlp_kernel,
        out_shape=jax.ShapeDtypeStruct((batch, NUM_LABELS), jnp.float32),
        in_specs=[vmem] * (1 + len(params)),
        out_specs=vmem,
        # Working set: ~7 MiB bf16 weights + ~14 MiB f32 upcast temps + small
        # activations (~22 MiB total).  48 MiB gives headroom while fitting
        # v7x's 64 MiB physical VMEM (previous 100 MiB request did not).
        compiler_params=pltpu.CompilerParams(vmem_limit_bytes=48 * 1024 * 1024),
    )(x2d, *params)


def xavier_uniform(key, fan_in, fan_out):
    # Matches torch.nn.init.xavier_uniform_ for a Linear weight of shape (out, in);
    # emitted directly in [in, out] layout.
    bound = (6.0 / (fan_in + fan_out)) ** 0.5
    return jax.random.uniform(key, (fan_in, fan_out), jnp.float32, -bound, bound)


def linear_bias(key, fan_in, fan_out):
    # torch Linear default bias init: U(-1/sqrt(fan_in), 1/sqrt(fan_in)); shaped (1, out)
    bound = 1.0 / (fan_in ** 0.5)
    return jax.random.uniform(key, (1, fan_out), jnp.float32, -bound, bound)


def _pad2(a, rows, cols, value=0.0):
    return jnp.pad(a, ((0, rows - a.shape[0]), (0, cols - a.shape[1])),
                   constant_values=value)


def make_params(key):
    """Returns (kernel_params, reference_params)."""
    keys = jax.random.split(key, 8)
    # PyTorch-equivalent initialization.
    w1 = xavier_uniform(keys[0], L * N, N1); b1 = linear_bias(keys[1], L * N, N1)
    w2 = xavier_uniform(keys[2], N1, N1);    b2 = linear_bias(keys[3], N1, N1)
    w3 = xavier_uniform(keys[4], N1, N2);    b3 = linear_bias(keys[5], N1, N2)
    w4 = xavier_uniform(keys[6], N2, NUM_LABELS)
    b4 = linear_bias(keys[7], N2, NUM_LABELS)

    # Zero-pad hidden dims to lane multiples; quantize weights to bf16 for HBM/DMA.
    w1p = _pad2(w1, L * N, N1_PAD).astype(jnp.bfloat16)
    w2p = _pad2(w2, N1_PAD, N1_PAD).astype(jnp.bfloat16)
    w3p = _pad2(w3, N1_PAD, N2_PAD).astype(jnp.bfloat16)
    w4p = _pad2(w4, N2_PAD, NUM_LABELS).astype(jnp.bfloat16)

    # BatchNorm affine (PyTorch default gamma=1, beta=0); padded lanes gamma=1, beta=0.
    g1 = jnp.ones((1, N1_PAD), jnp.float32); be1 = jnp.zeros((1, N1_PAD), jnp.float32)
    g2 = jnp.ones((1, N1_PAD), jnp.float32); be2 = jnp.zeros((1, N1_PAD), jnp.float32)
    g3 = jnp.ones((1, N2_PAD), jnp.float32); be3 = jnp.zeros((1, N2_PAD), jnp.float32)

    kernel_params = (w1p, g1, be1, w2p, g2, be2, w3p, g3, be3, w4p, b4)

    # The reference uses the SAME bf16-quantized weights (dequantized to f32) but
    # keeps the fc1-fc3 biases, so the check validates both the bf16 weight storage
    # and the bias-cancellation-under-BN optimization against the literal forward.
    ref_params = (
        w1p.astype(jnp.float32), _pad2(b1, 1, N1_PAD), g1, be1,
        w2p.astype(jnp.float32), _pad2(b2, 1, N1_PAD), g2, be2,
        w3p.astype(jnp.float32), _pad2(b3, 1, N2_PAD), g3, be3,
        w4p.astype(jnp.float32), b4,
    )
    return kernel_params, ref_params


def reference_forward(x, ref_params):
    (w1, b1, g1, be1, w2, b2, g2, be2, w3, b3, g3, be3, w4, b4) = ref_params
    h = x.reshape(-1, L * N)

    def bn_relu(h, g, be):
        mean = jnp.mean(h, axis=0, keepdims=True)
        var = jnp.mean((h - mean) ** 2, axis=0, keepdims=True)
        return jnp.maximum((h - mean) / jnp.sqrt(var + BN_EPS) * g + be, 0.0)

    h = bn_relu(h @ w1 + b1, g1, be1)
    h = bn_relu(h @ w2 + b2, g2, be2)
    h = bn_relu(h @ w3 + b3, g3, be3)
    logits = h @ w4 + b4
    return jax.nn.log_softmax(logits, axis=1)


if __name__ == "__main__":
    key = jax.random.PRNGKey(0)
    pkey, xkey = jax.random.split(key)
    kernel_params, ref_params = make_params(pkey)

    batch = 8
    x = jax.random.normal(xkey, (batch, L * N), jnp.float32)

    out = jax.block_until_ready(mlp_forward(x, kernel_params))
    ref = reference_forward(x, ref_params)

    assert out.shape == (batch, NUM_LABELS)
    assert jnp.allclose(out, ref, atol=1e-4, rtol=1e-4), float(jnp.max(jnp.abs(out - ref)))
    print("KERNEL_OK")
</pallas_src>

<mosaic_0001>
module attributes {stable_mosaic.version = 11 : i64} {
  func.func @mlp_kernel(%arg0: memref<8x2500xf32, #tpu.memory_space<vmem>>, %arg1: memref<2500x896xbf16, #tpu.memory_space<vmem>>, %arg2: memref<1x896xf32, #tpu.memory_space<vmem>>, %arg3: memref<1x896xf32, #tpu.memory_space<vmem>>, %arg4: memref<896x896xbf16, #tpu.memory_space<vmem>>, %arg5: memref<1x896xf32, #tpu.memory_space<vmem>>, %arg6: memref<1x896xf32, #tpu.memory_space<vmem>>, %arg7: memref<896x512xbf16, #tpu.memory_space<vmem>>, %arg8: memref<1x512xf32, #tpu.memory_space<vmem>>, %arg9: memref<1x512xf32, #tpu.memory_space<vmem>>, %arg10: memref<512x3xbf16, #tpu.memory_space<vmem>>, %arg11: memref<1x3xf32, #tpu.memory_space<vmem>>, %arg12: memref<8x3xf32, #tpu.memory_space<vmem>>) attributes {dimension_semantics = [], scalar_prefetch = 0 : i64, scratch_operands = 0 : i64, tpu.core_type = #tpu.core_type<tc>} {
    %c0 = arith.constant 0 : index
    %c0_0 = arith.constant 0 : index
    %0 = vector.load %arg0[%c0, %c0_0] : memref<8x2500xf32, #tpu.memory_space<vmem>>, vector<8x2500xf32>
    %c0_1 = arith.constant 0 : index
    %c0_2 = arith.constant 0 : index
    %1 = vector.load %arg1[%c0_1, %c0_2] : memref<2500x896xbf16, #tpu.memory_space<vmem>>, vector<2500x896xbf16>
    %2 = arith.extf %1 : vector<2500x896xbf16> to vector<2500x896xf32>
    %cst = arith.constant dense<0.000000e+00> : vector<8x896xf32>
    %3 = tpu.matmul %0, %2, %cst {dimension_numbers = #tpu.dot_dimension_numbers<[1], [0], [0], [1], [0, 0, 1, 1], [], []>} : vector<8x2500xf32>, vector<2500x896xf32>, vector<8x896xf32> -> vector<8x896xf32>
    %c0_3 = arith.constant 0 : index
    %c0_4 = arith.constant 0 : index
    %4 = vector.load %arg2[%c0_3, %c0_4] : memref<1x896xf32, #tpu.memory_space<vmem>>, vector<1x896xf32>
    %c0_5 = arith.constant 0 : index
    %c0_6 = arith.constant 0 : index
    %5 = vector.load %arg3[%c0_5, %c0_6] : memref<1x896xf32, #tpu.memory_space<vmem>>, vector<1x896xf32>
    %cst_7 = arith.constant dense<0.000000e+00> : vector<896xf32>
    %6 = vector.multi_reduction <add>, %3, %cst_7 [0] : vector<8x896xf32> to vector<896xf32>
    %7 = vector.shape_cast %6 : vector<896xf32> to vector<1x896xf32>
    %cst_8 = arith.constant 8.000000e+00 : f32
    %8 = vector.broadcast %cst_8 : f32 to vector<1x896xf32>
    %9 = arith.divf %7, %8 : vector<1x896xf32>
    %10 = vector.broadcast %9 : vector<1x896xf32> to vector<8x896xf32>
    %11 = arith.subf %3, %10 : vector<8x896xf32>
    %12 = arith.mulf %11, %11 : vector<8x896xf32>
    %cst_9 = arith.constant dense<0.000000e+00> : vector<896xf32>
    %13 = vector.multi_reduction <add>, %12, %cst_9 [0] : vector<8x896xf32> to vector<896xf32>
    %14 = vector.shape_cast %13 : vector<896xf32> to vector<1x896xf32>
    %cst_10 = arith.constant 8.000000e+00 : f32
    %15 = vector.broadcast %cst_10 : f32 to vector<1x896xf32>
    %16 = arith.divf %14, %15 : vector<1x896xf32>
    %cst_11 = arith.constant 9.99999974E-6 : f32
    %17 = vector.broadcast %cst_11 : f32 to vector<1x896xf32>
    %18 = arith.addf %16, %17 : vector<1x896xf32>
    %19 = math.rsqrt %18 : vector<1x896xf32>
    %20 = arith.mulf %4, %19 : vector<1x896xf32>
    %21 = arith.mulf %9, %20 : vector<1x896xf32>
    %22 = arith.subf %5, %21 : vector<1x896xf32>
    %23 = vector.broadcast %20 : vector<1x896xf32> to vector<8x896xf32>
    %24 = arith.mulf %3, %23 : vector<8x896xf32>
    %25 = vector.broadcast %22 : vector<1x896xf32> to vector<8x896xf32>
    %26 = arith.addf %24, %25 : vector<8x896xf32>
    %cst_12 = arith.constant 0.000000e+00 : f32
    %27 = vector.broadcast %cst_12 : f32 to vector<8x896xf32>
    %28 = arith.maximumf %26, %27 : vector<8x896xf32>
    %c0_13 = arith.constant 0 : index
    %c0_14 = arith.constant 0 : index
    %29 = vector.load %arg4[%c0_13, %c0_14] : memref<896x896xbf16, #tpu.memory_space<vmem>>, vector<896x896xbf16>
    %30 = arith.extf %29 : vector<896x896xbf16> to vector<896x896xf32>
    %cst_15 = arith.constant dense<0.000000e+00> : vector<8x896xf32>
    %31 = tpu.matmul %28, %30, %cst_15 {dimension_numbers = #tpu.dot_dimension_numbers<[1], [0], [0], [1], [0, 0, 1, 1], [], []>} : vector<8x896xf32>, vector<896x896xf32>, vector<8x896xf32> -> vector<8x896xf32>
    %c0_16 = arith.constant 0 : index
    %c0_17 = arith.constant 0 : index
    %32 = vector.load %arg5[%c0_16, %c0_17] : memref<1x896xf32, #tpu.memory_space<vmem>>, vector<1x896xf32>
    %c0_18 = arith.constant 0 : index
    %c0_19 = arith.constant 0 : index
    %33 = vector.load %arg6[%c0_18, %c0_19] : memref<1x896xf32, #tpu.memory_space<vmem>>, vector<1x896xf32>
    %cst_20 = arith.constant dense<0.000000e+00> : vector<896xf32>
    %34 = vector.multi_reduction <add>, %31, %cst_20 [0] : vector<8x896xf32> to vector<896xf32>
    %35 = vector.shape_cast %34 : vector<896xf32> to vector<1x896xf32>
    %cst_21 = arith.constant 8.000000e+00 : f32
    %36 = vector.broadcast %cst_21 : f32 to vector<1x896xf32>
    %37 = arith.divf %35, %36 : vector<1x896xf32>
    %38 = vector.broadcast %37 : vector<1x896xf32> to vector<8x896xf32>
    %39 = arith.subf %31, %38 : vector<8x896xf32>
    %40 = arith.mulf %39, %39 : vector<8x896xf32>
    %cst_22 = arith.constant dense<0.000000e+00> : vector<896xf32>
    %41 = vector.multi_reduction <add>, %40, %cst_22 [0] : vector<8x896xf32> to vector<896xf32>
    %42 = vector.shape_cast %41 : vector<896xf32> to vector<1x896xf32>
    %cst_23 = arith.constant 8.000000e+00 : f32
    %43 = vector.broadcast %cst_23 : f32 to vector<1x896xf32>
    %44 = arith.divf %42, %43 : vector<1x896xf32>
    %cst_24 = arith.constant 9.99999974E-6 : f32
    %45 = vector.broadcast %cst_24 : f32 to vector<1x896xf32>
    %46 = arith.addf %44, %45 : vector<1x896xf32>
    %47 = math.rsqrt %46 : vector<1x896xf32>
    %48 = arith.mulf %32, %47 : vector<1x896xf32>
    %49 = arith.mulf %37, %48 : vector<1x896xf32>
    %50 = arith.subf %33, %49 : vector<1x896xf32>
    %51 = vector.broadcast %48 : vector<1x896xf32> to vector<8x896xf32>
    %52 = arith.mulf %31, %51 : vector<8x896xf32>
    %53 = vector.broadcast %50 : vector<1x896xf32> to vector<8x896xf32>
    %54 = arith.addf %52, %53 : vector<8x896xf32>
    %cst_25 = arith.constant 0.000000e+00 : f32
    %55 = vector.broadcast %cst_25 : f32 to vector<8x896xf32>
    %56 = arith.maximumf %54, %55 : vector<8x896xf32>
    %c0_26 = arith.constant 0 : index
    %c0_27 = arith.constant 0 : index
    %57 = vector.load %arg7[%c0_26, %c0_27] : memref<896x512xbf16, #tpu.memory_space<vmem>>, vector<896x512xbf16>
    %58 = arith.extf %57 : vector<896x512xbf16> to vector<896x512xf32>
    %cst_28 = arith.constant dense<0.000000e+00> : vector<8x512xf32>
    %59 = tpu.matmul %56, %58, %cst_28 {dimension_numbers = #tpu.dot_dimension_numbers<[1], [0], [0], [1], [0, 0, 1, 1], [], []>} : vector<8x896xf32>, vector<896x512xf32>, vector<8x512xf32> -> vector<8x512xf32>
    %c0_29 = arith.constant 0 : index
    %c0_30 = arith.constant 0 : index
    %60 = vector.load %arg8[%c0_29, %c0_30] : memref<1x512xf32, #tpu.memory_space<vmem>>, vector<1x512xf32>
    %c0_31 = arith.constant 0 : index
    %c0_32 = arith.constant 0 : index
    %61 = vector.load %arg9[%c0_31, %c0_32] : memref<1x512xf32, #tpu.memory_space<vmem>>, vector<1x512xf32>
    %cst_33 = arith.constant dense<0.000000e+00> : vector<512xf32>
    %62 = vector.multi_reduction <add>, %59, %cst_33 [0] : vector<8x512xf32> to vector<512xf32>
    %63 = vector.shape_cast %62 : vector<512xf32> to vector<1x512xf32>
    %cst_34 = arith.constant 8.000000e+00 : f32
    %64 = vector.broadcast %cst_34 : f32 to vector<1x512xf32>
    %65 = arith.divf %63, %64 : vector<1x512xf32>
    %66 = vector.broadcast %65 : vector<1x512xf32> to vector<8x512xf32>
    %67 = arith.subf %59, %66 : vector<8x512xf32>
    %68 = arith.mulf %67, %67 : vector<8x512xf32>
    %cst_35 = arith.constant dense<0.000000e+00> : vector<512xf32>
    %69 = vector.multi_reduction <add>, %68, %cst_35 [0] : vector<8x512xf32> to vector<512xf32>
    %70 = vector.shape_cast %69 : vector<512xf32> to vector<1x512xf32>
    %cst_36 = arith.constant 8.000000e+00 : f32
    %71 = vector.broadcast %cst_36 : f32 to vector<1x512xf32>
    %72 = arith.divf %70, %71 : vector<1x512xf32>
    %cst_37 = arith.constant 9.99999974E-6 : f32
    %73 = vector.broadcast %cst_37 : f32 to vector<1x512xf32>
    %74 = arith.addf %72, %73 : vector<1x512xf32>
    %75 = math.rsqrt %74 : vector<1x512xf32>
    %76 = arith.mulf %60, %75 : vector<1x512xf32>
    %77 = arith.mulf %65, %76 : vector<1x512xf32>
    %78 = arith.subf %61, %77 : vector<1x512xf32>
    %79 = vector.broadcast %76 : vector<1x512xf32> to vector<8x512xf32>
    %80 = arith.mulf %59, %79 : vector<8x512xf32>
    %81 = vector.broadcast %78 : vector<1x512xf32> to vector<8x512xf32>
    %82 = arith.addf %80, %81 : vector<8x512xf32>
    %cst_38 = arith.constant 0.000000e+00 : f32
    %83 = vector.broadcast %cst_38 : f32 to vector<8x512xf32>
    %84 = arith.maximumf %82, %83 : vector<8x512xf32>
    %c0_39 = arith.constant 0 : index
    %c0_40 = arith.constant 0 : index
    %85 = vector.load %arg10[%c0_39, %c0_40] : memref<512x3xbf16, #tpu.memory_space<vmem>>, vector<512x3xbf16>
    %86 = arith.extf %85 : vector<512x3xbf16> to vector<512x3xf32>
    %cst_41 = arith.constant dense<0.000000e+00> : vector<8x3xf32>
    %87 = tpu.matmul %84, %86, %cst_41 {dimension_numbers = #tpu.dot_dimension_numbers<[1], [0], [0], [1], [0, 0, 1, 1], [], []>} : vector<8x512xf32>, vector<512x3xf32>, vector<8x3xf32> -> vector<8x3xf32>
    %c0_42 = arith.constant 0 : index
    %c0_43 = arith.constant 0 : index
    %88 = vector.load %arg11[%c0_42, %c0_43] : memref<1x3xf32, #tpu.memory_space<vmem>>, vector<1x3xf32>
    %89 = vector.broadcast %88 : vector<1x3xf32> to vector<8x3xf32>
    %90 = arith.addf %87, %89 : vector<8x3xf32>
    %cst_44 = arith.constant dense<0xFF800000> : vector<8xf32>
    %91 = vector.multi_reduction <maximumf>, %90, %cst_44 [1] : vector<8x3xf32> to vector<8xf32>
    %92 = vector.shape_cast %91 : vector<8xf32> to vector<8x1xf32>
    %93 = vector.broadcast %92 : vector<8x1xf32> to vector<8x3xf32>
    %94 = arith.subf %90, %93 : vector<8x3xf32>
    %95 = math.exp %94 : vector<8x3xf32>
    %cst_45 = arith.constant dense<0.000000e+00> : vector<8xf32>
    %96 = vector.multi_reduction <add>, %95, %cst_45 [1] : vector<8x3xf32> to vector<8xf32>
    %97 = vector.shape_cast %96 : vector<8xf32> to vector<8x1xf32>
    %98 = math.log %97 : vector<8x1xf32>
    %99 = vector.broadcast %98 : vector<8x1xf32> to vector<8x3xf32>
    %100 = arith.subf %94, %99 : vector<8x3xf32>
    %c0_46 = arith.constant 0 : index
    %c0_47 = arith.constant 0 : index
    %101 = vector.load %arg12[%c0_46, %c0_47] : memref<8x3xf32, #tpu.memory_space<vmem>>, vector<8x3xf32>
    tpu.vector_store %arg12[%c0_46, %c0_47], %100 {strides = array<i32>} : memref<8x3xf32, #tpu.memory_space<vmem>>, vector<8x3xf32>,
    return
  }
}

</mosaic_0001>

<llo_original>
// kernel: mlp_forward.1
$region0: #{mlp_forward.1}
  #allocation0 [shape = 'u32[]', space=smem, size = 0x4, offset = 0x4, fixed_abs, tag = 'smem constant byte address 0x4 - core index']
  #allocation1 [shape = 'u32[144,128]{1,0:T(1,128)}', space=vmem, size = 0x12000, scoped, tag = 'internal scratch']
  %s0 = inlined_call_operand.hbm [shape: f32[8,2500], index: 0, kind: input, shape index: {}]
  %s1 = inlined_call_operand.hbm [shape: bf16[2500,896], index: 1, kind: input, shape index: {}]
  %s2 = inlined_call_operand.hbm [shape: f32[1,896], index: 2, kind: input, shape index: {}]
  %s3 = inlined_call_operand.hbm [shape: f32[1,896], index: 3, kind: input, shape index: {}]
  %s4 = inlined_call_operand.hbm [shape: bf16[896,896], index: 4, kind: input, shape index: {}]
  %s5 = inlined_call_operand.hbm [shape: f32[1,896], index: 5, kind: input, shape index: {}]
  %s6 = inlined_call_operand.hbm [shape: f32[1,896], index: 6, kind: input, shape index: {}]
  %s7 = inlined_call_operand.hbm [shape: bf16[896,512], index: 7, kind: input, shape index: {}]
  %s8 = inlined_call_operand.hbm [shape: f32[1,512], index: 8, kind: input, shape index: {}]
  %s9 = inlined_call_operand.hbm [shape: f32[1,512], index: 9, kind: input, shape index: {}]
  %s10 = inlined_call_operand.vmem [shape: bf16[512,3], index: 10, kind: input, shape index: {}]
  %s11 = inlined_call_operand.hbm [shape: f32[1,3], index: 11, kind: input, shape index: {}]
  %s12 = inlined_call_operand.vmem [shape: f32[8,3], index: 12, kind: output, shape index: {}]
  %s13 = sld [smem:[#allocation0]]
  $region102: #{mlp_forward.1} parent=0
    _
  %s15 = ssub.s32 1, %s13
  %s16 = scalar_select 0, %s15, %s13
  $region1: #{mlp_forward.1} parent=0
    #allocation2 [shape = 'u8[81920]{0}', space=vmem, size = 0x14000, scoped, tag = 'input window, operand 0, single buffered']
    #allocation3 [shape = 's32[1]{0}', space=sflag, size = 0x4, scoped, tag = 'scoped memory for mlp_forward.1']
    #allocation4 [shape = 'u8[4487168]{0}', space=vmem, size = 0x447800, scoped, tag = 'input window, operand 1, single buffered']
    #allocation5 [shape = 's32[1]{0}', space=sflag, size = 0x4, scoped, tag = 'scoped memory for mlp_forward.1']
    #allocation6 [shape = 'u8[3584]{0}', space=vmem, size = 0x1000, scoped, tag = 'input window, operand 2, single buffered']
    #allocation7 [shape = 'u8[3584]{0}', space=vmem, size = 0x1000, scoped, tag = 'input window, operand 3, single buffered']
    #allocation8 [shape = 's32[1]{0}', space=sflag, size = 0x4, scoped, tag = 'scoped memory for mlp_forward.1']
    #allocation9 [shape = 'u8[1605632]{0}', space=vmem, size = 0x188000, scoped, tag = 'input window, operand 4, single buffered']
    #allocation10 [shape = 'u8[3584]{0}', space=vmem, size = 0x1000, scoped, tag = 'input window, operand 5, single buffered']
    #allocation11 [shape = 's32[1]{0}', space=sflag, size = 0x4, scoped, tag = 'scoped memory for mlp_forward.1']
    #allocation12 [shape = 'u8[3584]{0}', space=vmem, size = 0x1000, scoped, tag = 'input window, operand 6, single buffered']
    #allocation13 [shape = 'u8[917504]{0}', space=vmem, size = 0xe0000, scoped, tag = 'input window, operand 7, single buffered']
    #allocation14 [shape = 's32[1]{0}', space=sflag, size = 0x4, scoped, tag = 'scoped memory for mlp_forward.1']
    #allocation15 [shape = 'u8[2048]{0}', space=vmem, size = 0x800, scoped, tag = 'input window, operand 8, single buffered']
    #allocation16 [shape = 'u8[2048]{0}', space=vmem, size = 0x800, scoped, tag = 'input window, operand 9, single buffered']
    #allocation17 [shape = 's32[1]{0}', space=sflag, size = 0x4, scoped, tag = 'scoped memory for mlp_forward.1']
    #allocation18 [shape = 'u8[512]{0}', space=vmem, size = 0x400, scoped, tag = 'input window, operand 11, single buffered']
    %17 = vsyncpa [#allocation3], 0
    %18 = vsyncpa [#allocation5], 0
    %19 = vsyncpa [#allocation8], 0
    %20 = vsyncpa [#allocation11], 0
    %21 = vsyncpa [#allocation14], 0
    %22 = vsyncpa [#allocation17], 0
    // Predicated region
    $region2: #{mlp_forward.1} parent=1 // pred_check
      _
    $region3: #{mlp_forward.1} parent=1 // pred_check_branch
      %24 = sbr.rel (0) target = $region5
    $region4: #{mlp_forward.1} parent=1 // pred_region
      %s26 = ssub.s32 2560, 2560
      %27 = vsyncadd [#allocation3], %s26
      %s29 = sshll.u32 [#allocation2], 4
      %s30 = int_to_ptr.vmem [resolvable:$true] %s29
      %32 = dma.hbm_to_vmem [thread:$0]  %s0, 2560, %s30, [#allocation3]
    $region5: #{mlp_forward.1} parent=1 // pred_fallthru
      _
    // Predicated region
    $region6: #{mlp_forward.1} parent=1 // pred_check
      _
    $region7: #{mlp_forward.1} parent=1 // pred_check_branch
      %34 = sbr.rel (0) target = $region9
    $region8: #{mlp_forward.1} parent=1 // pred_region
      %s36 = ssub.s32 140224, 140224
      %37 = vsyncadd [#allocation5], %s36
      %s38 = sshll.u32 [#allocation4], 4
      %s39 = int_to_ptr.vmem [resolvable:$true] %s38
      %44 = dma.hbm_to_vmem [thread:$0]  %s1, 140224, %s39, [#allocation5], 448, 448, 28
    $region9: #{mlp_forward.1} parent=1 // pred_fallthru
      _
    // Predicated region
    $region10: #{mlp_forward.1} parent=1 // pred_check
      _
    $region11: #{mlp_forward.1} parent=1 // pred_check_branch
      %46 = sbr.rel (0) target = $region13
    $region12: #{mlp_forward.1} parent=1 // pred_region
      %s48 = ssub.s32 112, 112
      %49 = vsyncadd [#allocation5], %s48
      %s51 = sshll.u32 [#allocation6], 4
      %s52 = int_to_ptr.vmem [resolvable:$true] %s51
      %54 = dma.hbm_to_vmem [thread:$0]  %s2, 112, %s52, [#allocation5]
    $region13: #{mlp_forward.1} parent=1 // pred_fallthru
      _
    // Predicated region
    $region14: #{mlp_forward.1} parent=1 // pred_check
      _
    $region15: #{mlp_forward.1} parent=1 // pred_check_branch
      %56 = sbr.rel (0) target = $region17
    $region16: #{mlp_forward.1} parent=1 // pred_region
      %s58 = ssub.s32 112, 112
      %59 = vsyncadd [#allocation8], %s58
      %s61 = sshll.u32 [#allocation7], 4
      %s62 = int_to_ptr.vmem [resolvable:$true] %s61
      %64 = dma.hbm_to_vmem [thread:$0]  %s3, 112, %s62, [#allocation8]
    $region17: #{mlp_forward.1} parent=1 // pred_fallthru
      _
    // Predicated region
    $region18: #{mlp_forward.1} parent=1 // pred_check
      _
    $region19: #{mlp_forward.1} parent=1 // pred_check_branch
      %66 = sbr.rel (0) target = $region21
    $region20: #{mlp_forward.1} parent=1 // pred_region
      %s68 = ssub.s32 50176, 50176
      %69 = vsyncadd [#allocation8], %s68
      %s70 = sshll.u32 [#allocation9], 4
      %s71 = int_to_ptr.vmem [resolvable:$true] %s70
      %76 = dma.hbm_to_vmem [thread:$0]  %s4, 50176, %s71, [#allocation8], 448, 448, 28
    $region21: #{mlp_forward.1} parent=1 // pred_fallthru
      _
    // Predicated region
    $region22: #{mlp_forward.1} parent=1 // pred_check
      _
    $region23: #{mlp_forward.1} parent=1 // pred_check_branch
      %78 = sbr.rel (0) target = $region25
    $region24: #{mlp_forward.1} parent=1 // pred_region
      %s80 = ssub.s32 112, 112
      %81 = vsyncadd [#allocation11], %s80
      %s83 = sshll.u32 [#allocation10], 4
      %s84 = int_to_ptr.vmem [resolvable:$true] %s83
      %86 = dma.hbm_to_vmem [thread:$0]  %s5, 112, %s84, [#allocation11]
    $region25: #{mlp_forward.1} parent=1 // pred_fallthru
      _
    // Predicated region
    $region26: #{mlp_forward.1} parent=1 // pred_check
      _
    $region27: #{mlp_forward.1} parent=1 // pred_check_branch
      %88 = sbr.rel (0) target = $region29
    $region28: #{mlp_forward.1} parent=1 // pred_region
      %s90 = ssub.s32 112, 112
      %91 = vsyncadd [#allocation11], %s90
      %s93 = sshll.u32 [#allocation12], 4
      %s94 = int_to_ptr.vmem [resolvable:$true] %s93
      %96 = dma.hbm_to_vmem [thread:$0]  %s6, 112, %s94, [#allocation11]
    $region29: #{mlp_forward.1} parent=1 // pred_fallthru
      _
    // Predicated region
    $region30: #{mlp_forward.1} parent=1 // pred_check
      _
    $region31: #{mlp_forward.1} parent=1 // pred_check_branch
      %98 = sbr.rel (0) target = $region33
    $region32: #{mlp_forward.1} parent=1 // pred_region
      %s100 = ssub.s32 28672, 28672
      %101 = vsyncadd [#allocation14], %s100
      %s102 = sshll.u32 [#allocation13], 4
      %s103 = int_to_ptr.vmem [resolvable:$true] %s102
      %108 = dma.hbm_to_vmem [thread:$0]  %s7, 28672, %s103, [#allocation14], 256, 256, 16
    $region33: #{mlp_forward.1} parent=1 // pred_fallthru
      _
    // Predicated region
    $region34: #{mlp_forward.1} parent=1 // pred_check
      _
    $region35: #{mlp_forward.1} parent=1 // pred_check_branch
      %110 = sbr.rel (0) target = $region37
    $region36: #{mlp_forward.1} parent=1 // pred_region
      %s112 = ssub.s32 64, 64
      %113 = vsyncadd [#allocation14], %s112
      %s115 = sshll.u32 [#allocation15], 4
      %s116 = int_to_ptr.vmem [resolvable:$true] %s115
      %118 = dma.hbm_to_vmem [thread:$0]  %s8, 64, %s116, [#allocation14]
    $region37: #{mlp_forward.1} parent=1 // pred_fallthru
      _
    // Predicated region
    $region38: #{mlp_forward.1} parent=1 // pred_check
      _
    $region39: #{mlp_forward.1} parent=1 // pred_check_branch
      %120 = sbr.rel (0) target = $region41
    $region40: #{mlp_forward.1} parent=1 // pred_region
      %s122 = ssub.s32 64, 64
      %123 = vsyncadd [#allocation17], %s122
      %s125 = sshll.u32 [#allocation16], 4
      %s126 = int_to_ptr.vmem [resolvable:$true] %s125
      %128 = dma.hbm_to_vmem [thread:$0]  %s9, 64, %s126, [#allocation17]
    $region41: #{mlp_forward.1} parent=1 // pred_fallthru
      _
    // Predicated region
    $region42: #{mlp_forward.1} parent=1 // pred_check
      _
    $region43: #{mlp_forward.1} parent=1 // pred_check_branch
      %130 = sbr.rel (0) target = $region45
    $region44: #{mlp_forward.1} parent=1 // pred_region
      _
    $region45: #{mlp_forward.1} parent=1 // pred_fallthru
      _
    // Predicated region
    $region46: #{mlp_forward.1} parent=1 // pred_check
      _
    $region47: #{mlp_forward.1} parent=1 // pred_check_branch
      %132 = sbr.rel (0) target = $region49
    $region48: #{mlp_forward.1} parent=1 // pred_region
      %s134 = ssub.s32 16, 16
      %135 = vsyncadd [#allocation17], %s134
      %s137 = sshll.u32 [#allocation18], 4
      %s138 = int_to_ptr.vmem [resolvable:$true] %s137
      %140 = dma.hbm_to_vmem [thread:$0]  %s11, 16, %s138, [#allocation17]
    $region49: #{mlp_forward.1} parent=1 // pred_fallthru
      _
    // Predicated region
    $region50: #{mlp_forward.1} parent=1 // pred_check
      _
    $region51: #{mlp_forward.1} parent=1 // pred_check_branch
      %142 = sbr.rel (0) target = $region53
    $region52: #{mlp_forward.1} parent=1 // pred_region
      %143 = dma.done [#allocation3], 2560
    $region53: #{mlp_forward.1} parent=1 // pred_fallthru
      _
    // Predicated region
    $region54: #{mlp_forward.1} parent=1 // pred_check
      _
    $region55: #{mlp_forward.1} parent=1 // pred_check_branch
      %145 = sbr.rel (0) target = $region57
    $region56: #{mlp_forward.1} parent=1 // pred_region
      %146 = dma.done [#allocation5], 140224
    $region57: #{mlp_forward.1} parent=1 // pred_fallthru
      _
    // Predicated region
    $region58: #{mlp_forward.1} parent=1 // pred_check
      _
    $region59: #{mlp_forward.1} parent=1 // pred_check_branch
      %148 = sbr.rel (0) target = $region61
    $region60: #{mlp_forward.1} parent=1 // pred_region
      %149 = dma.done [#allocation5], 112
    $region61: #{mlp_forward.1} parent=1 // pred_fallthru
      _
    // Predicated region
    $region62: #{mlp_forward.1} parent=1 // pred_check
      _
    $region63: #{mlp_forward.1} parent=1 // pred_check_branch
      %151 = sbr.rel (0) target = $region65
    $region64: #{mlp_forward.1} parent=1 // pred_region
      %152 = dma.done [#allocation8], 112
    $region65: #{mlp_forward.1} parent=1 // pred_fallthru
      _
    // Predicated region
    $region66: #{mlp_forward.1} parent=1 // pred_check
      _
    $region67: #{mlp_forward.1} parent=1 // pred_check_branch
      %154 = sbr.rel (0) target = $region69
    $region68: #{mlp_forward.1} parent=1 // pred_region
      %155 = dma.done [#allocation8], 50176
    $region69: #{mlp_forward.1} parent=1 // pred_fallthru
      _
    // Predicated region
    $region70: #{mlp_forward.1} parent=1 // pred_check
      _
    $region71: #{mlp_forward.1} parent=1 // pred_check_branch
      %157 = sbr.rel (0) target = $region73
    $region72: #{mlp_forward.1} parent=1 // pred_region
      %158 = dma.done [#allocation11], 112
    $region73: #{mlp_forward.1} parent=1 // pred_fallthru
      _
    // Predicated region
    $region74: #{mlp_forward.1} parent=1 // pred_check
      _
    $region75: #{mlp_forward.1} parent=1 // pred_check_branch
      %160 = sbr.rel (0) target = $region77
    $region76: #{mlp_forward.1} parent=1 // pred_region
      %161 = dma.done [#allocation11], 112
    $region77: #{mlp_forward.1} parent=1 // pred_fallthru
      _
    // Predicated region
    $region78: #{mlp_forward.1} parent=1 // pred_check
      _
    $region79: #{mlp_forward.1} parent=1 // pred_check_branch
      %163 = sbr.rel (0) target = $region81
    $region80: #{mlp_forward.1} parent=1 // pred_region
      %164 = dma.done [#allocation14], 28672
    $region81: #{mlp_forward.1} parent=1 // pred_fallthru
      _
    // Predicated region
    $region82: #{mlp_forward.1} parent=1 // pred_check
      _
    $region83: #{mlp_forward.1} parent=1 // pred_check_branch
      %166 = sbr.rel (0) target = $region85
    $region84: #{mlp_forward.1} parent=1 // pred_region
      %167 = dma.done [#allocation14], 64
    $region85: #{mlp_forward.1} parent=1 // pred_fallthru
      _
    // Predicated region
    $region86: #{mlp_forward.1} parent=1 // pred_check
      _
    $region87: #{mlp_forward.1} parent=1 // pred_check_branch
      %169 = sbr.rel (0) target = $region89
    $region88: #{mlp_forward.1} parent=1 // pred_region
      %170 = dma.done [#allocation17], 64
    $region89: #{mlp_forward.1} parent=1 // pred_fallthru
      _
    // Predicated region
    $region90: #{mlp_forward.1} parent=1 // pred_check
      _
    $region91: #{mlp_forward.1} parent=1 // pred_check_branch
      %172 = sbr.rel (0) target = $region93
    $region92: #{mlp_forward.1} parent=1 // pred_region
      %173 = dma.done [#allocation17], 16
    $region93: #{mlp_forward.1} parent=1 // pred_fallthru
      _
    %v174 = vld [vmem:[#allocation2] sm:$0xff]
    %v175 = vld [vmem:[#allocation2 + $0x8] sm:$0xff]
    %v176 = vld [vmem:[#allocation2 + $0x10] sm:$0xff]
    %v177 = vld [vmem:[#allocation2 + $0x18] sm:$0xff]
    %v178 = vld [vmem:[#allocation2 + $0x20] sm:$0xff]
    %v179 = vld [vmem:[#allocation2 + $0x28] sm:$0xff]
    %v180 = vld [vmem:[#allocation2 + $0x30] sm:$0xff]
    %v181 = vld [vmem:[#allocation2 + $0x38] sm:$0xff]
    %v182 = vld [vmem:[#allocation2 + $0x40] sm:$0xff]
    %v183 = vld [vmem:[#allocation2 + $0x48] sm:$0xff]
    %v184 = vld [vmem:[#allocation2 + $0x50] sm:$0xff]
    %v185 = vld [vmem:[#allocation2 + $0x58] sm:$0xff]
    %v186 = vld [vmem:[#allocation2 + $0x60] sm:$0xff]
    %v187 = vld [vmem:[#allocation2 + $0x68] sm:$0xff]
    %v188 = vld [vmem:[#allocation2 + $0x70] sm:$0xff]
    %v189 = vld [vmem:[#allocation2 + $0x78] sm:$0xff]
    %v190 = vld [vmem:[#allocation2 + $0x80] sm:$0xff]
    %v191 = vld [vmem:[#allocation2 + $0x88] sm:$0xff]
    %v192 = vld [vmem:[#allocation2 + $0x90] sm:$0xff]
    %v193 = vld [vmem:[#allocation2 + $0x98] sm:$0xff]
    %v194 = vld [vmem:[#allocation4] sm:$0xff]
    %v195 = vld [vmem:[#allocation4 + $0x8] sm:$0xff]
    %v196 = vld [vmem:[#allocation4 + $0x10] sm:$0xff]
    %v197 = vld [vmem:[#allocation4 + $0x18] sm:$0xf]
    %v198 = vld [vmem:[#allocation4 + $0x1c] sm:$0xff]
    %v199 = vld [vmem:[#allocation4 + $0x24] sm:$0xff]
    %v200 = vld [vmem:[#allocation4 + $0x2c] sm:$0xff]
    %v201 = vld [vmem:[#allocation4 + $0x34] sm:$0xf]
    %v202 = vld [vmem:[#allocation4 + $0x38] sm:$0xff]
    %v203 = vld [vmem:[#allocation4 + $0x40] sm:$0xff]
    %v204 = vld [vmem:[#allocation4 + $0x48] sm:$0xff]
    %v205 = vld [vmem:[#allocation4 + $0x50] sm:$0xf]
    %v206 = vld [vmem:[#allocation4 + $0x54] sm:$0xff]
    %v207 = vld [vmem:[#allocation4 + $0x5c] sm:$0xff]
    %v208 = vld [vmem:[#allocation4 + $0x64] sm:$0xff]
    %v209 = vld [vmem:[#allocation4 + $0x6c] sm:$0xf]
    %v210 = vld [vmem:[#allocation4 + $0x70] sm:$0xff]
    %v211 = vld [vmem:[#allocation4 + $0x78] sm:$0xff]
    %v212 = vld [vmem:[#allocation4 + $0x80] sm:$0xff]
    %v213 = vld [vmem:[#allocation4 + $0x88] sm:$0xf]
    %v214 = vld [vmem:[#allocation4 + $0x8c] sm:$0xff]
    %v215 = vld [vmem:[#allocation4 + $0x94] sm:$0xff]
    %v216 = vld [vmem:[#allocation4 + $0x9c] sm:$0xff]
    %v217 = vld [vmem:[#allocation4 + $0xa4] sm:$0xf]
    %v218 = vld [vmem:[#allocation4 + $0xa8] sm:$0xff]
    %v219 = vld [vmem:[#allocation4 + $0xb0] sm:$0xff]
    %v220 = vld [vmem:[#allocation4 + $0xb8] sm:$0xff]
    %v221 = vld [vmem:[#allocation4 + $0xc0] sm:$0xf]
    %v222 = vld [vmem:[#allocation4 + $0xc4] sm:$0xff]
    %v223 = vld [vmem:[#allocation4 + $0xcc] sm:$0xff]
    %v224 = vld [vmem:[#allocation4 + $0xd4] sm:$0xff]
    %v225 = vld [vmem:[#allocation4 + $0xdc] sm:$0xf]
    %v226 = vld [vmem:[#allocation4 + $0xe0] sm:$0xff]
    %v227 = vld [vmem:[#allocation4 + $0xe8] sm:$0xff]
    %v228 = vld [vmem:[#allocation4 + $0xf0] sm:$0xff]
    %v229 = vld [vmem:[#allocation4 + $0xf8] sm:$0xf]
    %v230 = vld [vmem:[#allocation4 + $0xfc] sm:$0xff]
    %v231 = vld [vmem:[#allocation4 + $0x104] sm:$0xff]
    %v232 = vld [vmem:[#allocation4 + $0x10c] sm:$0xff]
    %v233 = vld [vmem:[#allocation4 + $0x114] sm:$0xf]
    %v234 = vld [vmem:[#allocation4 + $0x118] sm:$0xff]
    %v235 = vld [vmem:[#allocation4 + $0x120] sm:$0xff]
    %v236 = vld [vmem:[#allocation4 + $0x128] sm:$0xff]
    %v237 = vld [vmem:[#allocation4 + $0x130] sm:$0xf]
    %v238 = vld [vmem:[#allocation4 + $0x134] sm:$0xff]
    %v239 = vld [vmem:[#allocation4 + $0x13c] sm:$0xff]
    %v240 = vld [vmem:[#allocation4 + $0x144] sm:$0xff]
    %v241 = vld [vmem:[#allocation4 + $0x14c] sm:$0xf]
    %v242 = vld [vmem:[#allocation4 + $0x150] sm:$0xff]
    %v243 = vld [vmem:[#allocation4 + $0x158] sm:$0xff]
    %v244 = vld [vmem:[#allocation4 + $0x160] sm:$0xff]
    %v245 = vld [vmem:[#allocation4 + $0x168] sm:$0xf]
    %v246 = vld [vmem:[#allocation4 + $0x16c] sm:$0xff]
    %v247 = vld [vmem:[#allocation4 + $0x174] sm:$0xff]
    %v248 = vld [vmem:[#allocation4 + $0x17c] sm:$0xff]
    %v249 = vld [vmem:[#allocation4 + $0x184] sm:$0xf]
    %v250 = vld [vmem:[#allocation4 + $0x188] sm:$0xff]
    %v251 = vld [vmem:[#allocation4 + $0x190] sm:$0xff]
    %v252 = vld [vmem:[#allocation4 + $0x198] sm:$0xff]
    %v253 = vld [vmem:[#allocation4 + $0x1a0] sm:$0xf]
    %v254 = vld [vmem:[#allocation4 + $0x1a4] sm:$0xff]
    %v255 = vld [vmem:[#allocation4 + $0x1ac] sm:$0xff]
    %v256 = vld [vmem:[#allocation4 + $0x1b4] sm:$0xff]
    %v257 = vld [vmem:[#allocation4 + $0x1bc] sm:$0xf]
    %v258 = vld [vmem:[#allocation4 + $0x1c0] sm:$0xff]
    %v259 = vld [vmem:[#allocation4 + $0x1c8] sm:$0xff]
    %v260 = vld [vmem:[#allocation4 + $0x1d0] sm:$0xff]
    %v261 = vld [vmem:[#allocation4 + $0x1d8] sm:$0xf]
    %v262 = vld [vmem:[#allocation4 + $0x1dc] sm:$0xff]
    %v263 = vld [vmem:[#allocation4 + $0x1e4] sm:$0xff]
    %v264 = vld [vmem:[#allocation4 + $0x1ec] sm:$0xff]
    %v265 = vld [vmem:[#allocation4 + $0x1f4] sm:$0xf]
    %v266 = vld [vmem:[#allocation4 + $0x1f8] sm:$0xff]
    %v267 = vld [vmem:[#allocation4 + $0x200] sm:$0xff]
    %v268 = vld [vmem:[#allocation4 + $0x208] sm:$0xff]
    %v269 = vld [vmem:[#allocation4 + $0x210] sm:$0xf]
    %v270 = vld [vmem:[#allocation4 + $0x214] sm:$0xff]
    %v271 = vld [vmem:[#allocation4 + $0x21c] sm:$0xff]
    %v272 = vld [vmem:[#allocation4 + $0x224] sm:$0xff]
    %v273 = vld [vmem:[#allocation4 + $0x22c] sm:$0xf]
    %v274 = vld [vmem:[#allocation4 + $0x230] sm:$0xff]
    %v275 = vld [vmem:[#allocation4 + $0x238] sm:$0xff]
    %v276 = vld [vmem:[#allocation4 + $0x240] sm:$0xff]
    %v277 = vld [vmem:[#allocation4 + $0x248] sm:$0xf]
    %v278 = vld [vmem:[#allocation4 + $0x24c] sm:$0xff]
    %v279 = vld [vmem:[#allocation4 + $0x254] sm:$0xff]
    %v280 = vld [vmem:[#allocation4 + $0x25c] sm:$0xff]
    %v281 = vld [vmem:[#allocation4 + $0x264] sm:$0xf]
    %v282 = vld [vmem:[#allocation4 + $0x268] sm:$0xff]
    %v283 = vld [vmem:[#allocation4 + $0x270] sm:$0xff]
    %v284 = vld [vmem:[#allocation4 + $0x278] sm:$0xff]
    %v285 = vld [vmem:[#allocation4 + $0x280] sm:$0xf]
    %v286 = vld [vmem:[#allocation4 + $0x284] sm:$0xff]
    %v287 = vld [vmem:[#allocation4 + $0x28c] sm:$0xff]
    %v288 = vld [vmem:[#allocation4 + $0x294] sm:$0xff]
    %v289 = vld [vmem:[#allocation4 + $0x29c] sm:$0xf]
    %v290 = vld [vmem:[#allocation4 + $0x2a0] sm:$0xff]
    %v291 = vld [vmem:[#allocation4 + $0x2a8] sm:$0xff]
    %v292 = vld [vmem:[#allocation4 + $0x2b0] sm:$0xff]
    %v293 = vld [vmem:[#allocation4 + $0x2b8] sm:$0xf]
    %v294 = vld [vmem:[#allocation4 + $0x2bc] sm:$0xff]
    %v295 = vld [vmem:[#allocation4 + $0x2c4] sm:$0xff]
    %v296 = vld [vmem:[#allocation4 + $0x2cc] sm:$0xff]
    %v297 = vld [vmem:[#allocation4 + $0x2d4] sm:$0xf]
    %v298 = vld [vmem:[#allocation4 + $0x2d8] sm:$0xff]
    %v299 = vld [vmem:[#allocation4 + $0x2e0] sm:$0xff]
    %v300 = vld [vmem:[#allocation4 + $0x2e8] sm:$0xff]
    %v301 = vld [vmem:[#allocation4 + $0x2f0] sm:$0xf]
    %v302 = vld [vmem:[#allocation4 + $0x2f4] sm:$0xff]
    %v303 = vld [vmem:[#allocation4 + $0x2fc] sm:$0xff]
    %v304 = vld [vmem:[#allocation4 + $0x304] sm:$0xff]
    %v305 = vld [vmem:[#allocation4 + $0x30c] sm:$0xf]
    %v306 = vld [vmem:[#allocation4 + $0x310] sm:$0xff]
    %v307 = vld [vmem:[#allocation4 + $0x318] sm:$0xff]
    %v308 = vld [vmem:[#allocation4 + $0x320] sm:$0xff]
    %v309 = vld [vmem:[#allocation4 + $0x328] sm:$0xf]
    %v310 = vld [vmem:[#allocation4 + $0x32c] sm:$0xff]
    %v311 = vld [vmem:[#allocation4 + $0x334] sm:$0xff]
    %v312 = vld [vmem:[#allocation4 + $0x33c] sm:$0xff]
    %v313 = vld [vmem:[#allocation4 + $0x344] sm:$0xf]
    %v314 = vld [vmem:[#allocation4 + $0x348] sm:$0xff]
    %v315 = vld [vmem:[#allocation4 + $0x350] sm:$0xff]
    %v316 = vld [vmem:[#allocation4 + $0x358] sm:$0xff]
    %v317 = vld [vmem:[#allocation4 + $0x360] sm:$0xf]
    %v318 = vld [vmem:[#allocation4 + $0x364] sm:$0xff]
    %v319 = vld [vmem:[#allocation4 + $0x36c] sm:$0xff]
    %v320 = vld [vmem:[#allocation4 + $0x374] sm:$0xff]
    %v321 = vld [vmem:[#allocation4 + $0x37c] sm:$0xf]
    %v322 = vld [vmem:[#allocation4 + $0x380] sm:$0xff]
    %v323 = vld [vmem:[#allocation4 + $0x388] sm:$0xff]
    %v324 = vld [vmem:[#allocation4 + $0x390] sm:$0xff]
    %v325 = vld [vmem:[#allocation4 + $0x398] sm:$0xf]
    %v326 = vld [vmem:[#allocation4 + $0x39c] sm:$0xff]
    %v327 = vld [vmem:[#allocation4 + $0x3a4] sm:$0xff]
    %v328 = vld [vmem:[#allocation4 + $0x3ac] sm:$0xff]
    %v329 = vld [vmem:[#allocation4 + $0x3b4] sm:$0xf]
    %v330 = vld [vmem:[#allocation4 + $0x3b8] sm:$0xff]
    %v331 = vld [vmem:[#allocation4 + $0x3c0] sm:$0xff]
    %v332 = vld [vmem:[#allocation4 + $0x3c8] sm:$0xff]
    %v333 = vld [vmem:[#allocation4 + $0x3d0] sm:$0xf]
    %v334 = vld [vmem:[#allocation4 + $0x3d4] sm:$0xff]
    %v335 = vld [vmem:[#allocation4 + $0x3dc] sm:$0xff]
    %v336 = vld [vmem:[#allocation4 + $0x3e4] sm:$0xff]
    %v337 = vld [vmem:[#allocation4 + $0x3ec] sm:$0xf]
    %v338 = vld [vmem:[#allocation4 + $0x3f0] sm:$0xff]
    %v339 = vld [vmem:[#allocation4 + $0x3f8] sm:$0xff]
    %v340 = vld [vmem:[#allocation4 + $0x400] sm:$0xff]
    %v341 = vld [vmem:[#allocation4 + $0x408] sm:$0xf]
    %v342 = vld [vmem:[#allocation4 + $0x40c] sm:$0xff]
    %v343 = vld [vmem:[#allocation4 + $0x414] sm:$0xff]
    %v344 = vld [vmem:[#allocation4 + $0x41c] sm:$0xff]
    %v345 = vld [vmem:[#allocation4 + $0x424] sm:$0xf]
    %v346 = vld [vmem:[#allocation4 + $0x428] sm:$0xff]
    %v347 = vld [vmem:[#allocation4 + $0x430] sm:$0xff]
    %v348 = vld [vmem:[#allocation4 + $0x438] sm:$0xff]
    %v349 = vld [vmem:[#allocation4 + $0x440] sm:$0xf]
    %v350 = vld [vmem:[#allocation4 + $0x444] sm:$0xff]
    %v351 = vld [vmem:[#allocation4 + $0x44c] sm:$0xff]
    %v352 = vld [vmem:[#allocation4 + $0x454] sm:$0xff]
    %v353 = vld [vmem:[#allocation4 + $0x45c] sm:$0xf]
    %v354 = vld [vmem:[#allocation4 + $0x460] sm:$0xff]
    %v355 = vld [vmem:[#allocation4 + $0x468] sm:$0xff]
    %v356 = vld [vmem:[#allocation4 + $0x470] sm:$0xff]
    %v357 = vld [vmem:[#allocation4 + $0x478] sm:$0xf]
    %v358 = vld [vmem:[#allocation4 + $0x47c] sm:$0xff]
    %v359 = vld [vmem:[#allocation4 + $0x484] sm:$0xff]
    %v360 = vld [vmem:[#allocation4 + $0x48c] sm:$0xff]
    %v361 = vld [vmem:[#allocation4 + $0x494] sm:$0xf]
    %v362 = vld [vmem:[#allocation4 + $0x498] sm:$0xff]
    %v363 = vld [vmem:[#allocation4 + $0x4a0] sm:$0xff]
    %v364 = vld [vmem:[#allocation4 + $0x4a8] sm:$0xff]
    %v365 = vld [vmem:[#allocation4 + $0x4b0] sm:$0xf]
    %v366 = vld [vmem:[#allocation4 + $0x4b4] sm:$0xff]
    %v367 = vld [vmem:[#allocation4 + $0x4bc] sm:$0xff]
    %v368 = vld [vmem:[#allocation4 + $0x4c4] sm:$0xff]
    %v369 = vld [vmem:[#allocation4 + $0x4cc] sm:$0xf]
    %v370 = vld [vmem:[#allocation4 + $0x4d0] sm:$0xff]
    %v371 = vld [vmem:[#allocation4 + $0x4d8] sm:$0xff]
    %v372 = vld [vmem:[#allocation4 + $0x4e0] sm:$0xff]
    %v373 = vld [vmem:[#allocation4 + $0x4e8] sm:$0xf]
    %v374 = vld [vmem:[#allocation4 + $0x4ec] sm:$0xff]
    %v375 = vld [vmem:[#allocation4 + $0x4f4] sm:$0xff]
    %v376 = vld [vmem:[#allocation4 + $0x4fc] sm:$0xff]
    %v377 = vld [vmem:[#allocation4 + $0x504] sm:$0xf]
    %v378 = vld [vmem:[#allocation4 + $0x508] sm:$0xff]
    %v379 = vld [vmem:[#allocation4 + $0x510] sm:$0xff]
    %v380 = vld [vmem:[#allocation4 + $0x518] sm:$0xff]
    %v381 = vld [vmem:[#allocation4 + $0x520] sm:$0xf]
    %v382 = vld [vmem:[#allocation4 + $0x524] sm:$0xff]
    %v383 = vld [vmem:[#allocation4 + $0x52c] sm:$0xff]
    %v384 = vld [vmem:[#allocation4 + $0x534] sm:$0xff]
    %v385 = vld [vmem:[#allocation4 + $0x53c] sm:$0xf]
    %v386 = vld [vmem:[#allocation4 + $0x540] sm:$0xff]
    %v387 = vld [vmem:[#allocation4 + $0x548] sm:$0xff]
    %v388 = vld [vmem:[#allocation4 + $0x550] sm:$0xff]
    %v389 = vld [vmem:[#allocation4 + $0x558] sm:$0xf]
    %v390 = vld [vmem:[#allocation4 + $0x55c] sm:$0xff]
    %v391 = vld [vmem:[#allocation4 + $0x564] sm:$0xff]
    %v392 = vld [vmem:[#allocation4 + $0x56c] sm:$0xff]
    %v393 = vld [vmem:[#allocation4 + $0x574] sm:$0xf]
    %v394 = vld [vmem:[#allocation4 + $0x578] sm:$0xff]
    %v395 = vld [vmem:[#allocation4 + $0x580] sm:$0xff]
    %v396 = vld [vmem:[#allocation4 + $0x588] sm:$0xff]
    %v397 = vld [vmem:[#allocation4 + $0x590] sm:$0xf]
    %v398 = vld [vmem:[#allocation4 + $0x594] sm:$0xff]
    %v399 = vld [vmem:[#allocation4 + $0x59c] sm:$0xff]
    %v400 = vld [vmem:[#allocation4 + $0x5a4] sm:$0xff]
    %v401 = vld [vmem:[#allocation4 + $0x5ac] sm:$0xf]
    %v402 = vld [vmem:[#allocation4 + $0x5b0] sm:$0xff]
    %v403 = vld [vmem:[#allocation4 + $0x5b8] sm:$0xff]
    %v404 = vld [vmem:[#allocation4 + $0x5c0] sm:$0xff]
    %v405 = vld [vmem:[#allocation4 + $0x5c8] sm:$0xf]
    %v406 = vld [vmem:[#allocation4 + $0x5cc] sm:$0xff]
    %v407 = vld [vmem:[#allocation4 + $0x5d4] sm:$0xff]
    %v408 = vld [vmem:[#allocation4 + $0x5dc] sm:$0xff]
    %v409 = vld [vmem:[#allocation4 + $0x5e4] sm:$0xf]
    %v410 = vld [vmem:[#allocation4 + $0x5e8] sm:$0xff]
    %v411 = vld [vmem:[#allocation4 + $0x5f0] sm:$0xff]
    %v412 = vld [vmem:[#allocation4 + $0x5f8] sm:$0xff]
    %v413 = vld [vmem:[#allocation4 + $0x600] sm:$0xf]
    %v414 = vld [vmem:[#allocation4 + $0x604] sm:$0xff]
    %v415 = vld [vmem:[#allocation4 + $0x60c] sm:$0xff]
    %v416 = vld [vmem:[#allocation4 + $0x614] sm:$0xff]
    %v417 = vld [vmem:[#allocation4 + $0x61c] sm:$0xf]
    %v418 = vld [vmem:[#allocation4 + $0x620] sm:$0xff]
    %v419 = vld [vmem:[#allocation4 + $0x628] sm:$0xff]
    %v420 = vld [vmem:[#allocation4 + $0x630] sm:$0xff]
    %v421 = vld [vmem:[#allocation4 + $0x638] sm:$0xf]
    %v422 = vld [vmem:[#allocation4 + $0x63c] sm:$0xff]
    %v423 = vld [vmem:[#allocation4 + $0x644] sm:$0xff]
    %v424 = vld [vmem:[#allocation4 + $0x64c] sm:$0xff]
    %v425 = vld [vmem:[#allocation4 + $0x654] sm:$0xf]
    %v426 = vld [vmem:[#allocation4 + $0x658] sm:$0xff]
    %v427 = vld [vmem:[#allocation4 + $0x660] sm:$0xff]
    %v428 = vld [vmem:[#allocation4 + $0x668] sm:$0xff]
    %v429 = vld [vmem:[#allocation4 + $0x670] sm:$0xf]
    %v430 = vld [vmem:[#allocation4 + $0x674] sm:$0xff]
    %v431 = vld [vmem:[#allocation4 + $0x67c] sm:$0xff]
    %v432 = vld [vmem:[#allocation4 + $0x684] sm:$0xff]
    %v433 = vld [vmem:[#allocation4 + $0x68c] sm:$0xf]
    %v434 = vld [vmem:[#allocation4 + $0x690] sm:$0xff]
    %v435 = vld [vmem:[#allocation4 + $0x698] sm:$0xff]
    %v436 = vld [vmem:[#allocation4 + $0x6a0] sm:$0xff]
    %v437 = vld [vmem:[#allocation4 + $0x6a8] sm:$0xf]
    %v438 = vld [vmem:[#allocation4 + $0x6ac] sm:$0xff]
    %v439 = vld [vmem:[#allocation4 + $0x6b4] sm:$0xff]
    %v440 = vld [vmem:[#allocation4 + $0x6bc] sm:$0xff]
    %v441 = vld [vmem:[#allocation4 + $0x6c4] sm:$0xf]
    %v442 = vld [vmem:[#allocation4 + $0x6c8] sm:$0xff]
    %v443 = vld [vmem:[#allocation4 + $0x6d0] sm:$0xff]
    %v444 = vld [vmem:[#allocation4 + $0x6d8] sm:$0xff]
    %v445 = vld [vmem:[#allocation4 + $0x6e0] sm:$0xf]
    %v446 = vld [vmem:[#allocation4 + $0x6e4] sm:$0xff]
    %v447 = vld [vmem:[#allocation4 + $0x6ec] sm:$0xff]
    %v448 = vld [vmem:[#allocation4 + $0x6f4] sm:$0xff]
    %v449 = vld [vmem:[#allocation4 + $0x6fc] sm:$0xf]
    %v450 = vld [vmem:[#allocation4 + $0x700] sm:$0xff]
    %v451 = vld [vmem:[#allocation4 + $0x708] sm:$0xff]
    %v452 = vld [vmem:[#allocation4 + $0x710] sm:$0xff]
    %v453 = vld [vmem:[#allocation4 + $0x718] sm:$0xf]
    %v454 = vld [vmem:[#allocation4 + $0x71c] sm:$0xff]
    %v455 = vld [vmem:[#allocation4 + $0x724] sm:$0xff]
    %v456 = vld [vmem:[#allocation4 + $0x72c] sm:$0xff]
    %v457 = vld [vmem:[#allocation4 + $0x734] sm:$0xf]
    %v458 = vld [vmem:[#allocation4 + $0x738] sm:$0xff]
    %v459 = vld [vmem:[#allocation4 + $0x740] sm:$0xff]
    %v460 = vld [vmem:[#allocation4 + $0x748] sm:$0xff]
    %v461 = vld [vmem:[#allocation4 + $0x750] sm:$0xf]
    %v462 = vld [vmem:[#allocation4 + $0x754] sm:$0xff]
    %v463 = vld [vmem:[#allocation4 + $0x75c] sm:$0xff]
    %v464 = vld [vmem:[#allocation4 + $0x764] sm:$0xff]
    %v465 = vld [vmem:[#allocation4 + $0x76c] sm:$0xf]
    %v466 = vld [vmem:[#allocation4 + $0x770] sm:$0xff]
    %v467 = vld [vmem:[#allocation4 + $0x778] sm:$0xff]
    %v468 = vld [vmem:[#allocation4 + $0x780] sm:$0xff]
    %v469 = vld [vmem:[#allocation4 + $0x788] sm:$0xf]
    %v470 = vld [vmem:[#allocation4 + $0x78c] sm:$0xff]
    %v471 = vld [vmem:[#allocation4 + $0x794] sm:$0xff]
    %v472 = vld [vmem:[#allocation4 + $0x79c] sm:$0xff]
    %v473 = vld [vmem:[#allocation4 + $0x7a4] sm:$0xf]
    %v474 = vld [vmem:[#allocation4 + $0x7a8] sm:$0xff]
    %v475 = vld [vmem:[#allocation4 + $0x7b0] sm:$0xff]
    %v476 = vld [vmem:[#allocation4 + $0x7b8] sm:$0xff]
    %v477 = vld [vmem:[#allocation4 + $0x7c0] sm:$0xf]
    %v478 = vld [vmem:[#allocation4 + $0x7c4] sm:$0xff]
    %v479 = vld [vmem:[#allocation4 + $0x7cc] sm:$0xff]
    %v480 = vld [vmem:[#allocation4 + $0x7d4] sm:$0xff]
    %v481 = vld [vmem:[#allocation4 + $0x7dc] sm:$0xf]
    %v482 = vld [vmem:[#allocation4 + $0x7e0] sm:$0xff]
    %v483 = vld [vmem:[#allocation4 + $0x7e8] sm:$0xff]
    %v484 = vld [vmem:[#allocation4 + $0x7f0] sm:$0xff]
    %v485 = vld [vmem:[#allocation4 + $0x7f8] sm:$0xf]
    %v486 = vld [vmem:[#allocation4 + $0x7fc] sm:$0xff]
    %v487 = vld [vmem:[#allocation4 + $0x804] sm:$0xff]
    %v488 = vld [vmem:[#allocation4 + $0x80c] sm:$0xff]
    %v489 = vld [vmem:[#allocation4 + $0x814] sm:$0xf]
    %v490 = vld [vmem:[#allocation4 + $0x818] sm:$0xff]
    %v491 = vld [vmem:[#allocation4 + $0x820] sm:$0xff]
    %v492 = vld [vmem:[#allocation4 + $0x828] sm:$0xff]
    %v493 = vld [vmem:[#allocation4 + $0x830] sm:$0xf]
    %v494 = vld [vmem:[#allocation4 + $0x834] sm:$0xff]
    %v495 = vld [vmem:[#allocation4 + $0x83c] sm:$0xff]
    %v496 = vld [vmem:[#allocation4 + $0x844] sm:$0xff]
    %v497 = vld [vmem:[#allocation4 + $0x84c] sm:$0xf]
    %v498 = vld [vmem:[#allocation4 + $0x850] sm:$0xff]
    %v499 = vld [vmem:[#allocation4 + $0x858] sm:$0xff]
    %v500 = vld [vmem:[#allocation4 + $0x860] sm:$0xff]
    %v501 = vld [vmem:[#allocation4 + $0x868] sm:$0xf]
    %v502 = vld [vmem:[#allocation4 + $0x86c] sm:$0xff]
    %v503 = vld [vmem:[#allocation4 + $0x874] sm:$0xff]
    %v504 = vld [vmem:[#allocation4 + $0x87c] sm:$0xff]
    %v505 = vld [vmem:[#allocation4 + $0x884] sm:$0xf]
    %v506 = vld [vmem:[#allocation4 + $0x888] sm:$0xff]
    %v507 = vld [vmem:[#allocation4 + $0x890] sm:$0xff]
    %v508 = vld [vmem:[#allocation4 + $0x898] sm:$0xff]
    %v509 = vld [vmem:[#allocation4 + $0x8a0] sm:$0xf]
    %v510 = vld [vmem:[#allocation4 + $0x8a4] sm:$0xff]
    %v511 = vld [vmem:[#allocation4 + $0x8ac] sm:$0xff]
    %v512 = vld [vmem:[#allocation4 + $0x8b4] sm:$0xff]
    %v513 = vld [vmem:[#allocation4 + $0x8bc] sm:$0xf]
    %v514 = vld [vmem:[#allocation4 + $0x8c0] sm:$0xff]
    %v515 = vld [vmem:[#allocation4 + $0x8c8] sm:$0xff]
    %v516 = vld [vmem:[#allocation4 + $0x8d0] sm:$0xff]
    %v517 = vld [vmem:[#allocation4 + $0x8d8] sm:$0xf]
    %v518 = vld [vmem:[#allocation4 + $0x8dc] sm:$0xff]
    %v519 = vld [vmem:[#allocation4 + $0x8e4] sm:$0xff]
    %v520 = vld [vmem:[#allocation4 + $0x8ec] sm:$0xff]
    %v521 = vld [vmem:[#allocation4 + $0x8f4] sm:$0xf]
    %v522 = vld [vmem:[#allocation4 + $0x8f8] sm:$0xff]
    %v523 = vld [vmem:[#allocation4 + $0x900] sm:$0xff]
    %v524 = vld [vmem:[#allocation4 + $0x908] sm:$0xff]
    %v525 = vld [vmem:[#allocation4 + $0x910] sm:$0xf]
    %v526 = vld [vmem:[#allocation4 + $0x914] sm:$0xff]
    %v527 = vld [vmem:[#allocation4 + $0x91c] sm:$0xff]
    %v528 = vld [vmem:[#allocation4 + $0x924] sm:$0xff]
    %v529 = vld [vmem:[#allocation4 + $0x92c] sm:$0xf]
    %v530 = vld [vmem:[#allocation4 + $0x930] sm:$0xff]
    %v531 = vld [vmem:[#allocation4 + $0x938] sm:$0xff]
    %v532 = vld [vmem:[#allocation4 + $0x940] sm:$0xff]
    %v533 = vld [vmem:[#allocation4 + $0x948] sm:$0xf]
    %v534 = vld [vmem:[#allocation4 + $0x94c] sm:$0xff]
    %v535 = vld [vmem:[#allocation4 + $0x954] sm:$0xff]
    %v536 = vld [vmem:[#allocation4 + $0x95c] sm:$0xff]
    %v537 = vld [vmem:[#allocation4 + $0x964] sm:$0xf]
    %v538 = vld [vmem:[#allocation4 + $0x968] sm:$0xff]
    %v539 = vld [vmem:[#allocation4 + $0x970] sm:$0xff]
    %v540 = vld [vmem:[#allocation4 + $0x978] sm:$0xff]
    %v541 = vld [vmem:[#allocation4 + $0x980] sm:$0xf]
    %v542 = vld [vmem:[#allocation4 + $0x984] sm:$0xff]
    %v543 = vld [vmem:[#allocation4 + $0x98c] sm:$0xff]
    %v544 = vld [vmem:[#allocation4 + $0x994] sm:$0xff]
    %v545 = vld [vmem:[#allocation4 + $0x99c] sm:$0xf]
    %v546 = vld [vmem:[#allocation4 + $0x9a0] sm:$0xff]
    %v547 = vld [vmem:[#allocation4 + $0x9a8] sm:$0xff]
    %v548 = vld [vmem:[#allocation4 + $0x9b0] sm:$0xff]
    %v549 = vld [vmem:[#allocation4 + $0x9b8] sm:$0xf]
    %v550 = vld [vmem:[#allocation4 + $0x9bc] sm:$0xff]
    %v551 = vld [vmem:[#allocation4 + $0x9c4] sm:$0xff]
    %v552 = vld [vmem:[#allocation4 + $0x9cc] sm:$0xff]
    %v553 = vld [vmem:[#allocation4 + $0x9d4] sm:$0xf]
    %v554 = vld [vmem:[#allocation4 + $0x9d8] sm:$0xff]
    %v555 = vld [vmem:[#allocation4 + $0x9e0] sm:$0xff]
    %v556 = vld [vmem:[#allocation4 + $0x9e8] sm:$0xff]
    %v557 = vld [vmem:[#allocation4 + $0x9f0] sm:$0xf]
    %v558 = vld [vmem:[#allocation4 + $0x9f4] sm:$0xff]
    %v559 = vld [vmem:[#allocation4 + $0x9fc] sm:$0xff]
    %v560 = vld [vmem:[#allocation4 + $0xa04] sm:$0xff]
    %v561 = vld [vmem:[#allocation4 + $0xa0c] sm:$0xf]
    %v562 = vld [vmem:[#allocation4 + $0xa10] sm:$0xff]
    %v563 = vld [vmem:[#allocation4 + $0xa18] sm:$0xff]
    %v564 = vld [vmem:[#allocation4 + $0xa20] sm:$0xff]
    %v565 = vld [vmem:[#allocation4 + $0xa28] sm:$0xf]
    %v566 = vld [vmem:[#allocation4 + $0xa2c] sm:$0xff]
    %v567 = vld [vmem:[#allocation4 + $0xa34] sm:$0xff]
    %v568 = vld [vmem:[#allocation4 + $0xa3c] sm:$0xff]
    %v569 = vld [vmem:[#allocation4 + $0xa44] sm:$0xf]
    %v570 = vld [vmem:[#allocation4 + $0xa48] sm:$0xff]
    %v571 = vld [vmem:[#allocation4 + $0xa50] sm:$0xff]
    %v572 = vld [vmem:[#allocation4 + $0xa58] sm:$0xff]
    %v573 = vld [vmem:[#allocation4 + $0xa60] sm:$0xf]
    %v574 = vld [vmem:[#allocation4 + $0xa64] sm:$0xff]
    %v575 = vld [vmem:[#allocation4 + $0xa6c] sm:$0xff]
    %v576 = vld [vmem:[#allocation4 + $0xa74] sm:$0xff]
    %v577 = vld [vmem:[#allocation4 + $0xa7c] sm:$0xf]
    %v578 = vld [vmem:[#allocation4 + $0xa80] sm:$0xff]
    %v579 = vld [vmem:[#allocation4 + $0xa88] sm:$0xff]
    %v580 = vld [vmem:[#allocation4 + $0xa90] sm:$0xff]
    %v581 = vld [vmem:[#allocation4 + $0xa98] sm:$0xf]
    %v582 = vld [vmem:[#allocation4 + $0xa9c] sm:$0xff]
    %v583 = vld [vmem:[#allocation4 + $0xaa4] sm:$0xff]
    %v584 = vld [vmem:[#allocation4 + $0xaac] sm:$0xff]
    %v585 = vld [vmem:[#allocation4 + $0xab4] sm:$0xf]
    %v586 = vld [vmem:[#allocation4 + $0xab8] sm:$0xff]
    %v587 = vld [vmem:[#allocation4 + $0xac0] sm:$0xff]
    %v588 = vld [vmem:[#allocation4 + $0xac8] sm:$0xff]
    %v589 = vld [vmem:[#allocation4 + $0xad0] sm:$0xf]
    %v590 = vld [vmem:[#allocation4 + $0xad4] sm:$0xff]
    %v591 = vld [vmem:[#allocation4 + $0xadc] sm:$0xff]
    %v592 = vld [vmem:[#allocation4 + $0xae4] sm:$0xff]
    %v593 = vld [vmem:[#allocation4 + $0xaec] sm:$0xf]
    %v594 = vld [vmem:[#allocation4 + $0xaf0] sm:$0xff]
    %v595 = vld [vmem:[#allocation4 + $0xaf8] sm:$0xff]
    %v596 = vld [vmem:[#allocation4 + $0xb00] sm:$0xff]
    %v597 = vld [vmem:[#allocation4 + $0xb08] sm:$0xf]
    %v598 = vld [vmem:[#allocation4 + $0xb0c] sm:$0xff]
    %v599 = vld [vmem:[#allocation4 + $0xb14] sm:$0xff]
    %v600 = vld [vmem:[#allocation4 + $0xb1c] sm:$0xff]
    %v601 = vld [vmem:[#allocation4 + $0xb24] sm:$0xf]
    %v602 = vld [vmem:[#allocation4 + $0xb28] sm:$0xff]
    %v603 = vld [vmem:[#allocation4 + $0xb30] sm:$0xff]
    %v604 = vld [vmem:[#allocation4 + $0xb38] sm:$0xff]
    %v605 = vld [vmem:[#allocation4 + $0xb40] sm:$0xf]
    %v606 = vld [vmem:[#allocation4 + $0xb44] sm:$0xff]
    %v607 = vld [vmem:[#allocation4 + $0xb4c] sm:$0xff]
    %v608 = vld [vmem:[#allocation4 + $0xb54] sm:$0xff]
    %v609 = vld [vmem:[#allocation4 + $0xb5c] sm:$0xf]
    %v610 = vld [vmem:[#allocation4 + $0xb60] sm:$0xff]
    %v611 = vld [vmem:[#allocation4 + $0xb68] sm:$0xff]
    %v612 = vld [vmem:[#allocation4 + $0xb70] sm:$0xff]
    %v613 = vld [vmem:[#allocation4 + $0xb78] sm:$0xf]
    %v614 = vld [vmem:[#allocation4 + $0xb7c] sm:$0xff]
    %v615 = vld [vmem:[#allocation4 + $0xb84] sm:$0xff]
    %v616 = vld [vmem:[#allocation4 + $0xb8c] sm:$0xff]
    %v617 = vld [vmem:[#allocation4 + $0xb94] sm:$0xf]
    %v618 = vld [vmem:[#allocation4 + $0xb98] sm:$0xff]
    %v619 = vld [vmem:[#allocation4 + $0xba0] sm:$0xff]
    %v620 = vld [vmem:[#allocation4 + $0xba8] sm:$0xff]
    %v621 = vld [vmem:[#allocation4 + $0xbb0] sm:$0xf]
    %v622 = vld [vmem:[#allocation4 + $0xbb4] sm:$0xff]
    %v623 = vld [vmem:[#allocation4 + $0xbbc] sm:$0xff]
    %v624 = vld [vmem:[#allocation4 + $0xbc4] sm:$0xff]
    %v625 = vld [vmem:[#allocation4 + $0xbcc] sm:$0xf]
    %v626 = vld [vmem:[#allocation4 + $0xbd0] sm:$0xff]
    %v627 = vld [vmem:[#allocation4 + $0xbd8] sm:$0xff]
    %v628 = vld [vmem:[#allocation4 + $0xbe0] sm:$0xff]
    %v629 = vld [vmem:[#allocation4 + $0xbe8] sm:$0xf]
    %v630 = vld [vmem:[#allocation4 + $0xbec] sm:$0xff]
    %v631 = vld [vmem:[#allocation4 + $0xbf4] sm:$0xff]
    %v632 = vld [vmem:[#allocation4 + $0xbfc] sm:$0xff]
    %v633 = vld [vmem:[#allocation4 + $0xc04] sm:$0xf]
    %v634 = vld [vmem:[#allocation4 + $0xc08] sm:$0xff]
    %v635 = vld [vmem:[#allocation4 + $0xc10] sm:$0xff]
    %v636 = vld [vmem:[#allocation4 + $0xc18] sm:$0xff]
    %v637 = vld [vmem:[#allocation4 + $0xc20] sm:$0xf]
    %v638 = vld [vmem:[#allocation4 + $0xc24] sm:$0xff]
    %v639 = vld [vmem:[#allocation4 + $0xc2c] sm:$0xff]
    %v640 = vld [vmem:[#allocation4 + $0xc34] sm:$0xff]
    %v641 = vld [vmem:[#allocation4 + $0xc3c] sm:$0xf]
    %v642 = vld [vmem:[#allocation4 + $0xc40] sm:$0xff]
    %v643 = vld [vmem:[#allocation4 + $0xc48] sm:$0xff]
    %v644 = vld [vmem:[#allocation4 + $0xc50] sm:$0xff]
    %v645 = vld [vmem:[#allocation4 + $0xc58] sm:$0xf]
    %v646 = vld [vmem:[#allocation4 + $0xc5c] sm:$0xff]
    %v647 = vld [vmem:[#allocation4 + $0xc64] sm:$0xff]
    %v648 = vld [vmem:[#allocation4 + $0xc6c] sm:$0xff]
    %v649 = vld [vmem:[#allocation4 + $0xc74] sm:$0xf]
    %v650 = vld [vmem:[#allocation4 + $0xc78] sm:$0xff]
    %v651 = vld [vmem:[#allocation4 + $0xc80] sm:$0xff]
    %v652 = vld [vmem:[#allocation4 + $0xc88] sm:$0xff]
    %v653 = vld [vmem:[#allocation4 + $0xc90] sm:$0xf]
    %v654 = vld [vmem:[#allocation4 + $0xc94] sm:$0xff]
    %v655 = vld [vmem:[#allocation4 + $0xc9c] sm:$0xff]
    %v656 = vld [vmem:[#allocation4 + $0xca4] sm:$0xff]
    %v657 = vld [vmem:[#allocation4 + $0xcac] sm:$0xf]
    %v658 = vld [vmem:[#allocation4 + $0xcb0] sm:$0xff]
    %v659 = vld [vmem:[#allocation4 + $0xcb8] sm:$0xff]
    %v660 = vld [vmem:[#allocation4 + $0xcc0] sm:$0xff]
    %v661 = vld [vmem:[#allocation4 + $0xcc8] sm:$0xf]
    %v662 = vld [vmem:[#allocation4 + $0xccc] sm:$0xff]
    %v663 = vld [vmem:[#allocation4 + $0xcd4] sm:$0xff]
    %v664 = vld [vmem:[#allocation4 + $0xcdc] sm:$0xff]
    %v665 = vld [vmem:[#allocation4 + $0xce4] sm:$0xf]
    %v666 = vld [vmem:[#allocation4 + $0xce8] sm:$0xff]
    %v667 = vld [vmem:[#allocation4 + $0xcf0] sm:$0xff]
    %v668 = vld [vmem:[#allocation4 + $0xcf8] sm:$0xff]
    %v669 = vld [vmem:[#allocation4 + $0xd00] sm:$0xf]
    %v670 = vld [vmem:[#allocation4 + $0xd04] sm:$0xff]
    %v671 = vld [vmem:[#allocation4 + $0xd0c] sm:$0xff]
    %v672 = vld [vmem:[#allocation4 + $0xd14] sm:$0xff]
    %v673 = vld [vmem:[#allocation4 + $0xd1c] sm:$0xf]
    %v674 = vld [vmem:[#allocation4 + $0xd20] sm:$0xff]
    %v675 = vld [vmem:[#allocation4 + $0xd28] sm:$0xff]
    %v676 = vld [vmem:[#allocation4 + $0xd30] sm:$0xff]
    %v677 = vld [vmem:[#allocation4 + $0xd38] sm:$0xf]
    %v678 = vld [vmem:[#allocation4 + $0xd3c] sm:$0xff]
    %v679 = vld [vmem:[#allocation4 + $0xd44] sm:$0xff]
    %v680 = vld [vmem:[#allocation4 + $0xd4c] sm:$0xff]
    %v681 = vld [vmem:[#allocation4 + $0xd54] sm:$0xf]
    %v682 = vld [vmem:[#allocation4 + $0xd58] sm:$0xff]
    %v683 = vld [vmem:[#allocation4 + $0xd60] sm:$0xff]
    %v684 = vld [vmem:[#allocation4 + $0xd68] sm:$0xff]
    %v685 = vld [vmem:[#allocation4 + $0xd70] sm:$0xf]
    %v686 = vld [vmem:[#allocation4 + $0xd74] sm:$0xff]
    %v687 = vld [vmem:[#allocation4 + $0xd7c] sm:$0xff]
    %v688 = vld [vmem:[#allocation4 + $0xd84] sm:$0xff]
    %v689 = vld [vmem:[#allocation4 + $0xd8c] sm:$0xf]
    %v690 = vld [vmem:[#allocation4 + $0xd90] sm:$0xff]
    %v691 = vld [vmem:[#allocation4 + $0xd98] sm:$0xff]
    %v692 = vld [vmem:[#allocation4 + $0xda0] sm:$0xff]
    %v693 = vld [vmem:[#allocation4 + $0xda8] sm:$0xf]
    %v694 = vld [vmem:[#allocation4 + $0xdac] sm:$0xff]
    %v695 = vld [vmem:[#allocation4 + $0xdb4] sm:$0xff]
    %v696 = vld [vmem:[#allocation4 + $0xdbc] sm:$0xff]
    %v697 = vld [vmem:[#allocation4 + $0xdc4] sm:$0xf]
    %v698 = vld [vmem:[#allocation4 + $0xdc8] sm:$0xff]
    %v699 = vld [vmem:[#allocation4 + $0xdd0] sm:$0xff]
    %v700 = vld [vmem:[#allocation4 + $0xdd8] sm:$0xff]
    %v701 = vld [vmem:[#allocation4 + $0xde0] sm:$0xf]
    %v702 = vld [vmem:[#allocation4 + $0xde4] sm:$0xff]
    %v703 = vld [vmem:[#allocation4 + $0xdec] sm:$0xff]
    %v704 = vld [vmem:[#allocation4 + $0xdf4] sm:$0xff]
    %v705 = vld [vmem:[#allocation4 + $0xdfc] sm:$0xf]
    %v706 = vld [vmem:[#allocation4 + $0xe00] sm:$0xff]
    %v707 = vld [vmem:[#allocation4 + $0xe08] sm:$0xff]
    %v708 = vld [vmem:[#allocation4 + $0xe10] sm:$0xff]
    %v709 = vld [vmem:[#allocation4 + $0xe18] sm:$0xf]
    %v710 = vld [vmem:[#allocation4 + $0xe1c] sm:$0xff]
    %v711 = vld [vmem:[#allocation4 + $0xe24] sm:$0xff]
    %v712 = vld [vmem:[#allocation4 + $0xe2c] sm:$0xff]
    %v713 = vld [vmem:[#allocation4 + $0xe34] sm:$0xf]
    %v714 = vld [vmem:[#allocation4 + $0xe38] sm:$0xff]
    %v715 = vld [vmem:[#allocation4 + $0xe40] sm:$0xff]
    %v716 = vld [vmem:[#allocation4 + $0xe48] sm:$0xff]
    %v717 = vld [vmem:[#allocation4 + $0xe50] sm:$0xf]
    %v718 = vld [vmem:[#allocation4 + $0xe54] sm:$0xff]
    %v719 = vld [vmem:[#allocation4 + $0xe5c] sm:$0xff]
    %v720 = vld [vmem:[#allocation4 + $0xe64] sm:$0xff]
    %v721 = vld [vmem:[#allocation4 + $0xe6c] sm:$0xf]
    %v722 = vld [vmem:[#allocation4 + $0xe70] sm:$0xff]
    %v723 = vld [vmem:[#allocation4 + $0xe78] sm:$0xff]
    %v724 = vld [vmem:[#allocation4 + $0xe80] sm:$0xff]
    %v725 = vld [vmem:[#allocation4 + $0xe88] sm:$0xf]
    %v726 = vld [vmem:[#allocation4 + $0xe8c] sm:$0xff]
    %v727 = vld [vmem:[#allocation4 + $0xe94] sm:$0xff]
    %v728 = vld [vmem:[#allocation4 + $0xe9c] sm:$0xff]
    %v729 = vld [vmem:[#allocation4 + $0xea4] sm:$0xf]
    %v730 = vld [vmem:[#allocation4 + $0xea8] sm:$0xff]
    %v731 = vld [vmem:[#allocation4 + $0xeb0] sm:$0xff]
    %v732 = vld [vmem:[#allocation4 + $0xeb8] sm:$0xff]
    %v733 = vld [vmem:[#allocation4 + $0xec0] sm:$0xf]
    %v734 = vld [vmem:[#allocation4 + $0xec4] sm:$0xff]
    %v735 = vld [vmem:[#allocation4 + $0xecc] sm:$0xff]
    %v736 = vld [vmem:[#allocation4 + $0xed4] sm:$0xff]
    %v737 = vld [vmem:[#allocation4 + $0xedc] sm:$0xf]
    %v738 = vld [vmem:[#allocation4 + $0xee0] sm:$0xff]
    %v739 = vld [vmem:[#allocation4 + $0xee8] sm:$0xff]
    %v740 = vld [vmem:[#allocation4 + $0xef0] sm:$0xff]
    %v741 = vld [vmem:[#allocation4 + $0xef8] sm:$0xf]
    %v742 = vld [vmem:[#allocation4 + $0xefc] sm:$0xff]
    %v743 = vld [vmem:[#allocation4 + $0xf04] sm:$0xff]
    %v744 = vld [vmem:[#allocation4 + $0xf0c] sm:$0xff]
    %v745 = vld [vmem:[#allocation4 + $0xf14] sm:$0xf]
    %v746 = vld [vmem:[#allocation4 + $0xf18] sm:$0xff]
    %v747 = vld [vmem:[#allocation4 + $0xf20] sm:$0xff]
    %v748 = vld [vmem:[#allocation4 + $0xf28] sm:$0xff]
    %v749 = vld [vmem:[#allocation4 + $0xf30] sm:$0xf]
    %v750 = vld [vmem:[#allocation4 + $0xf34] sm:$0xff]
    %v751 = vld [vmem:[#allocation4 + $0xf3c] sm:$0xff]
    %v752 = vld [vmem:[#allocation4 + $0xf44] sm:$0xff]
    %v753 = vld [vmem:[#allocation4 + $0xf4c] sm:$0xf]
    %v754 = vld [vmem:[#allocation4 + $0xf50] sm:$0xff]
    %v755 = vld [vmem:[#allocation4 + $0xf58] sm:$0xff]
    %v756 = vld [vmem:[#allocation4 + $0xf60] sm:$0xff]
    %v757 = vld [vmem:[#allocation4 + $0xf68] sm:$0xf]
    %v758 = vld [vmem:[#allocation4 + $0xf6c] sm:$0xff]
    %v759 = vld [vmem:[#allocation4 + $0xf74] sm:$0xff]
    %v760 = vld [vmem:[#allocation4 + $0xf7c] sm:$0xff]
    %v761 = vld [vmem:[#allocation4 + $0xf84] sm:$0xf]
    %v762 = vld [vmem:[#allocation4 + $0xf88] sm:$0xff]
    %v763 = vld [vmem:[#allocation4 + $0xf90] sm:$0xff]
    %v764 = vld [vmem:[#allocation4 + $0xf98] sm:$0xff]
    %v765 = vld [vmem:[#allocation4 + $0xfa0] sm:$0xf]
    %v766 = vld [vmem:[#allocation4 + $0xfa4] sm:$0xff]
    %v767 = vld [vmem:[#allocation4 + $0xfac] sm:$0xff]
    %v768 = vld [vmem:[#allocation4 + $0xfb4] sm:$0xff]
    %v769 = vld [vmem:[#allocation4 + $0xfbc] sm:$0xf]
    %v770 = vld [vmem:[#allocation4 + $0xfc0] sm:$0xff]
    %v771 = vld [vmem:[#allocation4 + $0xfc8] sm:$0xff]
    %v772 = vld [vmem:[#allocation4 + $0xfd0] sm:$0xff]
    %v773 = vld [vmem:[#allocation4 + $0xfd8] sm:$0xf]
    %v774 = vld [vmem:[#allocation4 + $0xfdc] sm:$0xff]
    %v775 = vld [vmem:[#allocation4 + $0xfe4] sm:$0xff]
    %v776 = vld [vmem:[#allocation4 + $0xfec] sm:$0xff]
    %v777 = vld [vmem:[#allocation4 + $0xff4] sm:$0xf]
    %v778 = vld [vmem:[#allocation4 + $0xff8] sm:$0xff]
    %v779 = vld [vmem:[#allocation4 + $0x1000] sm:$0xff]
    %v780 = vld [vmem:[#allocation4 + $0x1008] sm:$0xff]
    %v781 = vld [vmem:[#allocation4 + $0x1010] sm:$0xf]
    %v782 = vld [vmem:[#allocation4 + $0x1014] sm:$0xff]
    %v783 = vld [vmem:[#allocation4 + $0x101c] sm:$0xff]
    %v784 = vld [vmem:[#allocation4 + $0x1024] sm:$0xff]
    %v785 = vld [vmem:[#allocation4 + $0x102c] sm:$0xf]
    %v786 = vld [vmem:[#allocation4 + $0x1030] sm:$0xff]
    %v787 = vld [vmem:[#allocation4 + $0x1038] sm:$0xff]
    %v788 = vld [vmem:[#allocation4 + $0x1040] sm:$0xff]
    %v789 = vld [vmem:[#allocation4 + $0x1048] sm:$0xf]
    %v790 = vld [vmem:[#allocation4 + $0x104c] sm:$0xff]
    %v791 = vld [vmem:[#allocation4 + $0x1054] sm:$0xff]
    %v792 = vld [vmem:[#allocation4 + $0x105c] sm:$0xff]
    %v793 = vld [vmem:[#allocation4 + $0x1064] sm:$0xf]
    %v794 = vld [vmem:[#allocation4 + $0x1068] sm:$0xff]
    %v795 = vld [vmem:[#allocation4 + $0x1070] sm:$0xff]
    %v796 = vld [vmem:[#allocation4 + $0x1078] sm:$0xff]
    %v797 = vld [vmem:[#allocation4 + $0x1080] sm:$0xf]
    %v798 = vld [vmem:[#allocation4 + $0x1084] sm:$0xff]
    %v799 = vld [vmem:[#allocation4 + $0x108c] sm:$0xff]
    %v800 = vld [vmem:[#allocation4 + $0x1094] sm:$0xff]
    %v801 = vld [vmem:[#allocation4 + $0x109c] sm:$0xf]
    %v802 = vld [vmem:[#allocation4 + $0x10a0] sm:$0xff]
    %v803 = vld [vmem:[#allocation4 + $0x10a8] sm:$0xff]
    %v804 = vld [vmem:[#allocation4 + $0x10b0] sm:$0xff]
    %v805 = vld [vmem:[#allocation4 + $0x10b8] sm:$0xf]
    %v806 = vld [vmem:[#allocation4 + $0x10bc] sm:$0xff]
    %v807 = vld [vmem:[#allocation4 + $0x10c4] sm:$0xff]
    %v808 = vld [vmem:[#allocation4 + $0x10cc] sm:$0xff]
    %v809 = vld [vmem:[#allocation4 + $0x10d4] sm:$0xf]
    %v810 = vld [vmem:[#allocation4 + $0x10d8] sm:$0xff]
    %v811 = vld [vmem:[#allocation4 + $0x10e0] sm:$0xff]
    %v812 = vld [vmem:[#allocation4 + $0x10e8] sm:$0xff]
    %v813 = vld [vmem:[#allocation4 + $0x10f0] sm:$0xf]
    %v814 = vld [vmem:[#allocation4 + $0x10f4] sm:$0xff]
    %v815 = vld [vmem:[#allocation4 + $0x10fc] sm:$0xff]
    %v816 = vld [vmem:[#allocation4 + $0x1104] sm:$0xff]
    %v817 = vld [vmem:[#allocation4 + $0x110c] sm:$0xf]
    %v818 = vld [vmem:[#allocation4 + $0x1110] sm:$0xff]
    %v819 = vld [vmem:[#allocation4 + $0x1118] sm:$0xff]
    %v820 = vld [vmem:[#allocation4 + $0x1120] sm:$0xff]
    %v821 = vld [vmem:[#allocation4 + $0x1128] sm:$0xf]
    %v822 = vld [vmem:[#allocation4 + $0x112c] sm:$0xff]
    %v823 = vld [vmem:[#allocation4 + $0x1134] sm:$0xff]
    %v824 = vld [vmem:[#allocation4 + $0x113c] sm:$0xff]
    %v825 = vld [vmem:[#allocation4 + $0x1144] sm:$0xf]
    %v826 = vld [vmem:[#allocation4 + $0x1148] sm:$0xff]
    %v827 = vld [vmem:[#allocation4 + $0x1150] sm:$0xff]
    %v828 = vld [vmem:[#allocation4 + $0x1158] sm:$0xff]
    %v829 = vld [vmem:[#allocation4 + $0x1160] sm:$0xf]
    %v830 = vld [vmem:[#allocation4 + $0x1164] sm:$0xff]
    %v831 = vld [vmem:[#allocation4 + $0x116c] sm:$0xff]
    %v832 = vld [vmem:[#allocation4 + $0x1174] sm:$0xff]
    %v833 = vld [vmem:[#allocation4 + $0x117c] sm:$0xf]
    %v834 = vld [vmem:[#allocation4 + $0x1180] sm:$0xff]
    %v835 = vld [vmem:[#allocation4 + $0x1188] sm:$0xff]
    %v836 = vld [vmem:[#allocation4 + $0x1190] sm:$0xff]
    %v837 = vld [vmem:[#allocation4 + $0x1198] sm:$0xf]
    %v838 = vld [vmem:[#allocation4 + $0x119c] sm:$0xff]
    %v839 = vld [vmem:[#allocation4 + $0x11a4] sm:$0xff]
    %v840 = vld [vmem:[#allocation4 + $0x11ac] sm:$0xff]
    %v841 = vld [vmem:[#allocation4 + $0x11b4] sm:$0xf]
    %v842 = vld [vmem:[#allocation4 + $0x11b8] sm:$0xff]
    %v843 = vld [vmem:[#allocation4 + $0x11c0] sm:$0xff]
    %v844 = vld [vmem:[#allocation4 + $0x11c8] sm:$0xff]
    %v845 = vld [vmem:[#allocation4 + $0x11d0] sm:$0xf]
    %v846 = vld [vmem:[#allocation4 + $0x11d4] sm:$0xff]
    %v847 = vld [vmem:[#allocation4 + $0x11dc] sm:$0xff]
    %v848 = vld [vmem:[#allocation4 + $0x11e4] sm:$0xff]
    %v849 = vld [vmem:[#allocation4 + $0x11ec] sm:$0xf]
    %v850 = vld [vmem:[#allocation4 + $0x11f0] sm:$0xff]
    %v851 = vld [vmem:[#allocation4 + $0x11f8] sm:$0xff]
    %v852 = vld [vmem:[#allocation4 + $0x1200] sm:$0xff]
    %v853 = vld [vmem:[#allocation4 + $0x1208] sm:$0xf]
    %v854 = vld [vmem:[#allocation4 + $0x120c] sm:$0xff]
    %v855 = vld [vmem:[#allocation4 + $0x1214] sm:$0xff]
    %v856 = vld [vmem:[#allocation4 + $0x121c] sm:$0xff]
    %v857 = vld [vmem:[#allocation4 + $0x1224] sm:$0xf]
    %v858 = vld [vmem:[#allocation4 + $0x1228] sm:$0xff]
    %v859 = vld [vmem:[#allocation4 + $0x1230] sm:$0xff]
    %v860 = vld [vmem:[#allocation4 + $0x1238] sm:$0xff]
    %v861 = vld [vmem:[#allocation4 + $0x1240] sm:$0xf]
    %v862 = vld [vmem:[#allocation4 + $0x1244] sm:$0xff]
    %v863 = vld [vmem:[#allocation4 + $0x124c] sm:$0xff]
    %v864 = vld [vmem:[#allocation4 + $0x1254] sm:$0xff]
    %v865 = vld [vmem:[#allocation4 + $0x125c] sm:$0xf]
    %v866 = vld [vmem:[#allocation4 + $0x1260] sm:$0xff]
    %v867 = vld [vmem:[#allocation4 + $0x1268] sm:$0xff]
    %v868 = vld [vmem:[#allocation4 + $0x1270] sm:$0xff]
    %v869 = vld [vmem:[#allocation4 + $0x1278] sm:$0xf]
    %v870 = vld [vmem:[#allocation4 + $0x127c] sm:$0xff]
    %v871 = vld [vmem:[#allocation4 + $0x1284] sm:$0xff]
    %v872 = vld [vmem:[#allocation4 + $0x128c] sm:$0xff]
    %v873 = vld [vmem:[#allocation4 + $0x1294] sm:$0xf]
    %v874 = vld [vmem:[#allocation4 + $0x1298] sm:$0xff]
    %v875 = vld [vmem:[#allocation4 + $0x12a0] sm:$0xff]
    %v876 = vld [vmem:[#allocation4 + $0x12a8] sm:$0xff]
    %v877 = vld [vmem:[#allocation4 + $0x12b0] sm:$0xf]
    %v878 = vld [vmem:[#allocation4 + $0x12b4] sm:$0xff]
    %v879 = vld [vmem:[#allocation4 + $0x12bc] sm:$0xff]
    %v880 = vld [vmem:[#allocation4 + $0x12c4] sm:$0xff]
    %v881 = vld [vmem:[#allocation4 + $0x12cc] sm:$0xf]
    %v882 = vld [vmem:[#allocation4 + $0x12d0] sm:$0xff]
    %v883 = vld [vmem:[#allocation4 + $0x12d8] sm:$0xff]
    %v884 = vld [vmem:[#allocation4 + $0x12e0] sm:$0xff]
    %v885 = vld [vmem:[#allocation4 + $0x12e8] sm:$0xf]
    %v886 = vld [vmem:[#allocation4 + $0x12ec] sm:$0xff]
    %v887 = vld [vmem:[#allocation4 + $0x12f4] sm:$0xff]
    %v888 = vld [vmem:[#allocation4 + $0x12fc] sm:$0xff]
    %v889 = vld [vmem:[#allocation4 + $0x1304] sm:$0xf]
    %v890 = vld [vmem:[#allocation4 + $0x1308] sm:$0xff]
    %v891 = vld [vmem:[#allocation4 + $0x1310] sm:$0xff]
    %v892 = vld [vmem:[#allocation4 + $0x1318] sm:$0xff]
    %v893 = vld [vmem:[#allocation4 + $0x1320] sm:$0xf]
    %v894 = vld [vmem:[#allocation4 + $0x1324] sm:$0xff]
    %v895 = vld [vmem:[#allocation4 + $0x132c] sm:$0xff]
    %v896 = vld [vmem:[#allocation4 + $0x1334] sm:$0xff]
    %v897 = vld [vmem:[#allocation4 + $0x133c] sm:$0xf]
    %v898 = vld [vmem:[#allocation4 + $0x1340] sm:$0xff]
    %v899 = vld [vmem:[#allocation4 + $0x1348] sm:$0xff]
    %v900 = vld [vmem:[#allocation4 + $0x1350] sm:$0xff]
    %v901 = vld [vmem:[#allocation4 + $0x1358] sm:$0xf]
    %v902 = vld [vmem:[#allocation4 + $0x135c] sm:$0xff]
    %v903 = vld [vmem:[#allocation4 + $0x1364] sm:$0xff]
    %v904 = vld [vmem:[#allocation4 + $0x136c] sm:$0xff]
    %v905 = vld [vmem:[#allocation4 + $0x1374] sm:$0xf]
    %v906 = vld [vmem:[#allocation4 + $0x1378] sm:$0xff]
    %v907 = vld [vmem:[#allocation4 + $0x1380] sm:$0xff]
    %v908 = vld [vmem:[#allocation4 + $0x1388] sm:$0xff]
    %v909 = vld [vmem:[#allocation4 + $0x1390] sm:$0xf]
    %v910 = vld [vmem:[#allocation4 + $0x1394] sm:$0xff]
    %v911 = vld [vmem:[#allocation4 + $0x139c] sm:$0xff]
    %v912 = vld [vmem:[#allocation4 + $0x13a4] sm:$0xff]
    %v913 = vld [vmem:[#allocation4 + $0x13ac] sm:$0xf]
    %v914 = vld [vmem:[#allocation4 + $0x13b0] sm:$0xff]
    %v915 = vld [vmem:[#allocation4 + $0x13b8] sm:$0xff]
    %v916 = vld [vmem:[#allocation4 + $0x13c0] sm:$0xff]
    %v917 = vld [vmem:[#allocation4 + $0x13c8] sm:$0xf]
    %v918 = vld [vmem:[#allocation4 + $0x13cc] sm:$0xff]
    %v919 = vld [vmem:[#allocation4 + $0x13d4] sm:$0xff]
    %v920 = vld [vmem:[#allocation4 + $0x13dc] sm:$0xff]
    %v921 = vld [vmem:[#allocation4 + $0x13e4] sm:$0xf]
    %v922 = vld [vmem:[#allocation4 + $0x13e8] sm:$0xff]
    %v923 = vld [vmem:[#allocation4 + $0x13f0] sm:$0xff]
    %v924 = vld [vmem:[#allocation4 + $0x13f8] sm:$0xff]
    %v925 = vld [vmem:[#allocation4 + $0x1400] sm:$0xf]
    %v926 = vld [vmem:[#allocation4 + $0x1404] sm:$0xff]
    %v927 = vld [vmem:[#allocation4 + $0x140c] sm:$0xff]
    %v928 = vld [vmem:[#allocation4 + $0x1414] sm:$0xff]
    %v929 = vld [vmem:[#allocation4 + $0x141c] sm:$0xf]
    %v930 = vld [vmem:[#allocation4 + $0x1420] sm:$0xff]
    %v931 = vld [vmem:[#allocation4 + $0x1428] sm:$0xff]
    %v932 = vld [vmem:[#allocation4 + $0x1430] sm:$0xff]
    %v933 = vld [vmem:[#allocation4 + $0x1438] sm:$0xf]
    %v934 = vld [vmem:[#allocation4 + $0x143c] sm:$0xff]
    %v935 = vld [vmem:[#allocation4 + $0x1444] sm:$0xff]
    %v936 = vld [vmem:[#allocation4 + $0x144c] sm:$0xff]
    %v937 = vld [vmem:[#allocation4 + $0x1454] sm:$0xf]
    %v938 = vld [vmem:[#allocation4 + $0x1458] sm:$0xff]
    %v939 = vld [vmem:[#allocation4 + $0x1460] sm:$0xff]
    %v940 = vld [vmem:[#allocation4 + $0x1468] sm:$0xff]
    %v941 = vld [vmem:[#allocation4 + $0x1470] sm:$0xf]
    %v942 = vld [vmem:[#allocation4 + $0x1474] sm:$0xff]
    %v943 = vld [vmem:[#allocation4 + $0x147c] sm:$0xff]
    %v944 = vld [vmem:[#allocation4 + $0x1484] sm:$0xff]
    %v945 = vld [vmem:[#allocation4 + $0x148c] sm:$0xf]
    %v946 = vld [vmem:[#allocation4 + $0x1490] sm:$0xff]
    %v947 = vld [vmem:[#allocation4 + $0x1498] sm:$0xff]
    %v948 = vld [vmem:[#allocation4 + $0x14a0] sm:$0xff]
    %v949 = vld [vmem:[#allocation4 + $0x14a8] sm:$0xf]
    %v950 = vld [vmem:[#allocation4 + $0x14ac] sm:$0xff]
    %v951 = vld [vmem:[#allocation4 + $0x14b4] sm:$0xff]
    %v952 = vld [vmem:[#allocation4 + $0x14bc] sm:$0xff]
    %v953 = vld [vmem:[#allocation4 + $0x14c4] sm:$0xf]
    %v954 = vld [vmem:[#allocation4 + $0x14c8] sm:$0xff]
    %v955 = vld [vmem:[#allocation4 + $0x14d0] sm:$0xff]
    %v956 = vld [vmem:[#allocation4 + $0x14d8] sm:$0xff]
    %v957 = vld [vmem:[#allocation4 + $0x14e0] sm:$0xf]
    %v958 = vld [vmem:[#allocation4 + $0x14e4] sm:$0xff]
    %v959 = vld [vmem:[#allocation4 + $0x14ec] sm:$0xff]
    %v960 = vld [vmem:[#allocation4 + $0x14f4] sm:$0xff]
    %v961 = vld [vmem:[#allocation4 + $0x14fc] sm:$0xf]
    %v962 = vld [vmem:[#allocation4 + $0x1500] sm:$0xff]
    %v963 = vld [vmem:[#allocation4 + $0x1508] sm:$0xff]
    %v964 = vld [vmem:[#allocation4 + $0x1510] sm:$0xff]
    %v965 = vld [vmem:[#allocation4 + $0x1518] sm:$0xf]
    %v966 = vld [vmem:[#allocation4 + $0x151c] sm:$0xff]
    %v967 = vld [vmem:[#allocation4 + $0x1524] sm:$0xff]
    %v968 = vld [vmem:[#allocation4 + $0x152c] sm:$0xff]
    %v969 = vld [vmem:[#allocation4 + $0x1534] sm:$0xf]
    %v970 = vld [vmem:[#allocation4 + $0x1538] sm:$0xff]
    %v971 = vld [vmem:[#allocation4 + $0x1540] sm:$0xff]
    %v972 = vld [vmem:[#allocation4 + $0x1548] sm:$0xff]
    %v973 = vld [vmem:[#allocation4 + $0x1550] sm:$0xf]
    %v974 = vld [vmem:[#allocation4 + $0x1554] sm:$0xff]
    %v975 = vld [vmem:[#allocation4 + $0x155c] sm:$0xff]
    %v976 = vld [vmem:[#allocation4 + $0x1564] sm:$0xff]
    %v977 = vld [vmem:[#allocation4 + $0x156c] sm:$0xf]
    %v978 = vld [vmem:[#allocation4 + $0x1570] sm:$0xff]
    %v979 = vld [vmem:[#allocation4 + $0x1578] sm:$0xff]
    %v980 = vld [vmem:[#allocation4 + $0x1580] sm:$0xff]
    %v981 = vld [vmem:[#allocation4 + $0x1588] sm:$0xf]
    %v982 = vld [vmem:[#allocation4 + $0x158c] sm:$0xff]
    %v983 = vld [vmem:[#allocation4 + $0x1594] sm:$0xff]
    %v984 = vld [vmem:[#allocation4 + $0x159c] sm:$0xff]
    %v985 = vld [vmem:[#allocation4 + $0x15a4] sm:$0xf]
    %v986 = vld [vmem:[#allocation4 + $0x15a8] sm:$0xff]
    %v987 = vld [vmem:[#allocation4 + $0x15b0] sm:$0xff]
    %v988 = vld [vmem:[#allocation4 + $0x15b8] sm:$0xff]
    %v989 = vld [vmem:[#allocation4 + $0x15c0] sm:$0xf]
    %v990 = vld [vmem:[#allocation4 + $0x15c4] sm:$0xff]
    %v991 = vld [vmem:[#allocation4 + $0x15cc] sm:$0xff]
    %v992 = vld [vmem:[#allocation4 + $0x15d4] sm:$0xff]
    %v993 = vld [vmem:[#allocation4 + $0x15dc] sm:$0xf]
    %v994 = vld [vmem:[#allocation4 + $0x15e0] sm:$0xff]
    %v995 = vld [vmem:[#allocation4 + $0x15e8] sm:$0xff]
    %v996 = vld [vmem:[#allocation4 + $0x15f0] sm:$0xff]
    %v997 = vld [vmem:[#allocation4 + $0x15f8] sm:$0xf]
    %v998 = vld [vmem:[#allocation4 + $0x15fc] sm:$0xff]
    %v999 = vld [vmem:[#allocation4 + $0x1604] sm:$0xff]
    %v1000 = vld [vmem:[#allocation4 + $0x160c] sm:$0xff]
    %v1001 = vld [vmem:[#allocation4 + $0x1614] sm:$0xf]
    %v1002 = vld [vmem:[#allocation4 + $0x1618] sm:$0xff]
    %v1003 = vld [vmem:[#allocation4 + $0x1620] sm:$0xff]
    %v1004 = vld [vmem:[#allocation4 + $0x1628] sm:$0xff]
    %v1005 = vld [vmem:[#allocation4 + $0x1630] sm:$0xf]
    %v1006 = vld [vmem:[#allocation4 + $0x1634] sm:$0xff]
    %v1007 = vld [vmem:[#allocation4 + $0x163c] sm:$0xff]
    %v1008 = vld [vmem:[#allocation4 + $0x1644] sm:$0xff]
    %v1009 = vld [vmem:[#allocation4 + $0x164c] sm:$0xf]
    %v1010 = vld [vmem:[#allocation4 + $0x1650] sm:$0xff]
    %v1011 = vld [vmem:[#allocation4 + $0x1658] sm:$0xff]
    %v1012 = vld [vmem:[#allocation4 + $0x1660] sm:$0xff]
    %v1013 = vld [vmem:[#allocation4 + $0x1668] sm:$0xf]
    %v1014 = vld [vmem:[#allocation4 + $0x166c] sm:$0xff]
    %v1015 = vld [vmem:[#allocation4 + $0x1674] sm:$0xff]
    %v1016 = vld [vmem:[#allocation4 + $0x167c] sm:$0xff]
    %v1017 = vld [vmem:[#allocation4 + $0x1684] sm:$0xf]
    %v1018 = vld [vmem:[#allocation4 + $0x1688] sm:$0xff]
    %v1019 = vld [vmem:[#allocation4 + $0x1690] sm:$0xff]
    %v1020 = vld [vmem:[#allocation4 + $0x1698] sm:$0xff]
    %v1021 = vld [vmem:[#allocation4 + $0x16a0] sm:$0xf]
    %v1022 = vld [vmem:[#allocation4 + $0x16a4] sm:$0xff]
    %v1023 = vld [vmem:[#allocation4 + $0x16ac] sm:$0xff]
    %v1024 = vld [vmem:[#allocation4 + $0x16b4] sm:$0xff]
    %v1025 = vld [vmem:[#allocation4 + $0x16bc] sm:$0xf]
    %v1026 = vld [vmem:[#allocation4 + $0x16c0] sm:$0xff]
    %v1027 = vld [vmem:[#allocation4 + $0x16c8] sm:$0xff]
    %v1028 = vld [vmem:[#allocation4 + $0x16d0] sm:$0xff]
    %v1029 = vld [vmem:[#allocation4 + $0x16d8] sm:$0xf]
    %v1030 = vld [vmem:[#allocation4 + $0x16dc] sm:$0xff]
    %v1031 = vld [vmem:[#allocation4 + $0x16e4] sm:$0xff]
    %v1032 = vld [vmem:[#allocation4 + $0x16ec] sm:$0xff]
    %v1033 = vld [vmem:[#allocation4 + $0x16f4] sm:$0xf]
    %v1034 = vld [vmem:[#allocation4 + $0x16f8] sm:$0xff]
    %v1035 = vld [vmem:[#allocation4 + $0x1700] sm:$0xff]
    %v1036 = vld [vmem:[#allocation4 + $0x1708] sm:$0xff]
    %v1037 = vld [vmem:[#allocation4 + $0x1710] sm:$0xf]
    %v1038 = vld [vmem:[#allocation4 + $0x1714] sm:$0xff]
    %v1039 = vld [vmem:[#allocation4 + $0x171c] sm:$0xff]
    %v1040 = vld [vmem:[#allocation4 + $0x1724] sm:$0xff]
    %v1041 = vld [vmem:[#allocation4 + $0x172c] sm:$0xf]
    %v1042 = vld [vmem:[#allocation4 + $0x1730] sm:$0xff]
    %v1043 = vld [vmem:[#allocation4 + $0x1738] sm:$0xff]
    %v1044 = vld [vmem:[#allocation4 + $0x1740] sm:$0xff]
    %v1045 = vld [vmem:[#allocation4 + $0x1748] sm:$0xf]
    %v1046 = vld [vmem:[#allocation4 + $0x174c] sm:$0xff]
    %v1047 = vld [vmem:[#allocation4 + $0x1754] sm:$0xff]
    %v1048 = vld [vmem:[#allocation4 + $0x175c] sm:$0xff]
    %v1049 = vld [vmem:[#allocation4 + $0x1764] sm:$0xf]
    %v1050 = vld [vmem:[#allocation4 + $0x1768] sm:$0xff]
    %v1051 = vld [vmem:[#allocation4 + $0x1770] sm:$0xff]
    %v1052 = vld [vmem:[#allocation4 + $0x1778] sm:$0xff]
    %v1053 = vld [vmem:[#allocation4 + $0x1780] sm:$0xf]
    %v1054 = vld [vmem:[#allocation4 + $0x1784] sm:$0xff]
    %v1055 = vld [vmem:[#allocation4 + $0x178c] sm:$0xff]
    %v1056 = vld [vmem:[#allocation4 + $0x1794] sm:$0xff]
    %v1057 = vld [vmem:[#allocation4 + $0x179c] sm:$0xf]
    %v1058 = vld [vmem:[#allocation4 + $0x17a0] sm:$0xff]
    %v1059 = vld [vmem:[#allocation4 + $0x17a8] sm:$0xff]
    %v1060 = vld [vmem:[#allocation4 + $0x17b0] sm:$0xff]
    %v1061 = vld [vmem:[#allocation4 + $0x17b8] sm:$0xf]
    %v1062 = vld [vmem:[#allocation4 + $0x17bc] sm:$0xff]
    %v1063 = vld [vmem:[#allocation4 + $0x17c4] sm:$0xff]
    %v1064 = vld [vmem:[#allocation4 + $0x17cc] sm:$0xff]
    %v1065 = vld [vmem:[#allocation4 + $0x17d4] sm:$0xf]
    %v1066 = vld [vmem:[#allocation4 + $0x17d8] sm:$0xff]
    %v1067 = vld [vmem:[#allocation4 + $0x17e0] sm:$0xff]
    %v1068 = vld [vmem:[#allocation4 + $0x17e8] sm:$0xff]
    %v1069 = vld [vmem:[#allocation4 + $0x17f0] sm:$0xf]
    %v1070 = vld [vmem:[#allocation4 + $0x17f4] sm:$0xff]
    %v1071 = vld [vmem:[#allocation4 + $0x17fc] sm:$0xff]
    %v1072 = vld [vmem:[#allocation4 + $0x1804] sm:$0xff]
    %v1073 = vld [vmem:[#allocation4 + $0x180c] sm:$0xf]
    %v1074 = vld [vmem:[#allocation4 + $0x1810] sm:$0xff]
    %v1075 = vld [vmem:[#allocation4 + $0x1818] sm:$0xff]
    %v1076 = vld [vmem:[#allocation4 + $0x1820] sm:$0xff]
    %v1077 = vld [vmem:[#allocation4 + $0x1828] sm:$0xf]
    %v1078 = vld [vmem:[#allocation4 + $0x182c] sm:$0xff]
    %v1079 = vld [vmem:[#allocation4 + $0x1834] sm:$0xff]
    %v1080 = vld [vmem:[#allocation4 + $0x183c] sm:$0xff]
    %v1081 = vld [vmem:[#allocation4 + $0x1844] sm:$0xf]
    %v1082 = vld [vmem:[#allocation4 + $0x1848] sm:$0xff]
    %v1083 = vld [vmem:[#allocation4 + $0x1850] sm:$0xff]
    %v1084 = vld [vmem:[#allocation4 + $0x1858] sm:$0xff]
    %v1085 = vld [vmem:[#allocation4 + $0x1860] sm:$0xf]
    %v1086 = vld [vmem:[#allocation4 + $0x1864] sm:$0xff]
    %v1087 = vld [vmem:[#allocation4 + $0x186c] sm:$0xff]
    %v1088 = vld [vmem:[#allocation4 + $0x1874] sm:$0xff]
    %v1089 = vld [vmem:[#allocation4 + $0x187c] sm:$0xf]
    %v1090 = vld [vmem:[#allocation4 + $0x1880] sm:$0xff]
    %v1091 = vld [vmem:[#allocation4 + $0x1888] sm:$0xff]
    %v1092 = vld [vmem:[#allocation4 + $0x1890] sm:$0xff]
    %v1093 = vld [vmem:[#allocation4 + $0x1898] sm:$0xf]
    %v1094 = vld [vmem:[#allocation4 + $0x189c] sm:$0xff]
    %v1095 = vld [vmem:[#allocation4 + $0x18a4] sm:$0xff]
    %v1096 = vld [vmem:[#allocation4 + $0x18ac] sm:$0xff]
    %v1097 = vld [vmem:[#allocation4 + $0x18b4] sm:$0xf]
    %v1098 = vld [vmem:[#allocation4 + $0x18b8] sm:$0xff]
    %v1099 = vld [vmem:[#allocation4 + $0x18c0] sm:$0xff]
    %v1100 = vld [vmem:[#allocation4 + $0x18c8] sm:$0xff]
    %v1101 = vld [vmem:[#allocation4 + $0x18d0] sm:$0xf]
    %v1102 = vld [vmem:[#allocation4 + $0x18d4] sm:$0xff]
    %v1103 = vld [vmem:[#allocation4 + $0x18dc] sm:$0xff]
    %v1104 = vld [vmem:[#allocation4 + $0x18e4] sm:$0xff]
    %v1105 = vld [vmem:[#allocation4 + $0x18ec] sm:$0xf]
    %v1106 = vld [vmem:[#allocation4 + $0x18f0] sm:$0xff]
    %v1107 = vld [vmem:[#allocation4 + $0x18f8] sm:$0xff]
    %v1108 = vld [vmem:[#allocation4 + $0x1900] sm:$0xff]
    %v1109 = vld [vmem:[#allocation4 + $0x1908] sm:$0xf]
    %v1110 = vld [vmem:[#allocation4 + $0x190c] sm:$0xff]
    %v1111 = vld [vmem:[#allocation4 + $0x1914] sm:$0xff]
    %v1112 = vld [vmem:[#allocation4 + $0x191c] sm:$0xff]
    %v1113 = vld [vmem:[#allocation4 + $0x1924] sm:$0xf]
    %v1114 = vld [vmem:[#allocation4 + $0x1928] sm:$0xff]
    %v1115 = vld [vmem:[#allocation4 + $0x1930] sm:$0xff]
    %v1116 = vld [vmem:[#allocation4 + $0x1938] sm:$0xff]
    %v1117 = vld [vmem:[#allocation4 + $0x1940] sm:$0xf]
    %v1118 = vld [vmem:[#allocation4 + $0x1944] sm:$0xff]
    %v1119 = vld [vmem:[#allocation4 + $0x194c] sm:$0xff]
    %v1120 = vld [vmem:[#allocation4 + $0x1954] sm:$0xff]
    %v1121 = vld [vmem:[#allocation4 + $0x195c] sm:$0xf]
    %v1122 = vld [vmem:[#allocation4 + $0x1960] sm:$0xff]
    %v1123 = vld [vmem:[#allocation4 + $0x1968] sm:$0xff]
    %v1124 = vld [vmem:[#allocation4 + $0x1970] sm:$0xff]
    %v1125 = vld [vmem:[#allocation4 + $0x1978] sm:$0xf]
    %v1126 = vld [vmem:[#allocation4 + $0x197c] sm:$0xff]
    %v1127 = vld [vmem:[#allocation4 + $0x1984] sm:$0xff]
    %v1128 = vld [vmem:[#allocation4 + $0x198c] sm:$0xff]
    %v1129 = vld [vmem:[#allocation4 + $0x1994] sm:$0xf]
    %v1130 = vld [vmem:[#allocation4 + $0x1998] sm:$0xff]
    %v1131 = vld [vmem:[#allocation4 + $0x19a0] sm:$0xff]
    %v1132 = vld [vmem:[#allocation4 + $0x19a8] sm:$0xff]
    %v1133 = vld [vmem:[#allocation4 + $0x19b0] sm:$0xf]
    %v1134 = vld [vmem:[#allocation4 + $0x19b4] sm:$0xff]
    %v1135 = vld [vmem:[#allocation4 + $0x19bc] sm:$0xff]
    %v1136 = vld [vmem:[#allocation4 + $0x19c4] sm:$0xff]
    %v1137 = vld [vmem:[#allocation4 + $0x19cc] sm:$0xf]
    %v1138 = vld [vmem:[#allocation4 + $0x19d0] sm:$0xff]
    %v1139 = vld [vmem:[#allocation4 + $0x19d8] sm:$0xff]
    %v1140 = vld [vmem:[#allocation4 + $0x19e0] sm:$0xff]
    %v1141 = vld [vmem:[#allocation4 + $0x19e8] sm:$0xf]
    %v1142 = vld [vmem:[#allocation4 + $0x19ec] sm:$0xff]
    %v1143 = vld [vmem:[#allocation4 + $0x19f4] sm:$0xff]
    %v1144 = vld [vmem:[#allocation4 + $0x19fc] sm:$0xff]
    %v1145 = vld [vmem:[#allocation4 + $0x1a04] sm:$0xf]
    %v1146 = vld [vmem:[#allocation4 + $0x1a08] sm:$0xff]
    %v1147 = vld [vmem:[#allocation4 + $0x1a10] sm:$0xff]
    %v1148 = vld [vmem:[#allocation4 + $0x1a18] sm:$0xff]
    %v1149 = vld [vmem:[#allocation4 + $0x1a20] sm:$0xf]
    %v1150 = vld [vmem:[#allocation4 + $0x1a24] sm:$0xff]
    %v1151 = vld [vmem:[#allocation4 + $0x1a2c] sm:$0xff]
    %v1152 = vld [vmem:[#allocation4 + $0x1a34] sm:$0xff]
    %v1153 = vld [vmem:[#allocation4 + $0x1a3c] sm:$0xf]
    %v1154 = vld [vmem:[#allocation4 + $0x1a40] sm:$0xff]
    %v1155 = vld [vmem:[#allocation4 + $0x1a48] sm:$0xff]
    %v1156 = vld [vmem:[#allocation4 + $0x1a50] sm:$0xff]
    %v1157 = vld [vmem:[#allocation4 + $0x1a58] sm:$0xf]
    %v1158 = vld [vmem:[#allocation4 + $0x1a5c] sm:$0xff]
    %v1159 = vld [vmem:[#allocation4 + $0x1a64] sm:$0xff]
    %v1160 = vld [vmem:[#allocation4 + $0x1a6c] sm:$0xff]
    %v1161 = vld [vmem:[#allocation4 + $0x1a74] sm:$0xf]
    %v1162 = vld [vmem:[#allocation4 + $0x1a78] sm:$0xff]
    %v1163 = vld [vmem:[#allocation4 + $0x1a80] sm:$0xff]
    %v1164 = vld [vmem:[#allocation4 + $0x1a88] sm:$0xff]
    %v1165 = vld [vmem:[#allocation4 + $0x1a90] sm:$0xf]
    %v1166 = vld [vmem:[#allocation4 + $0x1a94] sm:$0xff]
    %v1167 = vld [vmem:[#allocation4 + $0x1a9c] sm:$0xff]
    %v1168 = vld [vmem:[#allocation4 + $0x1aa4] sm:$0xff]
    %v1169 = vld [vmem:[#allocation4 + $0x1aac] sm:$0xf]
    %v1170 = vld [vmem:[#allocation4 + $0x1ab0] sm:$0xff]
    %v1171 = vld [vmem:[#allocation4 + $0x1ab8] sm:$0xff]
    %v1172 = vld [vmem:[#allocation4 + $0x1ac0] sm:$0xff]
    %v1173 = vld [vmem:[#allocation4 + $0x1ac8] sm:$0xf]
    %v1174 = vld [vmem:[#allocation4 + $0x1acc] sm:$0xff]
    %v1175 = vld [vmem:[#allocation4 + $0x1ad4] sm:$0xff]
    %v1176 = vld [vmem:[#allocation4 + $0x1adc] sm:$0xff]
    %v1177 = vld [vmem:[#allocation4 + $0x1ae4] sm:$0xf]
    %v1178 = vld [vmem:[#allocation4 + $0x1ae8] sm:$0xff]
    %v1179 = vld [vmem:[#allocation4 + $0x1af0] sm:$0xff]
    %v1180 = vld [vmem:[#allocation4 + $0x1af8] sm:$0xff]
    %v1181 = vld [vmem:[#allocation4 + $0x1b00] sm:$0xf]
    %v1182 = vld [vmem:[#allocation4 + $0x1b04] sm:$0xff]
    %v1183 = vld [vmem:[#allocation4 + $0x1b0c] sm:$0xff]
    %v1184 = vld [vmem:[#allocation4 + $0x1b14] sm:$0xff]
    %v1185 = vld [vmem:[#allocation4 + $0x1b1c] sm:$0xf]
    %v1186 = vld [vmem:[#allocation4 + $0x1b20] sm:$0xff]
    %v1187 = vld [vmem:[#allocation4 + $0x1b28] sm:$0xff]
    %v1188 = vld [vmem:[#allocation4 + $0x1b30] sm:$0xff]
    %v1189 = vld [vmem:[#allocation4 + $0x1b38] sm:$0xf]
    %v1190 = vld [vmem:[#allocation4 + $0x1b3c] sm:$0xff]
    %v1191 = vld [vmem:[#allocation4 + $0x1b44] sm:$0xff]
    %v1192 = vld [vmem:[#allocation4 + $0x1b4c] sm:$0xff]
    %v1193 = vld [vmem:[#allocation4 + $0x1b54] sm:$0xf]
    %v1194 = vld [vmem:[#allocation4 + $0x1b58] sm:$0xff]
    %v1195 = vld [vmem:[#allocation4 + $0x1b60] sm:$0xff]
    %v1196 = vld [vmem:[#allocation4 + $0x1b68] sm:$0xff]
    %v1197 = vld [vmem:[#allocation4 + $0x1b70] sm:$0xf]
    %v1198 = vld [vmem:[#allocation4 + $0x1b74] sm:$0xff]
    %v1199 = vld [vmem:[#allocation4 + $0x1b7c] sm:$0xff]
    %v1200 = vld [vmem:[#allocation4 + $0x1b84] sm:$0xff]
    %v1201 = vld [vmem:[#allocation4 + $0x1b8c] sm:$0xf]
    %v1202 = vld [vmem:[#allocation4 + $0x1b90] sm:$0xff]
    %v1203 = vld [vmem:[#allocation4 + $0x1b98] sm:$0xff]
    %v1204 = vld [vmem:[#allocation4 + $0x1ba0] sm:$0xff]
    %v1205 = vld [vmem:[#allocation4 + $0x1ba8] sm:$0xf]
    %v1206 = vld [vmem:[#allocation4 + $0x1bac] sm:$0xff]
    %v1207 = vld [vmem:[#allocation4 + $0x1bb4] sm:$0xff]
    %v1208 = vld [vmem:[#allocation4 + $0x1bbc] sm:$0xff]
    %v1209 = vld [vmem:[#allocation4 + $0x1bc4] sm:$0xf]
    %v1210 = vld [vmem:[#allocation4 + $0x1bc8] sm:$0xff]
    %v1211 = vld [vmem:[#allocation4 + $0x1bd0] sm:$0xff]
    %v1212 = vld [vmem:[#allocation4 + $0x1bd8] sm:$0xff]
    %v1213 = vld [vmem:[#allocation4 + $0x1be0] sm:$0xf]
    %v1214 = vld [vmem:[#allocation4 + $0x1be4] sm:$0xff]
    %v1215 = vld [vmem:[#allocation4 + $0x1bec] sm:$0xff]
    %v1216 = vld [vmem:[#allocation4 + $0x1bf4] sm:$0xff]
    %v1217 = vld [vmem:[#allocation4 + $0x1bfc] sm:$0xf]
    %v1218 = vld [vmem:[#allocation4 + $0x1c00] sm:$0xff]
    %v1219 = vld [vmem:[#allocation4 + $0x1c08] sm:$0xff]
    %v1220 = vld [vmem:[#allocation4 + $0x1c10] sm:$0xff]
    %v1221 = vld [vmem:[#allocation4 + $0x1c18] sm:$0xf]
    %v1222 = vld [vmem:[#allocation4 + $0x1c1c] sm:$0xff]
    %v1223 = vld [vmem:[#allocation4 + $0x1c24] sm:$0xff]
    %v1224 = vld [vmem:[#allocation4 + $0x1c2c] sm:$0xff]
    %v1225 = vld [vmem:[#allocation4 + $0x1c34] sm:$0xf]
    %v1226 = vld [vmem:[#allocation4 + $0x1c38] sm:$0xff]
    %v1227 = vld [vmem:[#allocation4 + $0x1c40] sm:$0xff]
    %v1228 = vld [vmem:[#allocation4 + $0x1c48] sm:$0xff]
    %v1229 = vld [vmem:[#allocation4 + $0x1c50] sm:$0xf]
    %v1230 = vld [vmem:[#allocation4 + $0x1c54] sm:$0xff]
    %v1231 = vld [vmem:[#allocation4 + $0x1c5c] sm:$0xff]
    %v1232 = vld [vmem:[#allocation4 + $0x1c64] sm:$0xff]
    %v1233 = vld [vmem:[#allocation4 + $0x1c6c] sm:$0xf]
    %v1234 = vld [vmem:[#allocation4 + $0x1c70] sm:$0xff]
    %v1235 = vld [vmem:[#allocation4 + $0x1c78] sm:$0xff]
    %v1236 = vld [vmem:[#allocation4 + $0x1c80] sm:$0xff]
    %v1237 = vld [vmem:[#allocation4 + $0x1c88] sm:$0xf]
    %v1238 = vld [vmem:[#allocation4 + $0x1c8c] sm:$0xff]
    %v1239 = vld [vmem:[#allocation4 + $0x1c94] sm:$0xff]
    %v1240 = vld [vmem:[#allocation4 + $0x1c9c] sm:$0xff]
    %v1241 = vld [vmem:[#allocation4 + $0x1ca4] sm:$0xf]
    %v1242 = vld [vmem:[#allocation4 + $0x1ca8] sm:$0xff]
    %v1243 = vld [vmem:[#allocation4 + $0x1cb0] sm:$0xff]
    %v1244 = vld [vmem:[#allocation4 + $0x1cb8] sm:$0xff]
    %v1245 = vld [vmem:[#allocation4 + $0x1cc0] sm:$0xf]
    %v1246 = vld [vmem:[#allocation4 + $0x1cc4] sm:$0xff]
    %v1247 = vld [vmem:[#allocation4 + $0x1ccc] sm:$0xff]
    %v1248 = vld [vmem:[#allocation4 + $0x1cd4] sm:$0xff]
    %v1249 = vld [vmem:[#allocation4 + $0x1cdc] sm:$0xf]
    %v1250 = vld [vmem:[#allocation4 + $0x1ce0] sm:$0xff]
    %v1251 = vld [vmem:[#allocation4 + $0x1ce8] sm:$0xff]
    %v1252 = vld [vmem:[#allocation4 + $0x1cf0] sm:$0xff]
    %v1253 = vld [vmem:[#allocation4 + $0x1cf8] sm:$0xf]
    %v1254 = vld [vmem:[#allocation4 + $0x1cfc] sm:$0xff]
    %v1255 = vld [vmem:[#allocation4 + $0x1d04] sm:$0xff]
    %v1256 = vld [vmem:[#allocation4 + $0x1d0c] sm:$0xff]
    %v1257 = vld [vmem:[#allocation4 + $0x1d14] sm:$0xf]
    %v1258 = vld [vmem:[#allocation4 + $0x1d18] sm:$0xff]
    %v1259 = vld [vmem:[#allocation4 + $0x1d20] sm:$0xff]
    %v1260 = vld [vmem:[#allocation4 + $0x1d28] sm:$0xff]
    %v1261 = vld [vmem:[#allocation4 + $0x1d30] sm:$0xf]
    %v1262 = vld [vmem:[#allocation4 + $0x1d34] sm:$0xff]
    %v1263 = vld [vmem:[#allocation4 + $0x1d3c] sm:$0xff]
    %v1264 = vld [vmem:[#allocation4 + $0x1d44] sm:$0xff]
    %v1265 = vld [vmem:[#allocation4 + $0x1d4c] sm:$0xf]
    %v1266 = vld [vmem:[#allocation4 + $0x1d50] sm:$0xff]
    %v1267 = vld [vmem:[#allocation4 + $0x1d58] sm:$0xff]
    %v1268 = vld [vmem:[#allocation4 + $0x1d60] sm:$0xff]
    %v1269 = vld [vmem:[#allocation4 + $0x1d68] sm:$0xf]
    %v1270 = vld [vmem:[#allocation4 + $0x1d6c] sm:$0xff]
    %v1271 = vld [vmem:[#allocation4 + $0x1d74] sm:$0xff]
    %v1272 = vld [vmem:[#allocation4 + $0x1d7c] sm:$0xff]
    %v1273 = vld [vmem:[#allocation4 + $0x1d84] sm:$0xf]
    %v1274 = vld [vmem:[#allocation4 + $0x1d88] sm:$0xff]
    %v1275 = vld [vmem:[#allocation4 + $0x1d90] sm:$0xff]
    %v1276 = vld [vmem:[#allocation4 + $0x1d98] sm:$0xff]
    %v1277 = vld [vmem:[#allocation4 + $0x1da0] sm:$0xf]
    %v1278 = vld [vmem:[#allocation4 + $0x1da4] sm:$0xff]
    %v1279 = vld [vmem:[#allocation4 + $0x1dac] sm:$0xff]
    %v1280 = vld [vmem:[#allocation4 + $0x1db4] sm:$0xff]
    %v1281 = vld [vmem:[#allocation4 + $0x1dbc] sm:$0xf]
    %v1282 = vld [vmem:[#allocation4 + $0x1dc0] sm:$0xff]
    %v1283 = vld [vmem:[#allocation4 + $0x1dc8] sm:$0xff]
    %v1284 = vld [vmem:[#allocation4 + $0x1dd0] sm:$0xff]
    %v1285 = vld [vmem:[#allocation4 + $0x1dd8] sm:$0xf]
    %v1286 = vld [vmem:[#allocation4 + $0x1ddc] sm:$0xff]
    %v1287 = vld [vmem:[#allocation4 + $0x1de4] sm:$0xff]
    %v1288 = vld [vmem:[#allocation4 + $0x1dec] sm:$0xff]
    %v1289 = vld [vmem:[#allocation4 + $0x1df4] sm:$0xf]
    %v1290 = vld [vmem:[#allocation4 + $0x1df8] sm:$0xff]
    %v1291 = vld [vmem:[#allocation4 + $0x1e00] sm:$0xff]
    %v1292 = vld [vmem:[#allocation4 + $0x1e08] sm:$0xff]
    %v1293 = vld [vmem:[#allocation4 + $0x1e10] sm:$0xf]
    %v1294 = vld [vmem:[#allocation4 + $0x1e14] sm:$0xff]
    %v1295 = vld [vmem:[#allocation4 + $0x1e1c] sm:$0xff]
    %v1296 = vld [vmem:[#allocation4 + $0x1e24] sm:$0xff]
    %v1297 = vld [vmem:[#allocation4 + $0x1e2c] sm:$0xf]
    %v1298 = vld [vmem:[#allocation4 + $0x1e30] sm:$0xff]
    %v1299 = vld [vmem:[#allocation4 + $0x1e38] sm:$0xff]
    %v1300 = vld [vmem:[#allocation4 + $0x1e40] sm:$0xff]
    %v1301 = vld [vmem:[#allocation4 + $0x1e48] sm:$0xf]
    %v1302 = vld [vmem:[#allocation4 + $0x1e4c] sm:$0xff]
    %v1303 = vld [vmem:[#allocation4 + $0x1e54] sm:$0xff]
    %v1304 = vld [vmem:[#allocation4 + $0x1e5c] sm:$0xff]
    %v1305 = vld [vmem:[#allocation4 + $0x1e64] sm:$0xf]
    %v1306 = vld [vmem:[#allocation4 + $0x1e68] sm:$0xff]
    %v1307 = vld [vmem:[#allocation4 + $0x1e70] sm:$0xff]
    %v1308 = vld [vmem:[#allocation4 + $0x1e78] sm:$0xff]
    %v1309 = vld [vmem:[#allocation4 + $0x1e80] sm:$0xf]
    %v1310 = vld [vmem:[#allocation4 + $0x1e84] sm:$0xff]
    %v1311 = vld [vmem:[#allocation4 + $0x1e8c] sm:$0xff]
    %v1312 = vld [vmem:[#allocation4 + $0x1e94] sm:$0xff]
    %v1313 = vld [vmem:[#allocation4 + $0x1e9c] sm:$0xf]
    %v1314 = vld [vmem:[#allocation4 + $0x1ea0] sm:$0xff]
    %v1315 = vld [vmem:[#allocation4 + $0x1ea8] sm:$0xff]
    %v1316 = vld [vmem:[#allocation4 + $0x1eb0] sm:$0xff]
    %v1317 = vld [vmem:[#allocation4 + $0x1eb8] sm:$0xf]
    %v1318 = vld [vmem:[#allocation4 + $0x1ebc] sm:$0xff]
    %v1319 = vld [vmem:[#allocation4 + $0x1ec4] sm:$0xff]
    %v1320 = vld [vmem:[#allocation4 + $0x1ecc] sm:$0xff]
    %v1321 = vld [vmem:[#allocation4 + $0x1ed4] sm:$0xf]
    %v1322 = vld [vmem:[#allocation4 + $0x1ed8] sm:$0xff]
    %v1323 = vld [vmem:[#allocation4 + $0x1ee0] sm:$0xff]
    %v1324 = vld [vmem:[#allocation4 + $0x1ee8] sm:$0xff]
    %v1325 = vld [vmem:[#allocation4 + $0x1ef0] sm:$0xf]
    %v1326 = vld [vmem:[#allocation4 + $0x1ef4] sm:$0xff]
    %v1327 = vld [vmem:[#allocation4 + $0x1efc] sm:$0xff]
    %v1328 = vld [vmem:[#allocation4 + $0x1f04] sm:$0xff]
    %v1329 = vld [vmem:[#allocation4 + $0x1f0c] sm:$0xf]
    %v1330 = vld [vmem:[#allocation4 + $0x1f10] sm:$0xff]
    %v1331 = vld [vmem:[#allocation4 + $0x1f18] sm:$0xff]
    %v1332 = vld [vmem:[#allocation4 + $0x1f20] sm:$0xff]
    %v1333 = vld [vmem:[#allocation4 + $0x1f28] sm:$0xf]
    %v1334 = vld [vmem:[#allocation4 + $0x1f2c] sm:$0xff]
    %v1335 = vld [vmem:[#allocation4 + $0x1f34] sm:$0xff]
    %v1336 = vld [vmem:[#allocation4 + $0x1f3c] sm:$0xff]
    %v1337 = vld [vmem:[#allocation4 + $0x1f44] sm:$0xf]
    %v1338 = vld [vmem:[#allocation4 + $0x1f48] sm:$0xff]
    %v1339 = vld [vmem:[#allocation4 + $0x1f50] sm:$0xff]
    %v1340 = vld [vmem:[#allocation4 + $0x1f58] sm:$0xff]
    %v1341 = vld [vmem:[#allocation4 + $0x1f60] sm:$0xf]
    %v1342 = vld [vmem:[#allocation4 + $0x1f64] sm:$0xff]
    %v1343 = vld [vmem:[#allocation4 + $0x1f6c] sm:$0xff]
    %v1344 = vld [vmem:[#allocation4 + $0x1f74] sm:$0xff]
    %v1345 = vld [vmem:[#allocation4 + $0x1f7c] sm:$0xf]
    %v1346 = vld [vmem:[#allocation4 + $0x1f80] sm:$0xff]
    %v1347 = vld [vmem:[#allocation4 + $0x1f88] sm:$0xff]
    %v1348 = vld [vmem:[#allocation4 + $0x1f90] sm:$0xff]
    %v1349 = vld [vmem:[#allocation4 + $0x1f98] sm:$0xf]
    %v1350 = vld [vmem:[#allocation4 + $0x1f9c] sm:$0xff]
    %v1351 = vld [vmem:[#allocation4 + $0x1fa4] sm:$0xff]
    %v1352 = vld [vmem:[#allocation4 + $0x1fac] sm:$0xff]
    %v1353 = vld [vmem:[#allocation4 + $0x1fb4] sm:$0xf]
    %v1354 = vld [vmem:[#allocation4 + $0x1fb8] sm:$0xff]
    %v1355 = vld [vmem:[#allocation4 + $0x1fc0] sm:$0xff]
    %v1356 = vld [vmem:[#allocation4 + $0x1fc8] sm:$0xff]
    %v1357 = vld [vmem:[#allocation4 + $0x1fd0] sm:$0xf]
    %v1358 = vld [vmem:[#allocation4 + $0x1fd4] sm:$0xff]
    %v1359 = vld [vmem:[#allocation4 + $0x1fdc] sm:$0xff]
    %v1360 = vld [vmem:[#allocation4 + $0x1fe4] sm:$0xff]
    %v1361 = vld [vmem:[#allocation4 + $0x1fec] sm:$0xf]
    %v1362 = vld [vmem:[#allocation4 + $0x1ff0] sm:$0xff]
    %v1363 = vld [vmem:[#allocation4 + $0x1ff8] sm:$0xff]
    %v1364 = vld [vmem:[#allocation4 + $0x2000] sm:$0xff]
    %v1365 = vld [vmem:[#allocation4 + $0x2008] sm:$0xf]
    %v1366 = vld [vmem:[#allocation4 + $0x200c] sm:$0xff]
    %v1367 = vld [vmem:[#allocation4 + $0x2014] sm:$0xff]
    %v1368 = vld [vmem:[#allocation4 + $0x201c] sm:$0xff]
    %v1369 = vld [vmem:[#allocation4 + $0x2024] sm:$0xf]
    %v1370 = vld [vmem:[#allocation4 + $0x2028] sm:$0xff]
    %v1371 = vld [vmem:[#allocation4 + $0x2030] sm:$0xff]
    %v1372 = vld [vmem:[#allocation4 + $0x2038] sm:$0xff]
    %v1373 = vld [vmem:[#allocation4 + $0x2040] sm:$0xf]
    %v1374 = vld [vmem:[#allocation4 + $0x2044] sm:$0xff]
    %v1375 = vld [vmem:[#allocation4 + $0x204c] sm:$0xff]
    %v1376 = vld [vmem:[#allocation4 + $0x2054] sm:$0xff]
    %v1377 = vld [vmem:[#allocation4 + $0x205c] sm:$0xf]
    %v1378 = vld [vmem:[#allocation4 + $0x2060] sm:$0xff]
    %v1379 = vld [vmem:[#allocation4 + $0x2068] sm:$0xff]
    %v1380 = vld [vmem:[#allocation4 + $0x2070] sm:$0xff]
    %v1381 = vld [vmem:[#allocation4 + $0x2078] sm:$0xf]
    %v1382 = vld [vmem:[#allocation4 + $0x207c] sm:$0xff]
    %v1383 = vld [vmem:[#allocation4 + $0x2084] sm:$0xff]
    %v1384 = vld [vmem:[#allocation4 + $0x208c] sm:$0xff]
    %v1385 = vld [vmem:[#allocation4 + $0x2094] sm:$0xf]
    %v1386 = vld [vmem:[#allocation4 + $0x2098] sm:$0xff]
    %v1387 = vld [vmem:[#allocation4 + $0x20a0] sm:$0xff]
    %v1388 = vld [vmem:[#allocation4 + $0x20a8] sm:$0xff]
    %v1389 = vld [vmem:[#allocation4 + $0x20b0] sm:$0xf]
    %v1390 = vld [vmem:[#allocation4 + $0x20b4] sm:$0xff]
    %v1391 = vld [vmem:[#allocation4 + $0x20bc] sm:$0xff]
    %v1392 = vld [vmem:[#allocation4 + $0x20c4] sm:$0xff]
    %v1393 = vld [vmem:[#allocation4 + $0x20cc] sm:$0xf]
    %v1394 = vld [vmem:[#allocation4 + $0x20d0] sm:$0xff]
    %v1395 = vld [vmem:[#allocation4 + $0x20d8] sm:$0xff]
    %v1396 = vld [vmem:[#allocation4 + $0x20e0] sm:$0xff]
    %v1397 = vld [vmem:[#allocation4 + $0x20e8] sm:$0xf]
    %v1398 = vld [vmem:[#allocation4 + $0x20ec] sm:$0xff]
    %v1399 = vld [vmem:[#allocation4 + $0x20f4] sm:$0xff]
    %v1400 = vld [vmem:[#allocation4 + $0x20fc] sm:$0xff]
    %v1401 = vld [vmem:[#allocation4 + $0x2104] sm:$0xf]
    %v1402 = vld [vmem:[#allocation4 + $0x2108] sm:$0xff]
    %v1403 = vld [vmem:[#allocation4 + $0x2110] sm:$0xff]
    %v1404 = vld [vmem:[#allocation4 + $0x2118] sm:$0xff]
    %v1405 = vld [vmem:[#allocation4 + $0x2120] sm:$0xf]
    %v1406 = vld [vmem:[#allocation4 + $0x2124] sm:$0xff]
    %v1407 = vld [vmem:[#allocation4 + $0x212c] sm:$0xff]
    %v1408 = vld [vmem:[#allocation4 + $0x2134] sm:$0xff]
    %v1409 = vld [vmem:[#allocation4 + $0x213c] sm:$0xf]
    %v1410 = vld [vmem:[#allocation4 + $0x2140] sm:$0xff]
    %v1411 = vld [vmem:[#allocation4 + $0x2148] sm:$0xff]
    %v1412 = vld [vmem:[#allocation4 + $0x2150] sm:$0xff]
    %v1413 = vld [vmem:[#allocation4 + $0x2158] sm:$0xf]
    %v1414 = vld [vmem:[#allocation4 + $0x215c] sm:$0xff]
    %v1415 = vld [vmem:[#allocation4 + $0x2164] sm:$0xff]
    %v1416 = vld [vmem:[#allocation4 + $0x216c] sm:$0xff]
    %v1417 = vld [vmem:[#allocation4 + $0x2174] sm:$0xf]
    %v1418 = vld [vmem:[#allocation4 + $0x2178] sm:$0xff]
    %v1419 = vld [vmem:[#allocation4 + $0x2180] sm:$0xff]
    %v1420 = vld [vmem:[#allocation4 + $0x2188] sm:$0xff]
    %v1421 = vld [vmem:[#allocation4 + $0x2190] sm:$0xf]
    %v1422 = vld [vmem:[#allocation4 + $0x2194] sm:$0xff]
    %v1423 = vld [vmem:[#allocation4 + $0x219c] sm:$0xff]
    %v1424 = vld [vmem:[#allocation4 + $0x21a4] sm:$0xff]
    %v1425 = vld [vmem:[#allocation4 + $0x21ac] sm:$0xf]
    %v1426 = vld [vmem:[#allocation4 + $0x21b0] sm:$0xff]
    %v1427 = vld [vmem:[#allocation4 + $0x21b8] sm:$0xff]
    %v1428 = vld [vmem:[#allocation4 + $0x21c0] sm:$0xff]
    %v1429 = vld [vmem:[#allocation4 + $0x21c8] sm:$0xf]
    %v1430 = vld [vmem:[#allocation4 + $0x21cc] sm:$0xff]
    %v1431 = vld [vmem:[#allocation4 + $0x21d4] sm:$0xff]
    %v1432 = vld [vmem:[#allocation4 + $0x21dc] sm:$0xff]
    %v1433 = vld [vmem:[#allocation4 + $0x21e4] sm:$0xf]
    %v1434 = vld [vmem:[#allocation4 + $0x21e8] sm:$0xff]
    %v1435 = vld [vmem:[#allocation4 + $0x21f0] sm:$0xff]
    %v1436 = vld [vmem:[#allocation4 + $0x21f8] sm:$0xff]
    %v1437 = vld [vmem:[#allocation4 + $0x2200] sm:$0xf]
    %v1438 = vld [vmem:[#allocation4 + $0x2204] sm:$0xff]
    %v1439 = vld [vmem:[#allocation4 + $0x220c] sm:$0xff]
    %v1440 = vld [vmem:[#allocation4 + $0x2214] sm:$0xff]
    %v1441 = vld [vmem:[#allocation4 + $0x221c] sm:$0xf]
    %v1442 = vld [vmem:[#allocation4 + $0x2220] sm:$0x33]
    %v1443 = vld [vmem:[#allocation4 + $0x2228] sm:$0x33]
    %v1444 = vld [vmem:[#allocation4 + $0x2230] sm:$0x33]
    %v1445 = vld [vmem:[#allocation4 + $0x2238] sm:$0x3]
    %v1446 = vunpack.c.l.bf16 %v194
    %v1447 = vunpack.c.h.bf16 %v194
    %v1448 = vunpack.c.l.bf16 %v195
    %v1449 = vunpack.c.h.bf16 %v195
    %v1450 = vunpack.c.l.bf16 %v196
    %v1451 = vunpack.c.h.bf16 %v196
    %v1452 = vunpack.c.l.bf16 %v197
    %v1453 = vunpack.c.l.bf16 %v198
    %v1454 = vunpack.c.h.bf16 %v198
    %v1455 = vunpack.c.l.bf16 %v199
    %v1456 = vunpack.c.h.bf16 %v199
    %v1457 = vunpack.c.l.bf16 %v200
    %v1458 = vunpack.c.h.bf16 %v200
    %v1459 = vunpack.c.l.bf16 %v201
    %v1460 = vunpack.c.l.bf16 %v202
    %v1461 = vunpack.c.h.bf16 %v202
    %v1462 = vunpack.c.l.bf16 %v203
    %v1463 = vunpack.c.h.bf16 %v203
    %v1464 = vunpack.c.l.bf16 %v204
    %v1465 = vunpack.c.h.bf16 %v204
    %v1466 = vunpack.c.l.bf16 %v205
    %v1467 = vunpack.c.l.bf16 %v206
    %v1468 = vunpack.c.h.bf16 %v206
    %v1469 = vunpack.c.l.bf16 %v207
    %v1470 = vunpack.c.h.bf16 %v207
    %v1471 = vunpack.c.l.bf16 %v208
    %v1472 = vunpack.c.h.bf16 %v208
    %v1473 = vunpack.c.l.bf16 %v209
    %v1474 = vunpack.c.l.bf16 %v210
    %v1475 = vunpack.c.h.bf16 %v210
    %v1476 = vunpack.c.l.bf16 %v211
    %v1477 = vunpack.c.h.bf16 %v211
    %v1478 = vunpack.c.l.bf16 %v212
    %v1479 = vunpack.c.h.bf16 %v212
    %v1480 = vunpack.c.l.bf16 %v213
    %v1481 = vunpack.c.l.bf16 %v214
    %v1482 = vunpack.c.h.bf16 %v214
    %v1483 = vunpack.c.l.bf16 %v215
    %v1484 = vunpack.c.h.bf16 %v215
    %v1485 = vunpack.c.l.bf16 %v216
    %v1486 = vunpack.c.h.bf16 %v216
    %v1487 = vunpack.c.l.bf16 %v217
    %v1488 = vunpack.c.l.bf16 %v218
    %v1489 = vunpack.c.h.bf16 %v218
    %v1490 = vunpack.c.l.bf16 %v219
    %v1491 = vunpack.c.h.bf16 %v219
    %v1492 = vunpack.c.l.bf16 %v220
    %v1493 = vunpack.c.h.bf16 %v220
    %v1494 = vunpack.c.l.bf16 %v221
    %v1495 = vunpack.c.l.bf16 %v222
    %v1496 = vunpack.c.h.bf16 %v222
    %v1497 = vunpack.c.l.bf16 %v223
    %v1498 = vunpack.c.h.bf16 %v223
    %v1499 = vunpack.c.l.bf16 %v224
    %v1500 = vunpack.c.h.bf16 %v224
    %v1501 = vunpack.c.l.bf16 %v225
    %v1502 = vunpack.c.l.bf16 %v226
    %v1503 = vunpack.c.h.bf16 %v226
    %v1504 = vunpack.c.l.bf16 %v227
    %v1505 = vunpack.c.h.bf16 %v227
    %v1506 = vunpack.c.l.bf16 %v228
    %v1507 = vunpack.c.h.bf16 %v228
    %v1508 = vunpack.c.l.bf16 %v229
    %v1509 = vunpack.c.l.bf16 %v230
    %v1510 = vunpack.c.h.bf16 %v230
    %v1511 = vunpack.c.l.bf16 %v231
    %v1512 = vunpack.c.h.bf16 %v231
    %v1513 = vunpack.c.l.bf16 %v232
    %v1514 = vunpack.c.h.bf16 %v232
    %v1515 = vunpack.c.l.bf16 %v233
    %v1516 = vunpack.c.l.bf16 %v234
    %v1517 = vunpack.c.h.bf16 %v234
    %v1518 = vunpack.c.l.bf16 %v235
    %v1519 = vunpack.c.h.bf16 %v235
    %v1520 = vunpack.c.l.bf16 %v236
    %v1521 = vunpack.c.h.bf16 %v236
    %v1522 = vunpack.c.l.bf16 %v237
    %v1523 = vunpack.c.l.bf16 %v238
    %v1524 = vunpack.c.h.bf16 %v238
    %v1525 = vunpack.c.l.bf16 %v239
    %v1526 = vunpack.c.h.bf16 %v239
    %v1527 = vunpack.c.l.bf16 %v240
    %v1528 = vunpack.c.h.bf16 %v240
    %v1529 = vunpack.c.l.bf16 %v241
    %v1530 = vunpack.c.l.bf16 %v242
    %v1531 = vunpack.c.h.bf16 %v242
    %v1532 = vunpack.c.l.bf16 %v243
    %v1533 = vunpack.c.h.bf16 %v243
    %v1534 = vunpack.c.l.bf16 %v244
    %v1535 = vunpack.c.h.bf16 %v244
    %v1536 = vunpack.c.l.bf16 %v245
    %v1537 = vunpack.c.l.bf16 %v246
    %v1538 = vunpack.c.h.bf16 %v246
    %v1539 = vunpack.c.l.bf16 %v247
    %v1540 = vunpack.c.h.bf16 %v247
    %v1541 = vunpack.c.l.bf16 %v248
    %v1542 = vunpack.c.h.bf16 %v248
    %v1543 = vunpack.c.l.bf16 %v249
    %v1544 = vunpack.c.l.bf16 %v250
    %v1545 = vunpack.c.h.bf16 %v250
    %v1546 = vunpack.c.l.bf16 %v251
    %v1547 = vunpack.c.h.bf16 %v251
    %v1548 = vunpack.c.l.bf16 %v252
    %v1549 = vunpack.c.h.bf16 %v252
    %v1550 = vunpack.c.l.bf16 %v253
    %v1551 = vunpack.c.l.bf16 %v254
    %v1552 = vunpack.c.h.bf16 %v254
    %v1553 = vunpack.c.l.bf16 %v255
    %v1554 = vunpack.c.h.bf16 %v255
    %v1555 = vunpack.c.l.bf16 %v256
    %v1556 = vunpack.c.h.bf16 %v256
    %v1557 = vunpack.c.l.bf16 %v257
    %v1558 = vunpack.c.l.bf16 %v258
    %v1559 = vunpack.c.h.bf16 %v258
    %v1560 = vunpack.c.l.bf16 %v259
    %v1561 = vunpack.c.h.bf16 %v259
    %v1562 = vunpack.c.l.bf16 %v260
    %v1563 = vunpack.c.h.bf16 %v260
    %v1564 = vunpack.c.l.bf16 %v261
    %v1565 = vunpack.c.l.bf16 %v262
    %v1566 = vunpack.c.h.bf16 %v262
    %v1567 = vunpack.c.l.bf16 %v263
    %v1568 = vunpack.c.h.bf16 %v263
    %v1569 = vunpack.c.l.bf16 %v264
    %v1570 = vunpack.c.h.bf16 %v264
    %v1571 = vunpack.c.l.bf16 %v265
    %v1572 = vunpack.c.l.bf16 %v266
    %v1573 = vunpack.c.h.bf16 %v266
    %v1574 = vunpack.c.l.bf16 %v267
    %v1575 = vunpack.c.h.bf16 %v267
    %v1576 = vunpack.c.l.bf16 %v268
    %v1577 = vunpack.c.h.bf16 %v268
    %v1578 = vunpack.c.l.bf16 %v269
    %v1579 = vunpack.c.l.bf16 %v270
    %v1580 = vunpack.c.h.bf16 %v270
    %v1581 = vunpack.c.l.bf16 %v271
    %v1582 = vunpack.c.h.bf16 %v271
    %v1583 = vunpack.c.l.bf16 %v272
    %v1584 = vunpack.c.h.bf16 %v272
    %v1585 = vunpack.c.l.bf16 %v273
    %v1586 = vunpack.c.l.bf16 %v274
    %v1587 = vunpack.c.h.bf16 %v274
    %v1588 = vunpack.c.l.bf16 %v275
    %v1589 = vunpack.c.h.bf16 %v275
    %v1590 = vunpack.c.l.bf16 %v276
    %v1591 = vunpack.c.h.bf16 %v276
    %v1592 = vunpack.c.l.bf16 %v277
    %v1593 = vunpack.c.l.bf16 %v278
    %v1594 = vunpack.c.h.bf16 %v278
    %v1595 = vunpack.c.l.bf16 %v279
    %v1596 = vunpack.c.h.bf16 %v279
    %v1597 = vunpack.c.l.bf16 %v280
    %v1598 = vunpack.c.h.bf16 %v280
    %v1599 = vunpack.c.l.bf16 %v281
    %v1600 = vunpack.c.l.bf16 %v282
    %v1601 = vunpack.c.h.bf16 %v282
    %v1602 = vunpack.c.l.bf16 %v283
    %v1603 = vunpack.c.h.bf16 %v283
    %v1604 = vunpack.c.l.bf16 %v284
    %v1605 = vunpack.c.h.bf16 %v284
    %v1606 = vunpack.c.l.bf16 %v285
    %v1607 = vunpack.c.l.bf16 %v286
    %v1608 = vunpack.c.h.bf16 %v286
    %v1609 = vunpack.c.l.bf16 %v287
    %v1610 = vunpack.c.h.bf16 %v287
    %v1611 = vunpack.c.l.bf16 %v288
    %v1612 = vunpack.c.h.bf16 %v288
    %v1613 = vunpack.c.l.bf16 %v289
    %v1614 = vunpack.c.l.bf16 %v290
    %v1615 = vunpack.c.h.bf16 %v290
    %v1616 = vunpack.c.l.bf16 %v291
    %v1617 = vunpack.c.h.bf16 %v291
    %v1618 = vunpack.c.l.bf16 %v292
    %v1619 = vunpack.c.h.bf16 %v292
    %v1620 = vunpack.c.l.bf16 %v293
    %v1621 = vunpack.c.l.bf16 %v294
    %v1622 = vunpack.c.h.bf16 %v294
    %v1623 = vunpack.c.l.bf16 %v295
    %v1624 = vunpack.c.h.bf16 %v295
    %v1625 = vunpack.c.l.bf16 %v296
    %v1626 = vunpack.c.h.bf16 %v296
    %v1627 = vunpack.c.l.bf16 %v297
    %v1628 = vunpack.c.l.bf16 %v298
    %v1629 = vunpack.c.h.bf16 %v298
    %v1630 = vunpack.c.l.bf16 %v299
    %v1631 = vunpack.c.h.bf16 %v299
    %v1632 = vunpack.c.l.bf16 %v300
    %v1633 = vunpack.c.h.bf16 %v300
    %v1634 = vunpack.c.l.bf16 %v301
    %v1635 = vunpack.c.l.bf16 %v302
    %v1636 = vunpack.c.h.bf16 %v302
    %v1637 = vunpack.c.l.bf16 %v303
    %v1638 = vunpack.c.h.bf16 %v303
    %v1639 = vunpack.c.l.bf16 %v304
    %v1640 = vunpack.c.h.bf16 %v304
    %v1641 = vunpack.c.l.bf16 %v305
    %v1642 = vunpack.c.l.bf16 %v306
    %v1643 = vunpack.c.h.bf16 %v306
    %v1644 = vunpack.c.l.bf16 %v307
    %v1645 = vunpack.c.h.bf16 %v307
    %v1646 = vunpack.c.l.bf16 %v308
    %v1647 = vunpack.c.h.bf16 %v308
    %v1648 = vunpack.c.l.bf16 %v309
    %v1649 = vunpack.c.l.bf16 %v310
    %v1650 = vunpack.c.h.bf16 %v310
    %v1651 = vunpack.c.l.bf16 %v311
    %v1652 = vunpack.c.h.bf16 %v311
    %v1653 = vunpack.c.l.bf16 %v312
    %v1654 = vunpack.c.h.bf16 %v312
    %v1655 = vunpack.c.l.bf16 %v313
    %v1656 = vunpack.c.l.bf16 %v314
    %v1657 = vunpack.c.h.bf16 %v314
    %v1658 = vunpack.c.l.bf16 %v315
    %v1659 = vunpack.c.h.bf16 %v315
    %v1660 = vunpack.c.l.bf16 %v316
    %v1661 = vunpack.c.h.bf16 %v316
    %v1662 = vunpack.c.l.bf16 %v317
    %v1663 = vunpack.c.l.bf16 %v318
    %v1664 = vunpack.c.h.bf16 %v318
    %v1665 = vunpack.c.l.bf16 %v319
    %v1666 = vunpack.c.h.bf16 %v319
    %v1667 = vunpack.c.l.bf16 %v320
    %v1668 = vunpack.c.h.bf16 %v320
    %v1669 = vunpack.c.l.bf16 %v321
    %v1670 = vunpack.c.l.bf16 %v322
    %v1671 = vunpack.c.h.bf16 %v322
    %v1672 = vunpack.c.l.bf16 %v323
    %v1673 = vunpack.c.h.bf16 %v323
    %v1674 = vunpack.c.l.bf16 %v324
    %v1675 = vunpack.c.h.bf16 %v324
    %v1676 = vunpack.c.l.bf16 %v325
    %v1677 = vunpack.c.l.bf16 %v326
    %v1678 = vunpack.c.h.bf16 %v326
    %v1679 = vunpack.c.l.bf16 %v327
    %v1680 = vunpack.c.h.bf16 %v327
    %v1681 = vunpack.c.l.bf16 %v328
    %v1682 = vunpack.c.h.bf16 %v328
    %v1683 = vunpack.c.l.bf16 %v329
    %v1684 = vunpack.c.l.bf16 %v330
    %v1685 = vunpack.c.h.bf16 %v330
    %v1686 = vunpack.c.l.bf16 %v331
    %v1687 = vunpack.c.h.bf16 %v331
    %v1688 = vunpack.c.l.bf16 %v332
    %v1689 = vunpack.c.h.bf16 %v332
    %v1690 = vunpack.c.l.bf16 %v333
    %v1691 = vunpack.c.l.bf16 %v334
    %v1692 = vunpack.c.h.bf16 %v334
    %v1693 = vunpack.c.l.bf16 %v335
    %v1694 = vunpack.c.h.bf16 %v335
    %v1695 = vunpack.c.l.bf16 %v336
    %v1696 = vunpack.c.h.bf16 %v336
    %v1697 = vunpack.c.l.bf16 %v337
    %v1698 = vunpack.c.l.bf16 %v338
    %v1699 = vunpack.c.h.bf16 %v338
    %v1700 = vunpack.c.l.bf16 %v339
    %v1701 = vunpack.c.h.bf16 %v339
    %v1702 = vunpack.c.l.bf16 %v340
    %v1703 = vunpack.c.h.bf16 %v340
    %v1704 = vunpack.c.l.bf16 %v341
    %v1705 = vunpack.c.l.bf16 %v342
    %v1706 = vunpack.c.h.bf16 %v342
    %v1707 = vunpack.c.l.bf16 %v343
    %v1708 = vunpack.c.h.bf16 %v343
    %v1709 = vunpack.c.l.bf16 %v344
    %v1710 = vunpack.c.h.bf16 %v344
    %v1711 = vunpack.c.l.bf16 %v345
    %v1712 = vunpack.c.l.bf16 %v346
    %v1713 = vunpack.c.h.bf16 %v346
    %v1714 = vunpack.c.l.bf16 %v347
    %v1715 = vunpack.c.h.bf16 %v347
    %v1716 = vunpack.c.l.bf16 %v348
    %v1717 = vunpack.c.h.bf16 %v348
    %v1718 = vunpack.c.l.bf16 %v349
    %v1719 = vunpack.c.l.bf16 %v350
    %v1720 = vunpack.c.h.bf16 %v350
    %v1721 = vunpack.c.l.bf16 %v351
    %v1722 = vunpack.c.h.bf16 %v351
    %v1723 = vunpack.c.l.bf16 %v352
    %v1724 = vunpack.c.h.bf16 %v352
    %v1725 = vunpack.c.l.bf16 %v353
    %v1726 = vunpack.c.l.bf16 %v354
    %v1727 = vunpack.c.h.bf16 %v354
    %v1728 = vunpack.c.l.bf16 %v355
    %v1729 = vunpack.c.h.bf16 %v355
    %v1730 = vunpack.c.l.bf16 %v356
    %v1731 = vunpack.c.h.bf16 %v356
    %v1732 = vunpack.c.l.bf16 %v357
    %v1733 = vunpack.c.l.bf16 %v358
    %v1734 = vunpack.c.h.bf16 %v358
    %v1735 = vunpack.c.l.bf16 %v359
    %v1736 = vunpack.c.h.bf16 %v359
    %v1737 = vunpack.c.l.bf16 %v360
    %v1738 = vunpack.c.h.bf16 %v360
    %v1739 = vunpack.c.l.bf16 %v361
    %v1740 = vunpack.c.l.bf16 %v362
    %v1741 = vunpack.c.h.bf16 %v362
    %v1742 = vunpack.c.l.bf16 %v363
    %v1743 = vunpack.c.h.bf16 %v363
    %v1744 = vunpack.c.l.bf16 %v364
    %v1745 = vunpack.c.h.bf16 %v364
    %v1746 = vunpack.c.l.bf16 %v365
    %v1747 = vunpack.c.l.bf16 %v366
    %v1748 = vunpack.c.h.bf16 %v366
    %v1749 = vunpack.c.l.bf16 %v367
    %v1750 = vunpack.c.h.bf16 %v367
    %v1751 = vunpack.c.l.bf16 %v368
    %v1752 = vunpack.c.h.bf16 %v368
    %v1753 = vunpack.c.l.bf16 %v369
    %v1754 = vunpack.c.l.bf16 %v370
    %v1755 = vunpack.c.h.bf16 %v370
    %v1756 = vunpack.c.l.bf16 %v371
    %v1757 = vunpack.c.h.bf16 %v371
    %v1758 = vunpack.c.l.bf16 %v372
    %v1759 = vunpack.c.h.bf16 %v372
    %v1760 = vunpack.c.l.bf16 %v373
    %v1761 = vunpack.c.l.bf16 %v374
    %v1762 = vunpack.c.h.bf16 %v374
    %v1763 = vunpack.c.l.bf16 %v375
    %v1764 = vunpack.c.h.bf16 %v375
    %v1765 = vunpack.c.l.bf16 %v376
    %v1766 = vunpack.c.h.bf16 %v376
    %v1767 = vunpack.c.l.bf16 %v377
    %v1768 = vunpack.c.l.bf16 %v378
    %v1769 = vunpack.c.h.bf16 %v378
    %v1770 = vunpack.c.l.bf16 %v379
    %v1771 = vunpack.c.h.bf16 %v379
    %v1772 = vunpack.c.l.bf16 %v380
    %v1773 = vunpack.c.h.bf16 %v380
    %v1774 = vunpack.c.l.bf16 %v381
    %v1775 = vunpack.c.l.bf16 %v382
    %v1776 = vunpack.c.h.bf16 %v382
    %v1777 = vunpack.c.l.bf16 %v383
    %v1778 = vunpack.c.h.bf16 %v383
    %v1779 = vunpack.c.l.bf16 %v384
    %v1780 = vunpack.c.h.bf16 %v384
    %v1781 = vunpack.c.l.bf16 %v385
    %v1782 = vunpack.c.l.bf16 %v386
    %v1783 = vunpack.c.h.bf16 %v386
    %v1784 = vunpack.c.l.bf16 %v387
    %v1785 = vunpack.c.h.bf16 %v387
    %v1786 = vunpack.c.l.bf16 %v388
    %v1787 = vunpack.c.h.bf16 %v388
    %v1788 = vunpack.c.l.bf16 %v389
    %v1789 = vunpack.c.l.bf16 %v390
    %v1790 = vunpack.c.h.bf16 %v390
    %v1791 = vunpack.c.l.bf16 %v391
    %v1792 = vunpack.c.h.bf16 %v391
    %v1793 = vunpack.c.l.bf16 %v392
    %v1794 = vunpack.c.h.bf16 %v392
    %v1795 = vunpack.c.l.bf16 %v393
    %v1796 = vunpack.c.l.bf16 %v394
    %v1797 = vunpack.c.h.bf16 %v394
    %v1798 = vunpack.c.l.bf16 %v395
    %v1799 = vunpack.c.h.bf16 %v395
    %v1800 = vunpack.c.l.bf16 %v396
    %v1801 = vunpack.c.h.bf16 %v396
    %v1802 = vunpack.c.l.bf16 %v397
    %v1803 = vunpack.c.l.bf16 %v398
    %v1804 = vunpack.c.h.bf16 %v398
    %v1805 = vunpack.c.l.bf16 %v399
    %v1806 = vunpack.c.h.bf16 %v399
    %v1807 = vunpack.c.l.bf16 %v400
    %v1808 = vunpack.c.h.bf16 %v400
    %v1809 = vunpack.c.l.bf16 %v401
    %v1810 = vunpack.c.l.bf16 %v402
    %v1811 = vunpack.c.h.bf16 %v402
    %v1812 = vunpack.c.l.bf16 %v403
    %v1813 = vunpack.c.h.bf16 %v403
    %v1814 = vunpack.c.l.bf16 %v404
    %v1815 = vunpack.c.h.bf16 %v404
    %v1816 = vunpack.c.l.bf16 %v405
    %v1817 = vunpack.c.l.bf16 %v406
    %v1818 = vunpack.c.h.bf16 %v406
    %v1819 = vunpack.c.l.bf16 %v407
    %v1820 = vunpack.c.h.bf16 %v407
    %v1821 = vunpack.c.l.bf16 %v408
    %v1822 = vunpack.c.h.bf16 %v408
    %v1823 = vunpack.c.l.bf16 %v409
    %v1824 = vunpack.c.l.bf16 %v410
    %v1825 = vunpack.c.h.bf16 %v410
    %v1826 = vunpack.c.l.bf16 %v411
    %v1827 = vunpack.c.h.bf16 %v411
    %v1828 = vunpack.c.l.bf16 %v412
    %v1829 = vunpack.c.h.bf16 %v412
    %v1830 = vunpack.c.l.bf16 %v413
    %v1831 = vunpack.c.l.bf16 %v414
    %v1832 = vunpack.c.h.bf16 %v414
    %v1833 = vunpack.c.l.bf16 %v415
    %v1834 = vunpack.c.h.bf16 %v415
    %v1835 = vunpack.c.l.bf16 %v416
    %v1836 = vunpack.c.h.bf16 %v416
    %v1837 = vunpack.c.l.bf16 %v417
    %v1838 = vunpack.c.l.bf16 %v418
    %v1839 = vunpack.c.h.bf16 %v418
    %v1840 = vunpack.c.l.bf16 %v419
    %v1841 = vunpack.c.h.bf16 %v419
    %v1842 = vunpack.c.l.bf16 %v420
    %v1843 = vunpack.c.h.bf16 %v420
    %v1844 = vunpack.c.l.bf16 %v421
    %v1845 = vunpack.c.l.bf16 %v422
    %v1846 = vunpack.c.h.bf16 %v422
    %v1847 = vunpack.c.l.bf16 %v423
    %v1848 = vunpack.c.h.bf16 %v423
    %v1849 = vunpack.c.l.bf16 %v424
    %v1850 = vunpack.c.h.bf16 %v424
    %v1851 = vunpack.c.l.bf16 %v425
    %v1852 = vunpack.c.l.bf16 %v426
    %v1853 = vunpack.c.h.bf16 %v426
    %v1854 = vunpack.c.l.bf16 %v427
    %v1855 = vunpack.c.h.bf16 %v427
    %v1856 = vunpack.c.l.bf16 %v428
    %v1857 = vunpack.c.h.bf16 %v428
    %v1858 = vunpack.c.l.bf16 %v429
    %v1859 = vunpack.c.l.bf16 %v430
    %v1860 = vunpack.c.h.bf16 %v430
    %v1861 = vunpack.c.l.bf16 %v431
    %v1862 = vunpack.c.h.bf16 %v431
    %v1863 = vunpack.c.l.bf16 %v432
    %v1864 = vunpack.c.h.bf16 %v432
    %v1865 = vunpack.c.l.bf16 %v433
    %v1866 = vunpack.c.l.bf16 %v434
    %v1867 = vunpack.c.h.bf16 %v434
    %v1868 = vunpack.c.l.bf16 %v435
    %v1869 = vunpack.c.h.bf16 %v435
    %v1870 = vunpack.c.l.bf16 %v436
    %v1871 = vunpack.c.h.bf16 %v436
    %v1872 = vunpack.c.l.bf16 %v437
    %v1873 = vunpack.c.l.bf16 %v438
    %v1874 = vunpack.c.h.bf16 %v438
    %v1875 = vunpack.c.l.bf16 %v439
    %v1876 = vunpack.c.h.bf16 %v439
    %v1877 = vunpack.c.l.bf16 %v440
    %v1878 = vunpack.c.h.bf16 %v440
    %v1879 = vunpack.c.l.bf16 %v441
    %v1880 = vunpack.c.l.bf16 %v442
    %v1881 = vunpack.c.h.bf16 %v442
    %v1882 = vunpack.c.l.bf16 %v443
    %v1883 = vunpack.c.h.bf16 %v443
    %v1884 = vunpack.c.l.bf16 %v444
    %v1885 = vunpack.c.h.bf16 %v444
    %v1886 = vunpack.c.l.bf16 %v445
    %v1887 = vunpack.c.l.bf16 %v446
    %v1888 = vunpack.c.h.bf16 %v446
    %v1889 = vunpack.c.l.bf16 %v447
    %v1890 = vunpack.c.h.bf16 %v447
    %v1891 = vunpack.c.l.bf16 %v448
    %v1892 = vunpack.c.h.bf16 %v448
    %v1893 = vunpack.c.l.bf16 %v449
    %v1894 = vunpack.c.l.bf16 %v450
    %v1895 = vunpack.c.h.bf16 %v450
    %v1896 = vunpack.c.l.bf16 %v451
    %v1897 = vunpack.c.h.bf16 %v451
    %v1898 = vunpack.c.l.bf16 %v452
    %v1899 = vunpack.c.h.bf16 %v452
    %v1900 = vunpack.c.l.bf16 %v453
    %v1901 = vunpack.c.l.bf16 %v454
    %v1902 = vunpack.c.h.bf16 %v454
    %v1903 = vunpack.c.l.bf16 %v455
    %v1904 = vunpack.c.h.bf16 %v455
    %v1905 = vunpack.c.l.bf16 %v456
    %v1906 = vunpack.c.h.bf16 %v456
    %v1907 = vunpack.c.l.bf16 %v457
    %v1908 = vunpack.c.l.bf16 %v458
    %v1909 = vunpack.c.h.bf16 %v458
    %v1910 = vunpack.c.l.bf16 %v459
    %v1911 = vunpack.c.h.bf16 %v459
    %v1912 = vunpack.c.l.bf16 %v460
    %v1913 = vunpack.c.h.bf16 %v460
    %v1914 = vunpack.c.l.bf16 %v461
    %v1915 = vunpack.c.l.bf16 %v462
    %v1916 = vunpack.c.h.bf16 %v462
    %v1917 = vunpack.c.l.bf16 %v463
    %v1918 = vunpack.c.h.bf16 %v463
    %v1919 = vunpack.c.l.bf16 %v464
    %v1920 = vunpack.c.h.bf16 %v464
    %v1921 = vunpack.c.l.bf16 %v465
    %v1922 = vunpack.c.l.bf16 %v466
    %v1923 = vunpack.c.h.bf16 %v466
    %v1924 = vunpack.c.l.bf16 %v467
    %v1925 = vunpack.c.h.bf16 %v467
    %v1926 = vunpack.c.l.bf16 %v468
    %v1927 = vunpack.c.h.bf16 %v468
    %v1928 = vunpack.c.l.bf16 %v469
    %v1929 = vunpack.c.l.bf16 %v470
    %v1930 = vunpack.c.h.bf16 %v470
    %v1931 = vunpack.c.l.bf16 %v471
    %v1932 = vunpack.c.h.bf16 %v471
    %v1933 = vunpack.c.l.bf16 %v472
    %v1934 = vunpack.c.h.bf16 %v472
    %v1935 = vunpack.c.l.bf16 %v473
    %v1936 = vunpack.c.l.bf16 %v474
    %v1937 = vunpack.c.h.bf16 %v474
    %v1938 = vunpack.c.l.bf16 %v475
    %v1939 = vunpack.c.h.bf16 %v475
    %v1940 = vunpack.c.l.bf16 %v476
    %v1941 = vunpack.c.h.bf16 %v476
    %v1942 = vunpack.c.l.bf16 %v477
    %v1943 = vunpack.c.l.bf16 %v478
    %v1944 = vunpack.c.h.bf16 %v478
    %v1945 = vunpack.c.l.bf16 %v479
    %v1946 = vunpack.c.h.bf16 %v479
    %v1947 = vunpack.c.l.bf16 %v480
    %v1948 = vunpack.c.h.bf16 %v480
    %v1949 = vunpack.c.l.bf16 %v481
    %v1950 = vunpack.c.l.bf16 %v482
    %v1951 = vunpack.c.h.bf16 %v482
    %v1952 = vunpack.c.l.bf16 %v483
    %v1953 = vunpack.c.h.bf16 %v483
    %v1954 = vunpack.c.l.bf16 %v484
    %v1955 = vunpack.c.h.bf16 %v484
    %v1956 = vunpack.c.l.bf16 %v485
    %v1957 = vunpack.c.l.bf16 %v486
    %v1958 = vunpack.c.h.bf16 %v486
    %v1959 = vunpack.c.l.bf16 %v487
    %v1960 = vunpack.c.h.bf16 %v487
    %v1961 = vunpack.c.l.bf16 %v488
    %v1962 = vunpack.c.h.bf16 %v488
    %v1963 = vunpack.c.l.bf16 %v489
    %v1964 = vunpack.c.l.bf16 %v490
    %v1965 = vunpack.c.h.bf16 %v490
    %v1966 = vunpack.c.l.bf16 %v491
    %v1967 = vunpack.c.h.bf16 %v491
    %v1968 = vunpack.c.l.bf16 %v492
    %v1969 = vunpack.c.h.bf16 %v492
    %v1970 = vunpack.c.l.bf16 %v493
    %v1971 = vunpack.c.l.bf16 %v494
    %v1972 = vunpack.c.h.bf16 %v494
    %v1973 = vunpack.c.l.bf16 %v495
    %v1974 = vunpack.c.h.bf16 %v495
    %v1975 = vunpack.c.l.bf16 %v496
    %v1976 = vunpack.c.h.bf16 %v496
    %v1977 = vunpack.c.l.bf16 %v497
    %v1978 = vunpack.c.l.bf16 %v498
    %v1979 = vunpack.c.h.bf16 %v498
    %v1980 = vunpack.c.l.bf16 %v499
    %v1981 = vunpack.c.h.bf16 %v499
    %v1982 = vunpack.c.l.bf16 %v500
    %v1983 = vunpack.c.h.bf16 %v500
    %v1984 = vunpack.c.l.bf16 %v501
    %v1985 = vunpack.c.l.bf16 %v502
    %v1986 = vunpack.c.h.bf16 %v502
    %v1987 = vunpack.c.l.bf16 %v503
    %v1988 = vunpack.c.h.bf16 %v503
    %v1989 = vunpack.c.l.bf16 %v504
    %v1990 = vunpack.c.h.bf16 %v504
    %v1991 = vunpack.c.l.bf16 %v505
    %v1992 = vunpack.c.l.bf16 %v506
    %v1993 = vunpack.c.h.bf16 %v506
    %v1994 = vunpack.c.l.bf16 %v507
    %v1995 = vunpack.c.h.bf16 %v507
    %v1996 = vunpack.c.l.bf16 %v508
    %v1997 = vunpack.c.h.bf16 %v508
    %v1998 = vunpack.c.l.bf16 %v509
    %v1999 = vunpack.c.l.bf16 %v510
    %v2000 = vunpack.c.h.bf16 %v510
    %v2001 = vunpack.c.l.bf16 %v511
    %v2002 = vunpack.c.h.bf16 %v511
    %v2003 = vunpack.c.l.bf16 %v512
    %v2004 = vunpack.c.h.bf16 %v512
    %v2005 = vunpack.c.l.bf16 %v513
    %v2006 = vunpack.c.l.bf16 %v514
    %v2007 = vunpack.c.h.bf16 %v514
    %v2008 = vunpack.c.l.bf16 %v515
    %v2009 = vunpack.c.h.bf16 %v515
    %v2010 = vunpack.c.l.bf16 %v516
    %v2011 = vunpack.c.h.bf16 %v516
    %v2012 = vunpack.c.l.bf16 %v517
    %v2013 = vunpack.c.l.bf16 %v518
    %v2014 = vunpack.c.h.bf16 %v518
    %v2015 = vunpack.c.l.bf16 %v519
    %v2016 = vunpack.c.h.bf16 %v519
    %v2017 = vunpack.c.l.bf16 %v520
    %v2018 = vunpack.c.h.bf16 %v520
    %v2019 = vunpack.c.l.bf16 %v521
    %v2020 = vunpack.c.l.bf16 %v522
    %v2021 = vunpack.c.h.bf16 %v522
    %v2022 = vunpack.c.l.bf16 %v523
    %v2023 = vunpack.c.h.bf16 %v523
    %v2024 = vunpack.c.l.bf16 %v524
    %v2025 = vunpack.c.h.bf16 %v524
    %v2026 = vunpack.c.l.bf16 %v525
    %v2027 = vunpack.c.l.bf16 %v526
    %v2028 = vunpack.c.h.bf16 %v526
    %v2029 = vunpack.c.l.bf16 %v527
    %v2030 = vunpack.c.h.bf16 %v527
    %v2031 = vunpack.c.l.bf16 %v528
    %v2032 = vunpack.c.h.bf16 %v528
    %v2033 = vunpack.c.l.bf16 %v529
    %v2034 = vunpack.c.l.bf16 %v530
    %v2035 = vunpack.c.h.bf16 %v530
    %v2036 = vunpack.c.l.bf16 %v531
    %v2037 = vunpack.c.h.bf16 %v531
    %v2038 = vunpack.c.l.bf16 %v532
    %v2039 = vunpack.c.h.bf16 %v532
    %v2040 = vunpack.c.l.bf16 %v533
    %v2041 = vunpack.c.l.bf16 %v534
    %v2042 = vunpack.c.h.bf16 %v534
    %v2043 = vunpack.c.l.bf16 %v535
    %v2044 = vunpack.c.h.bf16 %v535
    %v2045 = vunpack.c.l.bf16 %v536
    %v2046 = vunpack.c.h.bf16 %v536
    %v2047 = vunpack.c.l.bf16 %v537
    %v2048 = vunpack.c.l.bf16 %v538
    %v2049 = vunpack.c.h.bf16 %v538
    %v2050 = vunpack.c.l.bf16 %v539
    %v2051 = vunpack.c.h.bf16 %v539
    %v2052 = vunpack.c.l.bf16 %v540
    %v2053 = vunpack.c.h.bf16 %v540
    %v2054 = vunpack.c.l.bf16 %v541
    %v2055 = vunpack.c.l.bf16 %v542
    %v2056 = vunpack.c.h.bf16 %v542
    %v2057 = vunpack.c.l.bf16 %v543
    %v2058 = vunpack.c.h.bf16 %v543
    %v2059 = vunpack.c.l.bf16 %v544
    %v2060 = vunpack.c.h.bf16 %v544
    %v2061 = vunpack.c.l.bf16 %v545
    %v2062 = vunpack.c.l.bf16 %v546
    %v2063 = vunpack.c.h.bf16 %v546
    %v2064 = vunpack.c.l.bf16 %v547
    %v2065 = vunpack.c.h.bf16 %v547
    %v2066 = vunpack.c.l.bf16 %v548
    %v2067 = vunpack.c.h.bf16 %v548
    %v2068 = vunpack.c.l.bf16 %v549
    %v2069 = vunpack.c.l.bf16 %v550
    %v2070 = vunpack.c.h.bf16 %v550
    %v2071 = vunpack.c.l.bf16 %v551
    %v2072 = vunpack.c.h.bf16 %v551
    %v2073 = vunpack.c.l.bf16 %v552
    %v2074 = vunpack.c.h.bf16 %v552
    %v2075 = vunpack.c.l.bf16 %v553
    %v2076 = vunpack.c.l.bf16 %v554
    %v2077 = vunpack.c.h.bf16 %v554
    %v2078 = vunpack.c.l.bf16 %v555
    %v2079 = vunpack.c.h.bf16 %v555
    %v2080 = vunpack.c.l.bf16 %v556
    %v2081 = vunpack.c.h.bf16 %v556
    %v2082 = vunpack.c.l.bf16 %v557
    %v2083 = vunpack.c.l.bf16 %v558
    %v2084 = vunpack.c.h.bf16 %v558
    %v2085 = vunpack.c.l.bf16 %v559
    %v2086 = vunpack.c.h.bf16 %v559
    %v2087 = vunpack.c.l.bf16 %v560
    %v2088 = vunpack.c.h.bf16 %v560
    %v2089 = vunpack.c.l.bf16 %v561
    %v2090 = vunpack.c.l.bf16 %v562
    %v2091 = vunpack.c.h.bf16 %v562
    %v2092 = vunpack.c.l.bf16 %v563
    %v2093 = vunpack.c.h.bf16 %v563
    %v2094 = vunpack.c.l.bf16 %v564
    %v2095 = vunpack.c.h.bf16 %v564
    %v2096 = vunpack.c.l.bf16 %v565
    %v2097 = vunpack.c.l.bf16 %v566
    %v2098 = vunpack.c.h.bf16 %v566
    %v2099 = vunpack.c.l.bf16 %v567
    %v2100 = vunpack.c.h.bf16 %v567
    %v2101 = vunpack.c.l.bf16 %v568
    %v2102 = vunpack.c.h.bf16 %v568
    %v2103 = vunpack.c.l.bf16 %v569
    %v2104 = vunpack.c.l.bf16 %v570
    %v2105 = vunpack.c.h.bf16 %v570
    %v2106 = vunpack.c.l.bf16 %v571
    %v2107 = vunpack.c.h.bf16 %v571
    %v2108 = vunpack.c.l.bf16 %v572
    %v2109 = vunpack.c.h.bf16 %v572
    %v2110 = vunpack.c.l.bf16 %v573
    %v2111 = vunpack.c.l.bf16 %v574
    %v2112 = vunpack.c.h.bf16 %v574
    %v2113 = vunpack.c.l.bf16 %v575
    %v2114 = vunpack.c.h.bf16 %v575
    %v2115 = vunpack.c.l.bf16 %v576
    %v2116 = vunpack.c.h.bf16 %v576
    %v2117 = vunpack.c.l.bf16 %v577
    %v2118 = vunpack.c.l.bf16 %v578
    %v2119 = vunpack.c.h.bf16 %v578
    %v2120 = vunpack.c.l.bf16 %v579
    %v2121 = vunpack.c.h.bf16 %v579
    %v2122 = vunpack.c.l.bf16 %v580
    %v2123 = vunpack.c.h.bf16 %v580
    %v2124 = vunpack.c.l.bf16 %v581
    %v2125 = vunpack.c.l.bf16 %v582
    %v2126 = vunpack.c.h.bf16 %v582
    %v2127 = vunpack.c.l.bf16 %v583
    %v2128 = vunpack.c.h.bf16 %v583
    %v2129 = vunpack.c.l.bf16 %v584
    %v2130 = vunpack.c.h.bf16 %v584
    %v2131 = vunpack.c.l.bf16 %v585
    %v2132 = vunpack.c.l.bf16 %v586
    %v2133 = vunpack.c.h.bf16 %v586
    %v2134 = vunpack.c.l.bf16 %v587
    %v2135 = vunpack.c.h.bf16 %v587
    %v2136 = vunpack.c.l.bf16 %v588
    %v2137 = vunpack.c.h.bf16 %v588
    %v2138 = vunpack.c.l.bf16 %v589
    %v2139 = vunpack.c.l.bf16 %v590
    %v2140 = vunpack.c.h.bf16 %v590
    %v2141 = vunpack.c.l.bf16 %v591
    %v2142 = vunpack.c.h.bf16 %v591
    %v2143 = vunpack.c.l.bf16 %v592
    %v2144 = vunpack.c.h.bf16 %v592
    %v2145 = vunpack.c.l.bf16 %v593
    %v2146 = vunpack.c.l.bf16 %v594
    %v2147 = vunpack.c.h.bf16 %v594
    %v2148 = vunpack.c.l.bf16 %v595
    %v2149 = vunpack.c.h.bf16 %v595
    %v2150 = vunpack.c.l.bf16 %v596
    %v2151 = vunpack.c.h.bf16 %v596
    %v2152 = vunpack.c.l.bf16 %v597
    %v2153 = vunpack.c.l.bf16 %v598
    %v2154 = vunpack.c.h.bf16 %v598
    %v2155 = vunpack.c.l.bf16 %v599
    %v2156 = vunpack.c.h.bf16 %v599
    %v2157 = vunpack.c.l.bf16 %v600
    %v2158 = vunpack.c.h.bf16 %v600
    %v2159 = vunpack.c.l.bf16 %v601
    %v2160 = vunpack.c.l.bf16 %v602
    %v2161 = vunpack.c.h.bf16 %v602
    %v2162 = vunpack.c.l.bf16 %v603
    %v2163 = vunpack.c.h.bf16 %v603
    %v2164 = vunpack.c.l.bf16 %v604
    %v2165 = vunpack.c.h.bf16 %v604
    %v2166 = vunpack.c.l.bf16 %v605
    %v2167 = vunpack.c.l.bf16 %v606
    %v2168 = vunpack.c.h.bf16 %v606
    %v2169 = vunpack.c.l.bf16 %v607
    %v2170 = vunpack.c.h.bf16 %v607
    %v2171 = vunpack.c.l.bf16 %v608
    %v2172 = vunpack.c.h.bf16 %v608
    %v2173 = vunpack.c.l.bf16 %v609
    %v2174 = vunpack.c.l.bf16 %v610
    %v2175 = vunpack.c.h.bf16 %v610
    %v2176 = vunpack.c.l.bf16 %v611
    %v2177 = vunpack.c.h.bf16 %v611
    %v2178 = vunpack.c.l.bf16 %v612
    %v2179 = vunpack.c.h.bf16 %v612
    %v2180 = vunpack.c.l.bf16 %v613
    %v2181 = vunpack.c.l.bf16 %v614
    %v2182 = vunpack.c.h.bf16 %v614
    %v2183 = vunpack.c.l.bf16 %v615
    %v2184 = vunpack.c.h.bf16 %v615
    %v2185 = vunpack.c.l.bf16 %v616
    %v2186 = vunpack.c.h.bf16 %v616
    %v2187 = vunpack.c.l.bf16 %v617
    %v2188 = vunpack.c.l.bf16 %v618
    %v2189 = vunpack.c.h.bf16 %v618
    %v2190 = vunpack.c.l.bf16 %v619
    %v2191 = vunpack.c.h.bf16 %v619
    %v2192 = vunpack.c.l.bf16 %v620
    %v2193 = vunpack.c.h.bf16 %v620
    %v2194 = vunpack.c.l.bf16 %v621
    %v2195 = vunpack.c.l.bf16 %v622
    %v2196 = vunpack.c.h.bf16 %v622
    %v2197 = vunpack.c.l.bf16 %v623
    %v2198 = vunpack.c.h.bf16 %v623
    %v2199 = vunpack.c.l.bf16 %v624
    %v2200 = vunpack.c.h.bf16 %v624
    %v2201 = vunpack.c.l.bf16 %v625
    %v2202 = vunpack.c.l.bf16 %v626
    %v2203 = vunpack.c.h.bf16 %v626
    %v2204 = vunpack.c.l.bf16 %v627
    %v2205 = vunpack.c.h.bf16 %v627
    %v2206 = vunpack.c.l.bf16 %v628
    %v2207 = vunpack.c.h.bf16 %v628
    %v2208 = vunpack.c.l.bf16 %v629
    %v2209 = vunpack.c.l.bf16 %v630
    %v2210 = vunpack.c.h.bf16 %v630
    %v2211 = vunpack.c.l.bf16 %v631
    %v2212 = vunpack.c.h.bf16 %v631
    %v2213 = vunpack.c.l.bf16 %v632
    %v2214 = vunpack.c.h.bf16 %v632
    %v2215 = vunpack.c.l.bf16 %v633
    %v2216 = vunpack.c.l.bf16 %v634
    %v2217 = vunpack.c.h.bf16 %v634
    %v2218 = vunpack.c.l.bf16 %v635
    %v2219 = vunpack.c.h.bf16 %v635
    %v2220 = vunpack.c.l.bf16 %v636
    %v2221 = vunpack.c.h.bf16 %v636
    %v2222 = vunpack.c.l.bf16 %v637
    %v2223 = vunpack.c.l.bf16 %v638
    %v2224 = vunpack.c.h.bf16 %v638
    %v2225 = vunpack.c.l.bf16 %v639
    %v2226 = vunpack.c.h.bf16 %v639
    %v2227 = vunpack.c.l.bf16 %v640
    %v2228 = vunpack.c.h.bf16 %v640
    %v2229 = vunpack.c.l.bf16 %v641
    %v2230 = vunpack.c.l.bf16 %v642
    %v2231 = vunpack.c.h.bf16 %v642
    %v2232 = vunpack.c.l.bf16 %v643
    %v2233 = vunpack.c.h.bf16 %v643
    %v2234 = vunpack.c.l.bf16 %v644
    %v2235 = vunpack.c.h.bf16 %v644
    %v2236 = vunpack.c.l.bf16 %v645
    %v2237 = vunpack.c.l.bf16 %v646
    %v2238 = vunpack.c.h.bf16 %v646
    %v2239 = vunpack.c.l.bf16 %v647
    %v2240 = vunpack.c.h.bf16 %v647
    %v2241 = vunpack.c.l.bf16 %v648
    %v2242 = vunpack.c.h.bf16 %v648
    %v2243 = vunpack.c.l.bf16 %v649
    %v2244 = vunpack.c.l.bf16 %v650
    %v2245 = vunpack.c.h.bf16 %v650
    %v2246 = vunpack.c.l.bf16 %v651
    %v2247 = vunpack.c.h.bf16 %v651
    %v2248 = vunpack.c.l.bf16 %v652
    %v2249 = vunpack.c.h.bf16 %v652
    %v2250 = vunpack.c.l.bf16 %v653
    %v2251 = vunpack.c.l.bf16 %v654
    %v2252 = vunpack.c.h.bf16 %v654
    %v2253 = vunpack.c.l.bf16 %v655
    %v2254 = vunpack.c.h.bf16 %v655
    %v2255 = vunpack.c.l.bf16 %v656
    %v2256 = vunpack.c.h.bf16 %v656
    %v2257 = vunpack.c.l.bf16 %v657
    %v2258 = vunpack.c.l.bf16 %v658
    %v2259 = vunpack.c.h.bf16 %v658
    %v2260 = vunpack.c.l.bf16 %v659
    %v2261 = vunpack.c.h.bf16 %v659
    %v2262 = vunpack.c.l.bf16 %v660
    %v2263 = vunpack.c.h.bf16 %v660
    %v2264 = vunpack.c.l.bf16 %v661
    %v2265 = vunpack.c.l.bf16 %v662
    %v2266 = vunpack.c.h.bf16 %v662
    %v2267 = vunpack.c.l.bf16 %v663
    %v2268 = vunpack.c.h.bf16 %v663
    %v2269 = vunpack.c.l.bf16 %v664
    %v2270 = vunpack.c.h.bf16 %v664
    %v2271 = vunpack.c.l.bf16 %v665
    %v2272 = vunpack.c.l.bf16 %v666
    %v2273 = vunpack.c.h.bf16 %v666
    %v2274 = vunpack.c.l.bf16 %v667
    %v2275 = vunpack.c.h.bf16 %v667
    %v2276 = vunpack.c.l.bf16 %v668
    %v2277 = vunpack.c.h.bf16 %v668
    %v2278 = vunpack.c.l.bf16 %v669
    %v2279 = vunpack.c.l.bf16 %v670
    %v2280 = vunpack.c.h.bf16 %v670
    %v2281 = vunpack.c.l.bf16 %v671
    %v2282 = vunpack.c.h.bf16 %v671
    %v2283 = vunpack.c.l.bf16 %v672
    %v2284 = vunpack.c.h.bf16 %v672
    %v2285 = vunpack.c.l.bf16 %v673
    %v2286 = vunpack.c.l.bf16 %v674
    %v2287 = vunpack.c.h.bf16 %v674
    %v2288 = vunpack.c.l.bf16 %v675
    %v2289 = vunpack.c.h.bf16 %v675
    %v2290 = vunpack.c.l.bf16 %v676
    %v2291 = vunpack.c.h.bf16 %v676
    %v2292 = vunpack.c.l.bf16 %v677
    %v2293 = vunpack.c.l.bf16 %v678
    %v2294 = vunpack.c.h.bf16 %v678
    %v2295 = vunpack.c.l.bf16 %v679
    %v2296 = vunpack.c.h.bf16 %v679
    %v2297 = vunpack.c.l.bf16 %v680
    %v2298 = vunpack.c.h.bf16 %v680
    %v2299 = vunpack.c.l.bf16 %v681
    %v2300 = vunpack.c.l.bf16 %v682
    %v2301 = vunpack.c.h.bf16 %v682
    %v2302 = vunpack.c.l.bf16 %v683
    %v2303 = vunpack.c.h.bf16 %v683
    %v2304 = vunpack.c.l.bf16 %v684
    %v2305 = vunpack.c.h.bf16 %v684
    %v2306 = vunpack.c.l.bf16 %v685
    %v2307 = vunpack.c.l.bf16 %v686
    %v2308 = vunpack.c.h.bf16 %v686
    %v2309 = vunpack.c.l.bf16 %v687
    %v2310 = vunpack.c.h.bf16 %v687
    %v2311 = vunpack.c.l.bf16 %v688
    %v2312 = vunpack.c.h.bf16 %v688
    %v2313 = vunpack.c.l.bf16 %v689
    %v2314 = vunpack.c.l.bf16 %v690
    %v2315 = vunpack.c.h.bf16 %v690
    %v2316 = vunpack.c.l.bf16 %v691
    %v2317 = vunpack.c.h.bf16 %v691
    %v2318 = vunpack.c.l.bf16 %v692
    %v2319 = vunpack.c.h.bf16 %v692
    %v2320 = vunpack.c.l.bf16 %v693
    %v2321 = vunpack.c.l.bf16 %v694
    %v2322 = vunpack.c.h.bf16 %v694
    %v2323 = vunpack.c.l.bf16 %v695
    %v2324 = vunpack.c.h.bf16 %v695
    %v2325 = vunpack.c.l.bf16 %v696
    %v2326 = vunpack.c.h.bf16 %v696
    %v2327 = vunpack.c.l.bf16 %v697
    %v2328 = vunpack.c.l.bf16 %v698
    %v2329 = vunpack.c.h.bf16 %v698
    %v2330 = vunpack.c.l.bf16 %v699
    %v2331 = vunpack.c.h.bf16 %v699
    %v2332 = vunpack.c.l.bf16 %v700
    %v2333 = vunpack.c.h.bf16 %v700
    %v2334 = vunpack.c.l.bf16 %v701
    %v2335 = vunpack.c.l.bf16 %v702
    %v2336 = vunpack.c.h.bf16 %v702
    %v2337 = vunpack.c.l.bf16 %v703
    %v2338 = vunpack.c.h.bf16 %v703
    %v2339 = vunpack.c.l.bf16 %v704
    %v2340 = vunpack.c.h.bf16 %v704
    %v2341 = vunpack.c.l.bf16 %v705
    %v2342 = vunpack.c.l.bf16 %v706
    %v2343 = vunpack.c.h.bf16 %v706
    %v2344 = vunpack.c.l.bf16 %v707
    %v2345 = vunpack.c.h.bf16 %v707
    %v2346 = vunpack.c.l.bf16 %v708
    %v2347 = vunpack.c.h.bf16 %v708
    %v2348 = vunpack.c.l.bf16 %v709
    %v2349 = vunpack.c.l.bf16 %v710
    %v2350 = vunpack.c.h.bf16 %v710
    %v2351 = vunpack.c.l.bf16 %v711
    %v2352 = vunpack.c.h.bf16 %v711
    %v2353 = vunpack.c.l.bf16 %v712
    %v2354 = vunpack.c.h.bf16 %v712
    %v2355 = vunpack.c.l.bf16 %v713
    %v2356 = vunpack.c.l.bf16 %v714
    %v2357 = vunpack.c.h.bf16 %v714
    %v2358 = vunpack.c.l.bf16 %v715
    %v2359 = vunpack.c.h.bf16 %v715
    %v2360 = vunpack.c.l.bf16 %v716
    %v2361 = vunpack.c.h.bf16 %v716
    %v2362 = vunpack.c.l.bf16 %v717
    %v2363 = vunpack.c.l.bf16 %v718
    %v2364 = vunpack.c.h.bf16 %v718
    %v2365 = vunpack.c.l.bf16 %v719
    %v2366 = vunpack.c.h.bf16 %v719
    %v2367 = vunpack.c.l.bf16 %v720
    %v2368 = vunpack.c.h.bf16 %v720
    %v2369 = vunpack.c.l.bf16 %v721
    %v2370 = vunpack.c.l.bf16 %v722
    %v2371 = vunpack.c.h.bf16 %v722
    %v2372 = vunpack.c.l.bf16 %v723
    %v2373 = vunpack.c.h.bf16 %v723
    %v2374 = vunpack.c.l.bf16 %v724
    %v2375 = vunpack.c.h.bf16 %v724
    %v2376 = vunpack.c.l.bf16 %v725
    %v2377 = vunpack.c.l.bf16 %v726
    %v2378 = vunpack.c.h.bf16 %v726
    %v2379 = vunpack.c.l.bf16 %v727
    %v2380 = vunpack.c.h.bf16 %v727
    %v2381 = vunpack.c.l.bf16 %v728
    %v2382 = vunpack.c.h.bf16 %v728
    %v2383 = vunpack.c.l.bf16 %v729
    %v2384 = vunpack.c.l.bf16 %v730
    %v2385 = vunpack.c.h.bf16 %v730
    %v2386 = vunpack.c.l.bf16 %v731
    %v2387 = vunpack.c.h.bf16 %v731
    %v2388 = vunpack.c.l.bf16 %v732
    %v2389 = vunpack.c.h.bf16 %v732
    %v2390 = vunpack.c.l.bf16 %v733
    %v2391 = vunpack.c.l.bf16 %v734
    %v2392 = vunpack.c.h.bf16 %v734
    %v2393 = vunpack.c.l.bf16 %v735
    %v2394 = vunpack.c.h.bf16 %v735
    %v2395 = vunpack.c.l.bf16 %v736
    %v2396 = vunpack.c.h.bf16 %v736
    %v2397 = vunpack.c.l.bf16 %v737
    %v2398 = vunpack.c.l.bf16 %v738
    %v2399 = vunpack.c.h.bf16 %v738
    %v2400 = vunpack.c.l.bf16 %v739
    %v2401 = vunpack.c.h.bf16 %v739
    %v2402 = vunpack.c.l.bf16 %v740
    %v2403 = vunpack.c.h.bf16 %v740
    %v2404 = vunpack.c.l.bf16 %v741
    %v2405 = vunpack.c.l.bf16 %v742
    %v2406 = vunpack.c.h.bf16 %v742
    %v2407 = vunpack.c.l.bf16 %v743
    %v2408 = vunpack.c.h.bf16 %v743
    %v2409 = vunpack.c.l.bf16 %v744
    %v2410 = vunpack.c.h.bf16 %v744
    %v2411 = vunpack.c.l.bf16 %v745
    %v2412 = vunpack.c.l.bf16 %v746
    %v2413 = vunpack.c.h.bf16 %v746
    %v2414 = vunpack.c.l.bf16 %v747
    %v2415 = vunpack.c.h.bf16 %v747
    %v2416 = vunpack.c.l.bf16 %v748
    %v2417 = vunpack.c.h.bf16 %v748
    %v2418 = vunpack.c.l.bf16 %v749
    %v2419 = vunpack.c.l.bf16 %v750
    %v2420 = vunpack.c.h.bf16 %v750
    %v2421 = vunpack.c.l.bf16 %v751
    %v2422 = vunpack.c.h.bf16 %v751
    %v2423 = vunpack.c.l.bf16 %v752
    %v2424 = vunpack.c.h.bf16 %v752
    %v2425 = vunpack.c.l.bf16 %v753
    %v2426 = vunpack.c.l.bf16 %v754
    %v2427 = vunpack.c.h.bf16 %v754
    %v2428 = vunpack.c.l.bf16 %v755
    %v2429 = vunpack.c.h.bf16 %v755
    %v2430 = vunpack.c.l.bf16 %v756
    %v2431 = vunpack.c.h.bf16 %v756
    %v2432 = vunpack.c.l.bf16 %v757
    %v2433 = vunpack.c.l.bf16 %v758
    %v2434 = vunpack.c.h.bf16 %v758
    %v2435 = vunpack.c.l.bf16 %v759
    %v2436 = vunpack.c.h.bf16 %v759
    %v2437 = vunpack.c.l.bf16 %v760
    %v2438 = vunpack.c.h.bf16 %v760
    %v2439 = vunpack.c.l.bf16 %v761
    %v2440 = vunpack.c.l.bf16 %v762
    %v2441 = vunpack.c.h.bf16 %v762
    %v2442 = vunpack.c.l.bf16 %v763
    %v2443 = vunpack.c.h.bf16 %v763
    %v2444 = vunpack.c.l.bf16 %v764
    %v2445 = vunpack.c.h.bf16 %v764
    %v2446 = vunpack.c.l.bf16 %v765
    %v2447 = vunpack.c.l.bf16 %v766
    %v2448 = vunpack.c.h.bf16 %v766
    %v2449 = vunpack.c.l.bf16 %v767
    %v2450 = vunpack.c.h.bf16 %v767
    %v2451 = vunpack.c.l.bf16 %v768
    %v2452 = vunpack.c.h.bf16 %v768
    %v2453 = vunpack.c.l.bf16 %v769
    %v2454 = vunpack.c.l.bf16 %v770
    %v2455 = vunpack.c.h.bf16 %v770
    %v2456 = vunpack.c.l.bf16 %v771
    %v2457 = vunpack.c.h.bf16 %v771
    %v2458 = vunpack.c.l.bf16 %v772
    %v2459 = vunpack.c.h.bf16 %v772
    %v2460 = vunpack.c.l.bf16 %v773
    %v2461 = vunpack.c.l.bf16 %v774
    %v2462 = vunpack.c.h.bf16 %v774
    %v2463 = vunpack.c.l.bf16 %v775
    %v2464 = vunpack.c.h.bf16 %v775
    %v2465 = vunpack.c.l.bf16 %v776
    %v2466 = vunpack.c.h.bf16 %v776
    %v2467 = vunpack.c.l.bf16 %v777
    %v2468 = vunpack.c.l.bf16 %v778
    %v2469 = vunpack.c.h.bf16 %v778
    %v2470 = vunpack.c.l.bf16 %v779
    %v2471 = vunpack.c.h.bf16 %v779
    %v2472 = vunpack.c.l.bf16 %v780
    %v2473 = vunpack.c.h.bf16 %v780
    %v2474 = vunpack.c.l.bf16 %v781
    %v2475 = vunpack.c.l.bf16 %v782
    %v2476 = vunpack.c.h.bf16 %v782
    %v2477 = vunpack.c.l.bf16 %v783
    %v2478 = vunpack.c.h.bf16 %v783
    %v2479 = vunpack.c.l.bf16 %v784
    %v2480 = vunpack.c.h.bf16 %v784
    %v2481 = vunpack.c.l.bf16 %v785
    %v2482 = vunpack.c.l.bf16 %v786
    %v2483 = vunpack.c.h.bf16 %v786
    %v2484 = vunpack.c.l.bf16 %v787
    %v2485 = vunpack.c.h.bf16 %v787
    %v2486 = vunpack.c.l.bf16 %v788
    %v2487 = vunpack.c.h.bf16 %v788
    %v2488 = vunpack.c.l.bf16 %v789
    %v2489 = vunpack.c.l.bf16 %v790
    %v2490 = vunpack.c.h.bf16 %v790
    %v2491 = vunpack.c.l.bf16 %v791
    %v2492 = vunpack.c.h.bf16 %v791
    %v2493 = vunpack.c.l.bf16 %v792
    %v2494 = vunpack.c.h.bf16 %v792
    %v2495 = vunpack.c.l.bf16 %v793
    %v2496 = vunpack.c.l.bf16 %v794
    %v2497 = vunpack.c.h.bf16 %v794
    %v2498 = vunpack.c.l.bf16 %v795
    %v2499 = vunpack.c.h.bf16 %v795
    %v2500 = vunpack.c.l.bf16 %v796
    %v2501 = vunpack.c.h.bf16 %v796
    %v2502 = vunpack.c.l.bf16 %v797
    %v2503 = vunpack.c.l.bf16 %v798
    %v2504 = vunpack.c.h.bf16 %v798
    %v2505 = vunpack.c.l.bf16 %v799
    %v2506 = vunpack.c.h.bf16 %v799
    %v2507 = vunpack.c.l.bf16 %v800
    %v2508 = vunpack.c.h.bf16 %v800
    %v2509 = vunpack.c.l.bf16 %v801
    %v2510 = vunpack.c.l.bf16 %v802
    %v2511 = vunpack.c.h.bf16 %v802
    %v2512 = vunpack.c.l.bf16 %v803
    %v2513 = vunpack.c.h.bf16 %v803
    %v2514 = vunpack.c.l.bf16 %v804
    %v2515 = vunpack.c.h.bf16 %v804
    %v2516 = vunpack.c.l.bf16 %v805
    %v2517 = vunpack.c.l.bf16 %v806
    %v2518 = vunpack.c.h.bf16 %v806
    %v2519 = vunpack.c.l.bf16 %v807
    %v2520 = vunpack.c.h.bf16 %v807
    %v2521 = vunpack.c.l.bf16 %v808
    %v2522 = vunpack.c.h.bf16 %v808
    %v2523 = vunpack.c.l.bf16 %v809
    %v2524 = vunpack.c.l.bf16 %v810
    %v2525 = vunpack.c.h.bf16 %v810
    %v2526 = vunpack.c.l.bf16 %v811
    %v2527 = vunpack.c.h.bf16 %v811
    %v2528 = vunpack.c.l.bf16 %v812
    %v2529 = vunpack.c.h.bf16 %v812
    %v2530 = vunpack.c.l.bf16 %v813
    %v2531 = vunpack.c.l.bf16 %v814
    %v2532 = vunpack.c.h.bf16 %v814
    %v2533 = vunpack.c.l.bf16 %v815
    %v2534 = vunpack.c.h.bf16 %v815
    %v2535 = vunpack.c.l.bf16 %v816
    %v2536 = vunpack.c.h.bf16 %v816
    %v2537 = vunpack.c.l.bf16 %v817
    %v2538 = vunpack.c.l.bf16 %v818
    %v2539 = vunpack.c.h.bf16 %v818
    %v2540 = vunpack.c.l.bf16 %v819
    %v2541 = vunpack.c.h.bf16 %v819
    %v2542 = vunpack.c.l.bf16 %v820
    %v2543 = vunpack.c.h.bf16 %v820
    %v2544 = vunpack.c.l.bf16 %v821
    %v2545 = vunpack.c.l.bf16 %v822
    %v2546 = vunpack.c.h.bf16 %v822
    %v2547 = vunpack.c.l.bf16 %v823
    %v2548 = vunpack.c.h.bf16 %v823
    %v2549 = vunpack.c.l.bf16 %v824
    %v2550 = vunpack.c.h.bf16 %v824
    %v2551 = vunpack.c.l.bf16 %v825
    %v2552 = vunpack.c.l.bf16 %v826
    %v2553 = vunpack.c.h.bf16 %v826
    %v2554 = vunpack.c.l.bf16 %v827
    %v2555 = vunpack.c.h.bf16 %v827
    %v2556 = vunpack.c.l.bf16 %v828
    %v2557 = vunpack.c.h.bf16 %v828
    %v2558 = vunpack.c.l.bf16 %v829
    %v2559 = vunpack.c.l.bf16 %v830
    %v2560 = vunpack.c.h.bf16 %v830
    %v2561 = vunpack.c.l.bf16 %v831
    %v2562 = vunpack.c.h.bf16 %v831
    %v2563 = vunpack.c.l.bf16 %v832
    %v2564 = vunpack.c.h.bf16 %v832
    %v2565 = vunpack.c.l.bf16 %v833
    %v2566 = vunpack.c.l.bf16 %v834
    %v2567 = vunpack.c.h.bf16 %v834
    %v2568 = vunpack.c.l.bf16 %v835
    %v2569 = vunpack.c.h.bf16 %v835
    %v2570 = vunpack.c.l.bf16 %v836
    %v2571 = vunpack.c.h.bf16 %v836
    %v2572 = vunpack.c.l.bf16 %v837
    %v2573 = vunpack.c.l.bf16 %v838
    %v2574 = vunpack.c.h.bf16 %v838
    %v2575 = vunpack.c.l.bf16 %v839
    %v2576 = vunpack.c.h.bf16 %v839
    %v2577 = vunpack.c.l.bf16 %v840
    %v2578 = vunpack.c.h.bf16 %v840
    %v2579 = vunpack.c.l.bf16 %v841
    %v2580 = vunpack.c.l.bf16 %v842
    %v2581 = vunpack.c.h.bf16 %v842
    %v2582 = vunpack.c.l.bf16 %v843
    %v2583 = vunpack.c.h.bf16 %v843
    %v2584 = vunpack.c.l.bf16 %v844
    %v2585 = vunpack.c.h.bf16 %v844
    %v2586 = vunpack.c.l.bf16 %v845
    %v2587 = vunpack.c.l.bf16 %v846
    %v2588 = vunpack.c.h.bf16 %v846
    %v2589 = vunpack.c.l.bf16 %v847
    %v2590 = vunpack.c.h.bf16 %v847
    %v2591 = vunpack.c.l.bf16 %v848
    %v2592 = vunpack.c.h.bf16 %v848
    %v2593 = vunpack.c.l.bf16 %v849
    %v2594 = vunpack.c.l.bf16 %v850
    %v2595 = vunpack.c.h.bf16 %v850
    %v2596 = vunpack.c.l.bf16 %v851
    %v2597 = vunpack.c.h.bf16 %v851
    %v2598 = vunpack.c.l.bf16 %v852
    %v2599 = vunpack.c.h.bf16 %v852
    %v2600 = vunpack.c.l.bf16 %v853
    %v2601 = vunpack.c.l.bf16 %v854
    %v2602 = vunpack.c.h.bf16 %v854
    %v2603 = vunpack.c.l.bf16 %v855
    %v2604 = vunpack.c.h.bf16 %v855
    %v2605 = vunpack.c.l.bf16 %v856
    %v2606 = vunpack.c.h.bf16 %v856
    %v2607 = vunpack.c.l.bf16 %v857
    %v2608 = vunpack.c.l.bf16 %v858
    %v2609 = vunpack.c.h.bf16 %v858
    %v2610 = vunpack.c.l.bf16 %v859
    %v2611 = vunpack.c.h.bf16 %v859
    %v2612 = vunpack.c.l.bf16 %v860
    %v2613 = vunpack.c.h.bf16 %v860
    %v2614 = vunpack.c.l.bf16 %v861
    %v2615 = vunpack.c.l.bf16 %v862
    %v2616 = vunpack.c.h.bf16 %v862
    %v2617 = vunpack.c.l.bf16 %v863
    %v2618 = vunpack.c.h.bf16 %v863
    %v2619 = vunpack.c.l.bf16 %v864
    %v2620 = vunpack.c.h.bf16 %v864
    %v2621 = vunpack.c.l.bf16 %v865
    %v2622 = vunpack.c.l.bf16 %v866
    %v2623 = vunpack.c.h.bf16 %v866
    %v2624 = vunpack.c.l.bf16 %v867
    %v2625 = vunpack.c.h.bf16 %v867
    %v2626 = vunpack.c.l.bf16 %v868
    %v2627 = vunpack.c.h.bf16 %v868
    %v2628 = vunpack.c.l.bf16 %v869
    %v2629 = vunpack.c.l.bf16 %v870
    %v2630 = vunpack.c.h.bf16 %v870
    %v2631 = vunpack.c.l.bf16 %v871
    %v2632 = vunpack.c.h.bf16 %v871
    %v2633 = vunpack.c.l.bf16 %v872
    %v2634 = vunpack.c.h.bf16 %v872
    %v2635 = vunpack.c.l.bf16 %v873
    %v2636 = vunpack.c.l.bf16 %v874
    %v2637 = vunpack.c.h.bf16 %v874
    %v2638 = vunpack.c.l.bf16 %v875
    %v2639 = vunpack.c.h.bf16 %v875
    %v2640 = vunpack.c.l.bf16 %v876
    %v2641 = vunpack.c.h.bf16 %v876
    %v2642 = vunpack.c.l.bf16 %v877
    %v2643 = vunpack.c.l.bf16 %v878
    %v2644 = vunpack.c.h.bf16 %v878
    %v2645 = vunpack.c.l.bf16 %v879
    %v2646 = vunpack.c.h.bf16 %v879
    %v2647 = vunpack.c.l.bf16 %v880
    %v2648 = vunpack.c.h.bf16 %v880
    %v2649 = vunpack.c.l.bf16 %v881
    %v2650 = vunpack.c.l.bf16 %v882
    %v2651 = vunpack.c.h.bf16 %v882
    %v2652 = vunpack.c.l.bf16 %v883
    %v2653 = vunpack.c.h.bf16 %v883
    %v2654 = vunpack.c.l.bf16 %v884
    %v2655 = vunpack.c.h.bf16 %v884
    %v2656 = vunpack.c.l.bf16 %v885
    %v2657 = vunpack.c.l.bf16 %v886
    %v2658 = vunpack.c.h.bf16 %v886
    %v2659 = vunpack.c.l.bf16 %v887
    %v2660 = vunpack.c.h.bf16 %v887
    %v2661 = vunpack.c.l.bf16 %v888
    %v2662 = vunpack.c.h.bf16 %v888
    %v2663 = vunpack.c.l.bf16 %v889
    %v2664 = vunpack.c.l.bf16 %v890
    %v2665 = vunpack.c.h.bf16 %v890
    %v2666 = vunpack.c.l.bf16 %v891
    %v2667 = vunpack.c.h.bf16 %v891
    %v2668 = vunpack.c.l.bf16 %v892
    %v2669 = vunpack.c.h.bf16 %v892
    %v2670 = vunpack.c.l.bf16 %v893
    %v2671 = vunpack.c.l.bf16 %v894
    %v2672 = vunpack.c.h.bf16 %v894
    %v2673 = vunpack.c.l.bf16 %v895
    %v2674 = vunpack.c.h.bf16 %v895
    %v2675 = vunpack.c.l.bf16 %v896
    %v2676 = vunpack.c.h.bf16 %v896
    %v2677 = vunpack.c.l.bf16 %v897
    %v2678 = vunpack.c.l.bf16 %v898
    %v2679 = vunpack.c.h.bf16 %v898
    %v2680 = vunpack.c.l.bf16 %v899
    %v2681 = vunpack.c.h.bf16 %v899
    %v2682 = vunpack.c.l.bf16 %v900
    %v2683 = vunpack.c.h.bf16 %v900
    %v2684 = vunpack.c.l.bf16 %v901
    %v2685 = vunpack.c.l.bf16 %v902
    %v2686 = vunpack.c.h.bf16 %v902
    %v2687 = vunpack.c.l.bf16 %v903
    %v2688 = vunpack.c.h.bf16 %v903
    %v2689 = vunpack.c.l.bf16 %v904
    %v2690 = vunpack.c.h.bf16 %v904
    %v2691 = vunpack.c.l.bf16 %v905
    %v2692 = vunpack.c.l.bf16 %v906
    %v2693 = vunpack.c.h.bf16 %v906
    %v2694 = vunpack.c.l.bf16 %v907
    %v2695 = vunpack.c.h.bf16 %v907
    %v2696 = vunpack.c.l.bf16 %v908
    %v2697 = vunpack.c.h.bf16 %v908
    %v2698 = vunpack.c.l.bf16 %v909
    %v2699 = vunpack.c.l.bf16 %v910
    %v2700 = vunpack.c.h.bf16 %v910
    %v2701 = vunpack.c.l.bf16 %v911
    %v2702 = vunpack.c.h.bf16 %v911
    %v2703 = vunpack.c.l.bf16 %v912
    %v2704 = vunpack.c.h.bf16 %v912
    %v2705 = vunpack.c.l.bf16 %v913
    %v2706 = vunpack.c.l.bf16 %v914
    %v2707 = vunpack.c.h.bf16 %v914
    %v2708 = vunpack.c.l.bf16 %v915
    %v2709 = vunpack.c.h.bf16 %v915
    %v2710 = vunpack.c.l.bf16 %v916
    %v2711 = vunpack.c.h.bf16 %v916
    %v2712 = vunpack.c.l.bf16 %v917
    %v2713 = vunpack.c.l.bf16 %v918
    %v2714 = vunpack.c.h.bf16 %v918
    %v2715 = vunpack.c.l.bf16 %v919
    %v2716 = vunpack.c.h.bf16 %v919
    %v2717 = vunpack.c.l.bf16 %v920
    %v2718 = vunpack.c.h.bf16 %v920
    %v2719 = vunpack.c.l.bf16 %v921
    %v2720 = vunpack.c.l.bf16 %v922
    %v2721 = vunpack.c.h.bf16 %v922
    %v2722 = vunpack.c.l.bf16 %v923
    %v2723 = vunpack.c.h.bf16 %v923
    %v2724 = vunpack.c.l.bf16 %v924
    %v2725 = vunpack.c.h.bf16 %v924
    %v2726 = vunpack.c.l.bf16 %v925
    %v2727 = vunpack.c.l.bf16 %v926
    %v2728 = vunpack.c.h.bf16 %v926
    %v2729 = vunpack.c.l.bf16 %v927
    %v2730 = vunpack.c.h.bf16 %v927
    %v2731 = vunpack.c.l.bf16 %v928
    %v2732 = vunpack.c.h.bf16 %v928
    %v2733 = vunpack.c.l.bf16 %v929
    %v2734 = vunpack.c.l.bf16 %v930
    %v2735 = vunpack.c.h.bf16 %v930
    %v2736 = vunpack.c.l.bf16 %v931
    %v2737 = vunpack.c.h.bf16 %v931
    %v2738 = vunpack.c.l.bf16 %v932
    %v2739 = vunpack.c.h.bf16 %v932
    %v2740 = vunpack.c.l.bf16 %v933
    %v2741 = vunpack.c.l.bf16 %v934
    %v2742 = vunpack.c.h.bf16 %v934
    %v2743 = vunpack.c.l.bf16 %v935
    %v2744 = vunpack.c.h.bf16 %v935
    %v2745 = vunpack.c.l.bf16 %v936
    %v2746 = vunpack.c.h.bf16 %v936
    %v2747 = vunpack.c.l.bf16 %v937
    %v2748 = vunpack.c.l.bf16 %v938
    %v2749 = vunpack.c.h.bf16 %v938
    %v2750 = vunpack.c.l.bf16 %v939
    %v2751 = vunpack.c.h.bf16 %v939
    %v2752 = vunpack.c.l.bf16 %v940
    %v2753 = vunpack.c.h.bf16 %v940
    %v2754 = vunpack.c.l.bf16 %v941
    %v2755 = vunpack.c.l.bf16 %v942
    %v2756 = vunpack.c.h.bf16 %v942
    %v2757 = vunpack.c.l.bf16 %v943
    %v2758 = vunpack.c.h.bf16 %v943
    %v2759 = vunpack.c.l.bf16 %v944
    %v2760 = vunpack.c.h.bf16 %v944
    %v2761 = vunpack.c.l.bf16 %v945
    %v2762 = vunpack.c.l.bf16 %v946
    %v2763 = vunpack.c.h.bf16 %v946
    %v2764 = vunpack.c.l.bf16 %v947
    %v2765 = vunpack.c.h.bf16 %v947
    %v2766 = vunpack.c.l.bf16 %v948
    %v2767 = vunpack.c.h.bf16 %v948
    %v2768 = vunpack.c.l.bf16 %v949
    %v2769 = vunpack.c.l.bf16 %v950
    %v2770 = vunpack.c.h.bf16 %v950
    %v2771 = vunpack.c.l.bf16 %v951
    %v2772 = vunpack.c.h.bf16 %v951
    %v2773 = vunpack.c.l.bf16 %v952
    %v2774 = vunpack.c.h.bf16 %v952
    %v2775 = vunpack.c.l.bf16 %v953
    %v2776 = vunpack.c.l.bf16 %v954
    %v2777 = vunpack.c.h.bf16 %v954
    %v2778 = vunpack.c.l.bf16 %v955
    %v2779 = vunpack.c.h.bf16 %v955
    %v2780 = vunpack.c.l.bf16 %v956
    %v2781 = vunpack.c.h.bf16 %v956
    %v2782 = vunpack.c.l.bf16 %v957
    %v2783 = vunpack.c.l.bf16 %v958
    %v2784 = vunpack.c.h.bf16 %v958
    %v2785 = vunpack.c.l.bf16 %v959
    %v2786 = vunpack.c.h.bf16 %v959
    %v2787 = vunpack.c.l.bf16 %v960
    %v2788 = vunpack.c.h.bf16 %v960
    %v2789 = vunpack.c.l.bf16 %v961
    %v2790 = vunpack.c.l.bf16 %v962
    %v2791 = vunpack.c.h.bf16 %v962
    %v2792 = vunpack.c.l.bf16 %v963
    %v2793 = vunpack.c.h.bf16 %v963
    %v2794 = vunpack.c.l.bf16 %v964
    %v2795 = vunpack.c.h.bf16 %v964
    %v2796 = vunpack.c.l.bf16 %v965
    %v2797 = vunpack.c.l.bf16 %v966
    %v2798 = vunpack.c.h.bf16 %v966
    %v2799 = vunpack.c.l.bf16 %v967
    %v2800 = vunpack.c.h.bf16 %v967
    %v2801 = vunpack.c.l.bf16 %v968
    %v2802 = vunpack.c.h.bf16 %v968
    %v2803 = vunpack.c.l.bf16 %v969
    %v2804 = vunpack.c.l.bf16 %v970
    %v2805 = vunpack.c.h.bf16 %v970
    %v2806 = vunpack.c.l.bf16 %v971
    %v2807 = vunpack.c.h.bf16 %v971
    %v2808 = vunpack.c.l.bf16 %v972
    %v2809 = vunpack.c.h.bf16 %v972
    %v2810 = vunpack.c.l.bf16 %v973
    %v2811 = vunpack.c.l.bf16 %v974
    %v2812 = vunpack.c.h.bf16 %v974
    %v2813 = vunpack.c.l.bf16 %v975
    %v2814 = vunpack.c.h.bf16 %v975
    %v2815 = vunpack.c.l.bf16 %v976
    %v2816 = vunpack.c.h.bf16 %v976
    %v2817 = vunpack.c.l.bf16 %v977
    %v2818 = vunpack.c.l.bf16 %v978
    %v2819 = vunpack.c.h.bf16 %v978
    %v2820 = vunpack.c.l.bf16 %v979
    %v2821 = vunpack.c.h.bf16 %v979
    %v2822 = vunpack.c.l.bf16 %v980
    %v2823 = vunpack.c.h.bf16 %v980
    %v2824 = vunpack.c.l.bf16 %v981
    %v2825 = vunpack.c.l.bf16 %v982
    %v2826 = vunpack.c.h.bf16 %v982
    %v2827 = vunpack.c.l.bf16 %v983
    %v2828 = vunpack.c.h.bf16 %v983
    %v2829 = vunpack.c.l.bf16 %v984
    %v2830 = vunpack.c.h.bf16 %v984
    %v2831 = vunpack.c.l.bf16 %v985
    %v2832 = vunpack.c.l.bf16 %v986
    %v2833 = vunpack.c.h.bf16 %v986
    %v2834 = vunpack.c.l.bf16 %v987
    %v2835 = vunpack.c.h.bf16 %v987
    %v2836 = vunpack.c.l.bf16 %v988
    %v2837 = vunpack.c.h.bf16 %v988
    %v2838 = vunpack.c.l.bf16 %v989
    %v2839 = vunpack.c.l.bf16 %v990
    %v2840 = vunpack.c.h.bf16 %v990
    %v2841 = vunpack.c.l.bf16 %v991
    %v2842 = vunpack.c.h.bf16 %v991
    %v2843 = vunpack.c.l.bf16 %v992
    %v2844 = vunpack.c.h.bf16 %v992
    %v2845 = vunpack.c.l.bf16 %v993
    %v2846 = vunpack.c.l.bf16 %v994
    %v2847 = vunpack.c.h.bf16 %v994
    %v2848 = vunpack.c.l.bf16 %v995
    %v2849 = vunpack.c.h.bf16 %v995
    %v2850 = vunpack.c.l.bf16 %v996
    %v2851 = vunpack.c.h.bf16 %v996
    %v2852 = vunpack.c.l.bf16 %v997
    %v2853 = vunpack.c.l.bf16 %v998
    %v2854 = vunpack.c.h.bf16 %v998
    %v2855 = vunpack.c.l.bf16 %v999
    %v2856 = vunpack.c.h.bf16 %v999
    %v2857 = vunpack.c.l.bf16 %v1000
    %v2858 = vunpack.c.h.bf16 %v1000
    %v2859 = vunpack.c.l.bf16 %v1001
    %v2860 = vunpack.c.l.bf16 %v1002
    %v2861 = vunpack.c.h.bf16 %v1002
    %v2862 = vunpack.c.l.bf16 %v1003
    %v2863 = vunpack.c.h.bf16 %v1003
    %v2864 = vunpack.c.l.bf16 %v1004
    %v2865 = vunpack.c.h.bf16 %v1004
    %v2866 = vunpack.c.l.bf16 %v1005
    %v2867 = vunpack.c.l.bf16 %v1006
    %v2868 = vunpack.c.h.bf16 %v1006
    %v2869 = vunpack.c.l.bf16 %v1007
    %v2870 = vunpack.c.h.bf16 %v1007
    %v2871 = vunpack.c.l.bf16 %v1008
    %v2872 = vunpack.c.h.bf16 %v1008
    %v2873 = vunpack.c.l.bf16 %v1009
    %v2874 = vunpack.c.l.bf16 %v1010
    %v2875 = vunpack.c.h.bf16 %v1010
    %v2876 = vunpack.c.l.bf16 %v1011
    %v2877 = vunpack.c.h.bf16 %v1011
    %v2878 = vunpack.c.l.bf16 %v1012
    %v2879 = vunpack.c.h.bf16 %v1012
    %v2880 = vunpack.c.l.bf16 %v1013
    %v2881 = vunpack.c.l.bf16 %v1014
    %v2882 = vunpack.c.h.bf16 %v1014
    %v2883 = vunpack.c.l.bf16 %v1015
    %v2884 = vunpack.c.h.bf16 %v1015
    %v2885 = vunpack.c.l.bf16 %v1016
    %v2886 = vunpack.c.h.bf16 %v1016
    %v2887 = vunpack.c.l.bf16 %v1017
    %v2888 = vunpack.c.l.bf16 %v1018
    %v2889 = vunpack.c.h.bf16 %v1018
    %v2890 = vunpack.c.l.bf16 %v1019
    %v2891 = vunpack.c.h.bf16 %v1019
    %v2892 = vunpack.c.l.bf16 %v1020
    %v2893 = vunpack.c.h.bf16 %v1020
    %v2894 = vunpack.c.l.bf16 %v1021
    %v2895 = vunpack.c.l.bf16 %v1022
    %v2896 = vunpack.c.h.bf16 %v1022
    %v2897 = vunpack.c.l.bf16 %v1023
    %v2898 = vunpack.c.h.bf16 %v1023
    %v2899 = vunpack.c.l.bf16 %v1024
    %v2900 = vunpack.c.h.bf16 %v1024
    %v2901 = vunpack.c.l.bf16 %v1025
    %v2902 = vunpack.c.l.bf16 %v1026
    %v2903 = vunpack.c.h.bf16 %v1026
    %v2904 = vunpack.c.l.bf16 %v1027
    %v2905 = vunpack.c.h.bf16 %v1027
    %v2906 = vunpack.c.l.bf16 %v1028
    %v2907 = vunpack.c.h.bf16 %v1028
    %v2908 = vunpack.c.l.bf16 %v1029
    %v2909 = vunpack.c.l.bf16 %v1030
    %v2910 = vunpack.c.h.bf16 %v1030
    %v2911 = vunpack.c.l.bf16 %v1031
    %v2912 = vunpack.c.h.bf16 %v1031
    %v2913 = vunpack.c.l.bf16 %v1032
    %v2914 = vunpack.c.h.bf16 %v1032
    %v2915 = vunpack.c.l.bf16 %v1033
    %v2916 = vunpack.c.l.bf16 %v1034
    %v2917 = vunpack.c.h.bf16 %v1034
    %v2918 = vunpack.c.l.bf16 %v1035
    %v2919 = vunpack.c.h.bf16 %v1035
    %v2920 = vunpack.c.l.bf16 %v1036
    %v2921 = vunpack.c.h.bf16 %v1036
    %v2922 = vunpack.c.l.bf16 %v1037
    %v2923 = vunpack.c.l.bf16 %v1038
    %v2924 = vunpack.c.h.bf16 %v1038
    %v2925 = vunpack.c.l.bf16 %v1039
    %v2926 = vunpack.c.h.bf16 %v1039
    %v2927 = vunpack.c.l.bf16 %v1040
    %v2928 = vunpack.c.h.bf16 %v1040
    %v2929 = vunpack.c.l.bf16 %v1041
    %v2930 = vunpack.c.l.bf16 %v1042
    %v2931 = vunpack.c.h.bf16 %v1042
    %v2932 = vunpack.c.l.bf16 %v1043
    %v2933 = vunpack.c.h.bf16 %v1043
    %v2934 = vunpack.c.l.bf16 %v1044
    %v2935 = vunpack.c.h.bf16 %v1044
    %v2936 = vunpack.c.l.bf16 %v1045
    %v2937 = vunpack.c.l.bf16 %v1046
    %v2938 = vunpack.c.h.bf16 %v1046
    %v2939 = vunpack.c.l.bf16 %v1047
    %v2940 = vunpack.c.h.bf16 %v1047
    %v2941 = vunpack.c.l.bf16 %v1048
    %v2942 = vunpack.c.h.bf16 %v1048
    %v2943 = vunpack.c.l.bf16 %v1049
    %v2944 = vunpack.c.l.bf16 %v1050
    %v2945 = vunpack.c.h.bf16 %v1050
    %v2946 = vunpack.c.l.bf16 %v1051
    %v2947 = vunpack.c.h.bf16 %v1051
    %v2948 = vunpack.c.l.bf16 %v1052
    %v2949 = vunpack.c.h.bf16 %v1052
    %v2950 = vunpack.c.l.bf16 %v1053
    %v2951 = vunpack.c.l.bf16 %v1054
    %v2952 = vunpack.c.h.bf16 %v1054
    %v2953 = vunpack.c.l.bf16 %v1055
    %v2954 = vunpack.c.h.bf16 %v1055
    %v2955 = vunpack.c.l.bf16 %v1056
    %v2956 = vunpack.c.h.bf16 %v1056
    %v2957 = vunpack.c.l.bf16 %v1057
    %v2958 = vunpack.c.l.bf16 %v1058
    %v2959 = vunpack.c.h.bf16 %v1058
    %v2960 = vunpack.c.l.bf16 %v1059
    %v2961 = vunpack.c.h.bf16 %v1059
    %v2962 = vunpack.c.l.bf16 %v1060
    %v2963 = vunpack.c.h.bf16 %v1060
    %v2964 = vunpack.c.l.bf16 %v1061
    %v2965 = vunpack.c.l.bf16 %v1062
    %v2966 = vunpack.c.h.bf16 %v1062
    %v2967 = vunpack.c.l.bf16 %v1063
    %v2968 = vunpack.c.h.bf16 %v1063
    %v2969 = vunpack.c.l.bf16 %v1064
    %v2970 = vunpack.c.h.bf16 %v1064
    %v2971 = vunpack.c.l.bf16 %v1065
    %v2972 = vunpack.c.l.bf16 %v1066
    %v2973 = vunpack.c.h.bf16 %v1066
    %v2974 = vunpack.c.l.bf16 %v1067
    %v2975 = vunpack.c.h.bf16 %v1067
    %v2976 = vunpack.c.l.bf16 %v1068
    %v2977 = vunpack.c.h.bf16 %v1068
    %v2978 = vunpack.c.l.bf16 %v1069
    %v2979 = vunpack.c.l.bf16 %v1070
    %v2980 = vunpack.c.h.bf16 %v1070
    %v2981 = vunpack.c.l.bf16 %v1071
    %v2982 = vunpack.c.h.bf16 %v1071
    %v2983 = vunpack.c.l.bf16 %v1072
    %v2984 = vunpack.c.h.bf16 %v1072
    %v2985 = vunpack.c.l.bf16 %v1073
    %v2986 = vunpack.c.l.bf16 %v1074
    %v2987 = vunpack.c.h.bf16 %v1074
    %v2988 = vunpack.c.l.bf16 %v1075
    %v2989 = vunpack.c.h.bf16 %v1075
    %v2990 = vunpack.c.l.bf16 %v1076
    %v2991 = vunpack.c.h.bf16 %v1076
    %v2992 = vunpack.c.l.bf16 %v1077
    %v2993 = vunpack.c.l.bf16 %v1078
    %v2994 = vunpack.c.h.bf16 %v1078
    %v2995 = vunpack.c.l.bf16 %v1079
    %v2996 = vunpack.c.h.bf16 %v1079
    %v2997 = vunpack.c.l.bf16 %v1080
    %v2998 = vunpack.c.h.bf16 %v1080
    %v2999 = vunpack.c.l.bf16 %v1081
    %v3000 = vunpack.c.l.bf16 %v1082
    %v3001 = vunpack.c.h.bf16 %v1082
    %v3002 = vunpack.c.l.bf16 %v1083
    %v3003 = vunpack.c.h.bf16 %v1083
    %v3004 = vunpack.c.l.bf16 %v1084
    %v3005 = vunpack.c.h.bf16 %v1084
    %v3006 = vunpack.c.l.bf16 %v1085
    %v3007 = vunpack.c.l.bf16 %v1086
    %v3008 = vunpack.c.h.bf16 %v1086
    %v3009 = vunpack.c.l.bf16 %v1087
    %v3010 = vunpack.c.h.bf16 %v1087
    %v3011 = vunpack.c.l.bf16 %v1088
    %v3012 = vunpack.c.h.bf16 %v1088
    %v3013 = vunpack.c.l.bf16 %v1089
    %v3014 = vunpack.c.l.bf16 %v1090
    %v3015 = vunpack.c.h.bf16 %v1090
    %v3016 = vunpack.c.l.bf16 %v1091
    %v3017 = vunpack.c.h.bf16 %v1091
    %v3018 = vunpack.c.l.bf16 %v1092
    %v3019 = vunpack.c.h.bf16 %v1092
    %v3020 = vunpack.c.l.bf16 %v1093
    %v3021 = vunpack.c.l.bf16 %v1094
    %v3022 = vunpack.c.h.bf16 %v1094
    %v3023 = vunpack.c.l.bf16 %v1095
    %v3024 = vunpack.c.h.bf16 %v1095
    %v3025 = vunpack.c.l.bf16 %v1096
    %v3026 = vunpack.c.h.bf16 %v1096
    %v3027 = vunpack.c.l.bf16 %v1097
    %v3028 = vunpack.c.l.bf16 %v1098
    %v3029 = vunpack.c.h.bf16 %v1098
    %v3030 = vunpack.c.l.bf16 %v1099
    %v3031 = vunpack.c.h.bf16 %v1099
    %v3032 = vunpack.c.l.bf16 %v1100
    %v3033 = vunpack.c.h.bf16 %v1100
    %v3034 = vunpack.c.l.bf16 %v1101
    %v3035 = vunpack.c.l.bf16 %v1102
    %v3036 = vunpack.c.h.bf16 %v1102
    %v3037 = vunpack.c.l.bf16 %v1103
    %v3038 = vunpack.c.h.bf16 %v1103
    %v3039 = vunpack.c.l.bf16 %v1104
    %v3040 = vunpack.c.h.bf16 %v1104
    %v3041 = vunpack.c.l.bf16 %v1105
    %v3042 = vunpack.c.l.bf16 %v1106
    %v3043 = vunpack.c.h.bf16 %v1106
    %v3044 = vunpack.c.l.bf16 %v1107
    %v3045 = vunpack.c.h.bf16 %v1107
    %v3046 = vunpack.c.l.bf16 %v1108
    %v3047 = vunpack.c.h.bf16 %v1108
    %v3048 = vunpack.c.l.bf16 %v1109
    %v3049 = vunpack.c.l.bf16 %v1110
    %v3050 = vunpack.c.h.bf16 %v1110
    %v3051 = vunpack.c.l.bf16 %v1111
    %v3052 = vunpack.c.h.bf16 %v1111
    %v3053 = vunpack.c.l.bf16 %v1112
    %v3054 = vunpack.c.h.bf16 %v1112
    %v3055 = vunpack.c.l.bf16 %v1113
    %v3056 = vunpack.c.l.bf16 %v1114
    %v3057 = vunpack.c.h.bf16 %v1114
    %v3058 = vunpack.c.l.bf16 %v1115
    %v3059 = vunpack.c.h.bf16 %v1115
    %v3060 = vunpack.c.l.bf16 %v1116
    %v3061 = vunpack.c.h.bf16 %v1116
    %v3062 = vunpack.c.l.bf16 %v1117
    %v3063 = vunpack.c.l.bf16 %v1118
    %v3064 = vunpack.c.h.bf16 %v1118
    %v3065 = vunpack.c.l.bf16 %v1119
    %v3066 = vunpack.c.h.bf16 %v1119
    %v3067 = vunpack.c.l.bf16 %v1120
    %v3068 = vunpack.c.h.bf16 %v1120
    %v3069 = vunpack.c.l.bf16 %v1121
    %v3070 = vunpack.c.l.bf16 %v1122
    %v3071 = vunpack.c.h.bf16 %v1122
    %v3072 = vunpack.c.l.bf16 %v1123
    %v3073 = vunpack.c.h.bf16 %v1123
    %v3074 = vunpack.c.l.bf16 %v1124
    %v3075 = vunpack.c.h.bf16 %v1124
    %v3076 = vunpack.c.l.bf16 %v1125
    %v3077 = vunpack.c.l.bf16 %v1126
    %v3078 = vunpack.c.h.bf16 %v1126
    %v3079 = vunpack.c.l.bf16 %v1127
    %v3080 = vunpack.c.h.bf16 %v1127
    %v3081 = vunpack.c.l.bf16 %v1128
    %v3082 = vunpack.c.h.bf16 %v1128
    %v3083 = vunpack.c.l.bf16 %v1129
    %v3084 = vunpack.c.l.bf16 %v1130
    %v3085 = vunpack.c.h.bf16 %v1130
    %v3086 = vunpack.c.l.bf16 %v1131
    %v3087 = vunpack.c.h.bf16 %v1131
    %v3088 = vunpack.c.l.bf16 %v1132
    %v3089 = vunpack.c.h.bf16 %v1132
    %v3090 = vunpack.c.l.bf16 %v1133
    %v3091 = vunpack.c.l.bf16 %v1134
    %v3092 = vunpack.c.h.bf16 %v1134
    %v3093 = vunpack.c.l.bf16 %v1135
    %v3094 = vunpack.c.h.bf16 %v1135
    %v3095 = vunpack.c.l.bf16 %v1136
    %v3096 = vunpack.c.h.bf16 %v1136
    %v3097 = vunpack.c.l.bf16 %v1137
    %v3098 = vunpack.c.l.bf16 %v1138
    %v3099 = vunpack.c.h.bf16 %v1138
    %v3100 = vunpack.c.l.bf16 %v1139
    %v3101 = vunpack.c.h.bf16 %v1139
    %v3102 = vunpack.c.l.bf16 %v1140
    %v3103 = vunpack.c.h.bf16 %v1140
    %v3104 = vunpack.c.l.bf16 %v1141
    %v3105 = vunpack.c.l.bf16 %v1142
    %v3106 = vunpack.c.h.bf16 %v1142
    %v3107 = vunpack.c.l.bf16 %v1143
    %v3108 = vunpack.c.h.bf16 %v1143
    %v3109 = vunpack.c.l.bf16 %v1144
    %v3110 = vunpack.c.h.bf16 %v1144
    %v3111 = vunpack.c.l.bf16 %v1145
    %v3112 = vunpack.c.l.bf16 %v1146
    %v3113 = vunpack.c.h.bf16 %v1146
    %v3114 = vunpack.c.l.bf16 %v1147
    %v3115 = vunpack.c.h.bf16 %v1147
    %v3116 = vunpack.c.l.bf16 %v1148
    %v3117 = vunpack.c.h.bf16 %v1148
    %v3118 = vunpack.c.l.bf16 %v1149
    %v3119 = vunpack.c.l.bf16 %v1150
    %v3120 = vunpack.c.h.bf16 %v1150
    %v3121 = vunpack.c.l.bf16 %v1151
    %v3122 = vunpack.c.h.bf16 %v1151
    %v3123 = vunpack.c.l.bf16 %v1152
    %v3124 = vunpack.c.h.bf16 %v1152
    %v3125 = vunpack.c.l.bf16 %v1153
    %v3126 = vunpack.c.l.bf16 %v1154
    %v3127 = vunpack.c.h.bf16 %v1154
    %v3128 = vunpack.c.l.bf16 %v1155
    %v3129 = vunpack.c.h.bf16 %v1155
    %v3130 = vunpack.c.l.bf16 %v1156
    %v3131 = vunpack.c.h.bf16 %v1156
    %v3132 = vunpack.c.l.bf16 %v1157
    %v3133 = vunpack.c.l.bf16 %v1158
    %v3134 = vunpack.c.h.bf16 %v1158
    %v3135 = vunpack.c.l.bf16 %v1159
    %v3136 = vunpack.c.h.bf16 %v1159
    %v3137 = vunpack.c.l.bf16 %v1160
    %v3138 = vunpack.c.h.bf16 %v1160
    %v3139 = vunpack.c.l.bf16 %v1161
    %v3140 = vunpack.c.l.bf16 %v1162
    %v3141 = vunpack.c.h.bf16 %v1162
    %v3142 = vunpack.c.l.bf16 %v1163
    %v3143 = vunpack.c.h.bf16 %v1163
    %v3144 = vunpack.c.l.bf16 %v1164
    %v3145 = vunpack.c.h.bf16 %v1164
    %v3146 = vunpack.c.l.bf16 %v1165
    %v3147 = vunpack.c.l.bf16 %v1166
    %v3148 = vunpack.c.h.bf16 %v1166
    %v3149 = vunpack.c.l.bf16 %v1167
    %v3150 = vunpack.c.h.bf16 %v1167
    %v3151 = vunpack.c.l.bf16 %v1168
    %v3152 = vunpack.c.h.bf16 %v1168
    %v3153 = vunpack.c.l.bf16 %v1169
    %v3154 = vunpack.c.l.bf16 %v1170
    %v3155 = vunpack.c.h.bf16 %v1170
    %v3156 = vunpack.c.l.bf16 %v1171
    %v3157 = vunpack.c.h.bf16 %v1171
    %v3158 = vunpack.c.l.bf16 %v1172
    %v3159 = vunpack.c.h.bf16 %v1172
    %v3160 = vunpack.c.l.bf16 %v1173
    %v3161 = vunpack.c.l.bf16 %v1174
    %v3162 = vunpack.c.h.bf16 %v1174
    %v3163 = vunpack.c.l.bf16 %v1175
    %v3164 = vunpack.c.h.bf16 %v1175
    %v3165 = vunpack.c.l.bf16 %v1176
    %v3166 = vunpack.c.h.bf16 %v1176
    %v3167 = vunpack.c.l.bf16 %v1177
    %v3168 = vunpack.c.l.bf16 %v1178
    %v3169 = vunpack.c.h.bf16 %v1178
    %v3170 = vunpack.c.l.bf16 %v1179
    %v3171 = vunpack.c.h.bf16 %v1179
    %v3172 = vunpack.c.l.bf16 %v1180
    %v3173 = vunpack.c.h.bf16 %v1180
    %v3174 = vunpack.c.l.bf16 %v1181
    %v3175 = vunpack.c.l.bf16 %v1182
    %v3176 = vunpack.c.h.bf16 %v1182
    %v3177 = vunpack.c.l.bf16 %v1183
    %v3178 = vunpack.c.h.bf16 %v1183
    %v3179 = vunpack.c.l.bf16 %v1184
    %v3180 = vunpack.c.h.bf16 %v1184
    %v3181 = vunpack.c.l.bf16 %v1185
    %v3182 = vunpack.c.l.bf16 %v1186
    %v3183 = vunpack.c.h.bf16 %v1186
    %v3184 = vunpack.c.l.bf16 %v1187
    %v3185 = vunpack.c.h.bf16 %v1187
    %v3186 = vunpack.c.l.bf16 %v1188
    %v3187 = vunpack.c.h.bf16 %v1188
    %v3188 = vunpack.c.l.bf16 %v1189
    %v3189 = vunpack.c.l.bf16 %v1190
    %v3190 = vunpack.c.h.bf16 %v1190
    %v3191 = vunpack.c.l.bf16 %v1191
    %v3192 = vunpack.c.h.bf16 %v1191
    %v3193 = vunpack.c.l.bf16 %v1192
    %v3194 = vunpack.c.h.bf16 %v1192
    %v3195 = vunpack.c.l.bf16 %v1193
    %v3196 = vunpack.c.l.bf16 %v1194
    %v3197 = vunpack.c.h.bf16 %v1194
    %v3198 = vunpack.c.l.bf16 %v1195
    %v3199 = vunpack.c.h.bf16 %v1195
    %v3200 = vunpack.c.l.bf16 %v1196
    %v3201 = vunpack.c.h.bf16 %v1196
    %v3202 = vunpack.c.l.bf16 %v1197
    %v3203 = vunpack.c.l.bf16 %v1198
    %v3204 = vunpack.c.h.bf16 %v1198
    %v3205 = vunpack.c.l.bf16 %v1199
    %v3206 = vunpack.c.h.bf16 %v1199
    %v3207 = vunpack.c.l.bf16 %v1200
    %v3208 = vunpack.c.h.bf16 %v1200
    %v3209 = vunpack.c.l.bf16 %v1201
    %v3210 = vunpack.c.l.bf16 %v1202
    %v3211 = vunpack.c.h.bf16 %v1202
    %v3212 = vunpack.c.l.bf16 %v1203
    %v3213 = vunpack.c.h.bf16 %v1203
    %v3214 = vunpack.c.l.bf16 %v1204
    %v3215 = vunpack.c.h.bf16 %v1204
    %v3216 = vunpack.c.l.bf16 %v1205
    %v3217 = vunpack.c.l.bf16 %v1206
    %v3218 = vunpack.c.h.bf16 %v1206
    %v3219 = vunpack.c.l.bf16 %v1207
    %v3220 = vunpack.c.h.bf16 %v1207
    %v3221 = vunpack.c.l.bf16 %v1208
    %v3222 = vunpack.c.h.bf16 %v1208
    %v3223 = vunpack.c.l.bf16 %v1209
    %v3224 = vunpack.c.l.bf16 %v1210
    %v3225 = vunpack.c.h.bf16 %v1210
    %v3226 = vunpack.c.l.bf16 %v1211
    %v3227 = vunpack.c.h.bf16 %v1211
    %v3228 = vunpack.c.l.bf16 %v1212
    %v3229 = vunpack.c.h.bf16 %v1212
    %v3230 = vunpack.c.l.bf16 %v1213
    %v3231 = vunpack.c.l.bf16 %v1214
    %v3232 = vunpack.c.h.bf16 %v1214
    %v3233 = vunpack.c.l.bf16 %v1215
    %v3234 = vunpack.c.h.bf16 %v1215
    %v3235 = vunpack.c.l.bf16 %v1216
    %v3236 = vunpack.c.h.bf16 %v1216
    %v3237 = vunpack.c.l.bf16 %v1217
    %v3238 = vunpack.c.l.bf16 %v1218
    %v3239 = vunpack.c.h.bf16 %v1218
    %v3240 = vunpack.c.l.bf16 %v1219
    %v3241 = vunpack.c.h.bf16 %v1219
    %v3242 = vunpack.c.l.bf16 %v1220
    %v3243 = vunpack.c.h.bf16 %v1220
    %v3244 = vunpack.c.l.bf16 %v1221
    %v3245 = vunpack.c.l.bf16 %v1222
    %v3246 = vunpack.c.h.bf16 %v1222
    %v3247 = vunpack.c.l.bf16 %v1223
    %v3248 = vunpack.c.h.bf16 %v1223
    %v3249 = vunpack.c.l.bf16 %v1224
    %v3250 = vunpack.c.h.bf16 %v1224
    %v3251 = vunpack.c.l.bf16 %v1225
    %v3252 = vunpack.c.l.bf16 %v1226
    %v3253 = vunpack.c.h.bf16 %v1226
    %v3254 = vunpack.c.l.bf16 %v1227
    %v3255 = vunpack.c.h.bf16 %v1227
    %v3256 = vunpack.c.l.bf16 %v1228
    %v3257 = vunpack.c.h.bf16 %v1228
    %v3258 = vunpack.c.l.bf16 %v1229
    %v3259 = vunpack.c.l.bf16 %v1230
    %v3260 = vunpack.c.h.bf16 %v1230
    %v3261 = vunpack.c.l.bf16 %v1231
    %v3262 = vunpack.c.h.bf16 %v1231
    %v3263 = vunpack.c.l.bf16 %v1232
    %v3264 = vunpack.c.h.bf16 %v1232
    %v3265 = vunpack.c.l.bf16 %v1233
    %v3266 = vunpack.c.l.bf16 %v1234
    %v3267 = vunpack.c.h.bf16 %v1234
    %v3268 = vunpack.c.l.bf16 %v1235
    %v3269 = vunpack.c.h.bf16 %v1235
    %v3270 = vunpack.c.l.bf16 %v1236
    %v3271 = vunpack.c.h.bf16 %v1236
    %v3272 = vunpack.c.l.bf16 %v1237
    %v3273 = vunpack.c.l.bf16 %v1238
    %v3274 = vunpack.c.h.bf16 %v1238
    %v3275 = vunpack.c.l.bf16 %v1239
    %v3276 = vunpack.c.h.bf16 %v1239
    %v3277 = vunpack.c.l.bf16 %v1240
    %v3278 = vunpack.c.h.bf16 %v1240
    %v3279 = vunpack.c.l.bf16 %v1241
    %v3280 = vunpack.c.l.bf16 %v1242
    %v3281 = vunpack.c.h.bf16 %v1242
    %v3282 = vunpack.c.l.bf16 %v1243
    %v3283 = vunpack.c.h.bf16 %v1243
    %v3284 = vunpack.c.l.bf16 %v1244
    %v3285 = vunpack.c.h.bf16 %v1244
    %v3286 = vunpack.c.l.bf16 %v1245
    %v3287 = vunpack.c.l.bf16 %v1246
    %v3288 = vunpack.c.h.bf16 %v1246
    %v3289 = vunpack.c.l.bf16 %v1247
    %v3290 = vunpack.c.h.bf16 %v1247
    %v3291 = vunpack.c.l.bf16 %v1248
    %v3292 = vunpack.c.h.bf16 %v1248
    %v3293 = vunpack.c.l.bf16 %v1249
    %v3294 = vunpack.c.l.bf16 %v1250
    %v3295 = vunpack.c.h.bf16 %v1250
    %v3296 = vunpack.c.l.bf16 %v1251
    %v3297 = vunpack.c.h.bf16 %v1251
    %v3298 = vunpack.c.l.bf16 %v1252
    %v3299 = vunpack.c.h.bf16 %v1252
    %v3300 = vunpack.c.l.bf16 %v1253
    %v3301 = vunpack.c.l.bf16 %v1254
    %v3302 = vunpack.c.h.bf16 %v1254
    %v3303 = vunpack.c.l.bf16 %v1255
    %v3304 = vunpack.c.h.bf16 %v1255
    %v3305 = vunpack.c.l.bf16 %v1256
    %v3306 = vunpack.c.h.bf16 %v1256
    %v3307 = vunpack.c.l.bf16 %v1257
    %v3308 = vunpack.c.l.bf16 %v1258
    %v3309 = vunpack.c.h.bf16 %v1258
    %v3310 = vunpack.c.l.bf16 %v1259
    %v3311 = vunpack.c.h.bf16 %v1259
    %v3312 = vunpack.c.l.bf16 %v1260
    %v3313 = vunpack.c.h.bf16 %v1260
    %v3314 = vunpack.c.l.bf16 %v1261
    %v3315 = vunpack.c.l.bf16 %v1262
    %v3316 = vunpack.c.h.bf16 %v1262
    %v3317 = vunpack.c.l.bf16 %v1263
    %v3318 = vunpack.c.h.bf16 %v1263
    %v3319 = vunpack.c.l.bf16 %v1264
    %v3320 = vunpack.c.h.bf16 %v1264
    %v3321 = vunpack.c.l.bf16 %v1265
    %v3322 = vunpack.c.l.bf16 %v1266
    %v3323 = vunpack.c.h.bf16 %v1266
    %v3324 = vunpack.c.l.bf16 %v1267
    %v3325 = vunpack.c.h.bf16 %v1267
    %v3326 = vunpack.c.l.bf16 %v1268
    %v3327 = vunpack.c.h.bf16 %v1268
    %v3328 = vunpack.c.l.bf16 %v1269
    %v3329 = vunpack.c.l.bf16 %v1270
    %v3330 = vunpack.c.h.bf16 %v1270
    %v3331 = vunpack.c.l.bf16 %v1271
    %v3332 = vunpack.c.h.bf16 %v1271
    %v3333 = vunpack.c.l.bf16 %v1272
    %v3334 = vunpack.c.h.bf16 %v1272
    %v3335 = vunpack.c.l.bf16 %v1273
    %v3336 = vunpack.c.l.bf16 %v1274
    %v3337 = vunpack.c.h.bf16 %v1274
    %v3338 = vunpack.c.l.bf16 %v1275
    %v3339 = vunpack.c.h.bf16 %v1275
    %v3340 = vunpack.c.l.bf16 %v1276
    %v3341 = vunpack.c.h.bf16 %v1276
    %v3342 = vunpack.c.l.bf16 %v1277
    %v3343 = vunpack.c.l.bf16 %v1278
    %v3344 = vunpack.c.h.bf16 %v1278
    %v3345 = vunpack.c.l.bf16 %v1279
    %v3346 = vunpack.c.h.bf16 %v1279
    %v3347 = vunpack.c.l.bf16 %v1280
    %v3348 = vunpack.c.h.bf16 %v1280
    %v3349 = vunpack.c.l.bf16 %v1281
    %v3350 = vunpack.c.l.bf16 %v1282
    %v3351 = vunpack.c.h.bf16 %v1282
    %v3352 = vunpack.c.l.bf16 %v1283
    %v3353 = vunpack.c.h.bf16 %v1283
    %v3354 = vunpack.c.l.bf16 %v1284
    %v3355 = vunpack.c.h.bf16 %v1284
    %v3356 = vunpack.c.l.bf16 %v1285
    %v3357 = vunpack.c.l.bf16 %v1286
    %v3358 = vunpack.c.h.bf16 %v1286
    %v3359 = vunpack.c.l.bf16 %v1287
    %v3360 = vunpack.c.h.bf16 %v1287
    %v3361 = vunpack.c.l.bf16 %v1288
    %v3362 = vunpack.c.h.bf16 %v1288
    %v3363 = vunpack.c.l.bf16 %v1289
    %v3364 = vunpack.c.l.bf16 %v1290
    %v3365 = vunpack.c.h.bf16 %v1290
    %v3366 = vunpack.c.l.bf16 %v1291
    %v3367 = vunpack.c.h.bf16 %v1291
    %v3368 = vunpack.c.l.bf16 %v1292
    %v3369 = vunpack.c.h.bf16 %v1292
    %v3370 = vunpack.c.l.bf16 %v1293
    %v3371 = vunpack.c.l.bf16 %v1294
    %v3372 = vunpack.c.h.bf16 %v1294
    %v3373 = vunpack.c.l.bf16 %v1295
    %v3374 = vunpack.c.h.bf16 %v1295
    %v3375 = vunpack.c.l.bf16 %v1296
    %v3376 = vunpack.c.h.bf16 %v1296
    %v3377 = vunpack.c.l.bf16 %v1297
    %v3378 = vunpack.c.l.bf16 %v1298
    %v3379 = vunpack.c.h.bf16 %v1298
    %v3380 = vunpack.c.l.bf16 %v1299
    %v3381 = vunpack.c.h.bf16 %v1299
    %v3382 = vunpack.c.l.bf16 %v1300
    %v3383 = vunpack.c.h.bf16 %v1300
    %v3384 = vunpack.c.l.bf16 %v1301
    %v3385 = vunpack.c.l.bf16 %v1302
    %v3386 = vunpack.c.h.bf16 %v1302
    %v3387 = vunpack.c.l.bf16 %v1303
    %v3388 = vunpack.c.h.bf16 %v1303
    %v3389 = vunpack.c.l.bf16 %v1304
    %v3390 = vunpack.c.h.bf16 %v1304
    %v3391 = vunpack.c.l.bf16 %v1305
    %v3392 = vunpack.c.l.bf16 %v1306
    %v3393 = vunpack.c.h.bf16 %v1306
    %v3394 = vunpack.c.l.bf16 %v1307
    %v3395 = vunpack.c.h.bf16 %v1307
    %v3396 = vunpack.c.l.bf16 %v1308
    %v3397 = vunpack.c.h.bf16 %v1308
    %v3398 = vunpack.c.l.bf16 %v1309
    %v3399 = vunpack.c.l.bf16 %v1310
    %v3400 = vunpack.c.h.bf16 %v1310
    %v3401 = vunpack.c.l.bf16 %v1311
    %v3402 = vunpack.c.h.bf16 %v1311
    %v3403 = vunpack.c.l.bf16 %v1312
    %v3404 = vunpack.c.h.bf16 %v1312
    %v3405 = vunpack.c.l.bf16 %v1313
    %v3406 = vunpack.c.l.bf16 %v1314
    %v3407 = vunpack.c.h.bf16 %v1314
    %v3408 = vunpack.c.l.bf16 %v1315
    %v3409 = vunpack.c.h.bf16 %v1315
    %v3410 = vunpack.c.l.bf16 %v1316
    %v3411 = vunpack.c.h.bf16 %v1316
    %v3412 = vunpack.c.l.bf16 %v1317
    %v3413 = vunpack.c.l.bf16 %v1318
    %v3414 = vunpack.c.h.bf16 %v1318
    %v3415 = vunpack.c.l.bf16 %v1319
    %v3416 = vunpack.c.h.bf16 %v1319
    %v3417 = vunpack.c.l.bf16 %v1320
    %v3418 = vunpack.c.h.bf16 %v1320
    %v3419 = vunpack.c.l.bf16 %v1321
    %v3420 = vunpack.c.l.bf16 %v1322
    %v3421 = vunpack.c.h.bf16 %v1322
    %v3422 = vunpack.c.l.bf16 %v1323
    %v3423 = vunpack.c.h.bf16 %v1323
    %v3424 = vunpack.c.l.bf16 %v1324
    %v3425 = vunpack.c.h.bf16 %v1324
    %v3426 = vunpack.c.l.bf16 %v1325
    %v3427 = vunpack.c.l.bf16 %v1326
    %v3428 = vunpack.c.h.bf16 %v1326
    %v3429 = vunpack.c.l.bf16 %v1327
    %v3430 = vunpack.c.h.bf16 %v1327
    %v3431 = vunpack.c.l.bf16 %v1328
    %v3432 = vunpack.c.h.bf16 %v1328
    %v3433 = vunpack.c.l.bf16 %v1329
    %v3434 = vunpack.c.l.bf16 %v1330
    %v3435 = vunpack.c.h.bf16 %v1330
    %v3436 = vunpack.c.l.bf16 %v1331
    %v3437 = vunpack.c.h.bf16 %v1331
    %v3438 = vunpack.c.l.bf16 %v1332
    %v3439 = vunpack.c.h.bf16 %v1332
    %v3440 = vunpack.c.l.bf16 %v1333
    %v3441 = vunpack.c.l.bf16 %v1334
    %v3442 = vunpack.c.h.bf16 %v1334
    %v3443 = vunpack.c.l.bf16 %v1335
    %v3444 = vunpack.c.h.bf16 %v1335
    %v3445 = vunpack.c.l.bf16 %v1336
    %v3446 = vunpack.c.h.bf16 %v1336
    %v3447 = vunpack.c.l.bf16 %v1337
    %v3448 = vunpack.c.l.bf16 %v1338
    %v3449 = vunpack.c.h.bf16 %v1338
    %v3450 = vunpack.c.l.bf16 %v1339
    %v3451 = vunpack.c.h.bf16 %v1339
    %v3452 = vunpack.c.l.bf16 %v1340
    %v3453 = vunpack.c.h.bf16 %v1340
    %v3454 = vunpack.c.l.bf16 %v1341
    %v3455 = vunpack.c.l.bf16 %v1342
    %v3456 = vunpack.c.h.bf16 %v1342
    %v3457 = vunpack.c.l.bf16 %v1343
    %v3458 = vunpack.c.h.bf16 %v1343
    %v3459 = vunpack.c.l.bf16 %v1344
    %v3460 = vunpack.c.h.bf16 %v1344
    %v3461 = vunpack.c.l.bf16 %v1345
    %v3462 = vunpack.c.l.bf16 %v1346
    %v3463 = vunpack.c.h.bf16 %v1346
    %v3464 = vunpack.c.l.bf16 %v1347
    %v3465 = vunpack.c.h.bf16 %v1347
    %v3466 = vunpack.c.l.bf16 %v1348
    %v3467 = vunpack.c.h.bf16 %v1348
    %v3468 = vunpack.c.l.bf16 %v1349
    %v3469 = vunpack.c.l.bf16 %v1350
    %v3470 = vunpack.c.h.bf16 %v1350
    %v3471 = vunpack.c.l.bf16 %v1351
    %v3472 = vunpack.c.h.bf16 %v1351
    %v3473 = vunpack.c.l.bf16 %v1352
    %v3474 = vunpack.c.h.bf16 %v1352
    %v3475 = vunpack.c.l.bf16 %v1353
    %v3476 = vunpack.c.l.bf16 %v1354
    %v3477 = vunpack.c.h.bf16 %v1354
    %v3478 = vunpack.c.l.bf16 %v1355
    %v3479 = vunpack.c.h.bf16 %v1355
    %v3480 = vunpack.c.l.bf16 %v1356
    %v3481 = vunpack.c.h.bf16 %v1356
    %v3482 = vunpack.c.l.bf16 %v1357
    %v3483 = vunpack.c.l.bf16 %v1358
    %v3484 = vunpack.c.h.bf16 %v1358
    %v3485 = vunpack.c.l.bf16 %v1359
    %v3486 = vunpack.c.h.bf16 %v1359
    %v3487 = vunpack.c.l.bf16 %v1360
    %v3488 = vunpack.c.h.bf16 %v1360
    %v3489 = vunpack.c.l.bf16 %v1361
    %v3490 = vunpack.c.l.bf16 %v1362
    %v3491 = vunpack.c.h.bf16 %v1362
    %v3492 = vunpack.c.l.bf16 %v1363
    %v3493 = vunpack.c.h.bf16 %v1363
    %v3494 = vunpack.c.l.bf16 %v1364
    %v3495 = vunpack.c.h.bf16 %v1364
    %v3496 = vunpack.c.l.bf16 %v1365
    %v3497 = vunpack.c.l.bf16 %v1366
    %v3498 = vunpack.c.h.bf16 %v1366
    %v3499 = vunpack.c.l.bf16 %v1367
    %v3500 = vunpack.c.h.bf16 %v1367
    %v3501 = vunpack.c.l.bf16 %v1368
    %v3502 = vunpack.c.h.bf16 %v1368
    %v3503 = vunpack.c.l.bf16 %v1369
    %v3504 = vunpack.c.l.bf16 %v1370
    %v3505 = vunpack.c.h.bf16 %v1370
    %v3506 = vunpack.c.l.bf16 %v1371
    %v3507 = vunpack.c.h.bf16 %v1371
    %v3508 = vunpack.c.l.bf16 %v1372
    %v3509 = vunpack.c.h.bf16 %v1372
    %v3510 = vunpack.c.l.bf16 %v1373
    %v3511 = vunpack.c.l.bf16 %v1374
    %v3512 = vunpack.c.h.bf16 %v1374
    %v3513 = vunpack.c.l.bf16 %v1375
    %v3514 = vunpack.c.h.bf16 %v1375
    %v3515 = vunpack.c.l.bf16 %v1376
    %v3516 = vunpack.c.h.bf16 %v1376
    %v3517 = vunpack.c.l.bf16 %v1377
    %v3518 = vunpack.c.l.bf16 %v1378
    %v3519 = vunpack.c.h.bf16 %v1378
    %v3520 = vunpack.c.l.bf16 %v1379
    %v3521 = vunpack.c.h.bf16 %v1379
    %v3522 = vunpack.c.l.bf16 %v1380
    %v3523 = vunpack.c.h.bf16 %v1380
    %v3524 = vunpack.c.l.bf16 %v1381
    %v3525 = vunpack.c.l.bf16 %v1382
    %v3526 = vunpack.c.h.bf16 %v1382
    %v3527 = vunpack.c.l.bf16 %v1383
    %v3528 = vunpack.c.h.bf16 %v1383
    %v3529 = vunpack.c.l.bf16 %v1384
    %v3530 = vunpack.c.h.bf16 %v1384
    %v3531 = vunpack.c.l.bf16 %v1385
    %v3532 = vunpack.c.l.bf16 %v1386
    %v3533 = vunpack.c.h.bf16 %v1386
    %v3534 = vunpack.c.l.bf16 %v1387
    %v3535 = vunpack.c.h.bf16 %v1387
    %v3536 = vunpack.c.l.bf16 %v1388
    %v3537 = vunpack.c.h.bf16 %v1388
    %v3538 = vunpack.c.l.bf16 %v1389
    %v3539 = vunpack.c.l.bf16 %v1390
    %v3540 = vunpack.c.h.bf16 %v1390
    %v3541 = vunpack.c.l.bf16 %v1391
    %v3542 = vunpack.c.h.bf16 %v1391
    %v3543 = vunpack.c.l.bf16 %v1392
    %v3544 = vunpack.c.h.bf16 %v1392
    %v3545 = vunpack.c.l.bf16 %v1393
    %v3546 = vunpack.c.l.bf16 %v1394
    %v3547 = vunpack.c.h.bf16 %v1394
    %v3548 = vunpack.c.l.bf16 %v1395
    %v3549 = vunpack.c.h.bf16 %v1395
    %v3550 = vunpack.c.l.bf16 %v1396
    %v3551 = vunpack.c.h.bf16 %v1396
    %v3552 = vunpack.c.l.bf16 %v1397
    %v3553 = vunpack.c.l.bf16 %v1398
    %v3554 = vunpack.c.h.bf16 %v1398
    %v3555 = vunpack.c.l.bf16 %v1399
    %v3556 = vunpack.c.h.bf16 %v1399
    %v3557 = vunpack.c.l.bf16 %v1400
    %v3558 = vunpack.c.h.bf16 %v1400
    %v3559 = vunpack.c.l.bf16 %v1401
    %v3560 = vunpack.c.l.bf16 %v1402
    %v3561 = vunpack.c.h.bf16 %v1402
    %v3562 = vunpack.c.l.bf16 %v1403
    %v3563 = vunpack.c.h.bf16 %v1403
    %v3564 = vunpack.c.l.bf16 %v1404
    %v3565 = vunpack.c.h.bf16 %v1404
    %v3566 = vunpack.c.l.bf16 %v1405
    %v3567 = vunpack.c.l.bf16 %v1406
    %v3568 = vunpack.c.h.bf16 %v1406
    %v3569 = vunpack.c.l.bf16 %v1407
    %v3570 = vunpack.c.h.bf16 %v1407
    %v3571 = vunpack.c.l.bf16 %v1408
    %v3572 = vunpack.c.h.bf16 %v1408
    %v3573 = vunpack.c.l.bf16 %v1409
    %v3574 = vunpack.c.l.bf16 %v1410
    %v3575 = vunpack.c.h.bf16 %v1410
    %v3576 = vunpack.c.l.bf16 %v1411
    %v3577 = vunpack.c.h.bf16 %v1411
    %v3578 = vunpack.c.l.bf16 %v1412
    %v3579 = vunpack.c.h.bf16 %v1412
    %v3580 = vunpack.c.l.bf16 %v1413
    %v3581 = vunpack.c.l.bf16 %v1414
    %v3582 = vunpack.c.h.bf16 %v1414
    %v3583 = vunpack.c.l.bf16 %v1415
    %v3584 = vunpack.c.h.bf16 %v1415
    %v3585 = vunpack.c.l.bf16 %v1416
    %v3586 = vunpack.c.h.bf16 %v1416
    %v3587 = vunpack.c.l.bf16 %v1417
    %v3588 = vunpack.c.l.bf16 %v1418
    %v3589 = vunpack.c.h.bf16 %v1418
    %v3590 = vunpack.c.l.bf16 %v1419
    %v3591 = vunpack.c.h.bf16 %v1419
    %v3592 = vunpack.c.l.bf16 %v1420
    %v3593 = vunpack.c.h.bf16 %v1420
    %v3594 = vunpack.c.l.bf16 %v1421
    %v3595 = vunpack.c.l.bf16 %v1422
    %v3596 = vunpack.c.h.bf16 %v1422
    %v3597 = vunpack.c.l.bf16 %v1423
    %v3598 = vunpack.c.h.bf16 %v1423
    %v3599 = vunpack.c.l.bf16 %v1424
    %v3600 = vunpack.c.h.bf16 %v1424
    %v3601 = vunpack.c.l.bf16 %v1425
    %v3602 = vunpack.c.l.bf16 %v1426
    %v3603 = vunpack.c.h.bf16 %v1426
    %v3604 = vunpack.c.l.bf16 %v1427
    %v3605 = vunpack.c.h.bf16 %v1427
    %v3606 = vunpack.c.l.bf16 %v1428
    %v3607 = vunpack.c.h.bf16 %v1428
    %v3608 = vunpack.c.l.bf16 %v1429
    %v3609 = vunpack.c.l.bf16 %v1430
    %v3610 = vunpack.c.h.bf16 %v1430
    %v3611 = vunpack.c.l.bf16 %v1431
    %v3612 = vunpack.c.h.bf16 %v1431
    %v3613 = vunpack.c.l.bf16 %v1432
    %v3614 = vunpack.c.h.bf16 %v1432
    %v3615 = vunpack.c.l.bf16 %v1433
    %v3616 = vunpack.c.l.bf16 %v1434
    %v3617 = vunpack.c.h.bf16 %v1434
    %v3618 = vunpack.c.l.bf16 %v1435
    %v3619 = vunpack.c.h.bf16 %v1435
    %v3620 = vunpack.c.l.bf16 %v1436
    %v3621 = vunpack.c.h.bf16 %v1436
    %v3622 = vunpack.c.l.bf16 %v1437
    %v3623 = vunpack.c.l.bf16 %v1438
    %v3624 = vunpack.c.h.bf16 %v1438
    %v3625 = vunpack.c.l.bf16 %v1439
    %v3626 = vunpack.c.h.bf16 %v1439
    %v3627 = vunpack.c.l.bf16 %v1440
    %v3628 = vunpack.c.h.bf16 %v1440
    %v3629 = vunpack.c.l.bf16 %v1441
    %v3630 = vunpack.c.l.bf16 %v1442
    %v3631 = vunpack.c.h.bf16 %v1442
    %v3632 = vunpack.c.l.bf16 %v1443
    %v3633 = vunpack.c.h.bf16 %v1443
    %v3634 = vunpack.c.l.bf16 %v1444
    %v3635 = vunpack.c.h.bf16 %v1444
    %v3636 = vunpack.c.l.bf16 %v1445
    %vm3637 = vcmask 556032
    %v3639 = vsel %vm3637, %v193, 0
    %vm3641 = vcmask 1043456
    %v3643 = vsel %vm3641, %v3630, 0
    %v3646 = vsel %vm3641, %v3631, 0
    %v3649 = vsel %vm3641, %v3632, 0
    %v3652 = vsel %vm3641, %v3633, 0
    %v3655 = vsel %vm3641, %v3634, 0
    %v3658 = vsel %vm3641, %v3635, 0
    %v3661 = vsel %vm3641, %v3636, 0
    %3663 = vmatprep.subr.mxu0 %v1552
    %3664 = vmatpush1.msra.mxu0 %v1551
    %3665 = vmatprep.subr.mxu0 %v1545
    %3666 = vmatpush1.msra.mxu0 %v1544
    %3667 = vmatprep.subr.mxu0 %v1538
    %3668 = vmatpush1.msra.mxu0 %v1537
    %3669 = vmatprep.subr.mxu0 %v1531
    %3670 = vmatpush1.msra.mxu0 %v1530
    %3671 = vmatprep.subr.mxu0 %v1524
    %3672 = vmatpush1.msra.mxu0 %v1523
    %3673 = vmatprep.subr.mxu0 %v1517
    %3674 = vmatpush1.msra.mxu0 %v1516
    %3675 = vmatprep.subr.mxu0 %v1510
    %3676 = vmatpush1.msra.mxu0 %v1509
    %3677 = vmatprep.subr.mxu0 %v1503
    %3678 = vmatpush1.msra.mxu0 %v1502
    %3679 = vmatprep.subr.mxu0 %v1496
    %3680 = vmatpush1.msra.mxu0 %v1495
    %3681 = vmatprep.subr.mxu0 %v1489
    %3682 = vmatpush1.msra.mxu0 %v1488
    %3683 = vmatprep.subr.mxu0 %v1482
    %3684 = vmatpush1.msra.mxu0 %v1481
    %3685 = vmatprep.subr.mxu0 %v1475
    %3686 = vmatpush1.msra.mxu0 %v1474
    %3687 = vmatprep.subr.mxu0 %v1468
    %3688 = vmatpush1.msra.mxu0 %v1467
    %3689 = vmatprep.subr.mxu0 %v1461
    %3690 = vmatpush1.msra.mxu0 %v1460
    %3691 = vmatprep.subr.mxu0 %v1454
    %3692 = vmatpush1.msra.mxu0 %v1453
    %3693 = vmatprep.subr.mxu0 %v1447
    %3694 = vmatpush1.msra.mxu0 %v1446
    %3695 = vmatprep.subr.mxu0 %v1664
    %3696 = vmatpush2.msra.mxu0 %v1663
    %3697 = vmatprep.subr.mxu0 %v1657
    %3698 = vmatpush2.msra.mxu0 %v1656
    %3699 = vmatprep.subr.mxu0 %v1650
    %3700 = vmatpush2.msra.mxu0 %v1649
    %3701 = vmatprep.subr.mxu0 %v1643
    %3702 = vmatpush2.msra.mxu0 %v1642
    %3703 = vmatprep.subr.mxu0 %v1636
    %3704 = vmatpush2.msra.mxu0 %v1635
    %3705 = vmatprep.subr.mxu0 %v1629
    %3706 = vmatpush2.msra.mxu0 %v1628
    %3707 = vmatprep.subr.mxu0 %v1622
    %3708 = vmatpush2.msra.mxu0 %v1621
    %3709 = vmatprep.subr.mxu0 %v1615
    %3710 = vmatpush2.msra.mxu0 %v1614
    %3711 = vmatprep.subr.mxu0 %v1608
    %3712 = vmatpush2.msra.mxu0 %v1607
    %3713 = vmatprep.subr.mxu0 %v1601
    %3714 = vmatpush2.msra.mxu0 %v1600
    %3715 = vmatprep.subr.mxu0 %v1594
    %3716 = vmatpush2.msra.mxu0 %v1593
    %3717 = vmatprep.subr.mxu0 %v1587
    %3718 = vmatpush2.msra.mxu0 %v1586
    %3719 = vmatprep.subr.mxu0 %v1580
    %3720 = vmatpush2.msra.mxu0 %v1579
    %3721 = vmatprep.subr.mxu0 %v1573
    %3722 = vmatpush2.msra.mxu0 %v1572
    %3723 = vmatprep.subr.mxu0 %v1566
    %3724 = vmatpush2.msra.mxu0 %v1565
    %3725 = vmatprep.subr.mxu0 %v1559
    %3726 = vmatpush2.msra.mxu0 %v1558
    %3727 = vmatprep.mubr.f32.mxu0 %v175
    %3728 = vmatmul.mubr.f32.gmra.mxu0 %v174
    %v3729 = vpop.f32.mrf.mxu0
    %v3730 = vadd.f32 0.0, %v3729
    %v3731 = vpop.f32.mrf.mxu0
    %v3732 = vadd.f32 0.0, %v3731
    %3733 = vdwg.mxu0
    %3734 = vmatprep.subr.mxu0 %v1776
    %3735 = vmatpush1.msra.mxu0 %v1775
    %3736 = vmatprep.subr.mxu0 %v1769
    %3737 = vmatpush1.msra.mxu0 %v1768
    %3738 = vmatprep.subr.mxu0 %v1762
    %3739 = vmatpush1.msra.mxu0 %v1761
    %3740 = vmatprep.subr.mxu0 %v1755
    %3741 = vmatpush1.msra.mxu0 %v1754
    %3742 = vmatprep.subr.mxu0 %v1748
    %3743 = vmatpush1.msra.mxu0 %v1747
    %3744 = vmatprep.subr.mxu0 %v1741
    %3745 = vmatpush1.msra.mxu0 %v1740
    %3746 = vmatprep.subr.mxu0 %v1734
    %3747 = vmatpush1.msra.mxu0 %v1733
    %3748 = vmatprep.subr.mxu0 %v1727
    %3749 = vmatpush1.msra.mxu0 %v1726
    %3750 = vmatprep.subr.mxu0 %v1720
    %3751 = vmatpush1.msra.mxu0 %v1719
    %3752 = vmatprep.subr.mxu0 %v1713
    %3753 = vmatpush1.msra.mxu0 %v1712
    %3754 = vmatprep.subr.mxu0 %v1706
    %3755 = vmatpush1.msra.mxu0 %v1705
    %3756 = vmatprep.subr.mxu0 %v1699
    %3757 = vmatpush1.msra.mxu0 %v1698
    %3758 = vmatprep.subr.mxu0 %v1692
    %3759 = vmatpush1.msra.mxu0 %v1691
    %3760 = vmatprep.subr.mxu0 %v1685
    %3761 = vmatpush1.msra.mxu0 %v1684
    %3762 = vmatprep.subr.mxu0 %v1678
    %3763 = vmatpush1.msra.mxu0 %v1677
    %3764 = vmatprep.subr.mxu0 %v1671
    %3765 = vmatpush1.msra.mxu0 %v1670
    %3766 = vmatprep.subr.mxu0 %v1888
    %3767 = vmatpush2.msra.mxu0 %v1887
    %3768 = vmatprep.subr.mxu0 %v1881
    %3769 = vmatpush2.msra.mxu0 %v1880
    %3770 = vmatprep.subr.mxu0 %v1874
    %3771 = vmatpush2.msra.mxu0 %v1873
    %3772 = vmatprep.subr.mxu0 %v1867
    %3773 = vmatpush2.msra.mxu0 %v1866
    %3774 = vmatprep.subr.mxu0 %v1860
    %3775 = vmatpush2.msra.mxu0 %v1859
    %3776 = vmatprep.subr.mxu0 %v1853
    %3777 = vmatpush2.msra.mxu0 %v1852
    %3778 = vmatprep.subr.mxu0 %v1846
    %3779 = vmatpush2.msra.mxu0 %v1845
    %3780 = vmatprep.subr.mxu0 %v1839
    %3781 = vmatpush2.msra.mxu0 %v1838
    %3782 = vmatprep.subr.mxu0 %v1832
    %3783 = vmatpush2.msra.mxu0 %v1831
    %3784 = vmatprep.subr.mxu0 %v1825
    %3785 = vmatpush2.msra.mxu0 %v1824
    %3786 = vmatprep.subr.mxu0 %v1818
    %3787 = vmatpush2.msra.mxu0 %v1817
    %3788 = vmatprep.subr.mxu0 %v1811
    %3789 = vmatpush2.msra.mxu0 %v1810
    %3790 = vmatprep.subr.mxu0 %v1804
    %3791 = vmatpush2.msra.mxu0 %v1803
    %3792 = vmatprep.subr.mxu0 %v1797
    %3793 = vmatpush2.msra.mxu0 %v1796
    %3794 = vmatprep.subr.mxu0 %v1790
    %3795 = vmatpush2.msra.mxu0 %v1789
    %3796 = vmatprep.subr.mxu0 %v1783
    %3797 = vmatpush2.msra.mxu0 %v1782
    %3798 = vmatprep.mubr.f32.mxu0 %v177
    %3799 = vmatmul.mubr.f32.gmra.mxu0 %v176
    %v3800 = vpop.f32.mrf.mxu0
    %v3801 = vadd.f32 %v3730, %v3800
    %v3802 = vpop.f32.mrf.mxu0
    %v3803 = vadd.f32 %v3732, %v3802
    %3804 = vdwg.mxu0
    %3805 = vmatprep.subr.mxu0 %v2000
    %3806 = vmatpush1.msra.mxu0 %v1999
    %3807 = vmatprep.subr.mxu0 %v1993
    %3808 = vmatpush1.msra.mxu0 %v1992
    %3809 = vmatprep.subr.mxu0 %v1986
    %3810 = vmatpush1.msra.mxu0 %v1985
    %3811 = vmatprep.subr.mxu0 %v1979
    %3812 = vmatpush1.msra.mxu0 %v1978
    %3813 = vmatprep.subr.mxu0 %v1972
    %3814 = vmatpush1.msra.mxu0 %v1971
    %3815 = vmatprep.subr.mxu0 %v1965
    %3816 = vmatpush1.msra.mxu0 %v1964
    %3817 = vmatprep.subr.mxu0 %v1958
    %3818 = vmatpush1.msra.mxu0 %v1957
    %3819 = vmatprep.subr.mxu0 %v1951
    %3820 = vmatpush1.msra.mxu0 %v1950
    %3821 = vmatprep.subr.mxu0 %v1944
    %3822 = vmatpush1.msra.mxu0 %v1943
    %3823 = vmatprep.subr.mxu0 %v1937
    %3824 = vmatpush1.msra.mxu0 %v1936
    %3825 = vmatprep.subr.mxu0 %v1930
    %3826 = vmatpush1.msra.mxu0 %v1929
    %3827 = vmatprep.subr.mxu0 %v1923
    %3828 = vmatpush1.msra.mxu0 %v1922
    %3829 = vmatprep.subr.mxu0 %v1916
    %3830 = vmatpush1.msra.mxu0 %v1915
    %3831 = vmatprep.subr.mxu0 %v1909
    %3832 = vmatpush1.msra.mxu0 %v1908
    %3833 = vmatprep.subr.mxu0 %v1902
    %3834 = vmatpush1.msra.mxu0 %v1901
    %3835 = vmatprep.subr.mxu0 %v1895
    %3836 = vmatpush1.msra.mxu0 %v1894
    %3837 = vmatprep.subr.mxu0 %v2112
    %3838 = vmatpush2.msra.mxu0 %v2111
    %3839 = vmatprep.subr.mxu0 %v2105
    %3840 = vmatpush2.msra.mxu0 %v2104
    %3841 = vmatprep.subr.mxu0 %v2098
    %3842 = vmatpush2.msra.mxu0 %v2097
    %3843 = vmatprep.subr.mxu0 %v2091
    %3844 = vmatpush2.msra.mxu0 %v2090
    %3845 = vmatprep.subr.mxu0 %v2084
    %3846 = vmatpush2.msra.mxu0 %v2083
    %3847 = vmatprep.subr.mxu0 %v2077
    %3848 = vmatpush2.msra.mxu0 %v2076
    %3849 = vmatprep.subr.mxu0 %v2070
    %3850 = vmatpush2.msra.mxu0 %v2069
    %3851 = vmatprep.subr.mxu0 %v2063
    %3852 = vmatpush2.msra.mxu0 %v2062
    %3853 = vmatprep.subr.mxu0 %v2056
    %3854 = vmatpush2.msra.mxu0 %v2055
    %3855 = vmatprep.subr.mxu0 %v2049
    %3856 = vmatpush2.msra.mxu0 %v2048
    %3857 = vmatprep.subr.mxu0 %v2042
    %3858 = vmatpush2.msra.mxu0 %v2041
    %3859 = vmatprep.subr.mxu0 %v2035
    %3860 = vmatpush2.msra.mxu0 %v2034
    %3861 = vmatprep.subr.mxu0 %v2028
    %3862 = vmatpush2.msra.mxu0 %v2027
    %3863 = vmatprep.subr.mxu0 %v2021
    %3864 = vmatpush2.msra.mxu0 %v2020
    %3865 = vmatprep.subr.mxu0 %v2014
    %3866 = vmatpush2.msra.mxu0 %v2013
    %3867 = vmatprep.subr.mxu0 %v2007
    %3868 = vmatpush2.msra.mxu0 %v2006
    %3869 = vmatprep.mubr.f32.mxu0 %v179
    %3870 = vmatmul.mubr.f32.gmra.mxu0 %v178
    %v3871 = vpop.f32.mrf.mxu0
    %v3872 = vadd.f32 %v3801, %v3871
    %v3873 = vpop.f32.mrf.mxu0
    %v3874 = vadd.f32 %v3803, %v3873
    %3875 = vdwg.mxu0
    %3876 = vmatprep.subr.mxu0 %v2224
    %3877 = vmatpush1.msra.mxu0 %v2223
    %3878 = vmatprep.subr.mxu0 %v2217
    %3879 = vmatpush1.msra.mxu0 %v2216
    %3880 = vmatprep.subr.mxu0 %v2210
    %3881 = vmatpush1.msra.mxu0 %v2209
    %3882 = vmatprep.subr.mxu0 %v2203
    %3883 = vmatpush1.msra.mxu0 %v2202
    %3884 = vmatprep.subr.mxu0 %v2196
    %3885 = vmatpush1.msra.mxu0 %v2195
    %3886 = vmatprep.subr.mxu0 %v2189
    %3887 = vmatpush1.msra.mxu0 %v2188
    %3888 = vmatprep.subr.mxu0 %v2182
    %3889 = vmatpush1.msra.mxu0 %v2181
    %3890 = vmatprep.subr.mxu0 %v2175
    %3891 = vmatpush1.msra.mxu0 %v2174
    %3892 = vmatprep.subr.mxu0 %v2168
    %3893 = vmatpush1.msra.mxu0 %v2167
    %3894 = vmatprep.subr.mxu0 %v2161
    %3895 = vmatpush1.msra.mxu0 %v2160
    %3896 = vmatprep.subr.mxu0 %v2154
    %3897 = vmatpush1.msra.mxu0 %v2153
    %3898 = vmatprep.subr.mxu0 %v2147
    %3899 = vmatpush1.msra.mxu0 %v2146
    %3900 = vmatprep.subr.mxu0 %v2140
    %3901 = vmatpush1.msra.mxu0 %v2139
    %3902 = vmatprep.subr.mxu0 %v2133
    %3903 = vmatpush1.msra.mxu0 %v2132
    %3904 = vmatprep.subr.mxu0 %v2126
    %3905 = vmatpush1.msra.mxu0 %v2125
    %3906 = vmatprep.subr.mxu0 %v2119
    %3907 = vmatpush1.msra.mxu0 %v2118
    %3908 = vmatprep.subr.mxu0 %v2336
    %3909 = vmatpush2.msra.mxu0 %v2335
    %3910 = vmatprep.subr.mxu0 %v2329
    %3911 = vmatpush2.msra.mxu0 %v2328
    %3912 = vmatprep.subr.mxu0 %v2322
    %3913 = vmatpush2.msra.mxu0 %v2321
    %3914 = vmatprep.subr.mxu0 %v2315
    %3915 = vmatpush2.msra.mxu0 %v2314
    %3916 = vmatprep.subr.mxu0 %v2308
    %3917 = vmatpush2.msra.mxu0 %v2307
    %3918 = vmatprep.subr.mxu0 %v2301
    %3919 = vmatpush2.msra.mxu0 %v2300
    %3920 = vmatprep.subr.mxu0 %v2294
    %3921 = vmatpush2.msra.mxu0 %v2293
    %3922 = vmatprep.subr.mxu0 %v2287
    %3923 = vmatpush2.msra.mxu0 %v2286
    %3924 = vmatprep.subr.mxu0 %v2280
    %3925 = vmatpush2.msra.mxu0 %v2279
    %3926 = vmatprep.subr.mxu0 %v2273
    %3927 = vmatpush2.msra.mxu0 %v2272
    %3928 = vmatprep.subr.mxu0 %v2266
    %3929 = vmatpush2.msra.mxu0 %v2265
    %3930 = vmatprep.subr.mxu0 %v2259
    %3931 = vmatpush2.msra.mxu0 %v2258
    %3932 = vmatprep.subr.mxu0 %v2252
    %3933 = vmatpush2.msra.mxu0 %v2251
    %3934 = vmatprep.subr.mxu0 %v2245
    %3935 = vmatpush2.msra.mxu0 %v2244
    %3936 = vmatprep.subr.mxu0 %v2238
    %3937 = vmatpush2.msra.mxu0 %v2237
    %3938 = vmatprep.subr.mxu0 %v2231
    %3939 = vmatpush2.msra.mxu0 %v2230
    %3940 = vmatprep.mubr.f32.mxu0 %v181
    %3941 = vmatmul.mubr.f32.gmra.mxu0 %v180
    %v3942 = vpop.f32.mrf.mxu0
    %v3943 = vadd.f32 %v3872, %v3942
    %v3944 = vpop.f32.mrf.mxu0
    %v3945 = vadd.f32 %v3874, %v3944
    %3946 = vdwg.mxu0
    %3947 = vmatprep.subr.mxu0 %v2448
    %3948 = vmatpush1.msra.mxu0 %v2447
    %3949 = vmatprep.subr.mxu0 %v2441
    %3950 = vmatpush1.msra.mxu0 %v2440
    %3951 = vmatprep.subr.mxu0 %v2434
    %3952 = vmatpush1.msra.mxu0 %v2433
    %3953 = vmatprep.subr.mxu0 %v2427
    %3954 = vmatpush1.msra.mxu0 %v2426
    %3955 = vmatprep.subr.mxu0 %v2420
    %3956 = vmatpush1.msra.mxu0 %v2419
    %3957 = vmatprep.subr.mxu0 %v2413
    %3958 = vmatpush1.msra.mxu0 %v2412
    %3959 = vmatprep.subr.mxu0 %v2406
    %3960 = vmatpush1.msra.mxu0 %v2405
    %3961 = vmatprep.subr.mxu0 %v2399
    %3962 = vmatpush1.msra.mxu0 %v2398
    %3963 = vmatprep.subr.mxu0 %v2392
    %3964 = vmatpush1.msra.mxu0 %v2391
    %3965 = vmatprep.subr.mxu0 %v2385
    %3966 = vmatpush1.msra.mxu0 %v2384
    %3967 = vmatprep.subr.mxu0 %v2378
    %3968 = vmatpush1.msra.mxu0 %v2377
    %3969 = vmatprep.subr.mxu0 %v2371
    %3970 = vmatpush1.msra.mxu0 %v2370
    %3971 = vmatprep.subr.mxu0 %v2364
    %3972 = vmatpush1.msra.mxu0 %v2363
    %3973 = vmatprep.subr.mxu0 %v2357
    %3974 = vmatpush1.msra.mxu0 %v2356
    %3975 = vmatprep.subr.mxu0 %v2350
    %3976 = vmatpush1.msra.mxu0 %v2349
    %3977 = vmatprep.subr.mxu0 %v2343
    %3978 = vmatpush1.msra.mxu0 %v2342
    %3979 = vmatprep.subr.mxu0 %v2560
    %3980 = vmatpush2.msra.mxu0 %v2559
    %3981 = vmatprep.subr.mxu0 %v2553
    %3982 = vmatpush2.msra.mxu0 %v2552
    %3983 = vmatprep.subr.mxu0 %v2546
    %3984 = vmatpush2.msra.mxu0 %v2545
    %3985 = vmatprep.subr.mxu0 %v2539
    %3986 = vmatpush2.msra.mxu0 %v2538
    %3987 = vmatprep.subr.mxu0 %v2532
    %3988 = vmatpush2.msra.mxu0 %v2531
    %3989 = vmatprep.subr.mxu0 %v2525
    %3990 = vmatpush2.msra.mxu0 %v2524
    %3991 = vmatprep.subr.mxu0 %v2518
    %3992 = vmatpush2.msra.mxu0 %v2517
    %3993 = vmatprep.subr.mxu0 %v2511
    %3994 = vmatpush2.msra.mxu0 %v2510
    %3995 = vmatprep.subr.mxu0 %v2504
    %3996 = vmatpush2.msra.mxu0 %v2503
    %3997 = vmatprep.subr.mxu0 %v2497
    %3998 = vmatpush2.msra.mxu0 %v2496
    %3999 = vmatprep.subr.mxu0 %v2490
    %4000 = vmatpush2.msra.mxu0 %v2489
    %4001 = vmatprep.subr.mxu0 %v2483
    %4002 = vmatpush2.msra.mxu0 %v2482
    %4003 = vmatprep.subr.mxu0 %v2476
    %4004 = vmatpush2.msra.mxu0 %v2475
    %4005 = vmatprep.subr.mxu0 %v2469
    %4006 = vmatpush2.msra.mxu0 %v2468
    %4007 = vmatprep.subr.mxu0 %v2462
    %4008 = vmatpush2.msra.mxu0 %v2461
    %4009 = vmatprep.subr.mxu0 %v2455
    %4010 = vmatpush2.msra.mxu0 %v2454
    %4011 = vmatprep.mubr.f32.mxu0 %v183
    %4012 = vmatmul.mubr.f32.gmra.mxu0 %v182
    %v4013 = vpop.f32.mrf.mxu0
    %v4014 = vadd.f32 %v3943, %v4013
    %v4015 = vpop.f32.mrf.mxu0
    %v4016 = vadd.f32 %v3945, %v4015
    %4017 = vdwg.mxu0
    %4018 = vmatprep.subr.mxu0 %v2672
    %4019 = vmatpush1.msra.mxu0 %v2671
    %4020 = vmatprep.subr.mxu0 %v2665
    %4021 = vmatpush1.msra.mxu0 %v2664
    %4022 = vmatprep.subr.mxu0 %v2658
    %4023 = vmatpush1.msra.mxu0 %v2657
    %4024 = vmatprep.subr.mxu0 %v2651
    %4025 = vmatpush1.msra.mxu0 %v2650
    %4026 = vmatprep.subr.mxu0 %v2644
    %4027 = vmatpush1.msra.mxu0 %v2643
    %4028 = vmatprep.subr.mxu0 %v2637
    %4029 = vmatpush1.msra.mxu0 %v2636
    %4030 = vmatprep.subr.mxu0 %v2630
    %4031 = vmatpush1.msra.mxu0 %v2629
    %4032 = vmatprep.subr.mxu0 %v2623
    %4033 = vmatpush1.msra.mxu0 %v2622
    %4034 = vmatprep.subr.mxu0 %v2616
    %4035 = vmatpush1.msra.mxu0 %v2615
    %4036 = vmatprep.subr.mxu0 %v2609
    %4037 = vmatpush1.msra.mxu0 %v2608
    %4038 = vmatprep.subr.mxu0 %v2602
    %4039 = vmatpush1.msra.mxu0 %v2601
    %4040 = vmatprep.subr.mxu0 %v2595
    %4041 = vmatpush1.msra.mxu0 %v2594
    %4042 = vmatprep.subr.mxu0 %v2588
    %4043 = vmatpush1.msra.mxu0 %v2587
    %4044 = vmatprep.subr.mxu0 %v2581
    %4045 = vmatpush1.msra.mxu0 %v2580
    %4046 = vmatprep.subr.mxu0 %v2574
    %4047 = vmatpush1.msra.mxu0 %v2573
    %4048 = vmatprep.subr.mxu0 %v2567
    %4049 = vmatpush1.msra.mxu0 %v2566
    %4050 = vmatprep.subr.mxu0 %v2784
    %4051 = vmatpush2.msra.mxu0 %v2783
    %4052 = vmatprep.subr.mxu0 %v2777
    %4053 = vmatpush2.msra.mxu0 %v2776
    %4054 = vmatprep.subr.mxu0 %v2770
    %4055 = vmatpush2.msra.mxu0 %v2769
    %4056 = vmatprep.subr.mxu0 %v2763
    %4057 = vmatpush2.msra.mxu0 %v2762
    %4058 = vmatprep.subr.mxu0 %v2756
    %4059 = vmatpush2.msra.mxu0 %v2755
    %4060 = vmatprep.subr.mxu0 %v2749
    %4061 = vmatpush2.msra.mxu0 %v2748
    %4062 = vmatprep.subr.mxu0 %v2742
    %4063 = vmatpush2.msra.mxu0 %v2741
    %4064 = vmatprep.subr.mxu0 %v2735
    %4065 = vmatpush2.msra.mxu0 %v2734
    %4066 = vmatprep.subr.mxu0 %v2728
    %4067 = vmatpush2.msra.mxu0 %v2727
    %4068 = vmatprep.subr.mxu0 %v2721
    %4069 = vmatpush2.msra.mxu0 %v2720
    %4070 = vmatprep.subr.mxu0 %v2714
    %4071 = vmatpush2.msra.mxu0 %v2713
    %4072 = vmatprep.subr.mxu0 %v2707
    %4073 = vmatpush2.msra.mxu0 %v2706
    %4074 = vmatprep.subr.mxu0 %v2700
    %4075 = vmatpush2.msra.mxu0 %v2699
    %4076 = vmatprep.subr.mxu0 %v2693
    %4077 = vmatpush2.msra.mxu0 %v2692
    %4078 = vmatprep.subr.mxu0 %v2686
    %4079 = vmatpush2.msra.mxu0 %v2685
    %4080 = vmatprep.subr.mxu0 %v2679
    %4081 = vmatpush2.msra.mxu0 %v2678
    %4082 = vmatprep.mubr.f32.mxu0 %v185
    %4083 = vmatmul.mubr.f32.gmra.mxu0 %v184
    %v4084 = vpop.f32.mrf.mxu0
    %v4085 = vadd.f32 %v4014, %v4084
    %v4086 = vpop.f32.mrf.mxu0
    %v4087 = vadd.f32 %v4016, %v4086
    %4088 = vdwg.mxu0
    %4089 = vmatprep.subr.mxu0 %v2896
    %4090 = vmatpush1.msra.mxu0 %v2895
    %4091 = vmatprep.subr.mxu0 %v2889
    %4092 = vmatpush1.msra.mxu0 %v2888
    %4093 = vmatprep.subr.mxu0 %v2882
    %4094 = vmatpush1.msra.mxu0 %v2881
    %4095 = vmatprep.subr.mxu0 %v2875
    %4096 = vmatpush1.msra.mxu0 %v2874
    %4097 = vmatprep.subr.mxu0 %v2868
    %4098 = vmatpush1.msra.mxu0 %v2867
    %4099 = vmatprep.subr.mxu0 %v2861
    %4100 = vmatpush1.msra.mxu0 %v2860
    %4101 = vmatprep.subr.mxu0 %v2854
    %4102 = vmatpush1.msra.mxu0 %v2853
    %4103 = vmatprep.subr.mxu0 %v2847
    %4104 = vmatpush1.msra.mxu0 %v2846
    %4105 = vmatprep.subr.mxu0 %v2840
    %4106 = vmatpush1.msra.mxu0 %v2839
    %4107 = vmatprep.subr.mxu0 %v2833
    %4108 = vmatpush1.msra.mxu0 %v2832
    %4109 = vmatprep.subr.mxu0 %v2826
    %4110 = vmatpush1.msra.mxu0 %v2825
    %4111 = vmatprep.subr.mxu0 %v2819
    %4112 = vmatpush1.msra.mxu0 %v2818
    %4113 = vmatprep.subr.mxu0 %v2812
    %4114 = vmatpush1.msra.mxu0 %v2811
    %4115 = vmatprep.subr.mxu0 %v2805
    %4116 = vmatpush1.msra.mxu0 %v2804
    %4117 = vmatprep.subr.mxu0 %v2798
    %4118 = vmatpush1.msra.mxu0 %v2797
    %4119 = vmatprep.subr.mxu0 %v2791
    %4120 = vmatpush1.msra.mxu0 %v2790
    %4121 = vmatprep.subr.mxu0 %v3008
    %4122 = vmatpush2.msra.mxu0 %v3007
    %4123 = vmatprep.subr.mxu0 %v3001
    %4124 = vmatpush2.msra.mxu0 %v3000
    %4125 = vmatprep.subr.mxu0 %v2994
    %4126 = vmatpush2.msra.mxu0 %v2993
    %4127 = vmatprep.subr.mxu0 %v2987
    %4128 = vmatpush2.msra.mxu0 %v2986
    %4129 = vmatprep.subr.mxu0 %v2980
    %4130 = vmatpush2.msra.mxu0 %v2979
    %4131 = vmatprep.subr.mxu0 %v2973
    %4132 = vmatpush2.msra.mxu0 %v2972
    %4133 = vmatprep.subr.mxu0 %v2966
    %4134 = vmatpush2.msra.mxu0 %v2965
    %4135 = vmatprep.subr.mxu0 %v2959
    %4136 = vmatpush2.msra.mxu0 %v2958
    %4137 = vmatprep.subr.mxu0 %v2952
    %4138 = vmatpush2.msra.mxu0 %v2951
    %4139 = vmatprep.subr.mxu0 %v2945
    %4140 = vmatpush2.msra.mxu0 %v2944
    %4141 = vmatprep.subr.mxu0 %v2938
    %4142 = vmatpush2.msra.mxu0 %v2937
    %4143 = vmatprep.subr.mxu0 %v2931
    %4144 = vmatpush2.msra.mxu0 %v2930
    %4145 = vmatprep.subr.mxu0 %v2924
    %4146 = vmatpush2.msra.mxu0 %v2923
    %4147 = vmatprep.subr.mxu0 %v2917
    %4148 = vmatpush2.msra.mxu0 %v2916
    %4149 = vmatprep.subr.mxu0 %v2910
    %4150 = vmatpush2.msra.mxu0 %v2909
    %4151 = vmatprep.subr.mxu0 %v2903
    %4152 = vmatpush2.msra.mxu0 %v2902
    %4153 = vmatprep.mubr.f32.mxu0 %v187
    %4154 = vmatmul.mubr.f32.gmra.mxu0 %v186
    %v4155 = vpop.f32.mrf.mxu0
    %v4156 = vadd.f32 %v4085, %v4155
    %v4157 = vpop.f32.mrf.mxu0
    %v4158 = vadd.f32 %v4087, %v4157
    %4159 = vdwg.mxu0
    %4160 = vmatprep.subr.mxu0 %v3120
    %4161 = vmatpush1.msra.mxu0 %v3119
    %4162 = vmatprep.subr.mxu0 %v3113
    %4163 = vmatpush1.msra.mxu0 %v3112
    %4164 = vmatprep.subr.mxu0 %v3106
    %4165 = vmatpush1.msra.mxu0 %v3105
    %4166 = vmatprep.subr.mxu0 %v3099
    %4167 = vmatpush1.msra.mxu0 %v3098
    %4168 = vmatprep.subr.mxu0 %v3092
    %4169 = vmatpush1.msra.mxu0 %v3091
    %4170 = vmatprep.subr.mxu0 %v3085
    %4171 = vmatpush1.msra.mxu0 %v3084
    %4172 = vmatprep.subr.mxu0 %v3078
    %4173 = vmatpush1.msra.mxu0 %v3077
    %4174 = vmatprep.subr.mxu0 %v3071
    %4175 = vmatpush1.msra.mxu0 %v3070
    %4176 = vmatprep.subr.mxu0 %v3064
    %4177 = vmatpush1.msra.mxu0 %v3063
    %4178 = vmatprep.subr.mxu0 %v3057
    %4179 = vmatpush1.msra.mxu0 %v3056
    %4180 = vmatprep.subr.mxu0 %v3050
    %4181 = vmatpush1.msra.mxu0 %v3049
    %4182 = vmatprep.subr.mxu0 %v3043
    %4183 = vmatpush1.msra.mxu0 %v3042
    %4184 = vmatprep.subr.mxu0 %v3036
    %4185 = vmatpush1.msra.mxu0 %v3035
    %4186 = vmatprep.subr.mxu0 %v3029
    %4187 = vmatpush1.msra.mxu0 %v3028
    %4188 = vmatprep.subr.mxu0 %v3022
    %4189 = vmatpush1.msra.mxu0 %v3021
    %4190 = vmatprep.subr.mxu0 %v3015
    %4191 = vmatpush1.msra.mxu0 %v3014
    %4192 = vmatprep.subr.mxu0 %v3232
    %4193 = vmatpush2.msra.mxu0 %v3231
    %4194 = vmatprep.subr.mxu0 %v3225
    %4195 = vmatpush2.msra.mxu0 %v3224
    %4196 = vmatprep.subr.mxu0 %v3218
    %4197 = vmatpush2.msra.mxu0 %v3217
    %4198 = vmatprep.subr.mxu0 %v3211
    %4199 = vmatpush2.msra.mxu0 %v3210
    %4200 = vmatprep.subr.mxu0 %v3204
    %4201 = vmatpush2.msra.mxu0 %v3203
    %4202 = vmatprep.subr.mxu0 %v3197
    %4203 = vmatpush2.msra.mxu0 %v3196
    %4204 = vmatprep.subr.mxu0 %v3190
    %4205 = vmatpush2.msra.mxu0 %v3189
    %4206 = vmatprep.subr.mxu0 %v3183
    %4207 = vmatpush2.msra.mxu0 %v3182
    %4208 = vmatprep.subr.mxu0 %v3176
    %4209 = vmatpush2.msra.mxu0 %v3175
    %4210 = vmatprep.subr.mxu0 %v3169
    %4211 = vmatpush2.msra.mxu0 %v3168
    %4212 = vmatprep.subr.mxu0 %v3162
    %4213 = vmatpush2.msra.mxu0 %v3161
    %4214 = vmatprep.subr.mxu0 %v3155
    %4215 = vmatpush2.msra.mxu0 %v3154
    %4216 = vmatprep.subr.mxu0 %v3148
    %4217 = vmatpush2.msra.mxu0 %v3147
    %4218 = vmatprep.subr.mxu0 %v3141
    %4219 = vmatpush2.msra.mxu0 %v3140
    %4220 = vmatprep.subr.mxu0 %v3134
    %4221 = vmatpush2.msra.mxu0 %v3133
    %4222 = vmatprep.subr.mxu0 %v3127
    %4223 = vmatpush2.msra.mxu0 %v3126
    %4224 = vmatprep.mubr.f32.mxu0 %v189
    %4225 = vmatmul.mubr.f32.gmra.mxu0 %v188
    %v4226 = vpop.f32.mrf.mxu0
    %v4227 = vadd.f32 %v4156, %v4226
    %v4228 = vpop.f32.mrf.mxu0
    %v4229 = vadd.f32 %v4158, %v4228
    %4230 = vdwg.mxu0
    %4231 = vmatprep.subr.mxu0 %v3344
    %4232 = vmatpush1.msra.mxu0 %v3343
    %4233 = vmatprep.subr.mxu0 %v3337
    %4234 = vmatpush1.msra.mxu0 %v3336
    %4235 = vmatprep.subr.mxu0 %v3330
    %4236 = vmatpush1.msra.mxu0 %v3329
    %4237 = vmatprep.subr.mxu0 %v3323
    %4238 = vmatpush1.msra.mxu0 %v3322
    %4239 = vmatprep.subr.mxu0 %v3316
    %4240 = vmatpush1.msra.mxu0 %v3315
    %4241 = vmatprep.subr.mxu0 %v3309
    %4242 = vmatpush1.msra.mxu0 %v3308
    %4243 = vmatprep.subr.mxu0 %v3302
    %4244 = vmatpush1.msra.mxu0 %v3301
    %4245 = vmatprep.subr.mxu0 %v3295
    %4246 = vmatpush1.msra.mxu0 %v3294
    %4247 = vmatprep.subr.mxu0 %v3288
    %4248 = vmatpush1.msra.mxu0 %v3287
    %4249 = vmatprep.subr.mxu0 %v3281
    %4250 = vmatpush1.msra.mxu0 %v3280
    %4251 = vmatprep.subr.mxu0 %v3274
    %4252 = vmatpush1.msra.mxu0 %v3273
    %4253 = vmatprep.subr.mxu0 %v3267
    %4254 = vmatpush1.msra.mxu0 %v3266
    %4255 = vmatprep.subr.mxu0 %v3260
    %4256 = vmatpush1.msra.mxu0 %v3259
    %4257 = vmatprep.subr.mxu0 %v3253
    %4258 = vmatpush1.msra.mxu0 %v3252
    %4259 = vmatprep.subr.mxu0 %v3246
    %4260 = vmatpush1.msra.mxu0 %v3245
    %4261 = vmatprep.subr.mxu0 %v3239
    %4262 = vmatpush1.msra.mxu0 %v3238
    %4263 = vmatprep.subr.mxu0 %v3456
    %4264 = vmatpush2.msra.mxu0 %v3455
    %4265 = vmatprep.subr.mxu0 %v3449
    %4266 = vmatpush2.msra.mxu0 %v3448
    %4267 = vmatprep.subr.mxu0 %v3442
    %4268 = vmatpush2.msra.mxu0 %v3441
    %4269 = vmatprep.subr.mxu0 %v3435
    %4270 = vmatpush2.msra.mxu0 %v3434
    %4271 = vmatprep.subr.mxu0 %v3428
    %4272 = vmatpush2.msra.mxu0 %v3427
    %4273 = vmatprep.subr.mxu0 %v3421
    %4274 = vmatpush2.msra.mxu0 %v3420
    %4275 = vmatprep.subr.mxu0 %v3414
    %4276 = vmatpush2.msra.mxu0 %v3413
    %4277 = vmatprep.subr.mxu0 %v3407
    %4278 = vmatpush2.msra.mxu0 %v3406
    %4279 = vmatprep.subr.mxu0 %v3400
    %4280 = vmatpush2.msra.mxu0 %v3399
    %4281 = vmatprep.subr.mxu0 %v3393
    %4282 = vmatpush2.msra.mxu0 %v3392
    %4283 = vmatprep.subr.mxu0 %v3386
    %4284 = vmatpush2.msra.mxu0 %v3385
    %4285 = vmatprep.subr.mxu0 %v3379
    %4286 = vmatpush2.msra.mxu0 %v3378
    %4287 = vmatprep.subr.mxu0 %v3372
    %4288 = vmatpush2.msra.mxu0 %v3371
    %4289 = vmatprep.subr.mxu0 %v3365
    %4290 = vmatpush2.msra.mxu0 %v3364
    %4291 = vmatprep.subr.mxu0 %v3358
    %4292 = vmatpush2.msra.mxu0 %v3357
    %4293 = vmatprep.subr.mxu0 %v3351
    %4294 = vmatpush2.msra.mxu0 %v3350
    %4295 = vmatprep.mubr.f32.mxu0 %v191
    %4296 = vmatmul.mubr.f32.gmra.mxu0 %v190
    %v4297 = vpop.f32.mrf.mxu0
    %v4298 = vadd.f32 %v4227, %v4297
    %v4299 = vpop.f32.mrf.mxu0
    %v4300 = vadd.f32 %v4229, %v4299
    %4301 = vdwg.mxu0
    %4302 = vmatprep.subr.mxu0 %v3568
    %4303 = vmatpush1.msra.mxu0 %v3567
    %4304 = vmatprep.subr.mxu0 %v3561
    %4305 = vmatpush1.msra.mxu0 %v3560
    %4306 = vmatprep.subr.mxu0 %v3554
    %4307 = vmatpush1.msra.mxu0 %v3553
    %4308 = vmatprep.subr.mxu0 %v3547
    %4309 = vmatpush1.msra.mxu0 %v3546
    %4310 = vmatprep.subr.mxu0 %v3540
    %4311 = vmatpush1.msra.mxu0 %v3539
    %4312 = vmatprep.subr.mxu0 %v3533
    %4313 = vmatpush1.msra.mxu0 %v3532
    %4314 = vmatprep.subr.mxu0 %v3526
    %4315 = vmatpush1.msra.mxu0 %v3525
    %4316 = vmatprep.subr.mxu0 %v3519
    %4317 = vmatpush1.msra.mxu0 %v3518
    %4318 = vmatprep.subr.mxu0 %v3512
    %4319 = vmatpush1.msra.mxu0 %v3511
    %4320 = vmatprep.subr.mxu0 %v3505
    %4321 = vmatpush1.msra.mxu0 %v3504
    %4322 = vmatprep.subr.mxu0 %v3498
    %4323 = vmatpush1.msra.mxu0 %v3497
    %4324 = vmatprep.subr.mxu0 %v3491
    %4325 = vmatpush1.msra.mxu0 %v3490
    %4326 = vmatprep.subr.mxu0 %v3484
    %4327 = vmatpush1.msra.mxu0 %v3483
    %4328 = vmatprep.subr.mxu0 %v3477
    %4329 = vmatpush1.msra.mxu0 %v3476
    %4330 = vmatprep.subr.mxu0 %v3470
    %4331 = vmatpush1.msra.mxu0 %v3469
    %4332 = vmatprep.subr.mxu0 %v3463
    %4333 = vmatpush1.msra.mxu0 %v3462
    %4334 = vmatprep.subr.mxu0 0.0
    %4335 = vmatpush2.msra.mxu0 0.0
    %4336 = vmatprep.subr.mxu0 0.0
    %4337 = vmatpush2.msra.mxu0 0.0
    %4338 = vmatprep.subr.mxu0 0.0
    %4339 = vmatpush2.msra.mxu0 0.0
    %4340 = vmatprep.subr.mxu0 0.0
    %4341 = vmatpush2.msra.mxu0 0.0
    %4342 = vmatprep.subr.mxu0 0.0
    %4343 = vmatpush2.msra.mxu0 0.0
    %4344 = vmatprep.subr.mxu0 0.0
    %4345 = vmatpush2.msra.mxu0 0.0
    %4346 = vmatprep.subr.mxu0 0.0
    %4347 = vmatpush2.msra.mxu0 0.0
    %4348 = vmatprep.subr.mxu0 %v3646
    %4349 = vmatpush2.msra.mxu0 %v3643
    %4350 = vmatprep.subr.mxu0 %v3624
    %4351 = vmatpush2.msra.mxu0 %v3623
    %4352 = vmatprep.subr.mxu0 %v3617
    %4353 = vmatpush2.msra.mxu0 %v3616
    %4354 = vmatprep.subr.mxu0 %v3610
    %4355 = vmatpush2.msra.mxu0 %v3609
    %4356 = vmatprep.subr.mxu0 %v3603
    %4357 = vmatpush2.msra.mxu0 %v3602
    %4358 = vmatprep.subr.mxu0 %v3596
    %4359 = vmatpush2.msra.mxu0 %v3595
    %4360 = vmatprep.subr.mxu0 %v3589
    %4361 = vmatpush2.msra.mxu0 %v3588
    %4362 = vmatprep.subr.mxu0 %v3582
    %4363 = vmatpush2.msra.mxu0 %v3581
    %4364 = vmatprep.subr.mxu0 %v3575
    %4365 = vmatpush2.msra.mxu0 %v3574
    %4366 = vmatprep.mubr.f32.mxu0 %v3639
    %4367 = vmatmul.mubr.f32.gmra.mxu0 %v192
    %v4368 = vpop.f32.mrf.mxu0
    %v4369 = vadd.f32 %v4298, %v4368
    %v4370 = vpop.f32.mrf.mxu0
    %v4371 = vadd.f32 %v4300, %v4370
    %4372 = vdwg.mxu0
    %4373 = vmatprep.subr.mxu0 %v1554
    %4374 = vmatpush1.msra.mxu0 %v1553
    %4375 = vmatprep.subr.mxu0 %v1547
    %4376 = vmatpush1.msra.mxu0 %v1546
    %4377 = vmatprep.subr.mxu0 %v1540
    %4378 = vmatpush1.msra.mxu0 %v1539
    %4379 = vmatprep.subr.mxu0 %v1533
    %4380 = vmatpush1.msra.mxu0 %v1532
    %4381 = vmatprep.subr.mxu0 %v1526
    %4382 = vmatpush1.msra.mxu0 %v1525
    %4383 = vmatprep.subr.mxu0 %v1519
    %4384 = vmatpush1.msra.mxu0 %v1518
    %4385 = vmatprep.subr.mxu0 %v1512
    %4386 = vmatpush1.msra.mxu0 %v1511
    %4387 = vmatprep.subr.mxu0 %v1505
    %4388 = vmatpush1.msra.mxu0 %v1504
    %4389 = vmatprep.subr.mxu0 %v1498
    %4390 = vmatpush1.msra.mxu0 %v1497
    %4391 = vmatprep.subr.mxu0 %v1491
    %4392 = vmatpush1.msra.mxu0 %v1490
    %4393 = vmatprep.subr.mxu0 %v1484
    %4394 = vmatpush1.msra.mxu0 %v1483
    %4395 = vmatprep.subr.mxu0 %v1477
    %4396 = vmatpush1.msra.mxu0 %v1476
    %4397 = vmatprep.subr.mxu0 %v1470
    %4398 = vmatpush1.msra.mxu0 %v1469
    %4399 = vmatprep.subr.mxu0 %v1463
    %4400 = vmatpush1.msra.mxu0 %v1462
    %4401 = vmatprep.subr.mxu0 %v1456
    %4402 = vmatpush1.msra.mxu0 %v1455
    %4403 = vmatprep.subr.mxu0 %v1449
    %4404 = vmatpush1.msra.mxu0 %v1448
    %4405 = vmatprep.subr.mxu0 %v1666
    %4406 = vmatpush2.msra.mxu0 %v1665
    %4407 = vmatprep.subr.mxu0 %v1659
    %4408 = vmatpush2.msra.mxu0 %v1658
    %4409 = vmatprep.subr.mxu0 %v1652
    %4410 = vmatpush2.msra.mxu0 %v1651
    %4411 = vmatprep.subr.mxu0 %v1645
    %4412 = vmatpush2.msra.mxu0 %v1644
    %4413 = vmatprep.subr.mxu0 %v1638
    %4414 = vmatpush2.msra.mxu0 %v1637
    %4415 = vmatprep.subr.mxu0 %v1631
    %4416 = vmatpush2.msra.mxu0 %v1630
    %4417 = vmatprep.subr.mxu0 %v1624
    %4418 = vmatpush2.msra.mxu0 %v1623
    %4419 = vmatprep.subr.mxu0 %v1617
    %4420 = vmatpush2.msra.mxu0 %v1616
    %4421 = vmatprep.subr.mxu0 %v1610
    %4422 = vmatpush2.msra.mxu0 %v1609
    %4423 = vmatprep.subr.mxu0 %v1603
    %4424 = vmatpush2.msra.mxu0 %v1602
    %4425 = vmatprep.subr.mxu0 %v1596
    %4426 = vmatpush2.msra.mxu0 %v1595
    %4427 = vmatprep.subr.mxu0 %v1589
    %4428 = vmatpush2.msra.mxu0 %v1588
    %4429 = vmatprep.subr.mxu0 %v1582
    %4430 = vmatpush2.msra.mxu0 %v1581
    %4431 = vmatprep.subr.mxu0 %v1575
    %4432 = vmatpush2.msra.mxu0 %v1574
    %4433 = vmatprep.subr.mxu0 %v1568
    %4434 = vmatpush2.msra.mxu0 %v1567
    %4435 = vmatprep.subr.mxu0 %v1561
    %4436 = vmatpush2.msra.mxu0 %v1560
    %4437 = vmatprep.mubr.f32.mxu0 %v175
    %4438 = vmatmul.mubr.f32.gmra.mxu0 %v174
    %v4439 = vpop.f32.mrf.mxu0
    %v4440 = vadd.f32 0.0, %v4439
    %v4441 = vpop.f32.mrf.mxu0
    %v4442 = vadd.f32 0.0, %v4441
    %4443 = vdwg.mxu0
    %4444 = vmatprep.subr.mxu0 %v1778
    %4445 = vmatpush1.msra.mxu0 %v1777
    %4446 = vmatprep.subr.mxu0 %v1771
    %4447 = vmatpush1.msra.mxu0 %v1770
    %4448 = vmatprep.subr.mxu0 %v1764
    %4449 = vmatpush1.msra.mxu0 %v1763
    %4450 = vmatprep.subr.mxu0 %v1757
    %4451 = vmatpush1.msra.mxu0 %v1756
    %4452 = vmatprep.subr.mxu0 %v1750
    %4453 = vmatpush1.msra.mxu0 %v1749
    %4454 = vmatprep.subr.mxu0 %v1743
    %4455 = vmatpush1.msra.mxu0 %v1742
    %4456 = vmatprep.subr.mxu0 %v1736
    %4457 = vmatpush1.msra.mxu0 %v1735
    %4458 = vmatprep.subr.mxu0 %v1729
    %4459 = vmatpush1.msra.mxu0 %v1728
    %4460 = vmatprep.subr.mxu0 %v1722
    %4461 = vmatpush1.msra.mxu0 %v1721
    %4462 = vmatprep.subr.mxu0 %v1715
    %4463 = vmatpush1.msra.mxu0 %v1714
    %4464 = vmatprep.subr.mxu0 %v1708
    %4465 = vmatpush1.msra.mxu0 %v1707
    %4466 = vmatprep.subr.mxu0 %v1701
    %4467 = vmatpush1.msra.mxu0 %v1700
    %4468 = vmatprep.subr.mxu0 %v1694
    %4469 = vmatpush1.msra.mxu0 %v1693
    %4470 = vmatprep.subr.mxu0 %v1687
    %4471 = vmatpush1.msra.mxu0 %v1686
    %4472 = vmatprep.subr.mxu0 %v1680
    %4473 = vmatpush1.msra.mxu0 %v1679
    %4474 = vmatprep.subr.mxu0 %v1673
    %4475 = vmatpush1.msra.mxu0 %v1672
    %4476 = vmatprep.subr.mxu0 %v1890
    %4477 = vmatpush2.msra.mxu0 %v1889
    %4478 = vmatprep.subr.mxu0 %v1883
    %4479 = vmatpush2.msra.mxu0 %v1882
    %4480 = vmatprep.subr.mxu0 %v1876
    %4481 = vmatpush2.msra.mxu0 %v1875
    %4482 = vmatprep.subr.mxu0 %v1869
    %4483 = vmatpush2.msra.mxu0 %v1868
    %4484 = vmatprep.subr.mxu0 %v1862
    %4485 = vmatpush2.msra.mxu0 %v1861
    %4486 = vmatprep.subr.mxu0 %v1855
    %4487 = vmatpush2.msra.mxu0 %v1854
    %4488 = vmatprep.subr.mxu0 %v1848
    %4489 = vmatpush2.msra.mxu0 %v1847
    %4490 = vmatprep.subr.mxu0 %v1841
    %4491 = vmatpush2.msra.mxu0 %v1840
    %4492 = vmatprep.subr.mxu0 %v1834
    %4493 = vmatpush2.msra.mxu0 %v1833
    %4494 = vmatprep.subr.mxu0 %v1827
    %4495 = vmatpush2.msra.mxu0 %v1826
    %4496 = vmatprep.subr.mxu0 %v1820
    %4497 = vmatpush2.msra.mxu0 %v1819
    %4498 = vmatprep.subr.mxu0 %v1813
    %4499 = vmatpush2.msra.mxu0 %v1812
    %4500 = vmatprep.subr.mxu0 %v1806
    %4501 = vmatpush2.msra.mxu0 %v1805
    %4502 = vmatprep.subr.mxu0 %v1799
    %4503 = vmatpush2.msra.mxu0 %v1798
    %4504 = vmatprep.subr.mxu0 %v1792
    %4505 = vmatpush2.msra.mxu0 %v1791
    %4506 = vmatprep.subr.mxu0 %v1785
    %4507 = vmatpush2.msra.mxu0 %v1784
    %4508 = vmatprep.mubr.f32.mxu0 %v177
    %4509 = vmatmul.mubr.f32.gmra.mxu0 %v176
    %v4510 = vpop.f32.mrf.mxu0
    %v4511 = vadd.f32 %v4440, %v4510
    %v4512 = vpop.f32.mrf.mxu0
    %v4513 = vadd.f32 %v4442, %v4512
    %4514 = vdwg.mxu0
    %4515 = vmatprep.subr.mxu0 %v2002
    %4516 = vmatpush1.msra.mxu0 %v2001
    %4517 = vmatprep.subr.mxu0 %v1995
    %4518 = vmatpush1.msra.mxu0 %v1994
    %4519 = vmatprep.subr.mxu0 %v1988
    %4520 = vmatpush1.msra.mxu0 %v1987
    %4521 = vmatprep.subr.mxu0 %v1981
    %4522 = vmatpush1.msra.mxu0 %v1980
    %4523 = vmatprep.subr.mxu0 %v1974
    %4524 = vmatpush1.msra.mxu0 %v1973
    %4525 = vmatprep.subr.mxu0 %v1967
    %4526 = vmatpush1.msra.mxu0 %v1966
    %4527 = vmatprep.subr.mxu0 %v1960
    %4528 = vmatpush1.msra.mxu0 %v1959
    %4529 = vmatprep.subr.mxu0 %v1953
    %4530 = vmatpush1.msra.mxu0 %v1952
    %4531 = vmatprep.subr.mxu0 %v1946
    %4532 = vmatpush1.msra.mxu0 %v1945
    %4533 = vmatprep.subr.mxu0 %v1939
    %4534 = vmatpush1.msra.mxu0 %v1938
    %4535 = vmatprep.subr.mxu0 %v1932
    %4536 = vmatpush1.msra.mxu0 %v1931
    %4537 = vmatprep.subr.mxu0 %v1925
    %4538 = vmatpush1.msra.mxu0 %v1924
    %4539 = vmatprep.subr.mxu0 %v1918
    %4540 = vmatpush1.msra.mxu0 %v1917
    %4541 = vmatprep.subr.mxu0 %v1911
    %4542 = vmatpush1.msra.mxu0 %v1910
    %4543 = vmatprep.subr.mxu0 %v1904
    %4544 = vmatpush1.msra.mxu0 %v1903
    %4545 = vmatprep.subr.mxu0 %v1897
    %4546 = vmatpush1.msra.mxu0 %v1896
    %4547 = vmatprep.subr.mxu0 %v2114
    %4548 = vmatpush2.msra.mxu0 %v2113
    %4549 = vmatprep.subr.mxu0 %v2107
    %4550 = vmatpush2.msra.mxu0 %v2106
    %4551 = vmatprep.subr.mxu0 %v2100
    %4552 = vmatpush2.msra.mxu0 %v2099
    %4553 = vmatprep.subr.mxu0 %v2093
    %4554 = vmatpush2.msra.mxu0 %v2092
    %4555 = vmatprep.subr.mxu0 %v2086
    %4556 = vmatpush2.msra.mxu0 %v2085
    %4557 = vmatprep.subr.mxu0 %v2079
    %4558 = vmatpush2.msra.mxu0 %v2078
    %4559 = vmatprep.subr.mxu0 %v2072
    %4560 = vmatpush2.msra.mxu0 %v2071
    %4561 = vmatprep.subr.mxu0 %v2065
    %4562 = vmatpush2.msra.mxu0 %v2064
    %4563 = vmatprep.subr.mxu0 %v2058
    %4564 = vmatpush2.msra.mxu0 %v2057
    %4565 = vmatprep.subr.mxu0 %v2051
    %4566 = vmatpush2.msra.mxu0 %v2050
    %4567 = vmatprep.subr.mxu0 %v2044
    %4568 = vmatpush2.msra.mxu0 %v2043
    %4569 = vmatprep.subr.mxu0 %v2037
    %4570 = vmatpush2.msra.mxu0 %v2036
    %4571 = vmatprep.subr.mxu0 %v2030
    %4572 = vmatpush2.msra.mxu0 %v2029
    %4573 = vmatprep.subr.mxu0 %v2023
    %4574 = vmatpush2.msra.mxu0 %v2022
    %4575 = vmatprep.subr.mxu0 %v2016
    %4576 = vmatpush2.msra.mxu0 %v2015
    %4577 = vmatprep.subr.mxu0 %v2009
    %4578 = vmatpush2.msra.mxu0 %v2008
    %4579 = vmatprep.mubr.f32.mxu0 %v179
    %4580 = vmatmul.mubr.f32.gmra.mxu0 %v178
    %v4581 = vpop.f32.mrf.mxu0
    %v4582 = vadd.f32 %v4511, %v4581
    %v4583 = vpop.f32.mrf.mxu0
    %v4584 = vadd.f32 %v4513, %v4583
    %4585 = vdwg.mxu0
    %4586 = vmatprep.subr.mxu0 %v2226
    %4587 = vmatpush1.msra.mxu0 %v2225
    %4588 = vmatprep.subr.mxu0 %v2219
    %4589 = vmatpush1.msra.mxu0 %v2218
    %4590 = vmatprep.subr.mxu0 %v2212
    %4591 = vmatpush1.msra.mxu0 %v2211
    %4592 = vmatprep.subr.mxu0 %v2205
    %4593 = vmatpush1.msra.mxu0 %v2204
    %4594 = vmatprep.subr.mxu0 %v2198
    %4595 = vmatpush1.msra.mxu0 %v2197
    %4596 = vmatprep.subr.mxu0 %v2191
    %4597 = vmatpush1.msra.mxu0 %v2190
    %4598 = vmatprep.subr.mxu0 %v2184
    %4599 = vmatpush1.msra.mxu0 %v2183
    %4600 = vmatprep.subr.mxu0 %v2177
    %4601 = vmatpush1.msra.mxu0 %v2176
    %4602 = vmatprep.subr.mxu0 %v2170
    %4603 = vmatpush1.msra.mxu0 %v2169
    %4604 = vmatprep.subr.mxu0 %v2163
    %4605 = vmatpush1.msra.mxu0 %v2162
    %4606 = vmatprep.subr.mxu0 %v2156
    %4607 = vmatpush1.msra.mxu0 %v2155
    %4608 = vmatprep.subr.mxu0 %v2149
    %4609 = vmatpush1.msra.mxu0 %v2148
    %4610 = vmatprep.subr.mxu0 %v2142
    %4611 = vmatpush1.msra.mxu0 %v2141
    %4612 = vmatprep.subr.mxu0 %v2135
    %4613 = vmatpush1.msra.mxu0 %v2134
    %4614 = vmatprep.subr.mxu0 %v2128
    %4615 = vmatpush1.msra.mxu0 %v2127
    %4616 = vmatprep.subr.mxu0 %v2121
    %4617 = vmatpush1.msra.mxu0 %v2120
    %4618 = vmatprep.subr.mxu0 %v2338
    %4619 = vmatpush2.msra.mxu0 %v2337
    %4620 = vmatprep.subr.mxu0 %v2331
    %4621 = vmatpush2.msra.mxu0 %v2330
    %4622 = vmatprep.subr.mxu0 %v2324
    %4623 = vmatpush2.msra.mxu0 %v2323
    %4624 = vmatprep.subr.mxu0 %v2317
    %4625 = vmatpush2.msra.mxu0 %v2316
    %4626 = vmatprep.subr.mxu0 %v2310
    %4627 = vmatpush2.msra.mxu0 %v2309
    %4628 = vmatprep.subr.mxu0 %v2303
    %4629 = vmatpush2.msra.mxu0 %v2302
    %4630 = vmatprep.subr.mxu0 %v2296
    %4631 = vmatpush2.msra.mxu0 %v2295
    %4632 = vmatprep.subr.mxu0 %v2289
    %4633 = vmatpush2.msra.mxu0 %v2288
    %4634 = vmatprep.subr.mxu0 %v2282
    %4635 = vmatpush2.msra.mxu0 %v2281
    %4636 = vmatprep.subr.mxu0 %v2275
    %4637 = vmatpush2.msra.mxu0 %v2274
    %4638 = vmatprep.subr.mxu0 %v2268
    %4639 = vmatpush2.msra.mxu0 %v2267
    %4640 = vmatprep.subr.mxu0 %v2261
    %4641 = vmatpush2.msra.mxu0 %v2260
    %4642 = vmatprep.subr.mxu0 %v2254
    %4643 = vmatpush2.msra.mxu0 %v2253
    %4644 = vmatprep.subr.mxu0 %v2247
    %4645 = vmatpush2.msra.mxu0 %v2246
    %4646 = vmatprep.subr.mxu0 %v2240
    %4647 = vmatpush2.msra.mxu0 %v2239
    %4648 = vmatprep.subr.mxu0 %v2233
    %4649 = vmatpush2.msra.mxu0 %v2232
    %4650 = vmatprep.mubr.f32.mxu0 %v181
    %4651 = vmatmul.mubr.f32.gmra.mxu0 %v180
    %v4652 = vpop.f32.mrf.mxu0
    %v4653 = vadd.f32 %v4582, %v4652
    %v4654 = vpop.f32.mrf.mxu0
    %v4655 = vadd.f32 %v4584, %v4654
    %4656 = vdwg.mxu0
    %4657 = vmatprep.subr.mxu0 %v2450
    %4658 = vmatpush1.msra.mxu0 %v2449
    %4659 = vmatprep.subr.mxu0 %v2443
    %4660 = vmatpush1.msra.mxu0 %v2442
    %4661 = vmatprep.subr.mxu0 %v2436
    %4662 = vmatpush1.msra.mxu0 %v2435
    %4663 = vmatprep.subr.mxu0 %v2429
    %4664 = vmatpush1.msra.mxu0 %v2428
    %4665 = vmatprep.subr.mxu0 %v2422
    %4666 = vmatpush1.msra.mxu0 %v2421
    %4667 = vmatprep.subr.mxu0 %v2415
    %4668 = vmatpush1.msra.mxu0 %v2414
    %4669 = vmatprep.subr.mxu0 %v2408
    %4670 = vmatpush1.msra.mxu0 %v2407
    %4671 = vmatprep.subr.mxu0 %v2401
    %4672 = vmatpush1.msra.mxu0 %v2400
    %4673 = vmatprep.subr.mxu0 %v2394
    %4674 = vmatpush1.msra.mxu0 %v2393
    %4675 = vmatprep.subr.mxu0 %v2387
    %4676 = vmatpush1.msra.mxu0 %v2386
    %4677 = vmatprep.subr.mxu0 %v2380
    %4678 = vmatpush1.msra.mxu0 %v2379
    %4679 = vmatprep.subr.mxu0 %v2373
    %4680 = vmatpush1.msra.mxu0 %v2372
    %4681 = vmatprep.subr.mxu0 %v2366
    %4682 = vmatpush1.msra.mxu0 %v2365
    %4683 = vmatprep.subr.mxu0 %v2359
    %4684 = vmatpush1.msra.mxu0 %v2358
    %4685 = vmatprep.subr.mxu0 %v2352
    %4686 = vmatpush1.msra.mxu0 %v2351
    %4687 = vmatprep.subr.mxu0 %v2345
    %4688 = vmatpush1.msra.mxu0 %v2344
    %4689 = vmatprep.subr.mxu0 %v2562
    %4690 = vmatpush2.msra.mxu0 %v2561
    %4691 = vmatprep.subr.mxu0 %v2555
    %4692 = vmatpush2.msra.mxu0 %v2554
    %4693 = vmatprep.subr.mxu0 %v2548
    %4694 = vmatpush2.msra.mxu0 %v2547
    %4695 = vmatprep.subr.mxu0 %v2541
    %4696 = vmatpush2.msra.mxu0 %v2540
    %4697 = vmatprep.subr.mxu0 %v2534
    %4698 = vmatpush2.msra.mxu0 %v2533
    %4699 = vmatprep.subr.mxu0 %v2527
    %4700 = vmatpush2.msra.mxu0 %v2526
    %4701 = vmatprep.subr.mxu0 %v2520
    %4702 = vmatpush2.msra.mxu0 %v2519
    %4703 = vmatprep.subr.mxu0 %v2513
    %4704 = vmatpush2.msra.mxu0 %v2512
    %4705 = vmatprep.subr.mxu0 %v2506
    %4706 = vmatpush2.msra.mxu0 %v2505
    %4707 = vmatprep.subr.mxu0 %v2499
    %4708 = vmatpush2.msra.mxu0 %v2498
    %4709 = vmatprep.subr.mxu0 %v2492
    %4710 = vmatpush2.msra.mxu0 %v2491
    %4711 = vmatprep.subr.mxu0 %v2485
    %4712 = vmatpush2.msra.mxu0 %v2484
    %4713 = vmatprep.subr.mxu0 %v2478
    %4714 = vmatpush2.msra.mxu0 %v2477
    %4715 = vmatprep.subr.mxu0 %v2471
    %4716 = vmatpush2.msra.mxu0 %v2470
    %4717 = vmatprep.subr.mxu0 %v2464
    %4718 = vmatpush2.msra.mxu0 %v2463
    %4719 = vmatprep.subr.mxu0 %v2457
    %4720 = vmatpush2.msra.mxu0 %v2456
    %4721 = vmatprep.mubr.f32.mxu0 %v183
    %4722 = vmatmul.mubr.f32.gmra.mxu0 %v182
    %v4723 = vpop.f32.mrf.mxu0
    %v4724 = vadd.f32 %v4653, %v4723
    %v4725 = vpop.f32.mrf.mxu0
    %v4726 = vadd.f32 %v4655, %v4725
    %4727 = vdwg.mxu0
    %4728 = vmatprep.subr.mxu0 %v2674
    %4729 = vmatpush1.msra.mxu0 %v2673
    %4730 = vmatprep.subr.mxu0 %v2667
    %4731 = vmatpush1.msra.mxu0 %v2666
    %4732 = vmatprep.subr.mxu0 %v2660
    %4733 = vmatpush1.msra.mxu0 %v2659
    %4734 = vmatprep.subr.mxu0 %v2653
    %4735 = vmatpush1.msra.mxu0 %v2652
    %4736 = vmatprep.subr.mxu0 %v2646
    %4737 = vmatpush1.msra.mxu0 %v2645
    %4738 = vmatprep.subr.mxu0 %v2639
    %4739 = vmatpush1.msra.mxu0 %v2638
    %4740 = vmatprep.subr.mxu0 %v2632
    %4741 = vmatpush1.msra.mxu0 %v2631
    %4742 = vmatprep.subr.mxu0 %v2625
    %4743 = vmatpush1.msra.mxu0 %v2624
    %4744 = vmatprep.subr.mxu0 %v2618
    %4745 = vmatpush1.msra.mxu0 %v2617
    %4746 = vmatprep.subr.mxu0 %v2611
    %4747 = vmatpush1.msra.mxu0 %v2610
    %4748 = vmatprep.subr.mxu0 %v2604
    %4749 = vmatpush1.msra.mxu0 %v2603
    %4750 = vmatprep.subr.mxu0 %v2597
    %4751 = vmatpush1.msra.mxu0 %v2596
    %4752 = vmatprep.subr.mxu0 %v2590
    %4753 = vmatpush1.msra.mxu0 %v2589
    %4754 = vmatprep.subr.mxu0 %v2583
    %4755 = vmatpush1.msra.mxu0 %v2582
    %4756 = vmatprep.subr.mxu0 %v2576
    %4757 = vmatpush1.msra.mxu0 %v2575
    %4758 = vmatprep.subr.mxu0 %v2569
    %4759 = vmatpush1.msra.mxu0 %v2568
    %4760 = vmatprep.subr.mxu0 %v2786
    %4761 = vmatpush2.msra.mxu0 %v2785
    %4762 = vmatprep.subr.mxu0 %v2779
    %4763 = vmatpush2.msra.mxu0 %v2778
    %4764 = vmatprep.subr.mxu0 %v2772
    %4765 = vmatpush2.msra.mxu0 %v2771
    %4766 = vmatprep.subr.mxu0 %v2765
    %4767 = vmatpush2.msra.mxu0 %v2764
    %4768 = vmatprep.subr.mxu0 %v2758
    %4769 = vmatpush2.msra.mxu0 %v2757
    %4770 = vmatprep.subr.mxu0 %v2751
    %4771 = vmatpush2.msra.mxu0 %v2750
    %4772 = vmatprep.subr.mxu0 %v2744
    %4773 = vmatpush2.msra.mxu0 %v2743
    %4774 = vmatprep.subr.mxu0 %v2737
    %4775 = vmatpush2.msra.mxu0 %v2736
    %4776 = vmatprep.subr.mxu0 %v2730
    %4777 = vmatpush2.msra.mxu0 %v2729
    %4778 = vmatprep.subr.mxu0 %v2723
    %4779 = vmatpush2.msra.mxu0 %v2722
    %4780 = vmatprep.subr.mxu0 %v2716
    %4781 = vmatpush2.msra.mxu0 %v2715
    %4782 = vmatprep.subr.mxu0 %v2709
    %4783 = vmatpush2.msra.mxu0 %v2708
    %4784 = vmatprep.subr.mxu0 %v2702
    %4785 = vmatpush2.msra.mxu0 %v2701
    %4786 = vmatprep.subr.mxu0 %v2695
    %4787 = vmatpush2.msra.mxu0 %v2694
    %4788 = vmatprep.subr.mxu0 %v2688
    %4789 = vmatpush2.msra.mxu0 %v2687
    %4790 = vmatprep.subr.mxu0 %v2681
    %4791 = vmatpush2.msra.mxu0 %v2680
    %4792 = vmatprep.mubr.f32.mxu0 %v185
    %4793 = vmatmul.mubr.f32.gmra.mxu0 %v184
    %v4794 = vpop.f32.mrf.mxu0
    %v4795 = vadd.f32 %v4724, %v4794
    %v4796 = vpop.f32.mrf.mxu0
    %v4797 = vadd.f32 %v4726, %v4796
    %4798 = vdwg.mxu0
    %4799 = vmatprep.subr.mxu0 %v2898
    %4800 = vmatpush1.msra.mxu0 %v2897
    %4801 = vmatprep.subr.mxu0 %v2891
    %4802 = vmatpush1.msra.mxu0 %v2890
    %4803 = vmatprep.subr.mxu0 %v2884
    %4804 = vmatpush1.msra.mxu0 %v2883
    %4805 = vmatprep.subr.mxu0 %v2877
    %4806 = vmatpush1.msra.mxu0 %v2876
    %4807 = vmatprep.subr.mxu0 %v2870
    %4808 = vmatpush1.msra.mxu0 %v2869
    %4809 = vmatprep.subr.mxu0 %v2863
    %4810 = vmatpush1.msra.mxu0 %v2862
    %4811 = vmatprep.subr.mxu0 %v2856
    %4812 = vmatpush1.msra.mxu0 %v2855
    %4813 = vmatprep.subr.mxu0 %v2849
    %4814 = vmatpush1.msra.mxu0 %v2848
    %4815 = vmatprep.subr.mxu0 %v2842
    %4816 = vmatpush1.msra.mxu0 %v2841
    %4817 = vmatprep.subr.mxu0 %v2835
    %4818 = vmatpush1.msra.mxu0 %v2834
    %4819 = vmatprep.subr.mxu0 %v2828
    %4820 = vmatpush1.msra.mxu0 %v2827
    %4821 = vmatprep.subr.mxu0 %v2821
    %4822 = vmatpush1.msra.mxu0 %v2820
    %4823 = vmatprep.subr.mxu0 %v2814
    %4824 = vmatpush1.msra.mxu0 %v2813
    %4825 = vmatprep.subr.mxu0 %v2807
    %4826 = vmatpush1.msra.mxu0 %v2806
    %4827 = vmatprep.subr.mxu0 %v2800
    %4828 = vmatpush1.msra.mxu0 %v2799
    %4829 = vmatprep.subr.mxu0 %v2793
    %4830 = vmatpush1.msra.mxu0 %v2792
    %4831 = vmatprep.subr.mxu0 %v3010
    %4832 = vmatpush2.msra.mxu0 %v3009
    %4833 = vmatprep.subr.mxu0 %v3003
    %4834 = vmatpush2.msra.mxu0 %v3002
    %4835 = vmatprep.subr.mxu0 %v2996
    %4836 = vmatpush2.msra.mxu0 %v2995
    %4837 = vmatprep.subr.mxu0 %v2989
    %4838 = vmatpush2.msra.mxu0 %v2988
    %4839 = vmatprep.subr.mxu0 %v2982
    %4840 = vmatpush2.msra.mxu0 %v2981
    %4841 = vmatprep.subr.mxu0 %v2975
    %4842 = vmatpush2.msra.mxu0 %v2974
    %4843 = vmatprep.subr.mxu0 %v2968
    %4844 = vmatpush2.msra.mxu0 %v2967
    %4845 = vmatprep.subr.mxu0 %v2961
    %4846 = vmatpush2.msra.mxu0 %v2960
    %4847 = vmatprep.subr.mxu0 %v2954
    %4848 = vmatpush2.msra.mxu0 %v2953
    %4849 = vmatprep.subr.mxu0 %v2947
    %4850 = vmatpush2.msra.mxu0 %v2946
    %4851 = vmatprep.subr.mxu0 %v2940
    %4852 = vmatpush2.msra.mxu0 %v2939
    %4853 = vmatprep.subr.mxu0 %v2933
    %4854 = vmatpush2.msra.mxu0 %v2932
    %4855 = vmatprep.subr.mxu0 %v2926
    %4856 = vmatpush2.msra.mxu0 %v2925
    %4857 = vmatprep.subr.mxu0 %v2919
    %4858 = vmatpush2.msra.mxu0 %v2918
    %4859 = vmatprep.subr.mxu0 %v2912
    %4860 = vmatpush2.msra.mxu0 %v2911
    %4861 = vmatprep.subr.mxu0 %v2905
    %4862 = vmatpush2.msra.mxu0 %v2904
    %4863 = vmatprep.mubr.f32.mxu0 %v187
    %4864 = vmatmul.mubr.f32.gmra.mxu0 %v186
    %v4865 = vpop.f32.mrf.mxu0
    %v4866 = vadd.f32 %v4795, %v4865
    %v4867 = vpop.f32.mrf.mxu0
    %v4868 = vadd.f32 %v4797, %v4867
    %4869 = vdwg.mxu0
    %4870 = vmatprep.subr.mxu0 %v3122
    %4871 = vmatpush1.msra.mxu0 %v3121
    %4872 = vmatprep.subr.mxu0 %v3115
    %4873 = vmatpush1.msra.mxu0 %v3114
    %4874 = vmatprep.subr.mxu0 %v3108
    %4875 = vmatpush1.msra.mxu0 %v3107
    %4876 = vmatprep.subr.mxu0 %v3101
    %4877 = vmatpush1.msra.mxu0 %v3100
    %4878 = vmatprep.subr.mxu0 %v3094
    %4879 = vmatpush1.msra.mxu0 %v3093
    %4880 = vmatprep.subr.mxu0 %v3087
    %4881 = vmatpush1.msra.mxu0 %v3086
    %4882 = vmatprep.subr.mxu0 %v3080
    %4883 = vmatpush1.msra.mxu0 %v3079
    %4884 = vmatprep.subr.mxu0 %v3073
    %4885 = vmatpush1.msra.mxu0 %v3072
    %4886 = vmatprep.subr.mxu0 %v3066
    %4887 = vmatpush1.msra.mxu0 %v3065
    %4888 = vmatprep.subr.mxu0 %v3059
    %4889 = vmatpush1.msra.mxu0 %v3058
    %4890 = vmatprep.subr.mxu0 %v3052
    %4891 = vmatpush1.msra.mxu0 %v3051
    %4892 = vmatprep.subr.mxu0 %v3045
    %4893 = vmatpush1.msra.mxu0 %v3044
    %4894 = vmatprep.subr.mxu0 %v3038
    %4895 = vmatpush1.msra.mxu0 %v3037
    %4896 = vmatprep.subr.mxu0 %v3031
    %4897 = vmatpush1.msra.mxu0 %v3030
    %4898 = vmatprep.subr.mxu0 %v3024
    %4899 = vmatpush1.msra.mxu0 %v3023
    %4900 = vmatprep.subr.mxu0 %v3017
    %4901 = vmatpush1.msra.mxu0 %v3016
    %4902 = vmatprep.subr.mxu0 %v3234
    %4903 = vmatpush2.msra.mxu0 %v3233
    %4904 = vmatprep.subr.mxu0 %v3227
    %4905 = vmatpush2.msra.mxu0 %v3226
    %4906 = vmatprep.subr.mxu0 %v3220
    %4907 = vmatpush2.msra.mxu0 %v3219
    %4908 = vmatprep.subr.mxu0 %v3213
    %4909 = vmatpush2.msra.mxu0 %v3212
    %4910 = vmatprep.subr.mxu0 %v3206
    %4911 = vmatpush2.msra.mxu0 %v3205
    %4912 = vmatprep.subr.mxu0 %v3199
    %4913 = vmatpush2.msra.mxu0 %v3198
    %4914 = vmatprep.subr.mxu0 %v3192
    %4915 = vmatpush2.msra.mxu0 %v3191
    %4916 = vmatprep.subr.mxu0 %v3185
    %4917 = vmatpush2.msra.mxu0 %v3184
    %4918 = vmatprep.subr.mxu0 %v3178
    %4919 = vmatpush2.msra.mxu0 %v3177
    %4920 = vmatprep.subr.mxu0 %v3171
    %4921 = vmatpush2.msra.mxu0 %v3170
    %4922 = vmatprep.subr.mxu0 %v3164
    %4923 = vmatpush2.msra.mxu0 %v3163
    %4924 = vmatprep.subr.mxu0 %v3157
    %4925 = vmatpush2.msra.mxu0 %v3156
    %4926 = vmatprep.subr.mxu0 %v3150
    %4927 = vmatpush2.msra.mxu0 %v3149
    %4928 = vmatprep.subr.mxu0 %v3143
    %4929 = vmatpush2.msra.mxu0 %v3142
    %4930 = vmatprep.subr.mxu0 %v3136
    %4931 = vmatpush2.msra.mxu0 %v3135
    %4932 = vmatprep.subr.mxu0 %v3129
    %4933 = vmatpush2.msra.mxu0 %v3128
    %4934 = vmatprep.mubr.f32.mxu0 %v189
    %4935 = vmatmul.mubr.f32.gmra.mxu0 %v188
    %v4936 = vpop.f32.mrf.mxu0
    %v4937 = vadd.f32 %v4866, %v4936
    %v4938 = vpop.f32.mrf.mxu0
    %v4939 = vadd.f32 %v4868, %v4938
    %4940 = vdwg.mxu0
    %4941 = vmatprep.subr.mxu0 %v3346
    %4942 = vmatpush1.msra.mxu0 %v3345
    %4943 = vmatprep.subr.mxu0 %v3339
    %4944 = vmatpush1.msra.mxu0 %v3338
    %4945 = vmatprep.subr.mxu0 %v3332
    %4946 = vmatpush1.msra.mxu0 %v3331
    %4947 = vmatprep.subr.mxu0 %v3325
    %4948 = vmatpush1.msra.mxu0 %v3324
    %4949 = vmatprep.subr.mxu0 %v3318
    %4950 = vmatpush1.msra.mxu0 %v3317
    %4951 = vmatprep.subr.mxu0 %v3311
    %4952 = vmatpush1.msra.mxu0 %v3310
    %4953 = vmatprep.subr.mxu0 %v3304
    %4954 = vmatpush1.msra.mxu0 %v3303
    %4955 = vmatprep.subr.mxu0 %v3297
    %4956 = vmatpush1.msra.mxu0 %v3296
    %4957 = vmatprep.subr.mxu0 %v3290
    %4958 = vmatpush1.msra.mxu0 %v3289
    %4959 = vmatprep.subr.mxu0 %v3283
    %4960 = vmatpush1.msra.mxu0 %v3282
    %4961 = vmatprep.subr.mxu0 %v3276
    %4962 = vmatpush1.msra.mxu0 %v3275
    %4963 = vmatprep.subr.mxu0 %v3269
    %4964 = vmatpush1.msra.mxu0 %v3268
    %4965 = vmatprep.subr.mxu0 %v3262
    %4966 = vmatpush1.msra.mxu0 %v3261
    %4967 = vmatprep.subr.mxu0 %v3255
    %4968 = vmatpush1.msra.mxu0 %v3254
    %4969 = vmatprep.subr.mxu0 %v3248
    %4970 = vmatpush1.msra.mxu0 %v3247
    %4971 = vmatprep.subr.mxu0 %v3241
    %4972 = vmatpush1.msra.mxu0 %v3240
    %4973 = vmatprep.subr.mxu0 %v3458
    %4974 = vmatpush2.msra.mxu0 %v3457
    %4975 = vmatprep.subr.mxu0 %v3451
    %4976 = vmatpush2.msra.mxu0 %v3450
    %4977 = vmatprep.subr.mxu0 %v3444
    %4978 = vmatpush2.msra.mxu0 %v3443
    %4979 = vmatprep.subr.mxu0 %v3437
    %4980 = vmatpush2.msra.mxu0 %v3436
    %4981 = vmatprep.subr.mxu0 %v3430
    %4982 = vmatpush2.msra.mxu0 %v3429
    %4983 = vmatprep.subr.mxu0 %v3423
    %4984 = vmatpush2.msra.mxu0 %v3422
    %4985 = vmatprep.subr.mxu0 %v3416
    %4986 = vmatpush2.msra.mxu0 %v3415
    %4987 = vmatprep.subr.mxu0 %v3409
    %4988 = vmatpush2.msra.mxu0 %v3408
    %4989 = vmatprep.subr.mxu0 %v3402
    %4990 = vmatpush2.msra.mxu0 %v3401
    %4991 = vmatprep.subr.mxu0 %v3395
    %4992 = vmatpush2.msra.mxu0 %v3394
    %4993 = vmatprep.subr.mxu0 %v3388
    %4994 = vmatpush2.msra.mxu0 %v3387
    %4995 = vmatprep.subr.mxu0 %v3381
    %4996 = vmatpush2.msra.mxu0 %v3380
    %4997 = vmatprep.subr.mxu0 %v3374
    %4998 = vmatpush2.msra.mxu0 %v3373
    %4999 = vmatprep.subr.mxu0 %v3367
    %5000 = vmatpush2.msra.mxu0 %v3366
    %5001 = vmatprep.subr.mxu0 %v3360
    %5002 = vmatpush2.msra.mxu0 %v3359
    %5003 = vmatprep.subr.mxu0 %v3353
    %5004 = vmatpush2.msra.mxu0 %v3352
    %5005 = vmatprep.mubr.f32.mxu0 %v191
    %5006 = vmatmul.mubr.f32.gmra.mxu0 %v190
    %v5007 = vpop.f32.mrf.mxu0
    %v5008 = vadd.f32 %v4937, %v5007
    %v5009 = vpop.f32.mrf.mxu0
    %v5010 = vadd.f32 %v4939, %v5009
    %5011 = vdwg.mxu0
    %5012 = vmatprep.subr.mxu0 %v3570
    %5013 = vmatpush1.msra.mxu0 %v3569
    %5014 = vmatprep.subr.mxu0 %v3563
    %5015 = vmatpush1.msra.mxu0 %v3562
    %5016 = vmatprep.subr.mxu0 %v3556
    %5017 = vmatpush1.msra.mxu0 %v3555
    %5018 = vmatprep.subr.mxu0 %v3549
    %5019 = vmatpush1.msra.mxu0 %v3548
    %5020 = vmatprep.subr.mxu0 %v3542
    %5021 = vmatpush1.msra.mxu0 %v3541
    %5022 = vmatprep.subr.mxu0 %v3535
    %5023 = vmatpush1.msra.mxu0 %v3534
    %5024 = vmatprep.subr.mxu0 %v3528
    %5025 = vmatpush1.msra.mxu0 %v3527
    %5026 = vmatprep.subr.mxu0 %v3521
    %5027 = vmatpush1.msra.mxu0 %v3520
    %5028 = vmatprep.subr.mxu0 %v3514
    %5029 = vmatpush1.msra.mxu0 %v3513
    %5030 = vmatprep.subr.mxu0 %v3507
    %5031 = vmatpush1.msra.mxu0 %v3506
    %5032 = vmatprep.subr.mxu0 %v3500
    %5033 = vmatpush1.msra.mxu0 %v3499
    %5034 = vmatprep.subr.mxu0 %v3493
    %5035 = vmatpush1.msra.mxu0 %v3492
    %5036 = vmatprep.subr.mxu0 %v3486
    %5037 = vmatpush1.msra.mxu0 %v3485
    %5038 = vmatprep.subr.mxu0 %v3479
    %5039 = vmatpush1.msra.mxu0 %v3478
    %5040 = vmatprep.subr.mxu0 %v3472
    %5041 = vmatpush1.msra.mxu0 %v3471
    %5042 = vmatprep.subr.mxu0 %v3465
    %5043 = vmatpush1.msra.mxu0 %v3464
    %5044 = vmatprep.subr.mxu0 0.0
    %5045 = vmatpush2.msra.mxu0 0.0
    %5046 = vmatprep.subr.mxu0 0.0
    %5047 = vmatpush2.msra.mxu0 0.0
    %5048 = vmatprep.subr.mxu0 0.0
    %5049 = vmatpush2.msra.mxu0 0.0
    %5050 = vmatprep.subr.mxu0 0.0
    %5051 = vmatpush2.msra.mxu0 0.0
    %5052 = vmatprep.subr.mxu0 0.0
    %5053 = vmatpush2.msra.mxu0 0.0
    %5054 = vmatprep.subr.mxu0 0.0
    %5055 = vmatpush2.msra.mxu0 0.0
    %5056 = vmatprep.subr.mxu0 0.0
    %5057 = vmatpush2.msra.mxu0 0.0
    %5058 = vmatprep.subr.mxu0 %v3652
    %5059 = vmatpush2.msra.mxu0 %v3649
    %5060 = vmatprep.subr.mxu0 %v3626
    %5061 = vmatpush2.msra.mxu0 %v3625
    %5062 = vmatprep.subr.mxu0 %v3619
    %5063 = vmatpush2.msra.mxu0 %v3618
    %5064 = vmatprep.subr.mxu0 %v3612
    %5065 = vmatpush2.msra.mxu0 %v3611
    %5066 = vmatprep.subr.mxu0 %v3605
    %5067 = vmatpush2.msra.mxu0 %v3604
    %5068 = vmatprep.subr.mxu0 %v3598
    %5069 = vmatpush2.msra.mxu0 %v3597
    %5070 = vmatprep.subr.mxu0 %v3591
    %5071 = vmatpush2.msra.mxu0 %v3590
    %5072 = vmatprep.subr.mxu0 %v3584
    %5073 = vmatpush2.msra.mxu0 %v3583
    %5074 = vmatprep.subr.mxu0 %v3577
    %5075 = vmatpush2.msra.mxu0 %v3576
    %5076 = vmatprep.mubr.f32.mxu0 %v3639
    %5077 = vmatmul.mubr.f32.gmra.mxu0 %v192
    %v5078 = vpop.f32.mrf.mxu0
    %v5079 = vadd.f32 %v5008, %v5078
    %v5080 = vpop.f32.mrf.mxu0
    %v5081 = vadd.f32 %v5010, %v5080
    %5082 = vdwg.mxu0
    %5083 = vmatprep.subr.mxu0 %v1556
    %5084 = vmatpush1.msra.mxu0 %v1555
    %5085 = vmatprep.subr.mxu0 %v1549
    %5086 = vmatpush1.msra.mxu0 %v1548
    %5087 = vmatprep.subr.mxu0 %v1542
    %5088 = vmatpush1.msra.mxu0 %v1541
    %5089 = vmatprep.subr.mxu0 %v1535
    %5090 = vmatpush1.msra.mxu0 %v1534
    %5091 = vmatprep.subr.mxu0 %v1528
    %5092 = vmatpush1.msra.mxu0 %v1527
    %5093 = vmatprep.subr.mxu0 %v1521
    %5094 = vmatpush1.msra.mxu0 %v1520
    %5095 = vmatprep.subr.mxu0 %v1514
    %5096 = vmatpush1.msra.mxu0 %v1513
    %5097 = vmatprep.subr.mxu0 %v1507
    %5098 = vmatpush1.msra.mxu0 %v1506
    %5099 = vmatprep.subr.mxu0 %v1500
    %5100 = vmatpush1.msra.mxu0 %v1499
    %5101 = vmatprep.subr.mxu0 %v1493
    %5102 = vmatpush1.msra.mxu0 %v1492
    %5103 = vmatprep.subr.mxu0 %v1486
    %5104 = vmatpush1.msra.mxu0 %v1485
    %5105 = vmatprep.subr.mxu0 %v1479
    %5106 = vmatpush1.msra.mxu0 %v1478
    %5107 = vmatprep.subr.mxu0 %v1472
    %5108 = vmatpush1.msra.mxu0 %v1471
    %5109 = vmatprep.subr.mxu0 %v1465
    %5110 = vmatpush1.msra.mxu0 %v1464
    %5111 = vmatprep.subr.mxu0 %v1458
    %5112 = vmatpush1.msra.mxu0 %v1457
    %5113 = vmatprep.subr.mxu0 %v1451
    %5114 = vmatpush1.msra.mxu0 %v1450
    %5115 = vmatprep.subr.mxu0 %v1668
    %5116 = vmatpush2.msra.mxu0 %v1667
    %5117 = vmatprep.subr.mxu0 %v1661
    %5118 = vmatpush2.msra.mxu0 %v1660
    %5119 = vmatprep.subr.mxu0 %v1654
    %5120 = vmatpush2.msra.mxu0 %v1653
    %5121 = vmatprep.subr.mxu0 %v1647
    %5122 = vmatpush2.msra.mxu0 %v1646
    %5123 = vmatprep.subr.mxu0 %v1640
    %5124 = vmatpush2.msra.mxu0 %v1639
    %5125 = vmatprep.subr.mxu0 %v1633
    %5126 = vmatpush2.msra.mxu0 %v1632
    %5127 = vmatprep.subr.mxu0 %v1626
    %5128 = vmatpush2.msra.mxu0 %v1625
    %5129 = vmatprep.subr.mxu0 %v1619
    %5130 = vmatpush2.msra.mxu0 %v1618
    %5131 = vmatprep.subr.mxu0 %v1612
    %5132 = vmatpush2.msra.mxu0 %v1611
    %5133 = vmatprep.subr.mxu0 %v1605
    %5134 = vmatpush2.msra.mxu0 %v1604
    %5135 = vmatprep.subr.mxu0 %v1598
    %5136 = vmatpush2.msra.mxu0 %v1597
    %5137 = vmatprep.subr.mxu0 %v1591
    %5138 = vmatpush2.msra.mxu0 %v1590
    %5139 = vmatprep.subr.mxu0 %v1584
    %5140 = vmatpush2.msra.mxu0 %v1583
    %5141 = vmatprep.subr.mxu0 %v1577
    %5142 = vmatpush2.msra.mxu0 %v1576
    %5143 = vmatprep.subr.mxu0 %v1570
    %5144 = vmatpush2.msra.mxu0 %v1569
    %5145 = vmatprep.subr.mxu0 %v1563
    %5146 = vmatpush2.msra.mxu0 %v1562
    %5147 = vmatprep.mubr.f32.mxu0 %v175
    %5148 = vmatmul.mubr.f32.gmra.mxu0 %v174
    %v5149 = vpop.f32.mrf.mxu0
    %v5150 = vadd.f32 0.0, %v5149
    %v5151 = vpop.f32.mrf.mxu0
    %v5152 = vadd.f32 0.0, %v5151
    %5153 = vdwg.mxu0
    %5154 = vmatprep.subr.mxu0 %v1780
    %5155 = vmatpush1.msra.mxu0 %v1779
    %5156 = vmatprep.subr.mxu0 %v1773
    %5157 = vmatpush1.msra.mxu0 %v1772
    %5158 = vmatprep.subr.mxu0 %v1766
    %5159 = vmatpush1.msra.mxu0 %v1765
    %5160 = vmatprep.subr.mxu0 %v1759
    %5161 = vmatpush1.msra.mxu0 %v1758
    %5162 = vmatprep.subr.mxu0 %v1752
    %5163 = vmatpush1.msra.mxu0 %v1751
    %5164 = vmatprep.subr.mxu0 %v1745
    %5165 = vmatpush1.msra.mxu0 %v1744
    %5166 = vmatprep.subr.mxu0 %v1738
    %5167 = vmatpush1.msra.mxu0 %v1737
    %5168 = vmatprep.subr.mxu0 %v1731
    %5169 = vmatpush1.msra.mxu0 %v1730
    %5170 = vmatprep.subr.mxu0 %v1724
    %5171 = vmatpush1.msra.mxu0 %v1723
    %5172 = vmatprep.subr.mxu0 %v1717
    %5173 = vmatpush1.msra.mxu0 %v1716
    %5174 = vmatprep.subr.mxu0 %v1710
    %5175 = vmatpush1.msra.mxu0 %v1709
    %5176 = vmatprep.subr.mxu0 %v1703
    %5177 = vmatpush1.msra.mxu0 %v1702
    %5178 = vmatprep.subr.mxu0 %v1696
    %5179 = vmatpush1.msra.mxu0 %v1695
    %5180 = vmatprep.subr.mxu0 %v1689
    %5181 = vmatpush1.msra.mxu0 %v1688
    %5182 = vmatprep.subr.mxu0 %v1682
    %5183 = vmatpush1.msra.mxu0 %v1681
    %5184 = vmatprep.subr.mxu0 %v1675
    %5185 = vmatpush1.msra.mxu0 %v1674
    %5186 = vmatprep.subr.mxu0 %v1892
    %5187 = vmatpush2.msra.mxu0 %v1891
    %5188 = vmatprep.subr.mxu0 %v1885
    %5189 = vmatpush2.msra.mxu0 %v1884
    %5190 = vmatprep.subr.mxu0 %v1878
    %5191 = vmatpush2.msra.mxu0 %v1877
    %5192 = vmatprep.subr.mxu0 %v1871
    %5193 = vmatpush2.msra.mxu0 %v1870
    %5194 = vmatprep.subr.mxu0 %v1864
    %5195 = vmatpush2.msra.mxu0 %v1863
    %5196 = vmatprep.subr.mxu0 %v1857
    %5197 = vmatpush2.msra.mxu0 %v1856
    %5198 = vmatprep.subr.mxu0 %v1850
    %5199 = vmatpush2.msra.mxu0 %v1849
    %5200 = vmatprep.subr.mxu0 %v1843
    %5201 = vmatpush2.msra.mxu0 %v1842
    %5202 = vmatprep.subr.mxu0 %v1836
    %5203 = vmatpush2.msra.mxu0 %v1835
    %5204 = vmatprep.subr.mxu0 %v1829
    %5205 = vmatpush2.msra.mxu0 %v1828
    %5206 = vmatprep.subr.mxu0 %v1822
    %5207 = vmatpush2.msra.mxu0 %v1821
    %5208 = vmatprep.subr.mxu0 %v1815
    %5209 = vmatpush2.msra.mxu0 %v1814
    %5210 = vmatprep.subr.mxu0 %v1808
    %5211 = vmatpush2.msra.mxu0 %v1807
    %5212 = vmatprep.subr.mxu0 %v1801
    %5213 = vmatpush2.msra.mxu0 %v1800
    %5214 = vmatprep.subr.mxu0 %v1794
    %5215 = vmatpush2.msra.mxu0 %v1793
    %5216 = vmatprep.subr.mxu0 %v1787
    %5217 = vmatpush2.msra.mxu0 %v1786
    %5218 = vmatprep.mubr.f32.mxu0 %v177
    %5219 = vmatmul.mubr.f32.gmra.mxu0 %v176
    %v5220 = vpop.f32.mrf.mxu0
    %v5221 = vadd.f32 %v5150, %v5220
    %v5222 = vpop.f32.mrf.mxu0
    %v5223 = vadd.f32 %v5152, %v5222
    %5224 = vdwg.mxu0
    %5225 = vmatprep.subr.mxu0 %v2004
    %5226 = vmatpush1.msra.mxu0 %v2003
    %5227 = vmatprep.subr.mxu0 %v1997
    %5228 = vmatpush1.msra.mxu0 %v1996
    %5229 = vmatprep.subr.mxu0 %v1990
    %5230 = vmatpush1.msra.mxu0 %v1989
    %5231 = vmatprep.subr.mxu0 %v1983
    %5232 = vmatpush1.msra.mxu0 %v1982
    %5233 = vmatprep.subr.mxu0 %v1976
    %5234 = vmatpush1.msra.mxu0 %v1975
    %5235 = vmatprep.subr.mxu0 %v1969
    %5236 = vmatpush1.msra.mxu0 %v1968
    %5237 = vmatprep.subr.mxu0 %v1962
    %5238 = vmatpush1.msra.mxu0 %v1961
    %5239 = vmatprep.subr.mxu0 %v1955
    %5240 = vmatpush1.msra.mxu0 %v1954
    %5241 = vmatprep.subr.mxu0 %v1948
    %5242 = vmatpush1.msra.mxu0 %v1947
    %5243 = vmatprep.subr.mxu0 %v1941
    %5244 = vmatpush1.msra.mxu0 %v1940
    %5245 = vmatprep.subr.mxu0 %v1934
    %5246 = vmatpush1.msra.mxu0 %v1933
    %5247 = vmatprep.subr.mxu0 %v1927
    %5248 = vmatpush1.msra.mxu0 %v1926
    %5249 = vmatprep.subr.mxu0 %v1920
    %5250 = vmatpush1.msra.mxu0 %v1919
    %5251 = vmatprep.subr.mxu0 %v1913
    %5252 = vmatpush1.msra.mxu0 %v1912
    %5253 = vmatprep.subr.mxu0 %v1906
    %5254 = vmatpush1.msra.mxu0 %v1905
    %5255 = vmatprep.subr.mxu0 %v1899
    %5256 = vmatpush1.msra.mxu0 %v1898
    %5257 = vmatprep.subr.mxu0 %v2116
    %5258 = vmatpush2.msra.mxu0 %v2115
    %5259 = vmatprep.subr.mxu0 %v2109
    %5260 = vmatpush2.msra.mxu0 %v2108
    %5261 = vmatprep.subr.mxu0 %v2102
    %5262 = vmatpush2.msra.mxu0 %v2101
    %5263 = vmatprep.subr.mxu0 %v2095
    %5264 = vmatpush2.msra.mxu0 %v2094
    %5265 = vmatprep.subr.mxu0 %v2088
    %5266 = vmatpush2.msra.mxu0 %v2087
    %5267 = vmatprep.subr.mxu0 %v2081
    %5268 = vmatpush2.msra.mxu0 %v2080
    %5269 = vmatprep.subr.mxu0 %v2074
    %5270 = vmatpush2.msra.mxu0 %v2073
    %5271 = vmatprep.subr.mxu0 %v2067
    %5272 = vmatpush2.msra.mxu0 %v2066
    %5273 = vmatprep.subr.mxu0 %v2060
    %5274 = vmatpush2.msra.mxu0 %v2059
    %5275 = vmatprep.subr.mxu0 %v2053
    %5276 = vmatpush2.msra.mxu0 %v2052
    %5277 = vmatprep.subr.mxu0 %v2046
    %5278 = vmatpush2.msra.mxu0 %v2045
    %5279 = vmatprep.subr.mxu0 %v2039
    %5280 = vmatpush2.msra.mxu0 %v2038
    %5281 = vmatprep.subr.mxu0 %v2032
    %5282 = vmatpush2.msra.mxu0 %v2031
    %5283 = vmatprep.subr.mxu0 %v2025
    %5284 = vmatpush2.msra.mxu0 %v2024
    %5285 = vmatprep.subr.mxu0 %v2018
    %5286 = vmatpush2.msra.mxu0 %v2017
    %5287 = vmatprep.subr.mxu0 %v2011
    %5288 = vmatpush2.msra.mxu0 %v2010
    %5289 = vmatprep.mubr.f32.mxu0 %v179
    %5290 = vmatmul.mubr.f32.gmra.mxu0 %v178
    %v5291 = vpop.f32.mrf.mxu0
    %v5292 = vadd.f32 %v5221, %v5291
    %v5293 = vpop.f32.mrf.mxu0
    %v5294 = vadd.f32 %v5223, %v5293
    %5295 = vdwg.mxu0
    %5296 = vmatprep.subr.mxu0 %v2228
    %5297 = vmatpush1.msra.mxu0 %v2227
    %5298 = vmatprep.subr.mxu0 %v2221
    %5299 = vmatpush1.msra.mxu0 %v2220
    %5300 = vmatprep.subr.mxu0 %v2214
    %5301 = vmatpush1.msra.mxu0 %v2213
    %5302 = vmatprep.subr.mxu0 %v2207
    %5303 = vmatpush1.msra.mxu0 %v2206
    %5304 = vmatprep.subr.mxu0 %v2200
    %5305 = vmatpush1.msra.mxu0 %v2199
    %5306 = vmatprep.subr.mxu0 %v2193
    %5307 = vmatpush1.msra.mxu0 %v2192
    %5308 = vmatprep.subr.mxu0 %v2186
    %5309 = vmatpush1.msra.mxu0 %v2185
    %5310 = vmatprep.subr.mxu0 %v2179
    %5311 = vmatpush1.msra.mxu0 %v2178
    %5312 = vmatprep.subr.mxu0 %v2172
    %5313 = vmatpush1.msra.mxu0 %v2171
    %5314 = vmatprep.subr.mxu0 %v2165
    %5315 = vmatpush1.msra.mxu0 %v2164
    %5316 = vmatprep.subr.mxu0 %v2158
    %5317 = vmatpush1.msra.mxu0 %v2157
    %5318 = vmatprep.subr.mxu0 %v2151
    %5319 = vmatpush1.msra.mxu0 %v2150
    %5320 = vmatprep.subr.mxu0 %v2144
    %5321 = vmatpush1.msra.mxu0 %v2143
    %5322 = vmatprep.subr.mxu0 %v2137
    %5323 = vmatpush1.msra.mxu0 %v2136
    %5324 = vmatprep.subr.mxu0 %v2130
    %5325 = vmatpush1.msra.mxu0 %v2129
    %5326 = vmatprep.subr.mxu0 %v2123
    %5327 = vmatpush1.msra.mxu0 %v2122
    %5328 = vmatprep.subr.mxu0 %v2340
    %5329 = vmatpush2.msra.mxu0 %v2339
    %5330 = vmatprep.subr.mxu0 %v2333
    %5331 = vmatpush2.msra.mxu0 %v2332
    %5332 = vmatprep.subr.mxu0 %v2326
    %5333 = vmatpush2.msra.mxu0 %v2325
    %5334 = vmatprep.subr.mxu0 %v2319
    %5335 = vmatpush2.msra.mxu0 %v2318
    %5336 = vmatprep.subr.mxu0 %v2312
    %5337 = vmatpush2.msra.mxu0 %v2311
    %5338 = vmatprep.subr.mxu0 %v2305
    %5339 = vmatpush2.msra.mxu0 %v2304
    %5340 = vmatprep.subr.mxu0 %v2298
    %5341 = vmatpush2.msra.mxu0 %v2297
    %5342 = vmatprep.subr.mxu0 %v2291
    %5343 = vmatpush2.msra.mxu0 %v2290
    %5344 = vmatprep.subr.mxu0 %v2284
    %5345 = vmatpush2.msra.mxu0 %v2283
    %5346 = vmatprep.subr.mxu0 %v2277
    %5347 = vmatpush2.msra.mxu0 %v2276
    %5348 = vmatprep.subr.mxu0 %v2270
    %5349 = vmatpush2.msra.mxu0 %v2269
    %5350 = vmatprep.subr.mxu0 %v2263
    %5351 = vmatpush2.msra.mxu0 %v2262
    %5352 = vmatprep.subr.mxu0 %v2256
    %5353 = vmatpush2.msra.mxu0 %v2255
    %5354 = vmatprep.subr.mxu0 %v2249
    %5355 = vmatpush2.msra.mxu0 %v2248
    %5356 = vmatprep.subr.mxu0 %v2242
    %5357 = vmatpush2.msra.mxu0 %v2241
    %5358 = vmatprep.subr.mxu0 %v2235
    %5359 = vmatpush2.msra.mxu0 %v2234
    %5360 = vmatprep.mubr.f32.mxu0 %v181
    %5361 = vmatmul.mubr.f32.gmra.mxu0 %v180
    %v5362 = vpop.f32.mrf.mxu0
    %v5363 = vadd.f32 %v5292, %v5362
    %v5364 = vpop.f32.mrf.mxu0
    %v5365 = vadd.f32 %v5294, %v5364
    %5366 = vdwg.mxu0
    %5367 = vmatprep.subr.mxu0 %v2452
    %5368 = vmatpush1.msra.mxu0 %v2451
    %5369 = vmatprep.subr.mxu0 %v2445
    %5370 = vmatpush1.msra.mxu0 %v2444
    %5371 = vmatprep.subr.mxu0 %v2438
    %5372 = vmatpush1.msra.mxu0 %v2437
    %5373 = vmatprep.subr.mxu0 %v2431
    %5374 = vmatpush1.msra.mxu0 %v2430
    %5375 = vmatprep.subr.mxu0 %v2424
    %5376 = vmatpush1.msra.mxu0 %v2423
    %5377 = vmatprep.subr.mxu0 %v2417
    %5378 = vmatpush1.msra.mxu0 %v2416
    %5379 = vmatprep.subr.mxu0 %v2410
    %5380 = vmatpush1.msra.mxu0 %v2409
    %5381 = vmatprep.subr.mxu0 %v2403
    %5382 = vmatpush1.msra.mxu0 %v2402
    %5383 = vmatprep.subr.mxu0 %v2396
    %5384 = vmatpush1.msra.mxu0 %v2395
    %5385 = vmatprep.subr.mxu0 %v2389
    %5386 = vmatpush1.msra.mxu0 %v2388
    %5387 = vmatprep.subr.mxu0 %v2382
    %5388 = vmatpush1.msra.mxu0 %v2381
    %5389 = vmatprep.subr.mxu0 %v2375
    %5390 = vmatpush1.msra.mxu0 %v2374
    %5391 = vmatprep.subr.mxu0 %v2368
    %5392 = vmatpush1.msra.mxu0 %v2367
    %5393 = vmatprep.subr.mxu0 %v2361
    %5394 = vmatpush1.msra.mxu0 %v2360
    %5395 = vmatprep.subr.mxu0 %v2354
    %5396 = vmatpush1.msra.mxu0 %v2353
    %5397 = vmatprep.subr.mxu0 %v2347
    %5398 = vmatpush1.msra.mxu0 %v2346
    %5399 = vmatprep.subr.mxu0 %v2564
    %5400 = vmatpush2.msra.mxu0 %v2563
    %5401 = vmatprep.subr.mxu0 %v2557
    %5402 = vmatpush2.msra.mxu0 %v2556
    %5403 = vmatprep.subr.mxu0 %v2550
    %5404 = vmatpush2.msra.mxu0 %v2549
    %5405 = vmatprep.subr.mxu0 %v2543
    %5406 = vmatpush2.msra.mxu0 %v2542
    %5407 = vmatprep.subr.mxu0 %v2536
    %5408 = vmatpush2.msra.mxu0 %v2535
    %5409 = vmatprep.subr.mxu0 %v2529
    %5410 = vmatpush2.msra.mxu0 %v2528
    %5411 = vmatprep.subr.mxu0 %v2522
    %5412 = vmatpush2.msra.mxu0 %v2521
    %5413 = vmatprep.subr.mxu0 %v2515
    %5414 = vmatpush2.msra.mxu0 %v2514
    %5415 = vmatprep.subr.mxu0 %v2508
    %5416 = vmatpush2.msra.mxu0 %v2507
    %5417 = vmatprep.subr.mxu0 %v2501
    %5418 = vmatpush2.msra.mxu0 %v2500
    %5419 = vmatprep.subr.mxu0 %v2494
    %5420 = vmatpush2.msra.mxu0 %v2493
    %5421 = vmatprep.subr.mxu0 %v2487
    %5422 = vmatpush2.msra.mxu0 %v2486
    %5423 = vmatprep.subr.mxu0 %v2480
    %5424 = vmatpush2.msra.mxu0 %v2479
    %5425 = vmatprep.subr.mxu0 %v2473
    %5426 = vmatpush2.msra.mxu0 %v2472
    %5427 = vmatprep.subr.mxu0 %v2466
    %5428 = vmatpush2.msra.mxu0 %v2465
    %5429 = vmatprep.subr.mxu0 %v2459
    %5430 = vmatpush2.msra.mxu0 %v2458
    %5431 = vmatprep.mubr.f32.mxu0 %v183
    %5432 = vmatmul.mubr.f32.gmra.mxu0 %v182
    %v5433 = vpop.f32.mrf.mxu0
    %v5434 = vadd.f32 %v5363, %v5433
    %v5435 = vpop.f32.mrf.mxu0
    %v5436 = vadd.f32 %v5365, %v5435
    %5437 = vdwg.mxu0
    %5438 = vmatprep.subr.mxu0 %v2676
    %5439 = vmatpush1.msra.mxu0 %v2675
    %5440 = vmatprep.subr.mxu0 %v2669
    %5441 = vmatpush1.msra.mxu0 %v2668
    %5442 = vmatprep.subr.mxu0 %v2662
    %5443 = vmatpush1.msra.mxu0 %v2661
    %5444 = vmatprep.subr.mxu0 %v2655
    %5445 = vmatpush1.msra.mxu0 %v2654
    %5446 = vmatprep.subr.mxu0 %v2648
    %5447 = vmatpush1.msra.mxu0 %v2647
    %5448 = vmatprep.subr.mxu0 %v2641
    %5449 = vmatpush1.msra.mxu0 %v2640
    %5450 = vmatprep.subr.mxu0 %v2634
    %5451 = vmatpush1.msra.mxu0 %v2633
    %5452 = vmatprep.subr.mxu0 %v2627
    %5453 = vmatpush1.msra.mxu0 %v2626
    %5454 = vmatprep.subr.mxu0 %v2620
    %5455 = vmatpush1.msra.mxu0 %v2619
    %5456 = vmatprep.subr.mxu0 %v2613
    %5457 = vmatpush1.msra.mxu0 %v2612
    %5458 = vmatprep.subr.mxu0 %v2606
    %5459 = vmatpush1.msra.mxu0 %v2605
    %5460 = vmatprep.subr.mxu0 %v2599
    %5461 = vmatpush1.msra.mxu0 %v2598
    %5462 = vmatprep.subr.mxu0 %v2592
    %5463 = vmatpush1.msra.mxu0 %v2591
    %5464 = vmatprep.subr.mxu0 %v2585
    %5465 = vmatpush1.msra.mxu0 %v2584
    %5466 = vmatprep.subr.mxu0 %v2578
    %5467 = vmatpush1.msra.mxu0 %v2577
    %5468 = vmatprep.subr.mxu0 %v2571
    %5469 = vmatpush1.msra.mxu0 %v2570
    %5470 = vmatprep.subr.mxu0 %v2788
    %5471 = vmatpush2.msra.mxu0 %v2787
    %5472 = vmatprep.subr.mxu0 %v2781
    %5473 = vmatpush2.msra.mxu0 %v2780
    %5474 = vmatprep.subr.mxu0 %v2774
    %5475 = vmatpush2.msra.mxu0 %v2773
    %5476 = vmatprep.subr.mxu0 %v2767
    %5477 = vmatpush2.msra.mxu0 %v2766
    %5478 = vmatprep.subr.mxu0 %v2760
    %5479 = vmatpush2.msra.mxu0 %v2759
    %5480 = vmatprep.subr.mxu0 %v2753
    %5481 = vmatpush2.msra.mxu0 %v2752
    %5482 = vmatprep.subr.mxu0 %v2746
    %5483 = vmatpush2.msra.mxu0 %v2745
    %5484 = vmatprep.subr.mxu0 %v2739
    %5485 = vmatpush2.msra.mxu0 %v2738
    %5486 = vmatprep.subr.mxu0 %v2732
    %5487 = vmatpush2.msra.mxu0 %v2731
    %5488 = vmatprep.subr.mxu0 %v2725
    %5489 = vmatpush2.msra.mxu0 %v2724
    %5490 = vmatprep.subr.mxu0 %v2718
    %5491 = vmatpush2.msra.mxu0 %v2717
    %5492 = vmatprep.subr.mxu0 %v2711
    %5493 = vmatpush2.msra.mxu0 %v2710
    %5494 = vmatprep.subr.mxu0 %v2704
    %5495 = vmatpush2.msra.mxu0 %v2703
    %5496 = vmatprep.subr.mxu0 %v2697
    %5497 = vmatpush2.msra.mxu0 %v2696
    %5498 = vmatprep.subr.mxu0 %v2690
    %5499 = vmatpush2.msra.mxu0 %v2689
    %5500 = vmatprep.subr.mxu0 %v2683
    %5501 = vmatpush2.msra.mxu0 %v2682
    %5502 = vmatprep.mubr.f32.mxu0 %v185
    %5503 = vmatmul.mubr.f32.gmra.mxu0 %v184
    %v5504 = vpop.f32.mrf.mxu0
    %v5505 = vadd.f32 %v5434, %v5504
    %v5506 = vpop.f32.mrf.mxu0
    %v5507 = vadd.f32 %v5436, %v5506
    %5508 = vdwg.mxu0
    %5509 = vmatprep.subr.mxu0 %v2900
    %5510 = vmatpush1.msra.mxu0 %v2899
    %5511 = vmatprep.subr.mxu0 %v2893
    %5512 = vmatpush1.msra.mxu0 %v2892
    %5513 = vmatprep.subr.mxu0 %v2886
    %5514 = vmatpush1.msra.mxu0 %v2885
    %5515 = vmatprep.subr.mxu0 %v2879
    %5516 = vmatpush1.msra.mxu0 %v2878
    %5517 = vmatprep.subr.mxu0 %v2872
    %5518 = vmatpush1.msra.mxu0 %v2871
    %5519 = vmatprep.subr.mxu0 %v2865
    %5520 = vmatpush1.msra.mxu0 %v2864
    %5521 = vmatprep.subr.mxu0 %v2858
    %5522 = vmatpush1.msra.mxu0 %v2857
    %5523 = vmatprep.subr.mxu0 %v2851
    %5524 = vmatpush1.msra.mxu0 %v2850
    %5525 = vmatprep.subr.mxu0 %v2844
    %5526 = vmatpush1.msra.mxu0 %v2843
    %5527 = vmatprep.subr.mxu0 %v2837
    %5528 = vmatpush1.msra.mxu0 %v2836
    %5529 = vmatprep.subr.mxu0 %v2830
    %5530 = vmatpush1.msra.mxu0 %v2829
    %5531 = vmatprep.subr.mxu0 %v2823
    %5532 = vmatpush1.msra.mxu0 %v2822
    %5533 = vmatprep.subr.mxu0 %v2816
    %5534 = vmatpush1.msra.mxu0 %v2815
    %5535 = vmatprep.subr.mxu0 %v2809
    %5536 = vmatpush1.msra.mxu0 %v2808
    %5537 = vmatprep.subr.mxu0 %v2802
    %5538 = vmatpush1.msra.mxu0 %v2801
    %5539 = vmatprep.subr.mxu0 %v2795
    %5540 = vmatpush1.msra.mxu0 %v2794
    %5541 = vmatprep.subr.mxu0 %v3012
    %5542 = vmatpush2.msra.mxu0 %v3011
    %5543 = vmatprep.subr.mxu0 %v3005
    %5544 = vmatpush2.msra.mxu0 %v3004
    %5545 = vmatprep.subr.mxu0 %v2998
    %5546 = vmatpush2.msra.mxu0 %v2997
    %5547 = vmatprep.subr.mxu0 %v2991
    %5548 = vmatpush2.msra.mxu0 %v2990
    %5549 = vmatprep.subr.mxu0 %v2984
    %5550 = vmatpush2.msra.mxu0 %v2983
    %5551 = vmatprep.subr.mxu0 %v2977
    %5552 = vmatpush2.msra.mxu0 %v2976
    %5553 = vmatprep.subr.mxu0 %v2970
    %5554 = vmatpush2.msra.mxu0 %v2969
    %5555 = vmatprep.subr.mxu0 %v2963
    %5556 = vmatpush2.msra.mxu0 %v2962
    %5557 = vmatprep.subr.mxu0 %v2956
    %5558 = vmatpush2.msra.mxu0 %v2955
    %5559 = vmatprep.subr.mxu0 %v2949
    %5560 = vmatpush2.msra.mxu0 %v2948
    %5561 = vmatprep.subr.mxu0 %v2942
    %5562 = vmatpush2.msra.mxu0 %v2941
    %5563 = vmatprep.subr.mxu0 %v2935
    %5564 = vmatpush2.msra.mxu0 %v2934
    %5565 = vmatprep.subr.mxu0 %v2928
    %5566 = vmatpush2.msra.mxu0 %v2927
    %5567 = vmatprep.subr.mxu0 %v2921
    %5568 = vmatpush2.msra.mxu0 %v2920
    %5569 = vmatprep.subr.mxu0 %v2914
    %5570 = vmatpush2.msra.mxu0 %v2913
    %5571 = vmatprep.subr.mxu0 %v2907
    %5572 = vmatpush2.msra.mxu0 %v2906
    %5573 = vmatprep.mubr.f32.mxu0 %v187
    %5574 = vmatmul.mubr.f32.gmra.mxu0 %v186
    %v5575 = vpop.f32.mrf.mxu0
    %v5576 = vadd.f32 %v5505, %v5575
    %v5577 = vpop.f32.mrf.mxu0
    %v5578 = vadd.f32 %v5507, %v5577
    %5579 = vdwg.mxu0
    %5580 = vmatprep.subr.mxu0 %v3124
    %5581 = vmatpush1.msra.mxu0 %v3123
    %5582 = vmatprep.subr.mxu0 %v3117
    %5583 = vmatpush1.msra.mxu0 %v3116
    %5584 = vmatprep.subr.mxu0 %v3110
    %5585 = vmatpush1.msra.mxu0 %v3109
    %5586 = vmatprep.subr.mxu0 %v3103
    %5587 = vmatpush1.msra.mxu0 %v3102
    %5588 = vmatprep.subr.mxu0 %v3096
    %5589 = vmatpush1.msra.mxu0 %v3095
    %5590 = vmatprep.subr.mxu0 %v3089
    %5591 = vmatpush1.msra.mxu0 %v3088
    %5592 = vmatprep.subr.mxu0 %v3082
    %5593 = vmatpush1.msra.mxu0 %v3081
    %5594 = vmatprep.subr.mxu0 %v3075
    %5595 = vmatpush1.msra.mxu0 %v3074
    %5596 = vmatprep.subr.mxu0 %v3068
    %5597 = vmatpush1.msra.mxu0 %v3067
    %5598 = vmatprep.subr.mxu0 %v3061
    %5599 = vmatpush1.msra.mxu0 %v3060
    %5600 = vmatprep.subr.mxu0 %v3054
    %5601 = vmatpush1.msra.mxu0 %v3053
    %5602 = vmatprep.subr.mxu0 %v3047
    %5603 = vmatpush1.msra.mxu0 %v3046
    %5604 = vmatprep.subr.mxu0 %v3040
    %5605 = vmatpush1.msra.mxu0 %v3039
    %5606 = vmatprep.subr.mxu0 %v3033
    %5607 = vmatpush1.msra.mxu0 %v3032
    %5608 = vmatprep.subr.mxu0 %v3026
    %5609 = vmatpush1.msra.mxu0 %v3025
    %5610 = vmatprep.subr.mxu0 %v3019
    %5611 = vmatpush1.msra.mxu0 %v3018
    %5612 = vmatprep.subr.mxu0 %v3236
    %5613 = vmatpush2.msra.mxu0 %v3235
    %5614 = vmatprep.subr.mxu0 %v3229
    %5615 = vmatpush2.msra.mxu0 %v3228
    %5616 = vmatprep.subr.mxu0 %v3222
    %5617 = vmatpush2.msra.mxu0 %v3221
    %5618 = vmatprep.subr.mxu0 %v3215
    %5619 = vmatpush2.msra.mxu0 %v3214
    %5620 = vmatprep.subr.mxu0 %v3208
    %5621 = vmatpush2.msra.mxu0 %v3207
    %5622 = vmatprep.subr.mxu0 %v3201
    %5623 = vmatpush2.msra.mxu0 %v3200
    %5624 = vmatprep.subr.mxu0 %v3194
    %5625 = vmatpush2.msra.mxu0 %v3193
    %5626 = vmatprep.subr.mxu0 %v3187
    %5627 = vmatpush2.msra.mxu0 %v3186
    %5628 = vmatprep.subr.mxu0 %v3180
    %5629 = vmatpush2.msra.mxu0 %v3179
    %5630 = vmatprep.subr.mxu0 %v3173
    %5631 = vmatpush2.msra.mxu0 %v3172
    %5632 = vmatprep.subr.mxu0 %v3166
    %5633 = vmatpush2.msra.mxu0 %v3165
    %5634 = vmatprep.subr.mxu0 %v3159
    %5635 = vmatpush2.msra.mxu0 %v3158
    %5636 = vmatprep.subr.mxu0 %v3152
    %5637 = vmatpush2.msra.mxu0 %v3151
    %5638 = vmatprep.subr.mxu0 %v3145
    %5639 = vmatpush2.msra.mxu0 %v3144
    %5640 = vmatprep.subr.mxu0 %v3138
    %5641 = vmatpush2.msra.mxu0 %v3137
    %5642 = vmatprep.subr.mxu0 %v3131
    %5643 = vmatpush2.msra.mxu0 %v3130
    %5644 = vmatprep.mubr.f32.mxu0 %v189
    %5645 = vmatmul.mubr.f32.gmra.mxu0 %v188
    %v5646 = vpop.f32.mrf.mxu0
    %v5647 = vadd.f32 %v5576, %v5646
    %v5648 = vpop.f32.mrf.mxu0
    %v5649 = vadd.f32 %v5578, %v5648
    %5650 = vdwg.mxu0
    %5651 = vmatprep.subr.mxu0 %v3348
    %5652 = vmatpush1.msra.mxu0 %v3347
    %5653 = vmatprep.subr.mxu0 %v3341
    %5654 = vmatpush1.msra.mxu0 %v3340
    %5655 = vmatprep.subr.mxu0 %v3334
    %5656 = vmatpush1.msra.mxu0 %v3333
    %5657 = vmatprep.subr.mxu0 %v3327
    %5658 = vmatpush1.msra.mxu0 %v3326
    %5659 = vmatprep.subr.mxu0 %v3320
    %5660 = vmatpush1.msra.mxu0 %v3319
    %5661 = vmatprep.subr.mxu0 %v3313
    %5662 = vmatpush1.msra.mxu0 %v3312
    %5663 = vmatprep.subr.mxu0 %v3306
    %5664 = vmatpush1.msra.mxu0 %v3305
    %5665 = vmatprep.subr.mxu0 %v3299
    %5666 = vmatpush1.msra.mxu0 %v3298
    %5667 = vmatprep.subr.mxu0 %v3292
    %5668 = vmatpush1.msra.mxu0 %v3291
    %5669 = vmatprep.subr.mxu0 %v3285
    %5670 = vmatpush1.msra.mxu0 %v3284
    %5671 = vmatprep.subr.mxu0 %v3278
    %5672 = vmatpush1.msra.mxu0 %v3277
    %5673 = vmatprep.subr.mxu0 %v3271
    %5674 = vmatpush1.msra.mxu0 %v3270
    %5675 = vmatprep.subr.mxu0 %v3264
    %5676 = vmatpush1.msra.mxu0 %v3263
    %5677 = vmatprep.subr.mxu0 %v3257
    %5678 = vmatpush1.msra.mxu0 %v3256
    %5679 = vmatprep.subr.mxu0 %v3250
    %5680 = vmatpush1.msra.mxu0 %v3249
    %5681 = vmatprep.subr.mxu0 %v3243
    %5682 = vmatpush1.msra.mxu0 %v3242
    %5683 = vmatprep.subr.mxu0 %v3460
    %5684 = vmatpush2.msra.mxu0 %v3459
    %5685 = vmatprep.subr.mxu0 %v3453
    %5686 = vmatpush2.msra.mxu0 %v3452
    %5687 = vmatprep.subr.mxu0 %v3446
    %5688 = vmatpush2.msra.mxu0 %v3445
    %5689 = vmatprep.subr.mxu0 %v3439
    %5690 = vmatpush2.msra.mxu0 %v3438
    %5691 = vmatprep.subr.mxu0 %v3432
    %5692 = vmatpush2.msra.mxu0 %v3431
    %5693 = vmatprep.subr.mxu0 %v3425
    %5694 = vmatpush2.msra.mxu0 %v3424
    %5695 = vmatprep.subr.mxu0 %v3418
    %5696 = vmatpush2.msra.mxu0 %v3417
    %5697 = vmatprep.subr.mxu0 %v3411
    %5698 = vmatpush2.msra.mxu0 %v3410
    %5699 = vmatprep.subr.mxu0 %v3404
    %5700 = vmatpush2.msra.mxu0 %v3403
    %5701 = vmatprep.subr.mxu0 %v3397
    %5702 = vmatpush2.msra.mxu0 %v3396
    %5703 = vmatprep.subr.mxu0 %v3390
    %5704 = vmatpush2.msra.mxu0 %v3389
    %5705 = vmatprep.subr.mxu0 %v3383
    %5706 = vmatpush2.msra.mxu0 %v3382
    %5707 = vmatprep.subr.mxu0 %v3376
    %5708 = vmatpush2.msra.mxu0 %v3375
    %5709 = vmatprep.subr.mxu0 %v3369
    %5710 = vmatpush2.msra.mxu0 %v3368
    %5711 = vmatprep.subr.mxu0 %v3362
    %5712 = vmatpush2.msra.mxu0 %v3361
    %5713 = vmatprep.subr.mxu0 %v3355
    %5714 = vmatpush2.msra.mxu0 %v3354
    %5715 = vmatprep.mubr.f32.mxu0 %v191
    %5716 = vmatmul.mubr.f32.gmra.mxu0 %v190
    %v5717 = vpop.f32.mrf.mxu0
    %v5718 = vadd.f32 %v5647, %v5717
    %v5719 = vpop.f32.mrf.mxu0
    %v5720 = vadd.f32 %v5649, %v5719
    %5721 = vdwg.mxu0
    %5722 = vmatprep.subr.mxu0 %v3572
    %5723 = vmatpush1.msra.mxu0 %v3571
    %5724 = vmatprep.subr.mxu0 %v3565
    %5725 = vmatpush1.msra.mxu0 %v3564
    %5726 = vmatprep.subr.mxu0 %v3558
    %5727 = vmatpush1.msra.mxu0 %v3557
    %5728 = vmatprep.subr.mxu0 %v3551
    %5729 = vmatpush1.msra.mxu0 %v3550
    %5730 = vmatprep.subr.mxu0 %v3544
    %5731 = vmatpush1.msra.mxu0 %v3543
    %5732 = vmatprep.subr.mxu0 %v3537
    %5733 = vmatpush1.msra.mxu0 %v3536
    %5734 = vmatprep.subr.mxu0 %v3530
    %5735 = vmatpush1.msra.mxu0 %v3529
    %5736 = vmatprep.subr.mxu0 %v3523
    %5737 = vmatpush1.msra.mxu0 %v3522
    %5738 = vmatprep.subr.mxu0 %v3516
    %5739 = vmatpush1.msra.mxu0 %v3515
    %5740 = vmatprep.subr.mxu0 %v3509
    %5741 = vmatpush1.msra.mxu0 %v3508
    %5742 = vmatprep.subr.mxu0 %v3502
    %5743 = vmatpush1.msra.mxu0 %v3501
    %5744 = vmatprep.subr.mxu0 %v3495
    %5745 = vmatpush1.msra.mxu0 %v3494
    %5746 = vmatprep.subr.mxu0 %v3488
    %5747 = vmatpush1.msra.mxu0 %v3487
    %5748 = vmatprep.subr.mxu0 %v3481
    %5749 = vmatpush1.msra.mxu0 %v3480
    %5750 = vmatprep.subr.mxu0 %v3474
    %5751 = vmatpush1.msra.mxu0 %v3473
    %5752 = vmatprep.subr.mxu0 %v3467
    %5753 = vmatpush1.msra.mxu0 %v3466
    %5754 = vmatprep.subr.mxu0 0.0
    %5755 = vmatpush2.msra.mxu0 0.0
    %5756 = vmatprep.subr.mxu0 0.0
    %5757 = vmatpush2.msra.mxu0 0.0
    %5758 = vmatprep.subr.mxu0 0.0
    %5759 = vmatpush2.msra.mxu0 0.0
    %5760 = vmatprep.subr.mxu0 0.0
    %5761 = vmatpush2.msra.mxu0 0.0
    %5762 = vmatprep.subr.mxu0 0.0
    %5763 = vmatpush2.msra.mxu0 0.0
    %5764 = vmatprep.subr.mxu0 0.0
    %5765 = vmatpush2.msra.mxu0 0.0
    %5766 = vmatprep.subr.mxu0 0.0
    %5767 = vmatpush2.msra.mxu0 0.0
    %5768 = vmatprep.subr.mxu0 %v3658
    %5769 = vmatpush2.msra.mxu0 %v3655
    %5770 = vmatprep.subr.mxu0 %v3628
    %5771 = vmatpush2.msra.mxu0 %v3627
    %5772 = vmatprep.subr.mxu0 %v3621
    %5773 = vmatpush2.msra.mxu0 %v3620
    %5774 = vmatprep.subr.mxu0 %v3614
    %5775 = vmatpush2.msra.mxu0 %v3613
    %5776 = vmatprep.subr.mxu0 %v3607
    %5777 = vmatpush2.msra.mxu0 %v3606
    %5778 = vmatprep.subr.mxu0 %v3600
    %5779 = vmatpush2.msra.mxu0 %v3599
    %5780 = vmatprep.subr.mxu0 %v3593
    %5781 = vmatpush2.msra.mxu0 %v3592
    %5782 = vmatprep.subr.mxu0 %v3586
    %5783 = vmatpush2.msra.mxu0 %v3585
    %5784 = vmatprep.subr.mxu0 %v3579
    %5785 = vmatpush2.msra.mxu0 %v3578
    %5786 = vmatprep.mubr.f32.mxu0 %v3639
    %5787 = vmatmul.mubr.f32.gmra.mxu0 %v192
    %v5788 = vpop.f32.mrf.mxu0
    %v5789 = vadd.f32 %v5718, %v5788
    %v5790 = vpop.f32.mrf.mxu0
    %v5791 = vadd.f32 %v5720, %v5790
    %5792 = vdwg.mxu0
    %5793 = vmatprep.subr.mxu0 0.0
    %5794 = vmatpush1.msra.mxu0 %v1557
    %5795 = vmatprep.subr.mxu0 0.0
    %5796 = vmatpush1.msra.mxu0 %v1550
    %5797 = vmatprep.subr.mxu0 0.0
    %5798 = vmatpush1.msra.mxu0 %v1543
    %5799 = vmatprep.subr.mxu0 0.0
    %5800 = vmatpush1.msra.mxu0 %v1536
    %5801 = vmatprep.subr.mxu0 0.0
    %5802 = vmatpush1.msra.mxu0 %v1529
    %5803 = vmatprep.subr.mxu0 0.0
    %5804 = vmatpush1.msra.mxu0 %v1522
    %5805 = vmatprep.subr.mxu0 0.0
    %5806 = vmatpush1.msra.mxu0 %v1515
    %5807 = vmatprep.subr.mxu0 0.0
    %5808 = vmatpush1.msra.mxu0 %v1508
    %5809 = vmatprep.subr.mxu0 0.0
    %5810 = vmatpush1.msra.mxu0 %v1501
    %5811 = vmatprep.subr.mxu0 0.0
    %5812 = vmatpush1.msra.mxu0 %v1494
    %5813 = vmatprep.subr.mxu0 0.0
    %5814 = vmatpush1.msra.mxu0 %v1487
    %5815 = vmatprep.subr.mxu0 0.0
    %5816 = vmatpush1.msra.mxu0 %v1480
    %5817 = vmatprep.subr.mxu0 0.0
    %5818 = vmatpush1.msra.mxu0 %v1473
    %5819 = vmatprep.subr.mxu0 0.0
    %5820 = vmatpush1.msra.mxu0 %v1466
    %5821 = vmatprep.subr.mxu0 0.0
    %5822 = vmatpush1.msra.mxu0 %v1459
    %5823 = vmatprep.subr.mxu0 0.0
    %5824 = vmatpush1.msra.mxu0 %v1452
    %5825 = vmatprep.subr.mxu0 0.0
    %5826 = vmatpush2.msra.mxu0 %v1669
    %5827 = vmatprep.subr.mxu0 0.0
    %5828 = vmatpush2.msra.mxu0 %v1662
    %5829 = vmatprep.subr.mxu0 0.0
    %5830 = vmatpush2.msra.mxu0 %v1655
    %5831 = vmatprep.subr.mxu0 0.0
    %5832 = vmatpush2.msra.mxu0 %v1648
    %5833 = vmatprep.subr.mxu0 0.0
    %5834 = vmatpush2.msra.mxu0 %v1641
    %5835 = vmatprep.subr.mxu0 0.0
    %5836 = vmatpush2.msra.mxu0 %v1634
    %5837 = vmatprep.subr.mxu0 0.0
    %5838 = vmatpush2.msra.mxu0 %v1627
    %5839 = vmatprep.subr.mxu0 0.0
    %5840 = vmatpush2.msra.mxu0 %v1620
    %5841 = vmatprep.subr.mxu0 0.0
    %5842 = vmatpush2.msra.mxu0 %v1613
    %5843 = vmatprep.subr.mxu0 0.0
    %5844 = vmatpush2.msra.mxu0 %v1606
    %5845 = vmatprep.subr.mxu0 0.0
    %5846 = vmatpush2.msra.mxu0 %v1599
    %5847 = vmatprep.subr.mxu0 0.0
    %5848 = vmatpush2.msra.mxu0 %v1592
    %5849 = vmatprep.subr.mxu0 0.0
    %5850 = vmatpush2.msra.mxu0 %v1585
    %5851 = vmatprep.subr.mxu0 0.0
    %5852 = vmatpush2.msra.mxu0 %v1578
    %5853 = vmatprep.subr.mxu0 0.0
    %5854 = vmatpush2.msra.mxu0 %v1571
    %5855 = vmatprep.subr.mxu0 0.0
    %5856 = vmatpush2.msra.mxu0 %v1564
    %5857 = vmatprep.mubr.f32.mxu0 %v175
    %5858 = vmatmul.mubr.f32.gmra.mxu0 %v174
    %v5859 = vpop.f32.mrf.mxu0
    %v5860 = vadd.f32 0.0, %v5859
    %v5861 = vpop.f32.mrf.mxu0
    %5862 = vdwg.mxu0
    %5863 = vmatprep.subr.mxu0 0.0
    %5864 = vmatpush1.msra.mxu0 %v1781
    %5865 = vmatprep.subr.mxu0 0.0
    %5866 = vmatpush1.msra.mxu0 %v1774
    %5867 = vmatprep.subr.mxu0 0.0
    %5868 = vmatpush1.msra.mxu0 %v1767
    %5869 = vmatprep.subr.mxu0 0.0
    %5870 = vmatpush1.msra.mxu0 %v1760
    %5871 = vmatprep.subr.mxu0 0.0
    %5872 = vmatpush1.msra.mxu0 %v1753
    %5873 = vmatprep.subr.mxu0 0.0
    %5874 = vmatpush1.msra.mxu0 %v1746
    %5875 = vmatprep.subr.mxu0 0.0
    %5876 = vmatpush1.msra.mxu0 %v1739
    %5877 = vmatprep.subr.mxu0 0.0
    %5878 = vmatpush1.msra.mxu0 %v1732
    %5879 = vmatprep.subr.mxu0 0.0
    %5880 = vmatpush1.msra.mxu0 %v1725
    %5881 = vmatprep.subr.mxu0 0.0
    %5882 = vmatpush1.msra.mxu0 %v1718
    %5883 = vmatprep.subr.mxu0 0.0
    %5884 = vmatpush1.msra.mxu0 %v1711
    %5885 = vmatprep.subr.mxu0 0.0
    %5886 = vmatpush1.msra.mxu0 %v1704
    %5887 = vmatprep.subr.mxu0 0.0
    %5888 = vmatpush1.msra.mxu0 %v1697
    %5889 = vmatprep.subr.mxu0 0.0
    %5890 = vmatpush1.msra.mxu0 %v1690
    %5891 = vmatprep.subr.mxu0 0.0
    %5892 = vmatpush1.msra.mxu0 %v1683
    %5893 = vmatprep.subr.mxu0 0.0
    %5894 = vmatpush1.msra.mxu0 %v1676
    %5895 = vmatprep.subr.mxu0 0.0
    %5896 = vmatpush2.msra.mxu0 %v1893
    %5897 = vmatprep.subr.mxu0 0.0
    %5898 = vmatpush2.msra.mxu0 %v1886
    %5899 = vmatprep.subr.mxu0 0.0
    %5900 = vmatpush2.msra.mxu0 %v1879
    %5901 = vmatprep.subr.mxu0 0.0
    %5902 = vmatpush2.msra.mxu0 %v1872
    %5903 = vmatprep.subr.mxu0 0.0
    %5904 = vmatpush2.msra.mxu0 %v1865
    %5905 = vmatprep.subr.mxu0 0.0
    %5906 = vmatpush2.msra.mxu0 %v1858
    %5907 = vmatprep.subr.mxu0 0.0
    %5908 = vmatpush2.msra.mxu0 %v1851
    %5909 = vmatprep.subr.mxu0 0.0
    %5910 = vmatpush2.msra.mxu0 %v1844
    %5911 = vmatprep.subr.mxu0 0.0
    %5912 = vmatpush2.msra.mxu0 %v1837
    %5913 = vmatprep.subr.mxu0 0.0
    %5914 = vmatpush2.msra.mxu0 %v1830
    %5915 = vmatprep.subr.mxu0 0.0
    %5916 = vmatpush2.msra.mxu0 %v1823
    %5917 = vmatprep.subr.mxu0 0.0
    %5918 = vmatpush2.msra.mxu0 %v1816
    %5919 = vmatprep.subr.mxu0 0.0
    %5920 = vmatpush2.msra.mxu0 %v1809
    %5921 = vmatprep.subr.mxu0 0.0
    %5922 = vmatpush2.msra.mxu0 %v1802
    %5923 = vmatprep.subr.mxu0 0.0
    %5924 = vmatpush2.msra.mxu0 %v1795
    %5925 = vmatprep.subr.mxu0 0.0
    %5926 = vmatpush2.msra.mxu0 %v1788
    %5927 = vmatprep.mubr.f32.mxu0 %v177
    %5928 = vmatmul.mubr.f32.gmra.mxu0 %v176
    %v5929 = vpop.f32.mrf.mxu0
    %v5930 = vadd.f32 %v5860, %v5929
    %v5931 = vpop.f32.mrf.mxu0
    %5932 = vdwg.mxu0
    %5933 = vmatprep.subr.mxu0 0.0
    %5934 = vmatpush1.msra.mxu0 %v2005
    %5935 = vmatprep.subr.mxu0 0.0
    %5936 = vmatpush1.msra.mxu0 %v1998
    %5937 = vmatprep.subr.mxu0 0.0
    %5938 = vmatpush1.msra.mxu0 %v1991
    %5939 = vmatprep.subr.mxu0 0.0
    %5940 = vmatpush1.msra.mxu0 %v1984
    %5941 = vmatprep.subr.mxu0 0.0
    %5942 = vmatpush1.msra.mxu0 %v1977
    %5943 = vmatprep.subr.mxu0 0.0
    %5944 = vmatpush1.msra.mxu0 %v1970
    %5945 = vmatprep.subr.mxu0 0.0
    %5946 = vmatpush1.msra.mxu0 %v1963
    %5947 = vmatprep.subr.mxu0 0.0
    %5948 = vmatpush1.msra.mxu0 %v1956
    %5949 = vmatprep.subr.mxu0 0.0
    %5950 = vmatpush1.msra.mxu0 %v1949
    %5951 = vmatprep.subr.mxu0 0.0
    %5952 = vmatpush1.msra.mxu0 %v1942
    %5953 = vmatprep.subr.mxu0 0.0
    %5954 = vmatpush1.msra.mxu0 %v1935
    %5955 = vmatprep.subr.mxu0 0.0
    %5956 = vmatpush1.msra.mxu0 %v1928
    %5957 = vmatprep.subr.mxu0 0.0
    %5958 = vmatpush1.msra.mxu0 %v1921
    %5959 = vmatprep.subr.mxu0 0.0
    %5960 = vmatpush1.msra.mxu0 %v1914
    %5961 = vmatprep.subr.mxu0 0.0
    %5962 = vmatpush1.msra.mxu0 %v1907
    %5963 = vmatprep.subr.mxu0 0.0
    %5964 = vmatpush1.msra.mxu0 %v1900
    %5965 = vmatprep.subr.mxu0 0.0
    %5966 = vmatpush2.msra.mxu0 %v2117
    %5967 = vmatprep.subr.mxu0 0.0
    %5968 = vmatpush2.msra.mxu0 %v2110
    %5969 = vmatprep.subr.mxu0 0.0
    %5970 = vmatpush2.msra.mxu0 %v2103
    %5971 = vmatprep.subr.mxu0 0.0
    %5972 = vmatpush2.msra.mxu0 %v2096
    %5973 = vmatprep.subr.mxu0 0.0
    %5974 = vmatpush2.msra.mxu0 %v2089
    %5975 = vmatprep.subr.mxu0 0.0
    %5976 = vmatpush2.msra.mxu0 %v2082
    %5977 = vmatprep.subr.mxu0 0.0
    %5978 = vmatpush2.msra.mxu0 %v2075
    %5979 = vmatprep.subr.mxu0 0.0
    %5980 = vmatpush2.msra.mxu0 %v2068
    %5981 = vmatprep.subr.mxu0 0.0
    %5982 = vmatpush2.msra.mxu0 %v2061
    %5983 = vmatprep.subr.mxu0 0.0
    %5984 = vmatpush2.msra.mxu0 %v2054
    %5985 = vmatprep.subr.mxu0 0.0
    %5986 = vmatpush2.msra.mxu0 %v2047
    %5987 = vmatprep.subr.mxu0 0.0
    %5988 = vmatpush2.msra.mxu0 %v2040
    %5989 = vmatprep.subr.mxu0 0.0
    %5990 = vmatpush2.msra.mxu0 %v2033
    %5991 = vmatprep.subr.mxu0 0.0
    %5992 = vmatpush2.msra.mxu0 %v2026
    %5993 = vmatprep.subr.mxu0 0.0
    %5994 = vmatpush2.msra.mxu0 %v2019
    %5995 = vmatprep.subr.mxu0 0.0
    %5996 = vmatpush2.msra.mxu0 %v2012
    %5997 = vmatprep.mubr.f32.mxu0 %v179
    %5998 = vmatmul.mubr.f32.gmra.mxu0 %v178
    %v5999 = vpop.f32.mrf.mxu0
    %v6000 = vadd.f32 %v5930, %v5999
    %v6001 = vpop.f32.mrf.mxu0
    %6002 = vdwg.mxu0
    %6003 = vmatprep.subr.mxu0 0.0
    %6004 = vmatpush1.msra.mxu0 %v2229
    %6005 = vmatprep.subr.mxu0 0.0
    %6006 = vmatpush1.msra.mxu0 %v2222
    %6007 = vmatprep.subr.mxu0 0.0
    %6008 = vmatpush1.msra.mxu0 %v2215
    %6009 = vmatprep.subr.mxu0 0.0
    %6010 = vmatpush1.msra.mxu0 %v2208
    %6011 = vmatprep.subr.mxu0 0.0
    %6012 = vmatpush1.msra.mxu0 %v2201
    %6013 = vmatprep.subr.mxu0 0.0
    %6014 = vmatpush1.msra.mxu0 %v2194
    %6015 = vmatprep.subr.mxu0 0.0
    %6016 = vmatpush1.msra.mxu0 %v2187
    %6017 = vmatprep.subr.mxu0 0.0
    %6018 = vmatpush1.msra.mxu0 %v2180
    %6019 = vmatprep.subr.mxu0 0.0
    %6020 = vmatpush1.msra.mxu0 %v2173
    %6021 = vmatprep.subr.mxu0 0.0
    %6022 = vmatpush1.msra.mxu0 %v2166
    %6023 = vmatprep.subr.mxu0 0.0
    %6024 = vmatpush1.msra.mxu0 %v2159
    %6025 = vmatprep.subr.mxu0 0.0
    %6026 = vmatpush1.msra.mxu0 %v2152
    %6027 = vmatprep.subr.mxu0 0.0
    %6028 = vmatpush1.msra.mxu0 %v2145
    %6029 = vmatprep.subr.mxu0 0.0
    %6030 = vmatpush1.msra.mxu0 %v2138
    %6031 = vmatprep.subr.mxu0 0.0
    %6032 = vmatpush1.msra.mxu0 %v2131
    %6033 = vmatprep.subr.mxu0 0.0
    %6034 = vmatpush1.msra.mxu0 %v2124
    %6035 = vmatprep.subr.mxu0 0.0
    %6036 = vmatpush2.msra.mxu0 %v2341
    %6037 = vmatprep.subr.mxu0 0.0
    %6038 = vmatpush2.msra.mxu0 %v2334
    %6039 = vmatprep.subr.mxu0 0.0
    %6040 = vmatpush2.msra.mxu0 %v2327
    %6041 = vmatprep.subr.mxu0 0.0
    %6042 = vmatpush2.msra.mxu0 %v2320
    %6043 = vmatprep.subr.mxu0 0.0
    %6044 = vmatpush2.msra.mxu0 %v2313
    %6045 = vmatprep.subr.mxu0 0.0
    %6046 = vmatpush2.msra.mxu0 %v2306
    %6047 = vmatprep.subr.mxu0 0.0
    %6048 = vmatpush2.msra.mxu0 %v2299
    %6049 = vmatprep.subr.mxu0 0.0
    %6050 = vmatpush2.msra.mxu0 %v2292
    %6051 = vmatprep.subr.mxu0 0.0
    %6052 = vmatpush2.msra.mxu0 %v2285
    %6053 = vmatprep.subr.mxu0 0.0
    %6054 = vmatpush2.msra.mxu0 %v2278
    %6055 = vmatprep.subr.mxu0 0.0
    %6056 = vmatpush2.msra.mxu0 %v2271
    %6057 = vmatprep.subr.mxu0 0.0
    %6058 = vmatpush2.msra.mxu0 %v2264
    %6059 = vmatprep.subr.mxu0 0.0
    %6060 = vmatpush2.msra.mxu0 %v2257
    %6061 = vmatprep.subr.mxu0 0.0
    %6062 = vmatpush2.msra.mxu0 %v2250
    %6063 = vmatprep.subr.mxu0 0.0
    %6064 = vmatpush2.msra.mxu0 %v2243
    %6065 = vmatprep.subr.mxu0 0.0
    %6066 = vmatpush2.msra.mxu0 %v2236
    %6067 = vmatprep.mubr.f32.mxu0 %v181
    %6068 = vmatmul.mubr.f32.gmra.mxu0 %v180
    %v6069 = vpop.f32.mrf.mxu0
    %v6070 = vadd.f32 %v6000, %v6069
    %v6071 = vpop.f32.mrf.mxu0
    %6072 = vdwg.mxu0
    %6073 = vmatprep.subr.mxu0 0.0
    %6074 = vmatpush1.msra.mxu0 %v2453
    %6075 = vmatprep.subr.mxu0 0.0
    %6076 = vmatpush1.msra.mxu0 %v2446
    %6077 = vmatprep.subr.mxu0 0.0
    %6078 = vmatpush1.msra.mxu0 %v2439
    %6079 = vmatprep.subr.mxu0 0.0
    %6080 = vmatpush1.msra.mxu0 %v2432
    %6081 = vmatprep.subr.mxu0 0.0
    %6082 = vmatpush1.msra.mxu0 %v2425
    %6083 = vmatprep.subr.mxu0 0.0
    %6084 = vmatpush1.msra.mxu0 %v2418
    %6085 = vmatprep.subr.mxu0 0.0
    %6086 = vmatpush1.msra.mxu0 %v2411
    %6087 = vmatprep.subr.mxu0 0.0
    %6088 = vmatpush1.msra.mxu0 %v2404
    %6089 = vmatprep.subr.mxu0 0.0
    %6090 = vmatpush1.msra.mxu0 %v2397
    %6091 = vmatprep.subr.mxu0 0.0
    %6092 = vmatpush1.msra.mxu0 %v2390
    %6093 = vmatprep.subr.mxu0 0.0
    %6094 = vmatpush1.msra.mxu0 %v2383
    %6095 = vmatprep.subr.mxu0 0.0
    %6096 = vmatpush1.msra.mxu0 %v2376
    %6097 = vmatprep.subr.mxu0 0.0
    %6098 = vmatpush1.msra.mxu0 %v2369
    %6099 = vmatprep.subr.mxu0 0.0
    %6100 = vmatpush1.msra.mxu0 %v2362
    %6101 = vmatprep.subr.mxu0 0.0
    %6102 = vmatpush1.msra.mxu0 %v2355
    %6103 = vmatprep.subr.mxu0 0.0
    %6104 = vmatpush1.msra.mxu0 %v2348
    %6105 = vmatprep.subr.mxu0 0.0
    %6106 = vmatpush2.msra.mxu0 %v2565
    %6107 = vmatprep.subr.mxu0 0.0
    %6108 = vmatpush2.msra.mxu0 %v2558
    %6109 = vmatprep.subr.mxu0 0.0
    %6110 = vmatpush2.msra.mxu0 %v2551
    %6111 = vmatprep.subr.mxu0 0.0
    %6112 = vmatpush2.msra.mxu0 %v2544
    %6113 = vmatprep.subr.mxu0 0.0
    %6114 = vmatpush2.msra.mxu0 %v2537
    %6115 = vmatprep.subr.mxu0 0.0
    %6116 = vmatpush2.msra.mxu0 %v2530
    %6117 = vmatprep.subr.mxu0 0.0
    %6118 = vmatpush2.msra.mxu0 %v2523
    %6119 = vmatprep.subr.mxu0 0.0
    %6120 = vmatpush2.msra.mxu0 %v2516
    %6121 = vmatprep.subr.mxu0 0.0
    %6122 = vmatpush2.msra.mxu0 %v2509
    %6123 = vmatprep.subr.mxu0 0.0
    %6124 = vmatpush2.msra.mxu0 %v2502
    %6125 = vmatprep.subr.mxu0 0.0
    %6126 = vmatpush2.msra.mxu0 %v2495
    %6127 = vmatprep.subr.mxu0 0.0
    %6128 = vmatpush2.msra.mxu0 %v2488
    %6129 = vmatprep.subr.mxu0 0.0
    %6130 = vmatpush2.msra.mxu0 %v2481
    %6131 = vmatprep.subr.mxu0 0.0
    %6132 = vmatpush2.msra.mxu0 %v2474
    %6133 = vmatprep.subr.mxu0 0.0
    %6134 = vmatpush2.msra.mxu0 %v2467
    %6135 = vmatprep.subr.mxu0 0.0
    %6136 = vmatpush2.msra.mxu0 %v2460
    %6137 = vmatprep.mubr.f32.mxu0 %v183
    %6138 = vmatmul.mubr.f32.gmra.mxu0 %v182
    %v6139 = vpop.f32.mrf.mxu0
    %v6140 = vadd.f32 %v6070, %v6139
    %v6141 = vpop.f32.mrf.mxu0
    %6142 = vdwg.mxu0
    %6143 = vmatprep.subr.mxu0 0.0
    %6144 = vmatpush1.msra.mxu0 %v2677
    %6145 = vmatprep.subr.mxu0 0.0
    %6146 = vmatpush1.msra.mxu0 %v2670
    %6147 = vmatprep.subr.mxu0 0.0
    %6148 = vmatpush1.msra.mxu0 %v2663
    %6149 = vmatprep.subr.mxu0 0.0
    %6150 = vmatpush1.msra.mxu0 %v2656
    %6151 = vmatprep.subr.mxu0 0.0
    %6152 = vmatpush1.msra.mxu0 %v2649
    %6153 = vmatprep.subr.mxu0 0.0
    %6154 = vmatpush1.msra.mxu0 %v2642
    %6155 = vmatprep.subr.mxu0 0.0
    %6156 = vmatpush1.msra.mxu0 %v2635
    %6157 = vmatprep.subr.mxu0 0.0
    %6158 = vmatpush1.msra.mxu0 %v2628
    %6159 = vmatprep.subr.mxu0 0.0
    %6160 = vmatpush1.msra.mxu0 %v2621
    %6161 = vmatprep.subr.mxu0 0.0
    %6162 = vmatpush1.msra.mxu0 %v2614
    %6163 = vmatprep.subr.mxu0 0.0
    %6164 = vmatpush1.msra.mxu0 %v2607
    %6165 = vmatprep.subr.mxu0 0.0
    %6166 = vmatpush1.msra.mxu0 %v2600
    %6167 = vmatprep.subr.mxu0 0.0
    %6168 = vmatpush1.msra.mxu0 %v2593
    %6169 = vmatprep.subr.mxu0 0.0
    %6170 = vmatpush1.msra.mxu0 %v2586
    %6171 = vmatprep.subr.mxu0 0.0
    %6172 = vmatpush1.msra.mxu0 %v2579
    %6173 = vmatprep.subr.mxu0 0.0
    %6174 = vmatpush1.msra.mxu0 %v2572
    %6175 = vmatprep.subr.mxu0 0.0
    %6176 = vmatpush2.msra.mxu0 %v2789
    %6177 = vmatprep.subr.mxu0 0.0
    %6178 = vmatpush2.msra.mxu0 %v2782
    %6179 = vmatprep.subr.mxu0 0.0
    %6180 = vmatpush2.msra.mxu0 %v2775
    %6181 = vmatprep.subr.mxu0 0.0
    %6182 = vmatpush2.msra.mxu0 %v2768
    %6183 = vmatprep.subr.mxu0 0.0
    %6184 = vmatpush2.msra.mxu0 %v2761
    %6185 = vmatprep.subr.mxu0 0.0
    %6186 = vmatpush2.msra.mxu0 %v2754
    %6187 = vmatprep.subr.mxu0 0.0
    %6188 = vmatpush2.msra.mxu0 %v2747
    %6189 = vmatprep.subr.mxu0 0.0
    %6190 = vmatpush2.msra.mxu0 %v2740
    %6191 = vmatprep.subr.mxu0 0.0
    %6192 = vmatpush2.msra.mxu0 %v2733
    %6193 = vmatprep.subr.mxu0 0.0
    %6194 = vmatpush2.msra.mxu0 %v2726
    %6195 = vmatprep.subr.mxu0 0.0
    %6196 = vmatpush2.msra.mxu0 %v2719
    %6197 = vmatprep.subr.mxu0 0.0
    %6198 = vmatpush2.msra.mxu0 %v2712
    %6199 = vmatprep.subr.mxu0 0.0
    %6200 = vmatpush2.msra.mxu0 %v2705
    %6201 = vmatprep.subr.mxu0 0.0
    %6202 = vmatpush2.msra.mxu0 %v2698
    %6203 = vmatprep.subr.mxu0 0.0
    %6204 = vmatpush2.msra.mxu0 %v2691
    %6205 = vmatprep.subr.mxu0 0.0
    %6206 = vmatpush2.msra.mxu0 %v2684
    %6207 = vmatprep.mubr.f32.mxu0 %v185
    %6208 = vmatmul.mubr.f32.gmra.mxu0 %v184
    %v6209 = vpop.f32.mrf.mxu0
    %v6210 = vadd.f32 %v6140, %v6209
    %v6211 = vpop.f32.mrf.mxu0
    %6212 = vdwg.mxu0
    %6213 = vmatprep.subr.mxu0 0.0
    %6214 = vmatpush1.msra.mxu0 %v2901
    %6215 = vmatprep.subr.mxu0 0.0
    %6216 = vmatpush1.msra.mxu0 %v2894
    %6217 = vmatprep.subr.mxu0 0.0
    %6218 = vmatpush1.msra.mxu0 %v2887
    %6219 = vmatprep.subr.mxu0 0.0
    %6220 = vmatpush1.msra.mxu0 %v2880
    %6221 = vmatprep.subr.mxu0 0.0
    %6222 = vmatpush1.msra.mxu0 %v2873
    %6223 = vmatprep.subr.mxu0 0.0
    %6224 = vmatpush1.msra.mxu0 %v2866
    %6225 = vmatprep.subr.mxu0 0.0
    %6226 = vmatpush1.msra.mxu0 %v2859
    %6227 = vmatprep.subr.mxu0 0.0
    %6228 = vmatpush1.msra.mxu0 %v2852
    %6229 = vmatprep.subr.mxu0 0.0
    %6230 = vmatpush1.msra.mxu0 %v2845
    %6231 = vmatprep.subr.mxu0 0.0
    %6232 = vmatpush1.msra.mxu0 %v2838
    %6233 = vmatprep.subr.mxu0 0.0
    %6234 = vmatpush1.msra.mxu0 %v2831
    %6235 = vmatprep.subr.mxu0 0.0
    %6236 = vmatpush1.msra.mxu0 %v2824
    %6237 = vmatprep.subr.mxu0 0.0
    %6238 = vmatpush1.msra.mxu0 %v2817
    %6239 = vmatprep.subr.mxu0 0.0
    %6240 = vmatpush1.msra.mxu0 %v2810
    %6241 = vmatprep.subr.mxu0 0.0
    %6242 = vmatpush1.msra.mxu0 %v2803
    %6243 = vmatprep.subr.mxu0 0.0
    %6244 = vmatpush1.msra.mxu0 %v2796
    %6245 = vmatprep.subr.mxu0 0.0
    %6246 = vmatpush2.msra.mxu0 %v3013
    %6247 = vmatprep.subr.mxu0 0.0
    %6248 = vmatpush2.msra.mxu0 %v3006
    %6249 = vmatprep.subr.mxu0 0.0
    %6250 = vmatpush2.msra.mxu0 %v2999
    %6251 = vmatprep.subr.mxu0 0.0
    %6252 = vmatpush2.msra.mxu0 %v2992
    %6253 = vmatprep.subr.mxu0 0.0
    %6254 = vmatpush2.msra.mxu0 %v2985
    %6255 = vmatprep.subr.mxu0 0.0
    %6256 = vmatpush2.msra.mxu0 %v2978
    %6257 = vmatprep.subr.mxu0 0.0
    %6258 = vmatpush2.msra.mxu0 %v2971
    %6259 = vmatprep.subr.mxu0 0.0
    %6260 = vmatpush2.msra.mxu0 %v2964
    %6261 = vmatprep.subr.mxu0 0.0
    %6262 = vmatpush2.msra.mxu0 %v2957
    %6263 = vmatprep.subr.mxu0 0.0
    %6264 = vmatpush2.msra.mxu0 %v2950
    %6265 = vmatprep.subr.mxu0 0.0
    %6266 = vmatpush2.msra.mxu0 %v2943
    %6267 = vmatprep.subr.mxu0 0.0
    %6268 = vmatpush2.msra.mxu0 %v2936
    %6269 = vmatprep.subr.mxu0 0.0
    %6270 = vmatpush2.msra.mxu0 %v2929
    %6271 = vmatprep.subr.mxu0 0.0
    %6272 = vmatpush2.msra.mxu0 %v2922
    %6273 = vmatprep.subr.mxu0 0.0
    %6274 = vmatpush2.msra.mxu0 %v2915
    %6275 = vmatprep.subr.mxu0 0.0
    %6276 = vmatpush2.msra.mxu0 %v2908
    %6277 = vmatprep.mubr.f32.mxu0 %v187
    %6278 = vmatmul.mubr.f32.gmra.mxu0 %v186
    %v6279 = vpop.f32.mrf.mxu0
    %v6280 = vadd.f32 %v6210, %v6279
    %v6281 = vpop.f32.mrf.mxu0
    %6282 = vdwg.mxu0
    %6283 = vmatprep.subr.mxu0 0.0
    %6284 = vmatpush1.msra.mxu0 %v3125
    %6285 = vmatprep.subr.mxu0 0.0
    %6286 = vmatpush1.msra.mxu0 %v3118
    %6287 = vmatprep.subr.mxu0 0.0
    %6288 = vmatpush1.msra.mxu0 %v3111
    %6289 = vmatprep.subr.mxu0 0.0
    %6290 = vmatpush1.msra.mxu0 %v3104
    %6291 = vmatprep.subr.mxu0 0.0
    %6292 = vmatpush1.msra.mxu0 %v3097
    %6293 = vmatprep.subr.mxu0 0.0
    %6294 = vmatpush1.msra.mxu0 %v3090
    %6295 = vmatprep.subr.mxu0 0.0
    %6296 = vmatpush1.msra.mxu0 %v3083
    %6297 = vmatprep.subr.mxu0 0.0
    %6298 = vmatpush1.msra.mxu0 %v3076
    %6299 = vmatprep.subr.mxu0 0.0
    %6300 = vmatpush1.msra.mxu0 %v3069
    %6301 = vmatprep.subr.mxu0 0.0
    %6302 = vmatpush1.msra.mxu0 %v3062
    %6303 = vmatprep.subr.mxu0 0.0
    %6304 = vmatpush1.msra.mxu0 %v3055
    %6305 = vmatprep.subr.mxu0 0.0
    %6306 = vmatpush1.msra.mxu0 %v3048
    %6307 = vmatprep.subr.mxu0 0.0
    %6308 = vmatpush1.msra.mxu0 %v3041
    %6309 = vmatprep.subr.mxu0 0.0
    %6310 = vmatpush1.msra.mxu0 %v3034
    %6311 = vmatprep.subr.mxu0 0.0
    %6312 = vmatpush1.msra.mxu0 %v3027
    %6313 = vmatprep.subr.mxu0 0.0
    %6314 = vmatpush1.msra.mxu0 %v3020
    %6315 = vmatprep.subr.mxu0 0.0
    %6316 = vmatpush2.msra.mxu0 %v3237
    %6317 = vmatprep.subr.mxu0 0.0
    %6318 = vmatpush2.msra.mxu0 %v3230
    %6319 = vmatprep.subr.mxu0 0.0
    %6320 = vmatpush2.msra.mxu0 %v3223
    %6321 = vmatprep.subr.mxu0 0.0
    %6322 = vmatpush2.msra.mxu0 %v3216
    %6323 = vmatprep.subr.mxu0 0.0
    %6324 = vmatpush2.msra.mxu0 %v3209
    %6325 = vmatprep.subr.mxu0 0.0
    %6326 = vmatpush2.msra.mxu0 %v3202
    %6327 = vmatprep.subr.mxu0 0.0
    %6328 = vmatpush2.msra.mxu0 %v3195
    %6329 = vmatprep.subr.mxu0 0.0
    %6330 = vmatpush2.msra.mxu0 %v3188
    %6331 = vmatprep.subr.mxu0 0.0
    %6332 = vmatpush2.msra.mxu0 %v3181
    %6333 = vmatprep.subr.mxu0 0.0
    %6334 = vmatpush2.msra.mxu0 %v3174
    %6335 = vmatprep.subr.mxu0 0.0
    %6336 = vmatpush2.msra.mxu0 %v3167
    %6337 = vmatprep.subr.mxu0 0.0
    %6338 = vmatpush2.msra.mxu0 %v3160
    %6339 = vmatprep.subr.mxu0 0.0
    %6340 = vmatpush2.msra.mxu0 %v3153
    %6341 = vmatprep.subr.mxu0 0.0
    %6342 = vmatpush2.msra.mxu0 %v3146
    %6343 = vmatprep.subr.mxu0 0.0
    %6344 = vmatpush2.msra.mxu0 %v3139
    %6345 = vmatprep.subr.mxu0 0.0
    %6346 = vmatpush2.msra.mxu0 %v3132
    %6347 = vmatprep.mubr.f32.mxu0 %v189
    %6348 = vmatmul.mubr.f32.gmra.mxu0 %v188
    %v6349 = vpop.f32.mrf.mxu0
    %v6350 = vadd.f32 %v6280, %v6349
    %v6351 = vpop.f32.mrf.mxu0
    %6352 = vdwg.mxu0
    %6353 = vmatprep.subr.mxu0 0.0
    %6354 = vmatpush1.msra.mxu0 %v3349
    %6355 = vmatprep.subr.mxu0 0.0
    %6356 = vmatpush1.msra.mxu0 %v3342
    %6357 = vmatprep.subr.mxu0 0.0
    %6358 = vmatpush1.msra.mxu0 %v3335
    %6359 = vmatprep.subr.mxu0 0.0
    %6360 = vmatpush1.msra.mxu0 %v3328
    %6361 = vmatprep.subr.mxu0 0.0
    %6362 = vmatpush1.msra.mxu0 %v3321
    %6363 = vmatprep.subr.mxu0 0.0
    %6364 = vmatpush1.msra.mxu0 %v3314
    %6365 = vmatprep.subr.mxu0 0.0
    %6366 = vmatpush1.msra.mxu0 %v3307
    %6367 = vmatprep.subr.mxu0 0.0
    %6368 = vmatpush1.msra.mxu0 %v3300
    %6369 = vmatprep.subr.mxu0 0.0
    %6370 = vmatpush1.msra.mxu0 %v3293
    %6371 = vmatprep.subr.mxu0 0.0
    %6372 = vmatpush1.msra.mxu0 %v3286
    %6373 = vmatprep.subr.mxu0 0.0
    %6374 = vmatpush1.msra.mxu0 %v3279
    %6375 = vmatprep.subr.mxu0 0.0
    %6376 = vmatpush1.msra.mxu0 %v3272
    %6377 = vmatprep.subr.mxu0 0.0
    %6378 = vmatpush1.msra.mxu0 %v3265
    %6379 = vmatprep.subr.mxu0 0.0
    %6380 = vmatpush1.msra.mxu0 %v3258
    %6381 = vmatprep.subr.mxu0 0.0
    %6382 = vmatpush1.msra.mxu0 %v3251
    %6383 = vmatprep.subr.mxu0 0.0
    %6384 = vmatpush1.msra.mxu0 %v3244
    %6385 = vmatprep.subr.mxu0 0.0
    %6386 = vmatpush2.msra.mxu0 %v3461
    %6387 = vmatprep.subr.mxu0 0.0
    %6388 = vmatpush2.msra.mxu0 %v3454
    %6389 = vmatprep.subr.mxu0 0.0
    %6390 = vmatpush2.msra.mxu0 %v3447
    %6391 = vmatprep.subr.mxu0 0.0
    %6392 = vmatpush2.msra.mxu0 %v3440
    %6393 = vmatprep.subr.mxu0 0.0
    %6394 = vmatpush2.msra.mxu0 %v3433
    %6395 = vmatprep.subr.mxu0 0.0
    %6396 = vmatpush2.msra.mxu0 %v3426
    %6397 = vmatprep.subr.mxu0 0.0
    %6398 = vmatpush2.msra.mxu0 %v3419
    %6399 = vmatprep.subr.mxu0 0.0
    %6400 = vmatpush2.msra.mxu0 %v3412
    %6401 = vmatprep.subr.mxu0 0.0
    %6402 = vmatpush2.msra.mxu0 %v3405
    %6403 = vmatprep.subr.mxu0 0.0
    %6404 = vmatpush2.msra.mxu0 %v3398
    %6405 = vmatprep.subr.mxu0 0.0
    %6406 = vmatpush2.msra.mxu0 %v3391
    %6407 = vmatprep.subr.mxu0 0.0
    %6408 = vmatpush2.msra.mxu0 %v3384
    %6409 = vmatprep.subr.mxu0 0.0
    %6410 = vmatpush2.msra.mxu0 %v3377
    %6411 = vmatprep.subr.mxu0 0.0
    %6412 = vmatpush2.msra.mxu0 %v3370
    %6413 = vmatprep.subr.mxu0 0.0
    %6414 = vmatpush2.msra.mxu0 %v3363
    %6415 = vmatprep.subr.mxu0 0.0
    %6416 = vmatpush2.msra.mxu0 %v3356
    %6417 = vmatprep.mubr.f32.mxu0 %v191
    %6418 = vmatmul.mubr.f32.gmra.mxu0 %v190
    %v6419 = vpop.f32.mrf.mxu0
    %v6420 = vadd.f32 %v6350, %v6419
    %v6421 = vpop.f32.mrf.mxu0
    %6422 = vdwg.mxu0
    %6423 = vmatprep.subr.mxu0 0.0
    %6424 = vmatpush1.msra.mxu0 %v3573
    %6425 = vmatprep.subr.mxu0 0.0
    %6426 = vmatpush1.msra.mxu0 %v3566
    %6427 = vmatprep.subr.mxu0 0.0
    %6428 = vmatpush1.msra.mxu0 %v3559
    %6429 = vmatprep.subr.mxu0 0.0
    %6430 = vmatpush1.msra.mxu0 %v3552
    %6431 = vmatprep.subr.mxu0 0.0
    %6432 = vmatpush1.msra.mxu0 %v3545
    %6433 = vmatprep.subr.mxu0 0.0
    %6434 = vmatpush1.msra.mxu0 %v3538
    %6435 = vmatprep.subr.mxu0 0.0
    %6436 = vmatpush1.msra.mxu0 %v3531
    %6437 = vmatprep.subr.mxu0 0.0
    %6438 = vmatpush1.msra.mxu0 %v3524
    %6439 = vmatprep.subr.mxu0 0.0
    %6440 = vmatpush1.msra.mxu0 %v3517
    %6441 = vmatprep.subr.mxu0 0.0
    %6442 = vmatpush1.msra.mxu0 %v3510
    %6443 = vmatprep.subr.mxu0 0.0
    %6444 = vmatpush1.msra.mxu0 %v3503
    %6445 = vmatprep.subr.mxu0 0.0
    %6446 = vmatpush1.msra.mxu0 %v3496
    %6447 = vmatprep.subr.mxu0 0.0
    %6448 = vmatpush1.msra.mxu0 %v3489
    %6449 = vmatprep.subr.mxu0 0.0
    %6450 = vmatpush1.msra.mxu0 %v3482
    %6451 = vmatprep.subr.mxu0 0.0
    %6452 = vmatpush1.msra.mxu0 %v3475
    %6453 = vmatprep.subr.mxu0 0.0
    %6454 = vmatpush1.msra.mxu0 %v3468
    %6455 = vmatprep.subr.mxu0 0.0
    %6456 = vmatpush2.msra.mxu0 0.0
    %6457 = vmatprep.subr.mxu0 0.0
    %6458 = vmatpush2.msra.mxu0 0.0
    %6459 = vmatprep.subr.mxu0 0.0
    %6460 = vmatpush2.msra.mxu0 0.0
    %6461 = vmatprep.subr.mxu0 0.0
    %6462 = vmatpush2.msra.mxu0 0.0
    %6463 = vmatprep.subr.mxu0 0.0
    %6464 = vmatpush2.msra.mxu0 0.0
    %6465 = vmatprep.subr.mxu0 0.0
    %6466 = vmatpush2.msra.mxu0 0.0
    %6467 = vmatprep.subr.mxu0 0.0
    %6468 = vmatpush2.msra.mxu0 0.0
    %6469 = vmatprep.subr.mxu0 0.0
    %6470 = vmatpush2.msra.mxu0 %v3661
    %6471 = vmatprep.subr.mxu0 0.0
    %6472 = vmatpush2.msra.mxu0 %v3629
    %6473 = vmatprep.subr.mxu0 0.0
    %6474 = vmatpush2.msra.mxu0 %v3622
    %6475 = vmatprep.subr.mxu0 0.0
    %6476 = vmatpush2.msra.mxu0 %v3615
    %6477 = vmatprep.subr.mxu0 0.0
    %6478 = vmatpush2.msra.mxu0 %v3608
    %6479 = vmatprep.subr.mxu0 0.0
    %6480 = vmatpush2.msra.mxu0 %v3601
    %6481 = vmatprep.subr.mxu0 0.0
    %6482 = vmatpush2.msra.mxu0 %v3594
    %6483 = vmatprep.subr.mxu0 0.0
    %6484 = vmatpush2.msra.mxu0 %v3587
    %6485 = vmatprep.subr.mxu0 0.0
    %6486 = vmatpush2.msra.mxu0 %v3580
    %6487 = vmatprep.mubr.f32.mxu0 %v3639
    %6488 = vmatmul.mubr.f32.gmra.mxu0 %v192
    %v6489 = vpop.f32.mrf.mxu0
    %v6490 = vadd.f32 %v6420, %v6489
    %v6491 = vpop.f32.mrf.mxu0
    %6492 = vdwg.mxu0
    %v6493 = vld [vmem:[#allocation6] sm:$0xff]
    %v6494 = vld [vmem:[#allocation7] sm:$0xff]
    %v6495 = vrot.slane %v4369, 4
    %v6496 = vadd.f32 %v4369, %v6495
    %v6497 = vrot.slane %v6496, 2
    %v6498 = vadd.f32 %v6496, %v6497
    %v6499 = vrot.slane %v6498, 1
    %v6500 = vadd.f32 %v6498, %v6499
    %v6501 = vrot.slane %v4371, 4
    %v6502 = vadd.f32 %v4371, %v6501
    %v6503 = vrot.slane %v6502, 2
    %v6504 = vadd.f32 %v6502, %v6503
    %v6505 = vrot.slane %v6504, 1
    %v6506 = vadd.f32 %v6504, %v6505
    %v6507 = vrot.slane %v5079, 4
    %v6508 = vadd.f32 %v5079, %v6507
    %v6509 = vrot.slane %v6508, 2
    %v6510 = vadd.f32 %v6508, %v6509
    %v6511 = vrot.slane %v6510, 1
    %v6512 = vadd.f32 %v6510, %v6511
    %v6513 = vrot.slane %v5081, 4
    %v6514 = vadd.f32 %v5081, %v6513
    %v6515 = vrot.slane %v6514, 2
    %v6516 = vadd.f32 %v6514, %v6515
    %v6517 = vrot.slane %v6516, 1
    %v6518 = vadd.f32 %v6516, %v6517
    %v6519 = vrot.slane %v5789, 4
    %v6520 = vadd.f32 %v5789, %v6519
    %v6521 = vrot.slane %v6520, 2
    %v6522 = vadd.f32 %v6520, %v6521
    %v6523 = vrot.slane %v6522, 1
    %v6524 = vadd.f32 %v6522, %v6523
    %v6525 = vrot.slane %v5791, 4
    %v6526 = vadd.f32 %v5791, %v6525
    %v6527 = vrot.slane %v6526, 2
    %v6528 = vadd.f32 %v6526, %v6527
    %v6529 = vrot.slane %v6528, 1
    %v6530 = vadd.f32 %v6528, %v6529
    %v6531 = vrot.slane %v6490, 4
    %v6532 = vadd.f32 %v6490, %v6531
    %v6533 = vrot.slane %v6532, 2
    %v6534 = vadd.f32 %v6532, %v6533
    %v6535 = vrot.slane %v6534, 1
    %v6536 = vadd.f32 %v6534, %v6535
    %v6537 = vrcp.pop 8.0
    %v6538 = vmul.f32 %v6500, %v6537
    %v6539 = vmul.f32 %v6506, %v6537
    %v6540 = vmul.f32 %v6512, %v6537
    %v6541 = vmul.f32 %v6518, %v6537
    %v6542 = vmul.f32 %v6524, %v6537
    %v6543 = vmul.f32 %v6530, %v6537
    %v6544 = vmul.f32 %v6536, %v6537
    %v6545 = vsub.f32 %v4369, %v6538
    %v6546 = vsub.f32 %v4371, %v6539
    %v6547 = vsub.f32 %v5079, %v6540
    %v6548 = vsub.f32 %v5081, %v6541
    %v6549 = vsub.f32 %v5789, %v6542
    %v6550 = vsub.f32 %v5791, %v6543
    %v6551 = vsub.f32 %v6490, %v6544
    %v6552 = vmul.f32 %v6545, %v6545
    %v6553 = vmul.f32 %v6546, %v6546
    %v6554 = vmul.f32 %v6547, %v6547
    %v6555 = vmul.f32 %v6548, %v6548
    %v6556 = vmul.f32 %v6549, %v6549
    %v6557 = vmul.f32 %v6550, %v6550
    %v6558 = vmul.f32 %v6551, %v6551
    %v6559 = vrot.slane %v6552, 4
    %v6560 = vadd.f32 %v6552, %v6559
    %v6561 = vrot.slane %v6560, 2
    %v6562 = vadd.f32 %v6560, %v6561
    %v6563 = vrot.slane %v6562, 1
    %v6564 = vadd.f32 %v6562, %v6563
    %v6565 = vrot.slane %v6553, 4
    %v6566 = vadd.f32 %v6553, %v6565
    %v6567 = vrot.slane %v6566, 2
    %v6568 = vadd.f32 %v6566, %v6567
    %v6569 = vrot.slane %v6568, 1
    %v6570 = vadd.f32 %v6568, %v6569
    %v6571 = vrot.slane %v6554, 4
    %v6572 = vadd.f32 %v6554, %v6571
    %v6573 = vrot.slane %v6572, 2
    %v6574 = vadd.f32 %v6572, %v6573
    %v6575 = vrot.slane %v6574, 1
    %v6576 = vadd.f32 %v6574, %v6575
    %v6577 = vrot.slane %v6555, 4
    %v6578 = vadd.f32 %v6555, %v6577
    %v6579 = vrot.slane %v6578, 2
    %v6580 = vadd.f32 %v6578, %v6579
    %v6581 = vrot.slane %v6580, 1
    %v6582 = vadd.f32 %v6580, %v6581
    %v6583 = vrot.slane %v6556, 4
    %v6584 = vadd.f32 %v6556, %v6583
    %v6585 = vrot.slane %v6584, 2
    %v6586 = vadd.f32 %v6584, %v6585
    %v6587 = vrot.slane %v6586, 1
    %v6588 = vadd.f32 %v6586, %v6587
    %v6589 = vrot.slane %v6557, 4
    %v6590 = vadd.f32 %v6557, %v6589
    %v6591 = vrot.slane %v6590, 2
    %v6592 = vadd.f32 %v6590, %v6591
    %v6593 = vrot.slane %v6592, 1
    %v6594 = vadd.f32 %v6592, %v6593
    %v6595 = vrot.slane %v6558, 4
    %v6596 = vadd.f32 %v6558, %v6595
    %v6597 = vrot.slane %v6596, 2
    %v6598 = vadd.f32 %v6596, %v6597
    %v6599 = vrot.slane %v6598, 1
    %v6600 = vadd.f32 %v6598, %v6599
    %v6601 = vmul.f32 %v6564, %v6537
    %v6602 = vmul.f32 %v6570, %v6537
    %v6603 = vmul.f32 %v6576, %v6537
    %v6604 = vmul.f32 %v6582, %v6537
    %v6605 = vmul.f32 %v6588, %v6537
    %v6606 = vmul.f32 %v6594, %v6537
    %v6607 = vmul.f32 %v6600, %v6537
    %v6608 = vadd.f32 %v6601, 1e-05
    %v6609 = vadd.f32 %v6602, 1e-05
    %v6610 = vadd.f32 %v6603, 1e-05
    %v6611 = vadd.f32 %v6604, 1e-05
    %v6612 = vadd.f32 %v6605, 1e-05
    %v6613 = vadd.f32 %v6606, 1e-05
    %v6614 = vadd.f32 %v6607, 1e-05
    %v6615 = vrsqrt.pop %v6608
    %v6616 = vrsqrt.pop %v6609
    %v6617 = vrsqrt.pop %v6610
    %v6618 = vrsqrt.pop %v6611
    %v6619 = vrsqrt.pop %v6612
    %v6620 = vrsqrt.pop %v6613
    %v6621 = vrsqrt.pop %v6614
    %v6629 = vcombine.low %v6615, %v6616
    %v6630 = vcombine.low %v6617, %v6618
    %v6631 = vcombine.low %v6619, %v6620
    %v6633 = vunpack.c.l.s4 1966171168
    %v6634 = vunpack.c.0.s8 %v6633
    %v6635 = vlaneseq
    %v6636 = vshrl.u32 %v6635, 7
    %v6637 = vsub.s32 %v6634, %v6636
    %v6638 = vrot.slane %v6629, %v6637
    %v6640 = vunpack.c.l.s4 1966171168
    %v6641 = vunpack.c.0.s8 %v6640
    %v6642 = vlaneseq
    %v6643 = vshrl.u32 %v6642, 7
    %v6644 = vsub.s32 %v6641, %v6643
    %v6645 = vrot.slane %v6630, %v6644
    %v6647 = vunpack.c.l.s4 1966171168
    %v6648 = vunpack.c.0.s8 %v6647
    %v6649 = vlaneseq
    %v6650 = vshrl.u32 %v6649, 7
    %v6651 = vsub.s32 %v6648, %v6650
    %v6652 = vrot.slane %v6631, %v6651
    %v6654 = vunpack.c.l.s4 1966171168
    %v6655 = vunpack.c.0.s8 %v6654
    %v6656 = vlaneseq
    %v6657 = vshrl.u32 %v6656, 7
    %v6658 = vsub.s32 %v6655, %v6657
    %v6659 = vrot.slane %v6621, %v6658
    %v6660 = vcombine.low %v6638, %v6645
    %v6661 = vcombine.low %v6652, %v6659
    %v6663 = vunpack.c.l.s4 1966171168
    %v6664 = vunpack.c.0.s8 %v6663
    %v6665 = vlaneseq
    %v6666 = vshrl.u32 %v6665, 7
    %v6667 = vsub.s32 %v6664, %v6666
    %v6668 = vrot.slane %v6660, %v6667
    %v6670 = vunpack.c.l.s4 1966171168
    %v6671 = vunpack.c.0.s8 %v6670
    %v6672 = vlaneseq
    %v6673 = vshrl.u32 %v6672, 7
    %v6674 = vsub.s32 %v6671, %v6673
    %v6675 = vrot.slane %v6661, %v6674
    %v6676 = vcombine.low %v6668, %v6675
    %v6678 = vmul.f32 %v6493, %v6676
    %v6680 = vlaneseq
    %v6681 = vshrl.u32 %v6680, 7
    %v6682 = vsub.s32 0, %v6681
    %v6683 = vrot.slane %v6678, %v6682
    %v6684 = vlaneseq
    %v6685 = vshrl.u32 %v6684, 7
    %v6686 = vsub.s32 1, %v6685
    %v6687 = vrot.slane %v6678, %v6686
    %v6688 = vlaneseq
    %v6689 = vshrl.u32 %v6688, 7
    %v6690 = vsub.s32 2, %v6689
    %v6691 = vrot.slane %v6678, %v6690
    %v6692 = vlaneseq
    %v6693 = vshrl.u32 %v6692, 7
    %v6694 = vsub.s32 3, %v6693
    %v6695 = vrot.slane %v6678, %v6694
    %v6696 = vlaneseq
    %v6697 = vshrl.u32 %v6696, 7
    %v6698 = vsub.s32 4, %v6697
    %v6699 = vrot.slane %v6678, %v6698
    %v6700 = vlaneseq
    %v6701 = vshrl.u32 %v6700, 7
    %v6702 = vsub.s32 5, %v6701
    %v6703 = vrot.slane %v6678, %v6702
    %v6704 = vlaneseq
    %v6705 = vshrl.u32 %v6704, 7
    %v6706 = vsub.s32 6, %v6705
    %v6707 = vrot.slane %v6678, %v6706
    %v6715 = vmul.f32 %v6538, %v6683
    %v6716 = vmul.f32 %v6539, %v6687
    %v6717 = vmul.f32 %v6540, %v6691
    %v6718 = vmul.f32 %v6541, %v6695
    %v6719 = vmul.f32 %v6542, %v6699
    %v6720 = vmul.f32 %v6543, %v6703
    %v6721 = vmul.f32 %v6544, %v6707
    %v6729 = vcombine.low %v6715, %v6716
    %v6730 = vcombine.low %v6717, %v6718
    %v6731 = vcombine.low %v6719, %v6720
    %v6733 = vunpack.c.l.s4 1966171168
    %v6734 = vunpack.c.0.s8 %v6733
    %v6735 = vlaneseq
    %v6736 = vshrl.u32 %v6735, 7
    %v6737 = vsub.s32 %v6734, %v6736
    %v6738 = vrot.slane %v6729, %v6737
    %v6740 = vunpack.c.l.s4 1966171168
    %v6741 = vunpack.c.0.s8 %v6740
    %v6742 = vlaneseq
    %v6743 = vshrl.u32 %v6742, 7
    %v6744 = vsub.s32 %v6741, %v6743
    %v6745 = vrot.slane %v6730, %v6744
    %v6747 = vunpack.c.l.s4 1966171168
    %v6748 = vunpack.c.0.s8 %v6747
    %v6749 = vlaneseq
    %v6750 = vshrl.u32 %v6749, 7
    %v6751 = vsub.s32 %v6748, %v6750
    %v6752 = vrot.slane %v6731, %v6751
    %v6754 = vunpack.c.l.s4 1966171168
    %v6755 = vunpack.c.0.s8 %v6754
    %v6756 = vlaneseq
    %v6757 = vshrl.u32 %v6756, 7
    %v6758 = vsub.s32 %v6755, %v6757
    %v6759 = vrot.slane %v6721, %v6758
    %v6760 = vcombine.low %v6738, %v6745
    %v6761 = vcombine.low %v6752, %v6759
    %v6763 = vunpack.c.l.s4 1966171168
    %v6764 = vunpack.c.0.s8 %v6763
    %v6765 = vlaneseq
    %v6766 = vshrl.u32 %v6765, 7
    %v6767 = vsub.s32 %v6764, %v6766
    %v6768 = vrot.slane %v6760, %v6767
    %v6770 = vunpack.c.l.s4 1966171168
    %v6771 = vunpack.c.0.s8 %v6770
    %v6772 = vlaneseq
    %v6773 = vshrl.u32 %v6772, 7
    %v6774 = vsub.s32 %v6771, %v6773
    %v6775 = vrot.slane %v6761, %v6774
    %v6776 = vcombine.low %v6768, %v6775
    %v6778 = vsub.f32 %v6494, %v6776
    %v6779 = vmul.f32 %v4369, %v6683
    %v6780 = vmul.f32 %v4371, %v6687
    %v6781 = vmul.f32 %v5079, %v6691
    %v6782 = vmul.f32 %v5081, %v6695
    %v6783 = vmul.f32 %v5789, %v6699
    %v6784 = vmul.f32 %v5791, %v6703
    %v6785 = vmul.f32 %v6490, %v6707
    %v6787 = vlaneseq
    %v6788 = vshrl.u32 %v6787, 7
    %v6789 = vsub.s32 0, %v6788
    %v6790 = vrot.slane %v6778, %v6789
    %v6791 = vlaneseq
    %v6792 = vshrl.u32 %v6791, 7
    %v6793 = vsub.s32 1, %v6792
    %v6794 = vrot.slane %v6778, %v6793
    %v6795 = vlaneseq
    %v6796 = vshrl.u32 %v6795, 7
    %v6797 = vsub.s32 2, %v6796
    %v6798 = vrot.slane %v6778, %v6797
    %v6799 = vlaneseq
    %v6800 = vshrl.u32 %v6799, 7
    %v6801 = vsub.s32 3, %v6800
    %v6802 = vrot.slane %v6778, %v6801
    %v6803 = vlaneseq
    %v6804 = vshrl.u32 %v6803, 7
    %v6805 = vsub.s32 4, %v6804
    %v6806 = vrot.slane %v6778, %v6805
    %v6807 = vlaneseq
    %v6808 = vshrl.u32 %v6807, 7
    %v6809 = vsub.s32 5, %v6808
    %v6810 = vrot.slane %v6778, %v6809
    %v6811 = vlaneseq
    %v6812 = vshrl.u32 %v6811, 7
    %v6813 = vsub.s32 6, %v6812
    %v6814 = vrot.slane %v6778, %v6813
    %v6822 = vadd.f32 %v6779, %v6790
    %v6823 = vadd.f32 %v6780, %v6794
    %v6824 = vadd.f32 %v6781, %v6798
    %v6825 = vadd.f32 %v6782, %v6802
    %v6826 = vadd.f32 %v6783, %v6806
    %v6827 = vadd.f32 %v6784, %v6810
    %v6828 = vadd.f32 %v6785, %v6814
    %v6829 = vmax.f32 %v6822, 0.0
    %v6830 = vmax.f32 %v6823, 0.0
    %v6831 = vmax.f32 %v6824, 0.0
    %v6832 = vmax.f32 %v6825, 0.0
    %v6833 = vmax.f32 %v6826, 0.0
    %v6834 = vmax.f32 %v6827, 0.0
    %v6835 = vmax.f32 %v6828, 0.0
    %v6836 = vld [vmem:[#allocation9] sm:$0xff]
    %v6837 = vld [vmem:[#allocation9 + $0x8] sm:$0xff]
    %v6838 = vld [vmem:[#allocation9 + $0x10] sm:$0xff]
    %v6839 = vld [vmem:[#allocation9 + $0x18] sm:$0xf]
    %v6840 = vld [vmem:[#allocation9 + $0x1c] sm:$0xff]
    %v6841 = vld [vmem:[#allocation9 + $0x24] sm:$0xff]
    %v6842 = vld [vmem:[#allocation9 + $0x2c] sm:$0xff]
    %v6843 = vld [vmem:[#allocation9 + $0x34] sm:$0xf]
    %v6844 = vld [vmem:[#allocation9 + $0x38] sm:$0xff]
    %v6845 = vld [vmem:[#allocation9 + $0x40] sm:$0xff]
    %v6846 = vld [vmem:[#allocation9 + $0x48] sm:$0xff]
    %v6847 = vld [vmem:[#allocation9 + $0x50] sm:$0xf]
    %v6848 = vld [vmem:[#allocation9 + $0x54] sm:$0xff]
    %v6849 = vld [vmem:[#allocation9 + $0x5c] sm:$0xff]
    %v6850 = vld [vmem:[#allocation9 + $0x64] sm:$0xff]
    %v6851 = vld [vmem:[#allocation9 + $0x6c] sm:$0xf]
    %v6852 = vld [vmem:[#allocation9 + $0x70] sm:$0xff]
    %v6853 = vld [vmem:[#allocation9 + $0x78] sm:$0xff]
    %v6854 = vld [vmem:[#allocation9 + $0x80] sm:$0xff]
    %v6855 = vld [vmem:[#allocation9 + $0x88] sm:$0xf]
    %v6856 = vld [vmem:[#allocation9 + $0x8c] sm:$0xff]
    %v6857 = vld [vmem:[#allocation9 + $0x94] sm:$0xff]
    %v6858 = vld [vmem:[#allocation9 + $0x9c] sm:$0xff]
    %v6859 = vld [vmem:[#allocation9 + $0xa4] sm:$0xf]
    %v6860 = vld [vmem:[#allocation9 + $0xa8] sm:$0xff]
    %v6861 = vld [vmem:[#allocation9 + $0xb0] sm:$0xff]
    %v6862 = vld [vmem:[#allocation9 + $0xb8] sm:$0xff]
    %v6863 = vld [vmem:[#allocation9 + $0xc0] sm:$0xf]
    %v6864 = vld [vmem:[#allocation9 + $0xc4] sm:$0xff]
    %v6865 = vld [vmem:[#allocation9 + $0xcc] sm:$0xff]
    %v6866 = vld [vmem:[#allocation9 + $0xd4] sm:$0xff]
    %v6867 = vld [vmem:[#allocation9 + $0xdc] sm:$0xf]
    %v6868 = vld [vmem:[#allocation9 + $0xe0] sm:$0xff]
    %v6869 = vld [vmem:[#allocation9 + $0xe8] sm:$0xff]
    %v6870 = vld [vmem:[#allocation9 + $0xf0] sm:$0xff]
    %v6871 = vld [vmem:[#allocation9 + $0xf8] sm:$0xf]
    %v6872 = vld [vmem:[#allocation9 + $0xfc] sm:$0xff]
    %v6873 = vld [vmem:[#allocation9 + $0x104] sm:$0xff]
    %v6874 = vld [vmem:[#allocation9 + $0x10c] sm:$0xff]
    %v6875 = vld [vmem:[#allocation9 + $0x114] sm:$0xf]
    %v6876 = vld [vmem:[#allocation9 + $0x118] sm:$0xff]
    %v6877 = vld [vmem:[#allocation9 + $0x120] sm:$0xff]
    %v6878 = vld [vmem:[#allocation9 + $0x128] sm:$0xff]
    %v6879 = vld [vmem:[#allocation9 + $0x130] sm:$0xf]
    %v6880 = vld [vmem:[#allocation9 + $0x134] sm:$0xff]
    %v6881 = vld [vmem:[#allocation9 + $0x13c] sm:$0xff]
    %v6882 = vld [vmem:[#allocation9 + $0x144] sm:$0xff]
    %v6883 = vld [vmem:[#allocation9 + $0x14c] sm:$0xf]
    %v6884 = vld [vmem:[#allocation9 + $0x150] sm:$0xff]
    %v6885 = vld [vmem:[#allocation9 + $0x158] sm:$0xff]
    %v6886 = vld [vmem:[#allocation9 + $0x160] sm:$0xff]
    %v6887 = vld [vmem:[#allocation9 + $0x168] sm:$0xf]
    %v6888 = vld [vmem:[#allocation9 + $0x16c] sm:$0xff]
    %v6889 = vld [vmem:[#allocation9 + $0x174] sm:$0xff]
    %v6890 = vld [vmem:[#allocation9 + $0x17c] sm:$0xff]
    %v6891 = vld [vmem:[#allocation9 + $0x184] sm:$0xf]
    %v6892 = vld [vmem:[#allocation9 + $0x188] sm:$0xff]
    %v6893 = vld [vmem:[#allocation9 + $0x190] sm:$0xff]
    %v6894 = vld [vmem:[#allocation9 + $0x198] sm:$0xff]
    %v6895 = vld [vmem:[#allocation9 + $0x1a0] sm:$0xf]
    %v6896 = vld [vmem:[#allocation9 + $0x1a4] sm:$0xff]
    %v6897 = vld [vmem:[#allocation9 + $0x1ac] sm:$0xff]
    %v6898 = vld [vmem:[#allocation9 + $0x1b4] sm:$0xff]
    %v6899 = vld [vmem:[#allocation9 + $0x1bc] sm:$0xf]
    %v6900 = vld [vmem:[#allocation9 + $0x1c0] sm:$0xff]
    %v6901 = vld [vmem:[#allocation9 + $0x1c8] sm:$0xff]
    %v6902 = vld [vmem:[#allocation9 + $0x1d0] sm:$0xff]
    %v6903 = vld [vmem:[#allocation9 + $0x1d8] sm:$0xf]
    %v6904 = vld [vmem:[#allocation9 + $0x1dc] sm:$0xff]
    %v6905 = vld [vmem:[#allocation9 + $0x1e4] sm:$0xff]
    %v6906 = vld [vmem:[#allocation9 + $0x1ec] sm:$0xff]
    %v6907 = vld [vmem:[#allocation9 + $0x1f4] sm:$0xf]
    %v6908 = vld [vmem:[#allocation9 + $0x1f8] sm:$0xff]
    %v6909 = vld [vmem:[#allocation9 + $0x200] sm:$0xff]
    %v6910 = vld [vmem:[#allocation9 + $0x208] sm:$0xff]
    %v6911 = vld [vmem:[#allocation9 + $0x210] sm:$0xf]
    %v6912 = vld [vmem:[#allocation9 + $0x214] sm:$0xff]
    %v6913 = vld [vmem:[#allocation9 + $0x21c] sm:$0xff]
    %v6914 = vld [vmem:[#allocation9 + $0x224] sm:$0xff]
    %v6915 = vld [vmem:[#allocation9 + $0x22c] sm:$0xf]
    %v6916 = vld [vmem:[#allocation9 + $0x230] sm:$0xff]
    %v6917 = vld [vmem:[#allocation9 + $0x238] sm:$0xff]
    %v6918 = vld [vmem:[#allocation9 + $0x240] sm:$0xff]
    %v6919 = vld [vmem:[#allocation9 + $0x248] sm:$0xf]
    %v6920 = vld [vmem:[#allocation9 + $0x24c] sm:$0xff]
    %v6921 = vld [vmem:[#allocation9 + $0x254] sm:$0xff]
    %v6922 = vld [vmem:[#allocation9 + $0x25c] sm:$0xff]
    %v6923 = vld [vmem:[#allocation9 + $0x264] sm:$0xf]
    %v6924 = vld [vmem:[#allocation9 + $0x268] sm:$0xff]
    %v6925 = vld [vmem:[#allocation9 + $0x270] sm:$0xff]
    %v6926 = vld [vmem:[#allocation9 + $0x278] sm:$0xff]
    %v6927 = vld [vmem:[#allocation9 + $0x280] sm:$0xf]
    %v6928 = vld [vmem:[#allocation9 + $0x284] sm:$0xff]
    %v6929 = vld [vmem:[#allocation9 + $0x28c] sm:$0xff]
    %v6930 = vld [vmem:[#allocation9 + $0x294] sm:$0xff]
    %v6931 = vld [vmem:[#allocation9 + $0x29c] sm:$0xf]
    %v6932 = vld [vmem:[#allocation9 + $0x2a0] sm:$0xff]
    %v6933 = vld [vmem:[#allocation9 + $0x2a8] sm:$0xff]
    %v6934 = vld [vmem:[#allocation9 + $0x2b0] sm:$0xff]
    %v6935 = vld [vmem:[#allocation9 + $0x2b8] sm:$0xf]
    %v6936 = vld [vmem:[#allocation9 + $0x2bc] sm:$0xff]
    %v6937 = vld [vmem:[#allocation9 + $0x2c4] sm:$0xff]
    %v6938 = vld [vmem:[#allocation9 + $0x2cc] sm:$0xff]
    %v6939 = vld [vmem:[#allocation9 + $0x2d4] sm:$0xf]
    %v6940 = vld [vmem:[#allocation9 + $0x2d8] sm:$0xff]
    %v6941 = vld [vmem:[#allocation9 + $0x2e0] sm:$0xff]
    %v6942 = vld [vmem:[#allocation9 + $0x2e8] sm:$0xff]
    %v6943 = vld [vmem:[#allocation9 + $0x2f0] sm:$0xf]
    %v6944 = vld [vmem:[#allocation9 + $0x2f4] sm:$0xff]
    %v6945 = vld [vmem:[#allocation9 + $0x2fc] sm:$0xff]
    %v6946 = vld [vmem:[#allocation9 + $0x304] sm:$0xff]
    %v6947 = vld [vmem:[#allocation9 + $0x30c] sm:$0xf]
    %v6948 = vld [vmem:[#allocation9 + $0x310] sm:$0xff]
    %v6949 = vld [vmem:[#allocation9 + $0x318] sm:$0xff]
    %v6950 = vld [vmem:[#allocation9 + $0x320] sm:$0xff]
    %v6951 = vld [vmem:[#allocation9 + $0x328] sm:$0xf]
    %v6952 = vld [vmem:[#allocation9 + $0x32c] sm:$0xff]
    %v6953 = vld [vmem:[#allocation9 + $0x334] sm:$0xff]
    %v6954 = vld [vmem:[#allocation9 + $0x33c] sm:$0xff]
    %v6955 = vld [vmem:[#allocation9 + $0x344] sm:$0xf]
    %v6956 = vld [vmem:[#allocation9 + $0x348] sm:$0xff]
    %v6957 = vld [vmem:[#allocation9 + $0x350] sm:$0xff]
    %v6958 = vld [vmem:[#allocation9 + $0x358] sm:$0xff]
    %v6959 = vld [vmem:[#allocation9 + $0x360] sm:$0xf]
    %v6960 = vld [vmem:[#allocation9 + $0x364] sm:$0xff]
    %v6961 = vld [vmem:[#allocation9 + $0x36c] sm:$0xff]
    %v6962 = vld [vmem:[#allocation9 + $0x374] sm:$0xff]
    %v6963 = vld [vmem:[#allocation9 + $0x37c] sm:$0xf]
    %v6964 = vld [vmem:[#allocation9 + $0x380] sm:$0xff]
    %v6965 = vld [vmem:[#allocation9 + $0x388] sm:$0xff]
    %v6966 = vld [vmem:[#allocation9 + $0x390] sm:$0xff]
    %v6967 = vld [vmem:[#allocation9 + $0x398] sm:$0xf]
    %v6968 = vld [vmem:[#allocation9 + $0x39c] sm:$0xff]
    %v6969 = vld [vmem:[#allocation9 + $0x3a4] sm:$0xff]
    %v6970 = vld [vmem:[#allocation9 + $0x3ac] sm:$0xff]
    %v6971 = vld [vmem:[#allocation9 + $0x3b4] sm:$0xf]
    %v6972 = vld [vmem:[#allocation9 + $0x3b8] sm:$0xff]
    %v6973 = vld [vmem:[#allocation9 + $0x3c0] sm:$0xff]
    %v6974 = vld [vmem:[#allocation9 + $0x3c8] sm:$0xff]
    %v6975 = vld [vmem:[#allocation9 + $0x3d0] sm:$0xf]
    %v6976 = vld [vmem:[#allocation9 + $0x3d4] sm:$0xff]
    %v6977 = vld [vmem:[#allocation9 + $0x3dc] sm:$0xff]
    %v6978 = vld [vmem:[#allocation9 + $0x3e4] sm:$0xff]
    %v6979 = vld [vmem:[#allocation9 + $0x3ec] sm:$0xf]
    %v6980 = vld [vmem:[#allocation9 + $0x3f0] sm:$0xff]
    %v6981 = vld [vmem:[#allocation9 + $0x3f8] sm:$0xff]
    %v6982 = vld [vmem:[#allocation9 + $0x400] sm:$0xff]
    %v6983 = vld [vmem:[#allocation9 + $0x408] sm:$0xf]
    %v6984 = vld [vmem:[#allocation9 + $0x40c] sm:$0xff]
    %v6985 = vld [vmem:[#allocation9 + $0x414] sm:$0xff]
    %v6986 = vld [vmem:[#allocation9 + $0x41c] sm:$0xff]
    %v6987 = vld [vmem:[#allocation9 + $0x424] sm:$0xf]
    %v6988 = vld [vmem:[#allocation9 + $0x428] sm:$0xff]
    %v6989 = vld [vmem:[#allocation9 + $0x430] sm:$0xff]
    %v6990 = vld [vmem:[#allocation9 + $0x438] sm:$0xff]
    %v6991 = vld [vmem:[#allocation9 + $0x440] sm:$0xf]
    %v6992 = vld [vmem:[#allocation9 + $0x444] sm:$0xff]
    %v6993 = vld [vmem:[#allocation9 + $0x44c] sm:$0xff]
    %v6994 = vld [vmem:[#allocation9 + $0x454] sm:$0xff]
    %v6995 = vld [vmem:[#allocation9 + $0x45c] sm:$0xf]
    %v6996 = vld [vmem:[#allocation9 + $0x460] sm:$0xff]
    %v6997 = vld [vmem:[#allocation9 + $0x468] sm:$0xff]
    %v6998 = vld [vmem:[#allocation9 + $0x470] sm:$0xff]
    %v6999 = vld [vmem:[#allocation9 + $0x478] sm:$0xf]
    %v7000 = vld [vmem:[#allocation9 + $0x47c] sm:$0xff]
    %v7001 = vld [vmem:[#allocation9 + $0x484] sm:$0xff]
    %v7002 = vld [vmem:[#allocation9 + $0x48c] sm:$0xff]
    %v7003 = vld [vmem:[#allocation9 + $0x494] sm:$0xf]
    %v7004 = vld [vmem:[#allocation9 + $0x498] sm:$0xff]
    %v7005 = vld [vmem:[#allocation9 + $0x4a0] sm:$0xff]
    %v7006 = vld [vmem:[#allocation9 + $0x4a8] sm:$0xff]
    %v7007 = vld [vmem:[#allocation9 + $0x4b0] sm:$0xf]
    %v7008 = vld [vmem:[#allocation9 + $0x4b4] sm:$0xff]
    %v7009 = vld [vmem:[#allocation9 + $0x4bc] sm:$0xff]
    %v7010 = vld [vmem:[#allocation9 + $0x4c4] sm:$0xff]
    %v7011 = vld [vmem:[#allocation9 + $0x4cc] sm:$0xf]
    %v7012 = vld [vmem:[#allocation9 + $0x4d0] sm:$0xff]
    %v7013 = vld [vmem:[#allocation9 + $0x4d8] sm:$0xff]
    %v7014 = vld [vmem:[#allocation9 + $0x4e0] sm:$0xff]
    %v7015 = vld [vmem:[#allocation9 + $0x4e8] sm:$0xf]
    %v7016 = vld [vmem:[#allocation9 + $0x4ec] sm:$0xff]
    %v7017 = vld [vmem:[#allocation9 + $0x4f4] sm:$0xff]
    %v7018 = vld [vmem:[#allocation9 + $0x4fc] sm:$0xff]
    %v7019 = vld [vmem:[#allocation9 + $0x504] sm:$0xf]
    %v7020 = vld [vmem:[#allocation9 + $0x508] sm:$0xff]
    %v7021 = vld [vmem:[#allocation9 + $0x510] sm:$0xff]
    %v7022 = vld [vmem:[#allocation9 + $0x518] sm:$0xff]
    %v7023 = vld [vmem:[#allocation9 + $0x520] sm:$0xf]
    %v7024 = vld [vmem:[#allocation9 + $0x524] sm:$0xff]
    %v7025 = vld [vmem:[#allocation9 + $0x52c] sm:$0xff]
    %v7026 = vld [vmem:[#allocation9 + $0x534] sm:$0xff]
    %v7027 = vld [vmem:[#allocation9 + $0x53c] sm:$0xf]
    %v7028 = vld [vmem:[#allocation9 + $0x540] sm:$0xff]
    %v7029 = vld [vmem:[#allocation9 + $0x548] sm:$0xff]
    %v7030 = vld [vmem:[#allocation9 + $0x550] sm:$0xff]
    %v7031 = vld [vmem:[#allocation9 + $0x558] sm:$0xf]
    %v7032 = vld [vmem:[#allocation9 + $0x55c] sm:$0xff]
    %v7033 = vld [vmem:[#allocation9 + $0x564] sm:$0xff]
    %v7034 = vld [vmem:[#allocation9 + $0x56c] sm:$0xff]
    %v7035 = vld [vmem:[#allocation9 + $0x574] sm:$0xf]
    %v7036 = vld [vmem:[#allocation9 + $0x578] sm:$0xff]
    %v7037 = vld [vmem:[#allocation9 + $0x580] sm:$0xff]
    %v7038 = vld [vmem:[#allocation9 + $0x588] sm:$0xff]
    %v7039 = vld [vmem:[#allocation9 + $0x590] sm:$0xf]
    %v7040 = vld [vmem:[#allocation9 + $0x594] sm:$0xff]
    %v7041 = vld [vmem:[#allocation9 + $0x59c] sm:$0xff]
    %v7042 = vld [vmem:[#allocation9 + $0x5a4] sm:$0xff]
    %v7043 = vld [vmem:[#allocation9 + $0x5ac] sm:$0xf]
    %v7044 = vld [vmem:[#allocation9 + $0x5b0] sm:$0xff]
    %v7045 = vld [vmem:[#allocation9 + $0x5b8] sm:$0xff]
    %v7046 = vld [vmem:[#allocation9 + $0x5c0] sm:$0xff]
    %v7047 = vld [vmem:[#allocation9 + $0x5c8] sm:$0xf]
    %v7048 = vld [vmem:[#allocation9 + $0x5cc] sm:$0xff]
    %v7049 = vld [vmem:[#allocation9 + $0x5d4] sm:$0xff]
    %v7050 = vld [vmem:[#allocation9 + $0x5dc] sm:$0xff]
    %v7051 = vld [vmem:[#allocation9 + $0x5e4] sm:$0xf]
    %v7052 = vld [vmem:[#allocation9 + $0x5e8] sm:$0xff]
    %v7053 = vld [vmem:[#allocation9 + $0x5f0] sm:$0xff]
    %v7054 = vld [vmem:[#allocation9 + $0x5f8] sm:$0xff]
    %v7055 = vld [vmem:[#allocation9 + $0x600] sm:$0xf]
    %v7056 = vld [vmem:[#allocation9 + $0x604] sm:$0xff]
    %v7057 = vld [vmem:[#allocation9 + $0x60c] sm:$0xff]
    %v7058 = vld [vmem:[#allocation9 + $0x614] sm:$0xff]
    %v7059 = vld [vmem:[#allocation9 + $0x61c] sm:$0xf]
    %v7060 = vld [vmem:[#allocation9 + $0x620] sm:$0xff]
    %v7061 = vld [vmem:[#allocation9 + $0x628] sm:$0xff]
    %v7062 = vld [vmem:[#allocation9 + $0x630] sm:$0xff]
    %v7063 = vld [vmem:[#allocation9 + $0x638] sm:$0xf]
    %v7064 = vld [vmem:[#allocation9 + $0x63c] sm:$0xff]
    %v7065 = vld [vmem:[#allocation9 + $0x644] sm:$0xff]
    %v7066 = vld [vmem:[#allocation9 + $0x64c] sm:$0xff]
    %v7067 = vld [vmem:[#allocation9 + $0x654] sm:$0xf]
    %v7068 = vld [vmem:[#allocation9 + $0x658] sm:$0xff]
    %v7069 = vld [vmem:[#allocation9 + $0x660] sm:$0xff]
    %v7070 = vld [vmem:[#allocation9 + $0x668] sm:$0xff]
    %v7071 = vld [vmem:[#allocation9 + $0x670] sm:$0xf]
    %v7072 = vld [vmem:[#allocation9 + $0x674] sm:$0xff]
    %v7073 = vld [vmem:[#allocation9 + $0x67c] sm:$0xff]
    %v7074 = vld [vmem:[#allocation9 + $0x684] sm:$0xff]
    %v7075 = vld [vmem:[#allocation9 + $0x68c] sm:$0xf]
    %v7076 = vld [vmem:[#allocation9 + $0x690] sm:$0xff]
    %v7077 = vld [vmem:[#allocation9 + $0x698] sm:$0xff]
    %v7078 = vld [vmem:[#allocation9 + $0x6a0] sm:$0xff]
    %v7079 = vld [vmem:[#allocation9 + $0x6a8] sm:$0xf]
    %v7080 = vld [vmem:[#allocation9 + $0x6ac] sm:$0xff]
    %v7081 = vld [vmem:[#allocation9 + $0x6b4] sm:$0xff]
    %v7082 = vld [vmem:[#allocation9 + $0x6bc] sm:$0xff]
    %v7083 = vld [vmem:[#allocation9 + $0x6c4] sm:$0xf]
    %v7084 = vld [vmem:[#allocation9 + $0x6c8] sm:$0xff]
    %v7085 = vld [vmem:[#allocation9 + $0x6d0] sm:$0xff]
    %v7086 = vld [vmem:[#allocation9 + $0x6d8] sm:$0xff]
    %v7087 = vld [vmem:[#allocation9 + $0x6e0] sm:$0xf]
    %v7088 = vld [vmem:[#allocation9 + $0x6e4] sm:$0xff]
    %v7089 = vld [vmem:[#allocation9 + $0x6ec] sm:$0xff]
    %v7090 = vld [vmem:[#allocation9 + $0x6f4] sm:$0xff]
    %v7091 = vld [vmem:[#allocation9 + $0x6fc] sm:$0xf]
    %v7092 = vld [vmem:[#allocation9 + $0x700] sm:$0xff]
    %v7093 = vld [vmem:[#allocation9 + $0x708] sm:$0xff]
    %v7094 = vld [vmem:[#allocation9 + $0x710] sm:$0xff]
    %v7095 = vld [vmem:[#allocation9 + $0x718] sm:$0xf]
    %v7096 = vld [vmem:[#allocation9 + $0x71c] sm:$0xff]
    %v7097 = vld [vmem:[#allocation9 + $0x724] sm:$0xff]
    %v7098 = vld [vmem:[#allocation9 + $0x72c] sm:$0xff]
    %v7099 = vld [vmem:[#allocation9 + $0x734] sm:$0xf]
    %v7100 = vld [vmem:[#allocation9 + $0x738] sm:$0xff]
    %v7101 = vld [vmem:[#allocation9 + $0x740] sm:$0xff]
    %v7102 = vld [vmem:[#allocation9 + $0x748] sm:$0xff]
    %v7103 = vld [vmem:[#allocation9 + $0x750] sm:$0xf]
    %v7104 = vld [vmem:[#allocation9 + $0x754] sm:$0xff]
    %v7105 = vld [vmem:[#allocation9 + $0x75c] sm:$0xff]
    %v7106 = vld [vmem:[#allocation9 + $0x764] sm:$0xff]
    %v7107 = vld [vmem:[#allocation9 + $0x76c] sm:$0xf]
    %v7108 = vld [vmem:[#allocation9 + $0x770] sm:$0xff]
    %v7109 = vld [vmem:[#allocation9 + $0x778] sm:$0xff]
    %v7110 = vld [vmem:[#allocation9 + $0x780] sm:$0xff]
    %v7111 = vld [vmem:[#allocation9 + $0x788] sm:$0xf]
    %v7112 = vld [vmem:[#allocation9 + $0x78c] sm:$0xff]
    %v7113 = vld [vmem:[#allocation9 + $0x794] sm:$0xff]
    %v7114 = vld [vmem:[#allocation9 + $0x79c] sm:$0xff]
    %v7115 = vld [vmem:[#allocation9 + $0x7a4] sm:$0xf]
    %v7116 = vld [vmem:[#allocation9 + $0x7a8] sm:$0xff]
    %v7117 = vld [vmem:[#allocation9 + $0x7b0] sm:$0xff]
    %v7118 = vld [vmem:[#allocation9 + $0x7b8] sm:$0xff]
    %v7119 = vld [vmem:[#allocation9 + $0x7c0] sm:$0xf]
    %v7120 = vld [vmem:[#allocation9 + $0x7c4] sm:$0xff]
    %v7121 = vld [vmem:[#allocation9 + $0x7cc] sm:$0xff]
    %v7122 = vld [vmem:[#allocation9 + $0x7d4] sm:$0xff]
    %v7123 = vld [vmem:[#allocation9 + $0x7dc] sm:$0xf]
    %v7124 = vld [vmem:[#allocation9 + $0x7e0] sm:$0xff]
    %v7125 = vld [vmem:[#allocation9 + $0x7e8] sm:$0xff]
    %v7126 = vld [vmem:[#allocation9 + $0x7f0] sm:$0xff]
    %v7127 = vld [vmem:[#allocation9 + $0x7f8] sm:$0xf]
    %v7128 = vld [vmem:[#allocation9 + $0x7fc] sm:$0xff]
    %v7129 = vld [vmem:[#allocation9 + $0x804] sm:$0xff]
    %v7130 = vld [vmem:[#allocation9 + $0x80c] sm:$0xff]
    %v7131 = vld [vmem:[#allocation9 + $0x814] sm:$0xf]
    %v7132 = vld [vmem:[#allocation9 + $0x818] sm:$0xff]
    %v7133 = vld [vmem:[#allocation9 + $0x820] sm:$0xff]
    %v7134 = vld [vmem:[#allocation9 + $0x828] sm:$0xff]
    %v7135 = vld [vmem:[#allocation9 + $0x830] sm:$0xf]
    %v7136 = vld [vmem:[#allocation9 + $0x834] sm:$0xff]
    %v7137 = vld [vmem:[#allocation9 + $0x83c] sm:$0xff]
    %v7138 = vld [vmem:[#allocation9 + $0x844] sm:$0xff]
    %v7139 = vld [vmem:[#allocation9 + $0x84c] sm:$0xf]
    %v7140 = vld [vmem:[#allocation9 + $0x850] sm:$0xff]
    %v7141 = vld [vmem:[#allocation9 + $0x858] sm:$0xff]
    %v7142 = vld [vmem:[#allocation9 + $0x860] sm:$0xff]
    %v7143 = vld [vmem:[#allocation9 + $0x868] sm:$0xf]
    %v7144 = vld [vmem:[#allocation9 + $0x86c] sm:$0xff]
    %v7145 = vld [vmem:[#allocation9 + $0x874] sm:$0xff]
    %v7146 = vld [vmem:[#allocation9 + $0x87c] sm:$0xff]
    %v7147 = vld [vmem:[#allocation9 + $0x884] sm:$0xf]
    %v7148 = vld [vmem:[#allocation9 + $0x888] sm:$0xff]
    %v7149 = vld [vmem:[#allocation9 + $0x890] sm:$0xff]
    %v7150 = vld [vmem:[#allocation9 + $0x898] sm:$0xff]
    %v7151 = vld [vmem:[#allocation9 + $0x8a0] sm:$0xf]
    %v7152 = vld [vmem:[#allocation9 + $0x8a4] sm:$0xff]
    %v7153 = vld [vmem:[#allocation9 + $0x8ac] sm:$0xff]
    %v7154 = vld [vmem:[#allocation9 + $0x8b4] sm:$0xff]
    %v7155 = vld [vmem:[#allocation9 + $0x8bc] sm:$0xf]
    %v7156 = vld [vmem:[#allocation9 + $0x8c0] sm:$0xff]
    %v7157 = vld [vmem:[#allocation9 + $0x8c8] sm:$0xff]
    %v7158 = vld [vmem:[#allocation9 + $0x8d0] sm:$0xff]
    %v7159 = vld [vmem:[#allocation9 + $0x8d8] sm:$0xf]
    %v7160 = vld [vmem:[#allocation9 + $0x8dc] sm:$0xff]
    %v7161 = vld [vmem:[#allocation9 + $0x8e4] sm:$0xff]
    %v7162 = vld [vmem:[#allocation9 + $0x8ec] sm:$0xff]
    %v7163 = vld [vmem:[#allocation9 + $0x8f4] sm:$0xf]
    %v7164 = vld [vmem:[#allocation9 + $0x8f8] sm:$0xff]
    %v7165 = vld [vmem:[#allocation9 + $0x900] sm:$0xff]
    %v7166 = vld [vmem:[#allocation9 + $0x908] sm:$0xff]
    %v7167 = vld [vmem:[#allocation9 + $0x910] sm:$0xf]
    %v7168 = vld [vmem:[#allocation9 + $0x914] sm:$0xff]
    %v7169 = vld [vmem:[#allocation9 + $0x91c] sm:$0xff]
    %v7170 = vld [vmem:[#allocation9 + $0x924] sm:$0xff]
    %v7171 = vld [vmem:[#allocation9 + $0x92c] sm:$0xf]
    %v7172 = vld [vmem:[#allocation9 + $0x930] sm:$0xff]
    %v7173 = vld [vmem:[#allocation9 + $0x938] sm:$0xff]
    %v7174 = vld [vmem:[#allocation9 + $0x940] sm:$0xff]
    %v7175 = vld [vmem:[#allocation9 + $0x948] sm:$0xf]
    %v7176 = vld [vmem:[#allocation9 + $0x94c] sm:$0xff]
    %v7177 = vld [vmem:[#allocation9 + $0x954] sm:$0xff]
    %v7178 = vld [vmem:[#allocation9 + $0x95c] sm:$0xff]
    %v7179 = vld [vmem:[#allocation9 + $0x964] sm:$0xf]
    %v7180 = vld [vmem:[#allocation9 + $0x968] sm:$0xff]
    %v7181 = vld [vmem:[#allocation9 + $0x970] sm:$0xff]
    %v7182 = vld [vmem:[#allocation9 + $0x978] sm:$0xff]
    %v7183 = vld [vmem:[#allocation9 + $0x980] sm:$0xf]
    %v7184 = vld [vmem:[#allocation9 + $0x984] sm:$0xff]
    %v7185 = vld [vmem:[#allocation9 + $0x98c] sm:$0xff]
    %v7186 = vld [vmem:[#allocation9 + $0x994] sm:$0xff]
    %v7187 = vld [vmem:[#allocation9 + $0x99c] sm:$0xf]
    %v7188 = vld [vmem:[#allocation9 + $0x9a0] sm:$0xff]
    %v7189 = vld [vmem:[#allocation9 + $0x9a8] sm:$0xff]
    %v7190 = vld [vmem:[#allocation9 + $0x9b0] sm:$0xff]
    %v7191 = vld [vmem:[#allocation9 + $0x9b8] sm:$0xf]
    %v7192 = vld [vmem:[#allocation9 + $0x9bc] sm:$0xff]
    %v7193 = vld [vmem:[#allocation9 + $0x9c4] sm:$0xff]
    %v7194 = vld [vmem:[#allocation9 + $0x9cc] sm:$0xff]
    %v7195 = vld [vmem:[#allocation9 + $0x9d4] sm:$0xf]
    %v7196 = vld [vmem:[#allocation9 + $0x9d8] sm:$0xff]
    %v7197 = vld [vmem:[#allocation9 + $0x9e0] sm:$0xff]
    %v7198 = vld [vmem:[#allocation9 + $0x9e8] sm:$0xff]
    %v7199 = vld [vmem:[#allocation9 + $0x9f0] sm:$0xf]
    %v7200 = vld [vmem:[#allocation9 + $0x9f4] sm:$0xff]
    %v7201 = vld [vmem:[#allocation9 + $0x9fc] sm:$0xff]
    %v7202 = vld [vmem:[#allocation9 + $0xa04] sm:$0xff]
    %v7203 = vld [vmem:[#allocation9 + $0xa0c] sm:$0xf]
    %v7204 = vld [vmem:[#allocation9 + $0xa10] sm:$0xff]
    %v7205 = vld [vmem:[#allocation9 + $0xa18] sm:$0xff]
    %v7206 = vld [vmem:[#allocation9 + $0xa20] sm:$0xff]
    %v7207 = vld [vmem:[#allocation9 + $0xa28] sm:$0xf]
    %v7208 = vld [vmem:[#allocation9 + $0xa2c] sm:$0xff]
    %v7209 = vld [vmem:[#allocation9 + $0xa34] sm:$0xff]
    %v7210 = vld [vmem:[#allocation9 + $0xa3c] sm:$0xff]
    %v7211 = vld [vmem:[#allocation9 + $0xa44] sm:$0xf]
    %v7212 = vld [vmem:[#allocation9 + $0xa48] sm:$0xff]
    %v7213 = vld [vmem:[#allocation9 + $0xa50] sm:$0xff]
    %v7214 = vld [vmem:[#allocation9 + $0xa58] sm:$0xff]
    %v7215 = vld [vmem:[#allocation9 + $0xa60] sm:$0xf]
    %v7216 = vld [vmem:[#allocation9 + $0xa64] sm:$0xff]
    %v7217 = vld [vmem:[#allocation9 + $0xa6c] sm:$0xff]
    %v7218 = vld [vmem:[#allocation9 + $0xa74] sm:$0xff]
    %v7219 = vld [vmem:[#allocation9 + $0xa7c] sm:$0xf]
    %v7220 = vld [vmem:[#allocation9 + $0xa80] sm:$0xff]
    %v7221 = vld [vmem:[#allocation9 + $0xa88] sm:$0xff]
    %v7222 = vld [vmem:[#allocation9 + $0xa90] sm:$0xff]
    %v7223 = vld [vmem:[#allocation9 + $0xa98] sm:$0xf]
    %v7224 = vld [vmem:[#allocation9 + $0xa9c] sm:$0xff]
    %v7225 = vld [vmem:[#allocation9 + $0xaa4] sm:$0xff]
    %v7226 = vld [vmem:[#allocation9 + $0xaac] sm:$0xff]
    %v7227 = vld [vmem:[#allocation9 + $0xab4] sm:$0xf]
    %v7228 = vld [vmem:[#allocation9 + $0xab8] sm:$0xff]
    %v7229 = vld [vmem:[#allocation9 + $0xac0] sm:$0xff]
    %v7230 = vld [vmem:[#allocation9 + $0xac8] sm:$0xff]
    %v7231 = vld [vmem:[#allocation9 + $0xad0] sm:$0xf]
    %v7232 = vld [vmem:[#allocation9 + $0xad4] sm:$0xff]
    %v7233 = vld [vmem:[#allocation9 + $0xadc] sm:$0xff]
    %v7234 = vld [vmem:[#allocation9 + $0xae4] sm:$0xff]
    %v7235 = vld [vmem:[#allocation9 + $0xaec] sm:$0xf]
    %v7236 = vld [vmem:[#allocation9 + $0xaf0] sm:$0xff]
    %v7237 = vld [vmem:[#allocation9 + $0xaf8] sm:$0xff]
    %v7238 = vld [vmem:[#allocation9 + $0xb00] sm:$0xff]
    %v7239 = vld [vmem:[#allocation9 + $0xb08] sm:$0xf]
    %v7240 = vld [vmem:[#allocation9 + $0xb0c] sm:$0xff]
    %v7241 = vld [vmem:[#allocation9 + $0xb14] sm:$0xff]
    %v7242 = vld [vmem:[#allocation9 + $0xb1c] sm:$0xff]
    %v7243 = vld [vmem:[#allocation9 + $0xb24] sm:$0xf]
    %v7244 = vld [vmem:[#allocation9 + $0xb28] sm:$0xff]
    %v7245 = vld [vmem:[#allocation9 + $0xb30] sm:$0xff]
    %v7246 = vld [vmem:[#allocation9 + $0xb38] sm:$0xff]
    %v7247 = vld [vmem:[#allocation9 + $0xb40] sm:$0xf]
    %v7248 = vld [vmem:[#allocation9 + $0xb44] sm:$0xff]
    %v7249 = vld [vmem:[#allocation9 + $0xb4c] sm:$0xff]
    %v7250 = vld [vmem:[#allocation9 + $0xb54] sm:$0xff]
    %v7251 = vld [vmem:[#allocation9 + $0xb5c] sm:$0xf]
    %v7252 = vld [vmem:[#allocation9 + $0xb60] sm:$0xff]
    %v7253 = vld [vmem:[#allocation9 + $0xb68] sm:$0xff]
    %v7254 = vld [vmem:[#allocation9 + $0xb70] sm:$0xff]
    %v7255 = vld [vmem:[#allocation9 + $0xb78] sm:$0xf]
    %v7256 = vld [vmem:[#allocation9 + $0xb7c] sm:$0xff]
    %v7257 = vld [vmem:[#allocation9 + $0xb84] sm:$0xff]
    %v7258 = vld [vmem:[#allocation9 + $0xb8c] sm:$0xff]
    %v7259 = vld [vmem:[#allocation9 + $0xb94] sm:$0xf]
    %v7260 = vld [vmem:[#allocation9 + $0xb98] sm:$0xff]
    %v7261 = vld [vmem:[#allocation9 + $0xba0] sm:$0xff]
    %v7262 = vld [vmem:[#allocation9 + $0xba8] sm:$0xff]
    %v7263 = vld [vmem:[#allocation9 + $0xbb0] sm:$0xf]
    %v7264 = vld [vmem:[#allocation9 + $0xbb4] sm:$0xff]
    %v7265 = vld [vmem:[#allocation9 + $0xbbc] sm:$0xff]
    %v7266 = vld [vmem:[#allocation9 + $0xbc4] sm:$0xff]
    %v7267 = vld [vmem:[#allocation9 + $0xbcc] sm:$0xf]
    %v7268 = vld [vmem:[#allocation9 + $0xbd0] sm:$0xff]
    %v7269 = vld [vmem:[#allocation9 + $0xbd8] sm:$0xff]
    %v7270 = vld [vmem:[#allocation9 + $0xbe0] sm:$0xff]
    %v7271 = vld [vmem:[#allocation9 + $0xbe8] sm:$0xf]
    %v7272 = vld [vmem:[#allocation9 + $0xbec] sm:$0xff]
    %v7273 = vld [vmem:[#allocation9 + $0xbf4] sm:$0xff]
    %v7274 = vld [vmem:[#allocation9 + $0xbfc] sm:$0xff]
    %v7275 = vld [vmem:[#allocation9 + $0xc04] sm:$0xf]
    %v7276 = vld [vmem:[#allocation9 + $0xc08] sm:$0xff]
    %v7277 = vld [vmem:[#allocation9 + $0xc10] sm:$0xff]
    %v7278 = vld [vmem:[#allocation9 + $0xc18] sm:$0xff]
    %v7279 = vld [vmem:[#allocation9 + $0xc20] sm:$0xf]
    %v7280 = vld [vmem:[#allocation9 + $0xc24] sm:$0xff]
    %v7281 = vld [vmem:[#allocation9 + $0xc2c] sm:$0xff]
    %v7282 = vld [vmem:[#allocation9 + $0xc34] sm:$0xff]
    %v7283 = vld [vmem:[#allocation9 + $0xc3c] sm:$0xf]
    %v7284 = vunpack.c.l.bf16 %v6836
    %v7285 = vunpack.c.h.bf16 %v6836
    %v7286 = vunpack.c.l.bf16 %v6837
    %v7287 = vunpack.c.h.bf16 %v6837
    %v7288 = vunpack.c.l.bf16 %v6838
    %v7289 = vunpack.c.h.bf16 %v6838
    %v7290 = vunpack.c.l.bf16 %v6839
    %v7291 = vunpack.c.l.bf16 %v6840
    %v7292 = vunpack.c.h.bf16 %v6840
    %v7293 = vunpack.c.l.bf16 %v6841
    %v7294 = vunpack.c.h.bf16 %v6841
    %v7295 = vunpack.c.l.bf16 %v6842
    %v7296 = vunpack.c.h.bf16 %v6842
    %v7297 = vunpack.c.l.bf16 %v6843
    %v7298 = vunpack.c.l.bf16 %v6844
    %v7299 = vunpack.c.h.bf16 %v6844
    %v7300 = vunpack.c.l.bf16 %v6845
    %v7301 = vunpack.c.h.bf16 %v6845
    %v7302 = vunpack.c.l.bf16 %v6846
    %v7303 = vunpack.c.h.bf16 %v6846
    %v7304 = vunpack.c.l.bf16 %v6847
    %v7305 = vunpack.c.l.bf16 %v6848
    %v7306 = vunpack.c.h.bf16 %v6848
    %v7307 = vunpack.c.l.bf16 %v6849
    %v7308 = vunpack.c.h.bf16 %v6849
    %v7309 = vunpack.c.l.bf16 %v6850
    %v7310 = vunpack.c.h.bf16 %v6850
    %v7311 = vunpack.c.l.bf16 %v6851
    %v7312 = vunpack.c.l.bf16 %v6852
    %v7313 = vunpack.c.h.bf16 %v6852
    %v7314 = vunpack.c.l.bf16 %v6853
    %v7315 = vunpack.c.h.bf16 %v6853
    %v7316 = vunpack.c.l.bf16 %v6854
    %v7317 = vunpack.c.h.bf16 %v6854
    %v7318 = vunpack.c.l.bf16 %v6855
    %v7319 = vunpack.c.l.bf16 %v6856
    %v7320 = vunpack.c.h.bf16 %v6856
    %v7321 = vunpack.c.l.bf16 %v6857
    %v7322 = vunpack.c.h.bf16 %v6857
    %v7323 = vunpack.c.l.bf16 %v6858
    %v7324 = vunpack.c.h.bf16 %v6858
    %v7325 = vunpack.c.l.bf16 %v6859
    %v7326 = vunpack.c.l.bf16 %v6860
    %v7327 = vunpack.c.h.bf16 %v6860
    %v7328 = vunpack.c.l.bf16 %v6861
    %v7329 = vunpack.c.h.bf16 %v6861
    %v7330 = vunpack.c.l.bf16 %v6862
    %v7331 = vunpack.c.h.bf16 %v6862
    %v7332 = vunpack.c.l.bf16 %v6863
    %v7333 = vunpack.c.l.bf16 %v6864
    %v7334 = vunpack.c.h.bf16 %v6864
    %v7335 = vunpack.c.l.bf16 %v6865
    %v7336 = vunpack.c.h.bf16 %v6865
    %v7337 = vunpack.c.l.bf16 %v6866
    %v7338 = vunpack.c.h.bf16 %v6866
    %v7339 = vunpack.c.l.bf16 %v6867
    %v7340 = vunpack.c.l.bf16 %v6868
    %v7341 = vunpack.c.h.bf16 %v6868
    %v7342 = vunpack.c.l.bf16 %v6869
    %v7343 = vunpack.c.h.bf16 %v6869
    %v7344 = vunpack.c.l.bf16 %v6870
    %v7345 = vunpack.c.h.bf16 %v6870
    %v7346 = vunpack.c.l.bf16 %v6871
    %v7347 = vunpack.c.l.bf16 %v6872
    %v7348 = vunpack.c.h.bf16 %v6872
    %v7349 = vunpack.c.l.bf16 %v6873
    %v7350 = vunpack.c.h.bf16 %v6873
    %v7351 = vunpack.c.l.bf16 %v6874
    %v7352 = vunpack.c.h.bf16 %v6874
    %v7353 = vunpack.c.l.bf16 %v6875
    %v7354 = vunpack.c.l.bf16 %v6876
    %v7355 = vunpack.c.h.bf16 %v6876
    %v7356 = vunpack.c.l.bf16 %v6877
    %v7357 = vunpack.c.h.bf16 %v6877
    %v7358 = vunpack.c.l.bf16 %v6878
    %v7359 = vunpack.c.h.bf16 %v6878
    %v7360 = vunpack.c.l.bf16 %v6879
    %v7361 = vunpack.c.l.bf16 %v6880
    %v7362 = vunpack.c.h.bf16 %v6880
    %v7363 = vunpack.c.l.bf16 %v6881
    %v7364 = vunpack.c.h.bf16 %v6881
    %v7365 = vunpack.c.l.bf16 %v6882
    %v7366 = vunpack.c.h.bf16 %v6882
    %v7367 = vunpack.c.l.bf16 %v6883
    %v7368 = vunpack.c.l.bf16 %v6884
    %v7369 = vunpack.c.h.bf16 %v6884
    %v7370 = vunpack.c.l.bf16 %v6885
    %v7371 = vunpack.c.h.bf16 %v6885
    %v7372 = vunpack.c.l.bf16 %v6886
    %v7373 = vunpack.c.h.bf16 %v6886
    %v7374 = vunpack.c.l.bf16 %v6887
    %v7375 = vunpack.c.l.bf16 %v6888
    %v7376 = vunpack.c.h.bf16 %v6888
    %v7377 = vunpack.c.l.bf16 %v6889
    %v7378 = vunpack.c.h.bf16 %v6889
    %v7379 = vunpack.c.l.bf16 %v6890
    %v7380 = vunpack.c.h.bf16 %v6890
    %v7381 = vunpack.c.l.bf16 %v6891
    %v7382 = vunpack.c.l.bf16 %v6892
    %v7383 = vunpack.c.h.bf16 %v6892
    %v7384 = vunpack.c.l.bf16 %v6893
    %v7385 = vunpack.c.h.bf16 %v6893
    %v7386 = vunpack.c.l.bf16 %v6894
    %v7387 = vunpack.c.h.bf16 %v6894
    %v7388 = vunpack.c.l.bf16 %v6895
    %v7389 = vunpack.c.l.bf16 %v6896
    %v7390 = vunpack.c.h.bf16 %v6896
    %v7391 = vunpack.c.l.bf16 %v6897
    %v7392 = vunpack.c.h.bf16 %v6897
    %v7393 = vunpack.c.l.bf16 %v6898
    %v7394 = vunpack.c.h.bf16 %v6898
    %v7395 = vunpack.c.l.bf16 %v6899
    %v7396 = vunpack.c.l.bf16 %v6900
    %v7397 = vunpack.c.h.bf16 %v6900
    %v7398 = vunpack.c.l.bf16 %v6901
    %v7399 = vunpack.c.h.bf16 %v6901
    %v7400 = vunpack.c.l.bf16 %v6902
    %v7401 = vunpack.c.h.bf16 %v6902
    %v7402 = vunpack.c.l.bf16 %v6903
    %v7403 = vunpack.c.l.bf16 %v6904
    %v7404 = vunpack.c.h.bf16 %v6904
    %v7405 = vunpack.c.l.bf16 %v6905
    %v7406 = vunpack.c.h.bf16 %v6905
    %v7407 = vunpack.c.l.bf16 %v6906
    %v7408 = vunpack.c.h.bf16 %v6906
    %v7409 = vunpack.c.l.bf16 %v6907
    %v7410 = vunpack.c.l.bf16 %v6908
    %v7411 = vunpack.c.h.bf16 %v6908
    %v7412 = vunpack.c.l.bf16 %v6909
    %v7413 = vunpack.c.h.bf16 %v6909
    %v7414 = vunpack.c.l.bf16 %v6910
    %v7415 = vunpack.c.h.bf16 %v6910
    %v7416 = vunpack.c.l.bf16 %v6911
    %v7417 = vunpack.c.l.bf16 %v6912
    %v7418 = vunpack.c.h.bf16 %v6912
    %v7419 = vunpack.c.l.bf16 %v6913
    %v7420 = vunpack.c.h.bf16 %v6913
    %v7421 = vunpack.c.l.bf16 %v6914
    %v7422 = vunpack.c.h.bf16 %v6914
    %v7423 = vunpack.c.l.bf16 %v6915
    %v7424 = vunpack.c.l.bf16 %v6916
    %v7425 = vunpack.c.h.bf16 %v6916
    %v7426 = vunpack.c.l.bf16 %v6917
    %v7427 = vunpack.c.h.bf16 %v6917
    %v7428 = vunpack.c.l.bf16 %v6918
    %v7429 = vunpack.c.h.bf16 %v6918
    %v7430 = vunpack.c.l.bf16 %v6919
    %v7431 = vunpack.c.l.bf16 %v6920
    %v7432 = vunpack.c.h.bf16 %v6920
    %v7433 = vunpack.c.l.bf16 %v6921
    %v7434 = vunpack.c.h.bf16 %v6921
    %v7435 = vunpack.c.l.bf16 %v6922
    %v7436 = vunpack.c.h.bf16 %v6922
    %v7437 = vunpack.c.l.bf16 %v6923
    %v7438 = vunpack.c.l.bf16 %v6924
    %v7439 = vunpack.c.h.bf16 %v6924
    %v7440 = vunpack.c.l.bf16 %v6925
    %v7441 = vunpack.c.h.bf16 %v6925
    %v7442 = vunpack.c.l.bf16 %v6926
    %v7443 = vunpack.c.h.bf16 %v6926
    %v7444 = vunpack.c.l.bf16 %v6927
    %v7445 = vunpack.c.l.bf16 %v6928
    %v7446 = vunpack.c.h.bf16 %v6928
    %v7447 = vunpack.c.l.bf16 %v6929
    %v7448 = vunpack.c.h.bf16 %v6929
    %v7449 = vunpack.c.l.bf16 %v6930
    %v7450 = vunpack.c.h.bf16 %v6930
    %v7451 = vunpack.c.l.bf16 %v6931
    %v7452 = vunpack.c.l.bf16 %v6932
    %v7453 = vunpack.c.h.bf16 %v6932
    %v7454 = vunpack.c.l.bf16 %v6933
    %v7455 = vunpack.c.h.bf16 %v6933
    %v7456 = vunpack.c.l.bf16 %v6934
    %v7457 = vunpack.c.h.bf16 %v6934
    %v7458 = vunpack.c.l.bf16 %v6935
    %v7459 = vunpack.c.l.bf16 %v6936
    %v7460 = vunpack.c.h.bf16 %v6936
    %v7461 = vunpack.c.l.bf16 %v6937
    %v7462 = vunpack.c.h.bf16 %v6937
    %v7463 = vunpack.c.l.bf16 %v6938
    %v7464 = vunpack.c.h.bf16 %v6938
    %v7465 = vunpack.c.l.bf16 %v6939
    %v7466 = vunpack.c.l.bf16 %v6940
    %v7467 = vunpack.c.h.bf16 %v6940
    %v7468 = vunpack.c.l.bf16 %v6941
    %v7469 = vunpack.c.h.bf16 %v6941
    %v7470 = vunpack.c.l.bf16 %v6942
    %v7471 = vunpack.c.h.bf16 %v6942
    %v7472 = vunpack.c.l.bf16 %v6943
    %v7473 = vunpack.c.l.bf16 %v6944
    %v7474 = vunpack.c.h.bf16 %v6944
    %v7475 = vunpack.c.l.bf16 %v6945
    %v7476 = vunpack.c.h.bf16 %v6945
    %v7477 = vunpack.c.l.bf16 %v6946
    %v7478 = vunpack.c.h.bf16 %v6946
    %v7479 = vunpack.c.l.bf16 %v6947
    %v7480 = vunpack.c.l.bf16 %v6948
    %v7481 = vunpack.c.h.bf16 %v6948
    %v7482 = vunpack.c.l.bf16 %v6949
    %v7483 = vunpack.c.h.bf16 %v6949
    %v7484 = vunpack.c.l.bf16 %v6950
    %v7485 = vunpack.c.h.bf16 %v6950
    %v7486 = vunpack.c.l.bf16 %v6951
    %v7487 = vunpack.c.l.bf16 %v6952
    %v7488 = vunpack.c.h.bf16 %v6952
    %v7489 = vunpack.c.l.bf16 %v6953
    %v7490 = vunpack.c.h.bf16 %v6953
    %v7491 = vunpack.c.l.bf16 %v6954
    %v7492 = vunpack.c.h.bf16 %v6954
    %v7493 = vunpack.c.l.bf16 %v6955
    %v7494 = vunpack.c.l.bf16 %v6956
    %v7495 = vunpack.c.h.bf16 %v6956
    %v7496 = vunpack.c.l.bf16 %v6957
    %v7497 = vunpack.c.h.bf16 %v6957
    %v7498 = vunpack.c.l.bf16 %v6958
    %v7499 = vunpack.c.h.bf16 %v6958
    %v7500 = vunpack.c.l.bf16 %v6959
    %v7501 = vunpack.c.l.bf16 %v6960
    %v7502 = vunpack.c.h.bf16 %v6960
    %v7503 = vunpack.c.l.bf16 %v6961
    %v7504 = vunpack.c.h.bf16 %v6961
    %v7505 = vunpack.c.l.bf16 %v6962
    %v7506 = vunpack.c.h.bf16 %v6962
    %v7507 = vunpack.c.l.bf16 %v6963
    %v7508 = vunpack.c.l.bf16 %v6964
    %v7509 = vunpack.c.h.bf16 %v6964
    %v7510 = vunpack.c.l.bf16 %v6965
    %v7511 = vunpack.c.h.bf16 %v6965
    %v7512 = vunpack.c.l.bf16 %v6966
    %v7513 = vunpack.c.h.bf16 %v6966
    %v7514 = vunpack.c.l.bf16 %v6967
    %v7515 = vunpack.c.l.bf16 %v6968
    %v7516 = vunpack.c.h.bf16 %v6968
    %v7517 = vunpack.c.l.bf16 %v6969
    %v7518 = vunpack.c.h.bf16 %v6969
    %v7519 = vunpack.c.l.bf16 %v6970
    %v7520 = vunpack.c.h.bf16 %v6970
    %v7521 = vunpack.c.l.bf16 %v6971
    %v7522 = vunpack.c.l.bf16 %v6972
    %v7523 = vunpack.c.h.bf16 %v6972
    %v7524 = vunpack.c.l.bf16 %v6973
    %v7525 = vunpack.c.h.bf16 %v6973
    %v7526 = vunpack.c.l.bf16 %v6974
    %v7527 = vunpack.c.h.bf16 %v6974
    %v7528 = vunpack.c.l.bf16 %v6975
    %v7529 = vunpack.c.l.bf16 %v6976
    %v7530 = vunpack.c.h.bf16 %v6976
    %v7531 = vunpack.c.l.bf16 %v6977
    %v7532 = vunpack.c.h.bf16 %v6977
    %v7533 = vunpack.c.l.bf16 %v6978
    %v7534 = vunpack.c.h.bf16 %v6978
    %v7535 = vunpack.c.l.bf16 %v6979
    %v7536 = vunpack.c.l.bf16 %v6980
    %v7537 = vunpack.c.h.bf16 %v6980
    %v7538 = vunpack.c.l.bf16 %v6981
    %v7539 = vunpack.c.h.bf16 %v6981
    %v7540 = vunpack.c.l.bf16 %v6982
    %v7541 = vunpack.c.h.bf16 %v6982
    %v7542 = vunpack.c.l.bf16 %v6983
    %v7543 = vunpack.c.l.bf16 %v6984
    %v7544 = vunpack.c.h.bf16 %v6984
    %v7545 = vunpack.c.l.bf16 %v6985
    %v7546 = vunpack.c.h.bf16 %v6985
    %v7547 = vunpack.c.l.bf16 %v6986
    %v7548 = vunpack.c.h.bf16 %v6986
    %v7549 = vunpack.c.l.bf16 %v6987
    %v7550 = vunpack.c.l.bf16 %v6988
    %v7551 = vunpack.c.h.bf16 %v6988
    %v7552 = vunpack.c.l.bf16 %v6989
    %v7553 = vunpack.c.h.bf16 %v6989
    %v7554 = vunpack.c.l.bf16 %v6990
    %v7555 = vunpack.c.h.bf16 %v6990
    %v7556 = vunpack.c.l.bf16 %v6991
    %v7557 = vunpack.c.l.bf16 %v6992
    %v7558 = vunpack.c.h.bf16 %v6992
    %v7559 = vunpack.c.l.bf16 %v6993
    %v7560 = vunpack.c.h.bf16 %v6993
    %v7561 = vunpack.c.l.bf16 %v6994
    %v7562 = vunpack.c.h.bf16 %v6994
    %v7563 = vunpack.c.l.bf16 %v6995
    %v7564 = vunpack.c.l.bf16 %v6996
    %v7565 = vunpack.c.h.bf16 %v6996
    %v7566 = vunpack.c.l.bf16 %v6997
    %v7567 = vunpack.c.h.bf16 %v6997
    %v7568 = vunpack.c.l.bf16 %v6998
    %v7569 = vunpack.c.h.bf16 %v6998
    %v7570 = vunpack.c.l.bf16 %v6999
    %v7571 = vunpack.c.l.bf16 %v7000
    %v7572 = vunpack.c.h.bf16 %v7000
    %v7573 = vunpack.c.l.bf16 %v7001
    %v7574 = vunpack.c.h.bf16 %v7001
    %v7575 = vunpack.c.l.bf16 %v7002
    %v7576 = vunpack.c.h.bf16 %v7002
    %v7577 = vunpack.c.l.bf16 %v7003
    %v7578 = vunpack.c.l.bf16 %v7004
    %v7579 = vunpack.c.h.bf16 %v7004
    %v7580 = vunpack.c.l.bf16 %v7005
    %v7581 = vunpack.c.h.bf16 %v7005
    %v7582 = vunpack.c.l.bf16 %v7006
    %v7583 = vunpack.c.h.bf16 %v7006
    %v7584 = vunpack.c.l.bf16 %v7007
    %v7585 = vunpack.c.l.bf16 %v7008
    %v7586 = vunpack.c.h.bf16 %v7008
    %v7587 = vunpack.c.l.bf16 %v7009
    %v7588 = vunpack.c.h.bf16 %v7009
    %v7589 = vunpack.c.l.bf16 %v7010
    %v7590 = vunpack.c.h.bf16 %v7010
    %v7591 = vunpack.c.l.bf16 %v7011
    %v7592 = vunpack.c.l.bf16 %v7012
    %v7593 = vunpack.c.h.bf16 %v7012
    %v7594 = vunpack.c.l.bf16 %v7013
    %v7595 = vunpack.c.h.bf16 %v7013
    %v7596 = vunpack.c.l.bf16 %v7014
    %v7597 = vunpack.c.h.bf16 %v7014
    %v7598 = vunpack.c.l.bf16 %v7015
    %v7599 = vunpack.c.l.bf16 %v7016
    %v7600 = vunpack.c.h.bf16 %v7016
    %v7601 = vunpack.c.l.bf16 %v7017
    %v7602 = vunpack.c.h.bf16 %v7017
    %v7603 = vunpack.c.l.bf16 %v7018
    %v7604 = vunpack.c.h.bf16 %v7018
    %v7605 = vunpack.c.l.bf16 %v7019
    %v7606 = vunpack.c.l.bf16 %v7020
    %v7607 = vunpack.c.h.bf16 %v7020
    %v7608 = vunpack.c.l.bf16 %v7021
    %v7609 = vunpack.c.h.bf16 %v7021
    %v7610 = vunpack.c.l.bf16 %v7022
    %v7611 = vunpack.c.h.bf16 %v7022
    %v7612 = vunpack.c.l.bf16 %v7023
    %v7613 = vunpack.c.l.bf16 %v7024
    %v7614 = vunpack.c.h.bf16 %v7024
    %v7615 = vunpack.c.l.bf16 %v7025
    %v7616 = vunpack.c.h.bf16 %v7025
    %v7617 = vunpack.c.l.bf16 %v7026
    %v7618 = vunpack.c.h.bf16 %v7026
    %v7619 = vunpack.c.l.bf16 %v7027
    %v7620 = vunpack.c.l.bf16 %v7028
    %v7621 = vunpack.c.h.bf16 %v7028
    %v7622 = vunpack.c.l.bf16 %v7029
    %v7623 = vunpack.c.h.bf16 %v7029
    %v7624 = vunpack.c.l.bf16 %v7030
    %v7625 = vunpack.c.h.bf16 %v7030
    %v7626 = vunpack.c.l.bf16 %v7031
    %v7627 = vunpack.c.l.bf16 %v7032
    %v7628 = vunpack.c.h.bf16 %v7032
    %v7629 = vunpack.c.l.bf16 %v7033
    %v7630 = vunpack.c.h.bf16 %v7033
    %v7631 = vunpack.c.l.bf16 %v7034
    %v7632 = vunpack.c.h.bf16 %v7034
    %v7633 = vunpack.c.l.bf16 %v7035
    %v7634 = vunpack.c.l.bf16 %v7036
    %v7635 = vunpack.c.h.bf16 %v7036
    %v7636 = vunpack.c.l.bf16 %v7037
    %v7637 = vunpack.c.h.bf16 %v7037
    %v7638 = vunpack.c.l.bf16 %v7038
    %v7639 = vunpack.c.h.bf16 %v7038
    %v7640 = vunpack.c.l.bf16 %v7039
    %v7641 = vunpack.c.l.bf16 %v7040
    %v7642 = vunpack.c.h.bf16 %v7040
    %v7643 = vunpack.c.l.bf16 %v7041
    %v7644 = vunpack.c.h.bf16 %v7041
    %v7645 = vunpack.c.l.bf16 %v7042
    %v7646 = vunpack.c.h.bf16 %v7042
    %v7647 = vunpack.c.l.bf16 %v7043
    %v7648 = vunpack.c.l.bf16 %v7044
    %v7649 = vunpack.c.h.bf16 %v7044
    %v7650 = vunpack.c.l.bf16 %v7045
    %v7651 = vunpack.c.h.bf16 %v7045
    %v7652 = vunpack.c.l.bf16 %v7046
    %v7653 = vunpack.c.h.bf16 %v7046
    %v7654 = vunpack.c.l.bf16 %v7047
    %v7655 = vunpack.c.l.bf16 %v7048
    %v7656 = vunpack.c.h.bf16 %v7048
    %v7657 = vunpack.c.l.bf16 %v7049
    %v7658 = vunpack.c.h.bf16 %v7049
    %v7659 = vunpack.c.l.bf16 %v7050
    %v7660 = vunpack.c.h.bf16 %v7050
    %v7661 = vunpack.c.l.bf16 %v7051
    %v7662 = vunpack.c.l.bf16 %v7052
    %v7663 = vunpack.c.h.bf16 %v7052
    %v7664 = vunpack.c.l.bf16 %v7053
    %v7665 = vunpack.c.h.bf16 %v7053
    %v7666 = vunpack.c.l.bf16 %v7054
    %v7667 = vunpack.c.h.bf16 %v7054
    %v7668 = vunpack.c.l.bf16 %v7055
    %v7669 = vunpack.c.l.bf16 %v7056
    %v7670 = vunpack.c.h.bf16 %v7056
    %v7671 = vunpack.c.l.bf16 %v7057
    %v7672 = vunpack.c.h.bf16 %v7057
    %v7673 = vunpack.c.l.bf16 %v7058
    %v7674 = vunpack.c.h.bf16 %v7058
    %v7675 = vunpack.c.l.bf16 %v7059
    %v7676 = vunpack.c.l.bf16 %v7060
    %v7677 = vunpack.c.h.bf16 %v7060
    %v7678 = vunpack.c.l.bf16 %v7061
    %v7679 = vunpack.c.h.bf16 %v7061
    %v7680 = vunpack.c.l.bf16 %v7062
    %v7681 = vunpack.c.h.bf16 %v7062
    %v7682 = vunpack.c.l.bf16 %v7063
    %v7683 = vunpack.c.l.bf16 %v7064
    %v7684 = vunpack.c.h.bf16 %v7064
    %v7685 = vunpack.c.l.bf16 %v7065
    %v7686 = vunpack.c.h.bf16 %v7065
    %v7687 = vunpack.c.l.bf16 %v7066
    %v7688 = vunpack.c.h.bf16 %v7066
    %v7689 = vunpack.c.l.bf16 %v7067
    %v7690 = vunpack.c.l.bf16 %v7068
    %v7691 = vunpack.c.h.bf16 %v7068
    %v7692 = vunpack.c.l.bf16 %v7069
    %v7693 = vunpack.c.h.bf16 %v7069
    %v7694 = vunpack.c.l.bf16 %v7070
    %v7695 = vunpack.c.h.bf16 %v7070
    %v7696 = vunpack.c.l.bf16 %v7071
    %v7697 = vunpack.c.l.bf16 %v7072
    %v7698 = vunpack.c.h.bf16 %v7072
    %v7699 = vunpack.c.l.bf16 %v7073
    %v7700 = vunpack.c.h.bf16 %v7073
    %v7701 = vunpack.c.l.bf16 %v7074
    %v7702 = vunpack.c.h.bf16 %v7074
    %v7703 = vunpack.c.l.bf16 %v7075
    %v7704 = vunpack.c.l.bf16 %v7076
    %v7705 = vunpack.c.h.bf16 %v7076
    %v7706 = vunpack.c.l.bf16 %v7077
    %v7707 = vunpack.c.h.bf16 %v7077
    %v7708 = vunpack.c.l.bf16 %v7078
    %v7709 = vunpack.c.h.bf16 %v7078
    %v7710 = vunpack.c.l.bf16 %v7079
    %v7711 = vunpack.c.l.bf16 %v7080
    %v7712 = vunpack.c.h.bf16 %v7080
    %v7713 = vunpack.c.l.bf16 %v7081
    %v7714 = vunpack.c.h.bf16 %v7081
    %v7715 = vunpack.c.l.bf16 %v7082
    %v7716 = vunpack.c.h.bf16 %v7082
    %v7717 = vunpack.c.l.bf16 %v7083
    %v7718 = vunpack.c.l.bf16 %v7084
    %v7719 = vunpack.c.h.bf16 %v7084
    %v7720 = vunpack.c.l.bf16 %v7085
    %v7721 = vunpack.c.h.bf16 %v7085
    %v7722 = vunpack.c.l.bf16 %v7086
    %v7723 = vunpack.c.h.bf16 %v7086
    %v7724 = vunpack.c.l.bf16 %v7087
    %v7725 = vunpack.c.l.bf16 %v7088
    %v7726 = vunpack.c.h.bf16 %v7088
    %v7727 = vunpack.c.l.bf16 %v7089
    %v7728 = vunpack.c.h.bf16 %v7089
    %v7729 = vunpack.c.l.bf16 %v7090
    %v7730 = vunpack.c.h.bf16 %v7090
    %v7731 = vunpack.c.l.bf16 %v7091
    %v7732 = vunpack.c.l.bf16 %v7092
    %v7733 = vunpack.c.h.bf16 %v7092
    %v7734 = vunpack.c.l.bf16 %v7093
    %v7735 = vunpack.c.h.bf16 %v7093
    %v7736 = vunpack.c.l.bf16 %v7094
    %v7737 = vunpack.c.h.bf16 %v7094
    %v7738 = vunpack.c.l.bf16 %v7095
    %v7739 = vunpack.c.l.bf16 %v7096
    %v7740 = vunpack.c.h.bf16 %v7096
    %v7741 = vunpack.c.l.bf16 %v7097
    %v7742 = vunpack.c.h.bf16 %v7097
    %v7743 = vunpack.c.l.bf16 %v7098
    %v7744 = vunpack.c.h.bf16 %v7098
    %v7745 = vunpack.c.l.bf16 %v7099
    %v7746 = vunpack.c.l.bf16 %v7100
    %v7747 = vunpack.c.h.bf16 %v7100
    %v7748 = vunpack.c.l.bf16 %v7101
    %v7749 = vunpack.c.h.bf16 %v7101
    %v7750 = vunpack.c.l.bf16 %v7102
    %v7751 = vunpack.c.h.bf16 %v7102
    %v7752 = vunpack.c.l.bf16 %v7103
    %v7753 = vunpack.c.l.bf16 %v7104
    %v7754 = vunpack.c.h.bf16 %v7104
    %v7755 = vunpack.c.l.bf16 %v7105
    %v7756 = vunpack.c.h.bf16 %v7105
    %v7757 = vunpack.c.l.bf16 %v7106
    %v7758 = vunpack.c.h.bf16 %v7106
    %v7759 = vunpack.c.l.bf16 %v7107
    %v7760 = vunpack.c.l.bf16 %v7108
    %v7761 = vunpack.c.h.bf16 %v7108
    %v7762 = vunpack.c.l.bf16 %v7109
    %v7763 = vunpack.c.h.bf16 %v7109
    %v7764 = vunpack.c.l.bf16 %v7110
    %v7765 = vunpack.c.h.bf16 %v7110
    %v7766 = vunpack.c.l.bf16 %v7111
    %v7767 = vunpack.c.l.bf16 %v7112
    %v7768 = vunpack.c.h.bf16 %v7112
    %v7769 = vunpack.c.l.bf16 %v7113
    %v7770 = vunpack.c.h.bf16 %v7113
    %v7771 = vunpack.c.l.bf16 %v7114
    %v7772 = vunpack.c.h.bf16 %v7114
    %v7773 = vunpack.c.l.bf16 %v7115
    %v7774 = vunpack.c.l.bf16 %v7116
    %v7775 = vunpack.c.h.bf16 %v7116
    %v7776 = vunpack.c.l.bf16 %v7117
    %v7777 = vunpack.c.h.bf16 %v7117
    %v7778 = vunpack.c.l.bf16 %v7118
    %v7779 = vunpack.c.h.bf16 %v7118
    %v7780 = vunpack.c.l.bf16 %v7119
    %v7781 = vunpack.c.l.bf16 %v7120
    %v7782 = vunpack.c.h.bf16 %v7120
    %v7783 = vunpack.c.l.bf16 %v7121
    %v7784 = vunpack.c.h.bf16 %v7121
    %v7785 = vunpack.c.l.bf16 %v7122
    %v7786 = vunpack.c.h.bf16 %v7122
    %v7787 = vunpack.c.l.bf16 %v7123
    %v7788 = vunpack.c.l.bf16 %v7124
    %v7789 = vunpack.c.h.bf16 %v7124
    %v7790 = vunpack.c.l.bf16 %v7125
    %v7791 = vunpack.c.h.bf16 %v7125
    %v7792 = vunpack.c.l.bf16 %v7126
    %v7793 = vunpack.c.h.bf16 %v7126
    %v7794 = vunpack.c.l.bf16 %v7127
    %v7795 = vunpack.c.l.bf16 %v7128
    %v7796 = vunpack.c.h.bf16 %v7128
    %v7797 = vunpack.c.l.bf16 %v7129
    %v7798 = vunpack.c.h.bf16 %v7129
    %v7799 = vunpack.c.l.bf16 %v7130
    %v7800 = vunpack.c.h.bf16 %v7130
    %v7801 = vunpack.c.l.bf16 %v7131
    %v7802 = vunpack.c.l.bf16 %v7132
    %v7803 = vunpack.c.h.bf16 %v7132
    %v7804 = vunpack.c.l.bf16 %v7133
    %v7805 = vunpack.c.h.bf16 %v7133
    %v7806 = vunpack.c.l.bf16 %v7134
    %v7807 = vunpack.c.h.bf16 %v7134
    %v7808 = vunpack.c.l.bf16 %v7135
    %v7809 = vunpack.c.l.bf16 %v7136
    %v7810 = vunpack.c.h.bf16 %v7136
    %v7811 = vunpack.c.l.bf16 %v7137
    %v7812 = vunpack.c.h.bf16 %v7137
    %v7813 = vunpack.c.l.bf16 %v7138
    %v7814 = vunpack.c.h.bf16 %v7138
    %v7815 = vunpack.c.l.bf16 %v7139
    %v7816 = vunpack.c.l.bf16 %v7140
    %v7817 = vunpack.c.h.bf16 %v7140
    %v7818 = vunpack.c.l.bf16 %v7141
    %v7819 = vunpack.c.h.bf16 %v7141
    %v7820 = vunpack.c.l.bf16 %v7142
    %v7821 = vunpack.c.h.bf16 %v7142
    %v7822 = vunpack.c.l.bf16 %v7143
    %v7823 = vunpack.c.l.bf16 %v7144
    %v7824 = vunpack.c.h.bf16 %v7144
    %v7825 = vunpack.c.l.bf16 %v7145
    %v7826 = vunpack.c.h.bf16 %v7145
    %v7827 = vunpack.c.l.bf16 %v7146
    %v7828 = vunpack.c.h.bf16 %v7146
    %v7829 = vunpack.c.l.bf16 %v7147
    %v7830 = vunpack.c.l.bf16 %v7148
    %v7831 = vunpack.c.h.bf16 %v7148
    %v7832 = vunpack.c.l.bf16 %v7149
    %v7833 = vunpack.c.h.bf16 %v7149
    %v7834 = vunpack.c.l.bf16 %v7150
    %v7835 = vunpack.c.h.bf16 %v7150
    %v7836 = vunpack.c.l.bf16 %v7151
    %v7837 = vunpack.c.l.bf16 %v7152
    %v7838 = vunpack.c.h.bf16 %v7152
    %v7839 = vunpack.c.l.bf16 %v7153
    %v7840 = vunpack.c.h.bf16 %v7153
    %v7841 = vunpack.c.l.bf16 %v7154
    %v7842 = vunpack.c.h.bf16 %v7154
    %v7843 = vunpack.c.l.bf16 %v7155
    %v7844 = vunpack.c.l.bf16 %v7156
    %v7845 = vunpack.c.h.bf16 %v7156
    %v7846 = vunpack.c.l.bf16 %v7157
    %v7847 = vunpack.c.h.bf16 %v7157
    %v7848 = vunpack.c.l.bf16 %v7158
    %v7849 = vunpack.c.h.bf16 %v7158
    %v7850 = vunpack.c.l.bf16 %v7159
    %v7851 = vunpack.c.l.bf16 %v7160
    %v7852 = vunpack.c.h.bf16 %v7160
    %v7853 = vunpack.c.l.bf16 %v7161
    %v7854 = vunpack.c.h.bf16 %v7161
    %v7855 = vunpack.c.l.bf16 %v7162
    %v7856 = vunpack.c.h.bf16 %v7162
    %v7857 = vunpack.c.l.bf16 %v7163
    %v7858 = vunpack.c.l.bf16 %v7164
    %v7859 = vunpack.c.h.bf16 %v7164
    %v7860 = vunpack.c.l.bf16 %v7165
    %v7861 = vunpack.c.h.bf16 %v7165
    %v7862 = vunpack.c.l.bf16 %v7166
    %v7863 = vunpack.c.h.bf16 %v7166
    %v7864 = vunpack.c.l.bf16 %v7167
    %v7865 = vunpack.c.l.bf16 %v7168
    %v7866 = vunpack.c.h.bf16 %v7168
    %v7867 = vunpack.c.l.bf16 %v7169
    %v7868 = vunpack.c.h.bf16 %v7169
    %v7869 = vunpack.c.l.bf16 %v7170
    %v7870 = vunpack.c.h.bf16 %v7170
    %v7871 = vunpack.c.l.bf16 %v7171
    %v7872 = vunpack.c.l.bf16 %v7172
    %v7873 = vunpack.c.h.bf16 %v7172
    %v7874 = vunpack.c.l.bf16 %v7173
    %v7875 = vunpack.c.h.bf16 %v7173
    %v7876 = vunpack.c.l.bf16 %v7174
    %v7877 = vunpack.c.h.bf16 %v7174
    %v7878 = vunpack.c.l.bf16 %v7175
    %v7879 = vunpack.c.l.bf16 %v7176
    %v7880 = vunpack.c.h.bf16 %v7176
    %v7881 = vunpack.c.l.bf16 %v7177
    %v7882 = vunpack.c.h.bf16 %v7177
    %v7883 = vunpack.c.l.bf16 %v7178
    %v7884 = vunpack.c.h.bf16 %v7178
    %v7885 = vunpack.c.l.bf16 %v7179
    %v7886 = vunpack.c.l.bf16 %v7180
    %v7887 = vunpack.c.h.bf16 %v7180
    %v7888 = vunpack.c.l.bf16 %v7181
    %v7889 = vunpack.c.h.bf16 %v7181
    %v7890 = vunpack.c.l.bf16 %v7182
    %v7891 = vunpack.c.h.bf16 %v7182
    %v7892 = vunpack.c.l.bf16 %v7183
    %v7893 = vunpack.c.l.bf16 %v7184
    %v7894 = vunpack.c.h.bf16 %v7184
    %v7895 = vunpack.c.l.bf16 %v7185
    %v7896 = vunpack.c.h.bf16 %v7185
    %v7897 = vunpack.c.l.bf16 %v7186
    %v7898 = vunpack.c.h.bf16 %v7186
    %v7899 = vunpack.c.l.bf16 %v7187
    %v7900 = vunpack.c.l.bf16 %v7188
    %v7901 = vunpack.c.h.bf16 %v7188
    %v7902 = vunpack.c.l.bf16 %v7189
    %v7903 = vunpack.c.h.bf16 %v7189
    %v7904 = vunpack.c.l.bf16 %v7190
    %v7905 = vunpack.c.h.bf16 %v7190
    %v7906 = vunpack.c.l.bf16 %v7191
    %v7907 = vunpack.c.l.bf16 %v7192
    %v7908 = vunpack.c.h.bf16 %v7192
    %v7909 = vunpack.c.l.bf16 %v7193
    %v7910 = vunpack.c.h.bf16 %v7193
    %v7911 = vunpack.c.l.bf16 %v7194
    %v7912 = vunpack.c.h.bf16 %v7194
    %v7913 = vunpack.c.l.bf16 %v7195
    %v7914 = vunpack.c.l.bf16 %v7196
    %v7915 = vunpack.c.h.bf16 %v7196
    %v7916 = vunpack.c.l.bf16 %v7197
    %v7917 = vunpack.c.h.bf16 %v7197
    %v7918 = vunpack.c.l.bf16 %v7198
    %v7919 = vunpack.c.h.bf16 %v7198
    %v7920 = vunpack.c.l.bf16 %v7199
    %v7921 = vunpack.c.l.bf16 %v7200
    %v7922 = vunpack.c.h.bf16 %v7200
    %v7923 = vunpack.c.l.bf16 %v7201
    %v7924 = vunpack.c.h.bf16 %v7201
    %v7925 = vunpack.c.l.bf16 %v7202
    %v7926 = vunpack.c.h.bf16 %v7202
    %v7927 = vunpack.c.l.bf16 %v7203
    %v7928 = vunpack.c.l.bf16 %v7204
    %v7929 = vunpack.c.h.bf16 %v7204
    %v7930 = vunpack.c.l.bf16 %v7205
    %v7931 = vunpack.c.h.bf16 %v7205
    %v7932 = vunpack.c.l.bf16 %v7206
    %v7933 = vunpack.c.h.bf16 %v7206
    %v7934 = vunpack.c.l.bf16 %v7207
    %v7935 = vunpack.c.l.bf16 %v7208
    %v7936 = vunpack.c.h.bf16 %v7208
    %v7937 = vunpack.c.l.bf16 %v7209
    %v7938 = vunpack.c.h.bf16 %v7209
    %v7939 = vunpack.c.l.bf16 %v7210
    %v7940 = vunpack.c.h.bf16 %v7210
    %v7941 = vunpack.c.l.bf16 %v7211
    %v7942 = vunpack.c.l.bf16 %v7212
    %v7943 = vunpack.c.h.bf16 %v7212
    %v7944 = vunpack.c.l.bf16 %v7213
    %v7945 = vunpack.c.h.bf16 %v7213
    %v7946 = vunpack.c.l.bf16 %v7214
    %v7947 = vunpack.c.h.bf16 %v7214
    %v7948 = vunpack.c.l.bf16 %v7215
    %v7949 = vunpack.c.l.bf16 %v7216
    %v7950 = vunpack.c.h.bf16 %v7216
    %v7951 = vunpack.c.l.bf16 %v7217
    %v7952 = vunpack.c.h.bf16 %v7217
    %v7953 = vunpack.c.l.bf16 %v7218
    %v7954 = vunpack.c.h.bf16 %v7218
    %v7955 = vunpack.c.l.bf16 %v7219
    %v7956 = vunpack.c.l.bf16 %v7220
    %v7957 = vunpack.c.h.bf16 %v7220
    %v7958 = vunpack.c.l.bf16 %v7221
    %v7959 = vunpack.c.h.bf16 %v7221
    %v7960 = vunpack.c.l.bf16 %v7222
    %v7961 = vunpack.c.h.bf16 %v7222
    %v7962 = vunpack.c.l.bf16 %v7223
    %v7963 = vunpack.c.l.bf16 %v7224
    %v7964 = vunpack.c.h.bf16 %v7224
    %v7965 = vunpack.c.l.bf16 %v7225
    %v7966 = vunpack.c.h.bf16 %v7225
    %v7967 = vunpack.c.l.bf16 %v7226
    %v7968 = vunpack.c.h.bf16 %v7226
    %v7969 = vunpack.c.l.bf16 %v7227
    %v7970 = vunpack.c.l.bf16 %v7228
    %v7971 = vunpack.c.h.bf16 %v7228
    %v7972 = vunpack.c.l.bf16 %v7229
    %v7973 = vunpack.c.h.bf16 %v7229
    %v7974 = vunpack.c.l.bf16 %v7230
    %v7975 = vunpack.c.h.bf16 %v7230
    %v7976 = vunpack.c.l.bf16 %v7231
    %v7977 = vunpack.c.l.bf16 %v7232
    %v7978 = vunpack.c.h.bf16 %v7232
    %v7979 = vunpack.c.l.bf16 %v7233
    %v7980 = vunpack.c.h.bf16 %v7233
    %v7981 = vunpack.c.l.bf16 %v7234
    %v7982 = vunpack.c.h.bf16 %v7234
    %v7983 = vunpack.c.l.bf16 %v7235
    %v7984 = vunpack.c.l.bf16 %v7236
    %v7985 = vunpack.c.h.bf16 %v7236
    %v7986 = vunpack.c.l.bf16 %v7237
    %v7987 = vunpack.c.h.bf16 %v7237
    %v7988 = vunpack.c.l.bf16 %v7238
    %v7989 = vunpack.c.h.bf16 %v7238
    %v7990 = vunpack.c.l.bf16 %v7239
    %v7991 = vunpack.c.l.bf16 %v7240
    %v7992 = vunpack.c.h.bf16 %v7240
    %v7993 = vunpack.c.l.bf16 %v7241
    %v7994 = vunpack.c.h.bf16 %v7241
    %v7995 = vunpack.c.l.bf16 %v7242
    %v7996 = vunpack.c.h.bf16 %v7242
    %v7997 = vunpack.c.l.bf16 %v7243
    %v7998 = vunpack.c.l.bf16 %v7244
    %v7999 = vunpack.c.h.bf16 %v7244
    %v8000 = vunpack.c.l.bf16 %v7245
    %v8001 = vunpack.c.h.bf16 %v7245
    %v8002 = vunpack.c.l.bf16 %v7246
    %v8003 = vunpack.c.h.bf16 %v7246
    %v8004 = vunpack.c.l.bf16 %v7247
    %v8005 = vunpack.c.l.bf16 %v7248
    %v8006 = vunpack.c.h.bf16 %v7248
    %v8007 = vunpack.c.l.bf16 %v7249
    %v8008 = vunpack.c.h.bf16 %v7249
    %v8009 = vunpack.c.l.bf16 %v7250
    %v8010 = vunpack.c.h.bf16 %v7250
    %v8011 = vunpack.c.l.bf16 %v7251
    %v8012 = vunpack.c.l.bf16 %v7252
    %v8013 = vunpack.c.h.bf16 %v7252
    %v8014 = vunpack.c.l.bf16 %v7253
    %v8015 = vunpack.c.h.bf16 %v7253
    %v8016 = vunpack.c.l.bf16 %v7254
    %v8017 = vunpack.c.h.bf16 %v7254
    %v8018 = vunpack.c.l.bf16 %v7255
    %v8019 = vunpack.c.l.bf16 %v7256
    %v8020 = vunpack.c.h.bf16 %v7256
    %v8021 = vunpack.c.l.bf16 %v7257
    %v8022 = vunpack.c.h.bf16 %v7257
    %v8023 = vunpack.c.l.bf16 %v7258
    %v8024 = vunpack.c.h.bf16 %v7258
    %v8025 = vunpack.c.l.bf16 %v7259
    %v8026 = vunpack.c.l.bf16 %v7260
    %v8027 = vunpack.c.h.bf16 %v7260
    %v8028 = vunpack.c.l.bf16 %v7261
    %v8029 = vunpack.c.h.bf16 %v7261
    %v8030 = vunpack.c.l.bf16 %v7262
    %v8031 = vunpack.c.h.bf16 %v7262
    %v8032 = vunpack.c.l.bf16 %v7263
    %v8033 = vunpack.c.l.bf16 %v7264
    %v8034 = vunpack.c.h.bf16 %v7264
    %v8035 = vunpack.c.l.bf16 %v7265
    %v8036 = vunpack.c.h.bf16 %v7265
    %v8037 = vunpack.c.l.bf16 %v7266
    %v8038 = vunpack.c.h.bf16 %v7266
    %v8039 = vunpack.c.l.bf16 %v7267
    %v8040 = vunpack.c.l.bf16 %v7268
    %v8041 = vunpack.c.h.bf16 %v7268
    %v8042 = vunpack.c.l.bf16 %v7269
    %v8043 = vunpack.c.h.bf16 %v7269
    %v8044 = vunpack.c.l.bf16 %v7270
    %v8045 = vunpack.c.h.bf16 %v7270
    %v8046 = vunpack.c.l.bf16 %v7271
    %v8047 = vunpack.c.l.bf16 %v7272
    %v8048 = vunpack.c.h.bf16 %v7272
    %v8049 = vunpack.c.l.bf16 %v7273
    %v8050 = vunpack.c.h.bf16 %v7273
    %v8051 = vunpack.c.l.bf16 %v7274
    %v8052 = vunpack.c.h.bf16 %v7274
    %v8053 = vunpack.c.l.bf16 %v7275
    %v8054 = vunpack.c.l.bf16 %v7276
    %v8055 = vunpack.c.h.bf16 %v7276
    %v8056 = vunpack.c.l.bf16 %v7277
    %v8057 = vunpack.c.h.bf16 %v7277
    %v8058 = vunpack.c.l.bf16 %v7278
    %v8059 = vunpack.c.h.bf16 %v7278
    %v8060 = vunpack.c.l.bf16 %v7279
    %v8061 = vunpack.c.l.bf16 %v7280
    %v8062 = vunpack.c.h.bf16 %v7280
    %v8063 = vunpack.c.l.bf16 %v7281
    %v8064 = vunpack.c.h.bf16 %v7281
    %v8065 = vunpack.c.l.bf16 %v7282
    %v8066 = vunpack.c.h.bf16 %v7282
    %v8067 = vunpack.c.l.bf16 %v7283
    %8068 = vmatprep.subr.mxu0 %v7390
    %8069 = vmatpush1.msra.mxu0 %v7389
    %8070 = vmatprep.subr.mxu0 %v7383
    %8071 = vmatpush1.msra.mxu0 %v7382
    %8072 = vmatprep.subr.mxu0 %v7376
    %8073 = vmatpush1.msra.mxu0 %v7375
    %8074 = vmatprep.subr.mxu0 %v7369
    %8075 = vmatpush1.msra.mxu0 %v7368
    %8076 = vmatprep.subr.mxu0 %v7362
    %8077 = vmatpush1.msra.mxu0 %v7361
    %8078 = vmatprep.subr.mxu0 %v7355
    %8079 = vmatpush1.msra.mxu0 %v7354
    %8080 = vmatprep.subr.mxu0 %v7348
    %8081 = vmatpush1.msra.mxu0 %v7347
    %8082 = vmatprep.subr.mxu0 %v7341
    %8083 = vmatpush1.msra.mxu0 %v7340
    %8084 = vmatprep.subr.mxu0 %v7334
    %8085 = vmatpush1.msra.mxu0 %v7333
    %8086 = vmatprep.subr.mxu0 %v7327
    %8087 = vmatpush1.msra.mxu0 %v7326
    %8088 = vmatprep.subr.mxu0 %v7320
    %8089 = vmatpush1.msra.mxu0 %v7319
    %8090 = vmatprep.subr.mxu0 %v7313
    %8091 = vmatpush1.msra.mxu0 %v7312
    %8092 = vmatprep.subr.mxu0 %v7306
    %8093 = vmatpush1.msra.mxu0 %v7305
    %8094 = vmatprep.subr.mxu0 %v7299
    %8095 = vmatpush1.msra.mxu0 %v7298
    %8096 = vmatprep.subr.mxu0 %v7292
    %8097 = vmatpush1.msra.mxu0 %v7291
    %8098 = vmatprep.subr.mxu0 %v7285
    %8099 = vmatpush1.msra.mxu0 %v7284
    %8100 = vmatprep.subr.mxu0 %v7502
    %8101 = vmatpush2.msra.mxu0 %v7501
    %8102 = vmatprep.subr.mxu0 %v7495
    %8103 = vmatpush2.msra.mxu0 %v7494
    %8104 = vmatprep.subr.mxu0 %v7488
    %8105 = vmatpush2.msra.mxu0 %v7487
    %8106 = vmatprep.subr.mxu0 %v7481
    %8107 = vmatpush2.msra.mxu0 %v7480
    %8108 = vmatprep.subr.mxu0 %v7474
    %8109 = vmatpush2.msra.mxu0 %v7473
    %8110 = vmatprep.subr.mxu0 %v7467
    %8111 = vmatpush2.msra.mxu0 %v7466
    %8112 = vmatprep.subr.mxu0 %v7460
    %8113 = vmatpush2.msra.mxu0 %v7459
    %8114 = vmatprep.subr.mxu0 %v7453
    %8115 = vmatpush2.msra.mxu0 %v7452
    %8116 = vmatprep.subr.mxu0 %v7446
    %8117 = vmatpush2.msra.mxu0 %v7445
    %8118 = vmatprep.subr.mxu0 %v7439
    %8119 = vmatpush2.msra.mxu0 %v7438
    %8120 = vmatprep.subr.mxu0 %v7432
    %8121 = vmatpush2.msra.mxu0 %v7431
    %8122 = vmatprep.subr.mxu0 %v7425
    %8123 = vmatpush2.msra.mxu0 %v7424
    %8124 = vmatprep.subr.mxu0 %v7418
    %8125 = vmatpush2.msra.mxu0 %v7417
    %8126 = vmatprep.subr.mxu0 %v7411
    %8127 = vmatpush2.msra.mxu0 %v7410
    %8128 = vmatprep.subr.mxu0 %v7404
    %8129 = vmatpush2.msra.mxu0 %v7403
    %8130 = vmatprep.subr.mxu0 %v7397
    %8131 = vmatpush2.msra.mxu0 %v7396
    %8132 = vmatprep.mubr.f32.mxu0 %v6830
    %8133 = vmatmul.mubr.f32.gmra.mxu0 %v6829
    %v8134 = vpop.f32.mrf.mxu0
    %v8135 = vadd.f32 0.0, %v8134
    %v8136 = vpop.f32.mrf.mxu0
    %v8137 = vadd.f32 0.0, %v8136
    %8138 = vdwg.mxu0
    %8139 = vmatprep.subr.mxu0 %v7614
    %8140 = vmatpush1.msra.mxu0 %v7613
    %8141 = vmatprep.subr.mxu0 %v7607
    %8142 = vmatpush1.msra.mxu0 %v7606
    %8143 = vmatprep.subr.mxu0 %v7600
    %8144 = vmatpush1.msra.mxu0 %v7599
    %8145 = vmatprep.subr.mxu0 %v7593
    %8146 = vmatpush1.msra.mxu0 %v7592
    %8147 = vmatprep.subr.mxu0 %v7586
    %8148 = vmatpush1.msra.mxu0 %v7585
    %8149 = vmatprep.subr.mxu0 %v7579
    %8150 = vmatpush1.msra.mxu0 %v7578
    %8151 = vmatprep.subr.mxu0 %v7572
    %8152 = vmatpush1.msra.mxu0 %v7571
    %8153 = vmatprep.subr.mxu0 %v7565
    %8154 = vmatpush1.msra.mxu0 %v7564
    %8155 = vmatprep.subr.mxu0 %v7558
    %8156 = vmatpush1.msra.mxu0 %v7557
    %8157 = vmatprep.subr.mxu0 %v7551
    %8158 = vmatpush1.msra.mxu0 %v7550
    %8159 = vmatprep.subr.mxu0 %v7544
    %8160 = vmatpush1.msra.mxu0 %v7543
    %8161 = vmatprep.subr.mxu0 %v7537
    %8162 = vmatpush1.msra.mxu0 %v7536
    %8163 = vmatprep.subr.mxu0 %v7530
    %8164 = vmatpush1.msra.mxu0 %v7529
    %8165 = vmatprep.subr.mxu0 %v7523
    %8166 = vmatpush1.msra.mxu0 %v7522
    %8167 = vmatprep.subr.mxu0 %v7516
    %8168 = vmatpush1.msra.mxu0 %v7515
    %8169 = vmatprep.subr.mxu0 %v7509
    %8170 = vmatpush1.msra.mxu0 %v7508
    %8171 = vmatprep.subr.mxu0 %v7726
    %8172 = vmatpush2.msra.mxu0 %v7725
    %8173 = vmatprep.subr.mxu0 %v7719
    %8174 = vmatpush2.msra.mxu0 %v7718
    %8175 = vmatprep.subr.mxu0 %v7712
    %8176 = vmatpush2.msra.mxu0 %v7711
    %8177 = vmatprep.subr.mxu0 %v7705
    %8178 = vmatpush2.msra.mxu0 %v7704
    %8179 = vmatprep.subr.mxu0 %v7698
    %8180 = vmatpush2.msra.mxu0 %v7697
    %8181 = vmatprep.subr.mxu0 %v7691
    %8182 = vmatpush2.msra.mxu0 %v7690
    %8183 = vmatprep.subr.mxu0 %v7684
    %8184 = vmatpush2.msra.mxu0 %v7683
    %8185 = vmatprep.subr.mxu0 %v7677
    %8186 = vmatpush2.msra.mxu0 %v7676
    %8187 = vmatprep.subr.mxu0 %v7670
    %8188 = vmatpush2.msra.mxu0 %v7669
    %8189 = vmatprep.subr.mxu0 %v7663
    %8190 = vmatpush2.msra.mxu0 %v7662
    %8191 = vmatprep.subr.mxu0 %v7656
    %8192 = vmatpush2.msra.mxu0 %v7655
    %8193 = vmatprep.subr.mxu0 %v7649
    %8194 = vmatpush2.msra.mxu0 %v7648
    %8195 = vmatprep.subr.mxu0 %v7642
    %8196 = vmatpush2.msra.mxu0 %v7641
    %8197 = vmatprep.subr.mxu0 %v7635
    %8198 = vmatpush2.msra.mxu0 %v7634
    %8199 = vmatprep.subr.mxu0 %v7628
    %8200 = vmatpush2.msra.mxu0 %v7627
    %8201 = vmatprep.subr.mxu0 %v7621
    %8202 = vmatpush2.msra.mxu0 %v7620
    %8203 = vmatprep.mubr.f32.mxu0 %v6832
    %8204 = vmatmul.mubr.f32.gmra.mxu0 %v6831
    %v8205 = vpop.f32.mrf.mxu0
    %v8206 = vadd.f32 %v8135, %v8205
    %v8207 = vpop.f32.mrf.mxu0
    %v8208 = vadd.f32 %v8137, %v8207
    %8209 = vdwg.mxu0
    %8210 = vmatprep.subr.mxu0 %v7838
    %8211 = vmatpush1.msra.mxu0 %v7837
    %8212 = vmatprep.subr.mxu0 %v7831
    %8213 = vmatpush1.msra.mxu0 %v7830
    %8214 = vmatprep.subr.mxu0 %v7824
    %8215 = vmatpush1.msra.mxu0 %v7823
    %8216 = vmatprep.subr.mxu0 %v7817
    %8217 = vmatpush1.msra.mxu0 %v7816
    %8218 = vmatprep.subr.mxu0 %v7810
    %8219 = vmatpush1.msra.mxu0 %v7809
    %8220 = vmatprep.subr.mxu0 %v7803
    %8221 = vmatpush1.msra.mxu0 %v7802
    %8222 = vmatprep.subr.mxu0 %v7796
    %8223 = vmatpush1.msra.mxu0 %v7795
    %8224 = vmatprep.subr.mxu0 %v7789
    %8225 = vmatpush1.msra.mxu0 %v7788
    %8226 = vmatprep.subr.mxu0 %v7782
    %8227 = vmatpush1.msra.mxu0 %v7781
    %8228 = vmatprep.subr.mxu0 %v7775
    %8229 = vmatpush1.msra.mxu0 %v7774
    %8230 = vmatprep.subr.mxu0 %v7768
    %8231 = vmatpush1.msra.mxu0 %v7767
    %8232 = vmatprep.subr.mxu0 %v7761
    %8233 = vmatpush1.msra.mxu0 %v7760
    %8234 = vmatprep.subr.mxu0 %v7754
    %8235 = vmatpush1.msra.mxu0 %v7753
    %8236 = vmatprep.subr.mxu0 %v7747
    %8237 = vmatpush1.msra.mxu0 %v7746
    %8238 = vmatprep.subr.mxu0 %v7740
    %8239 = vmatpush1.msra.mxu0 %v7739
    %8240 = vmatprep.subr.mxu0 %v7733
    %8241 = vmatpush1.msra.mxu0 %v7732
    %8242 = vmatprep.subr.mxu0 %v7950
    %8243 = vmatpush2.msra.mxu0 %v7949
    %8244 = vmatprep.subr.mxu0 %v7943
    %8245 = vmatpush2.msra.mxu0 %v7942
    %8246 = vmatprep.subr.mxu0 %v7936
    %8247 = vmatpush2.msra.mxu0 %v7935
    %8248 = vmatprep.subr.mxu0 %v7929
    %8249 = vmatpush2.msra.mxu0 %v7928
    %8250 = vmatprep.subr.mxu0 %v7922
    %8251 = vmatpush2.msra.mxu0 %v7921
    %8252 = vmatprep.subr.mxu0 %v7915
    %8253 = vmatpush2.msra.mxu0 %v7914
    %8254 = vmatprep.subr.mxu0 %v7908
    %8255 = vmatpush2.msra.mxu0 %v7907
    %8256 = vmatprep.subr.mxu0 %v7901
    %8257 = vmatpush2.msra.mxu0 %v7900
    %8258 = vmatprep.subr.mxu0 %v7894
    %8259 = vmatpush2.msra.mxu0 %v7893
    %8260 = vmatprep.subr.mxu0 %v7887
    %8261 = vmatpush2.msra.mxu0 %v7886
    %8262 = vmatprep.subr.mxu0 %v7880
    %8263 = vmatpush2.msra.mxu0 %v7879
    %8264 = vmatprep.subr.mxu0 %v7873
    %8265 = vmatpush2.msra.mxu0 %v7872
    %8266 = vmatprep.subr.mxu0 %v7866
    %8267 = vmatpush2.msra.mxu0 %v7865
    %8268 = vmatprep.subr.mxu0 %v7859
    %8269 = vmatpush2.msra.mxu0 %v7858
    %8270 = vmatprep.subr.mxu0 %v7852
    %8271 = vmatpush2.msra.mxu0 %v7851
    %8272 = vmatprep.subr.mxu0 %v7845
    %8273 = vmatpush2.msra.mxu0 %v7844
    %8274 = vmatprep.mubr.f32.mxu0 %v6834
    %8275 = vmatmul.mubr.f32.gmra.mxu0 %v6833
    %v8276 = vpop.f32.mrf.mxu0
    %v8277 = vadd.f32 %v8206, %v8276
    %v8278 = vpop.f32.mrf.mxu0
    %v8279 = vadd.f32 %v8208, %v8278
    %8280 = vdwg.mxu0
    %8281 = vmatprep.subr.mxu0 %v8062
    %8282 = vmatpush1.msra.mxu0 %v8061
    %8283 = vmatprep.subr.mxu0 %v8055
    %8284 = vmatpush1.msra.mxu0 %v8054
    %8285 = vmatprep.subr.mxu0 %v8048
    %8286 = vmatpush1.msra.mxu0 %v8047
    %8287 = vmatprep.subr.mxu0 %v8041
    %8288 = vmatpush1.msra.mxu0 %v8040
    %8289 = vmatprep.subr.mxu0 %v8034
    %8290 = vmatpush1.msra.mxu0 %v8033
    %8291 = vmatprep.subr.mxu0 %v8027
    %8292 = vmatpush1.msra.mxu0 %v8026
    %8293 = vmatprep.subr.mxu0 %v8020
    %8294 = vmatpush1.msra.mxu0 %v8019
    %8295 = vmatprep.subr.mxu0 %v8013
    %8296 = vmatpush1.msra.mxu0 %v8012
    %8297 = vmatprep.subr.mxu0 %v8006
    %8298 = vmatpush1.msra.mxu0 %v8005
    %8299 = vmatprep.subr.mxu0 %v7999
    %8300 = vmatpush1.msra.mxu0 %v7998
    %8301 = vmatprep.subr.mxu0 %v7992
    %8302 = vmatpush1.msra.mxu0 %v7991
    %8303 = vmatprep.subr.mxu0 %v7985
    %8304 = vmatpush1.msra.mxu0 %v7984
    %8305 = vmatprep.subr.mxu0 %v7978
    %8306 = vmatpush1.msra.mxu0 %v7977
    %8307 = vmatprep.subr.mxu0 %v7971
    %8308 = vmatpush1.msra.mxu0 %v7970
    %8309 = vmatprep.subr.mxu0 %v7964
    %8310 = vmatpush1.msra.mxu0 %v7963
    %8311 = vmatprep.subr.mxu0 %v7957
    %8312 = vmatpush1.msra.mxu0 %v7956
    %8313 = vmatprep.subr.mxu0 0.0
    %8314 = vmatpush2.msra.mxu0 0.0
    %8315 = vmatprep.subr.mxu0 0.0
    %8316 = vmatpush2.msra.mxu0 0.0
    %8317 = vmatprep.subr.mxu0 0.0
    %8318 = vmatpush2.msra.mxu0 0.0
    %8319 = vmatprep.subr.mxu0 0.0
    %8320 = vmatpush2.msra.mxu0 0.0
    %8321 = vmatprep.subr.mxu0 0.0
    %8322 = vmatpush2.msra.mxu0 0.0
    %8323 = vmatprep.subr.mxu0 0.0
    %8324 = vmatpush2.msra.mxu0 0.0
    %8325 = vmatprep.subr.mxu0 0.0
    %8326 = vmatpush2.msra.mxu0 0.0
    %8327 = vmatprep.subr.mxu0 0.0
    %8328 = vmatpush2.msra.mxu0 0.0
    %8329 = vmatprep.subr.mxu0 0.0
    %8330 = vmatpush2.msra.mxu0 0.0
    %8331 = vmatprep.subr.mxu0 0.0
    %8332 = vmatpush2.msra.mxu0 0.0
    %8333 = vmatprep.subr.mxu0 0.0
    %8334 = vmatpush2.msra.mxu0 0.0
    %8335 = vmatprep.subr.mxu0 0.0
    %8336 = vmatpush2.msra.mxu0 0.0
    %8337 = vmatprep.subr.mxu0 0.0
    %8338 = vmatpush2.msra.mxu0 0.0
    %8339 = vmatprep.subr.mxu0 0.0
    %8340 = vmatpush2.msra.mxu0 0.0
    %8341 = vmatprep.subr.mxu0 0.0
    %8342 = vmatpush2.msra.mxu0 0.0
    %8343 = vmatprep.subr.mxu0 0.0
    %8344 = vmatpush2.msra.mxu0 0.0
    %8345 = vmatprep.mubr.f32.mxu0 0.0
    %8346 = vmatmul.mubr.f32.gmra.mxu0 %v6835
    %v8347 = vpop.f32.mrf.mxu0
    %v8348 = vadd.f32 %v8277, %v8347
    %v8349 = vpop.f32.mrf.mxu0
    %v8350 = vadd.f32 %v8279, %v8349
    %8351 = vdwg.mxu0
    %8352 = vmatprep.subr.mxu0 %v7392
    %8353 = vmatpush1.msra.mxu0 %v7391
    %8354 = vmatprep.subr.mxu0 %v7385
    %8355 = vmatpush1.msra.mxu0 %v7384
    %8356 = vmatprep.subr.mxu0 %v7378
    %8357 = vmatpush1.msra.mxu0 %v7377
    %8358 = vmatprep.subr.mxu0 %v7371
    %8359 = vmatpush1.msra.mxu0 %v7370
    %8360 = vmatprep.subr.mxu0 %v7364
    %8361 = vmatpush1.msra.mxu0 %v7363
    %8362 = vmatprep.subr.mxu0 %v7357
    %8363 = vmatpush1.msra.mxu0 %v7356
    %8364 = vmatprep.subr.mxu0 %v7350
    %8365 = vmatpush1.msra.mxu0 %v7349
    %8366 = vmatprep.subr.mxu0 %v7343
    %8367 = vmatpush1.msra.mxu0 %v7342
    %8368 = vmatprep.subr.mxu0 %v7336
    %8369 = vmatpush1.msra.mxu0 %v7335
    %8370 = vmatprep.subr.mxu0 %v7329
    %8371 = vmatpush1.msra.mxu0 %v7328
    %8372 = vmatprep.subr.mxu0 %v7322
    %8373 = vmatpush1.msra.mxu0 %v7321
    %8374 = vmatprep.subr.mxu0 %v7315
    %8375 = vmatpush1.msra.mxu0 %v7314
    %8376 = vmatprep.subr.mxu0 %v7308
    %8377 = vmatpush1.msra.mxu0 %v7307
    %8378 = vmatprep.subr.mxu0 %v7301
    %8379 = vmatpush1.msra.mxu0 %v7300
    %8380 = vmatprep.subr.mxu0 %v7294
    %8381 = vmatpush1.msra.mxu0 %v7293
    %8382 = vmatprep.subr.mxu0 %v7287
    %8383 = vmatpush1.msra.mxu0 %v7286
    %8384 = vmatprep.subr.mxu0 %v7504
    %8385 = vmatpush2.msra.mxu0 %v7503
    %8386 = vmatprep.subr.mxu0 %v7497
    %8387 = vmatpush2.msra.mxu0 %v7496
    %8388 = vmatprep.subr.mxu0 %v7490
    %8389 = vmatpush2.msra.mxu0 %v7489
    %8390 = vmatprep.subr.mxu0 %v7483
    %8391 = vmatpush2.msra.mxu0 %v7482
    %8392 = vmatprep.subr.mxu0 %v7476
    %8393 = vmatpush2.msra.mxu0 %v7475
    %8394 = vmatprep.subr.mxu0 %v7469
    %8395 = vmatpush2.msra.mxu0 %v7468
    %8396 = vmatprep.subr.mxu0 %v7462
    %8397 = vmatpush2.msra.mxu0 %v7461
    %8398 = vmatprep.subr.mxu0 %v7455
    %8399 = vmatpush2.msra.mxu0 %v7454
    %8400 = vmatprep.subr.mxu0 %v7448
    %8401 = vmatpush2.msra.mxu0 %v7447
    %8402 = vmatprep.subr.mxu0 %v7441
    %8403 = vmatpush2.msra.mxu0 %v7440
    %8404 = vmatprep.subr.mxu0 %v7434
    %8405 = vmatpush2.msra.mxu0 %v7433
    %8406 = vmatprep.subr.mxu0 %v7427
    %8407 = vmatpush2.msra.mxu0 %v7426
    %8408 = vmatprep.subr.mxu0 %v7420
    %8409 = vmatpush2.msra.mxu0 %v7419
    %8410 = vmatprep.subr.mxu0 %v7413
    %8411 = vmatpush2.msra.mxu0 %v7412
    %8412 = vmatprep.subr.mxu0 %v7406
    %8413 = vmatpush2.msra.mxu0 %v7405
    %8414 = vmatprep.subr.mxu0 %v7399
    %8415 = vmatpush2.msra.mxu0 %v7398
    %8416 = vmatprep.mubr.f32.mxu0 %v6830
    %8417 = vmatmul.mubr.f32.gmra.mxu0 %v6829
    %v8418 = vpop.f32.mrf.mxu0
    %v8419 = vadd.f32 0.0, %v8418
    %v8420 = vpop.f32.mrf.mxu0
    %v8421 = vadd.f32 0.0, %v8420
    %8422 = vdwg.mxu0
    %8423 = vmatprep.subr.mxu0 %v7616
    %8424 = vmatpush1.msra.mxu0 %v7615
    %8425 = vmatprep.subr.mxu0 %v7609
    %8426 = vmatpush1.msra.mxu0 %v7608
    %8427 = vmatprep.subr.mxu0 %v7602
    %8428 = vmatpush1.msra.mxu0 %v7601
    %8429 = vmatprep.subr.mxu0 %v7595
    %8430 = vmatpush1.msra.mxu0 %v7594
    %8431 = vmatprep.subr.mxu0 %v7588
    %8432 = vmatpush1.msra.mxu0 %v7587
    %8433 = vmatprep.subr.mxu0 %v7581
    %8434 = vmatpush1.msra.mxu0 %v7580
    %8435 = vmatprep.subr.mxu0 %v7574
    %8436 = vmatpush1.msra.mxu0 %v7573
    %8437 = vmatprep.subr.mxu0 %v7567
    %8438 = vmatpush1.msra.mxu0 %v7566
    %8439 = vmatprep.subr.mxu0 %v7560
    %8440 = vmatpush1.msra.mxu0 %v7559
    %8441 = vmatprep.subr.mxu0 %v7553
    %8442 = vmatpush1.msra.mxu0 %v7552
    %8443 = vmatprep.subr.mxu0 %v7546
    %8444 = vmatpush1.msra.mxu0 %v7545
    %8445 = vmatprep.subr.mxu0 %v7539
    %8446 = vmatpush1.msra.mxu0 %v7538
    %8447 = vmatprep.subr.mxu0 %v7532
    %8448 = vmatpush1.msra.mxu0 %v7531
    %8449 = vmatprep.subr.mxu0 %v7525
    %8450 = vmatpush1.msra.mxu0 %v7524
    %8451 = vmatprep.subr.mxu0 %v7518
    %8452 = vmatpush1.msra.mxu0 %v7517
    %8453 = vmatprep.subr.mxu0 %v7511
    %8454 = vmatpush1.msra.mxu0 %v7510
    %8455 = vmatprep.subr.mxu0 %v7728
    %8456 = vmatpush2.msra.mxu0 %v7727
    %8457 = vmatprep.subr.mxu0 %v7721
    %8458 = vmatpush2.msra.mxu0 %v7720
    %8459 = vmatprep.subr.mxu0 %v7714
    %8460 = vmatpush2.msra.mxu0 %v7713
    %8461 = vmatprep.subr.mxu0 %v7707
    %8462 = vmatpush2.msra.mxu0 %v7706
    %8463 = vmatprep.subr.mxu0 %v7700
    %8464 = vmatpush2.msra.mxu0 %v7699
    %8465 = vmatprep.subr.mxu0 %v7693
    %8466 = vmatpush2.msra.mxu0 %v7692
    %8467 = vmatprep.subr.mxu0 %v7686
    %8468 = vmatpush2.msra.mxu0 %v7685
    %8469 = vmatprep.subr.mxu0 %v7679
    %8470 = vmatpush2.msra.mxu0 %v7678
    %8471 = vmatprep.subr.mxu0 %v7672
    %8472 = vmatpush2.msra.mxu0 %v7671
    %8473 = vmatprep.subr.mxu0 %v7665
    %8474 = vmatpush2.msra.mxu0 %v7664
    %8475 = vmatprep.subr.mxu0 %v7658
    %8476 = vmatpush2.msra.mxu0 %v7657
    %8477 = vmatprep.subr.mxu0 %v7651
    %8478 = vmatpush2.msra.mxu0 %v7650
    %8479 = vmatprep.subr.mxu0 %v7644
    %8480 = vmatpush2.msra.mxu0 %v7643
    %8481 = vmatprep.subr.mxu0 %v7637
    %8482 = vmatpush2.msra.mxu0 %v7636
    %8483 = vmatprep.subr.mxu0 %v7630
    %8484 = vmatpush2.msra.mxu0 %v7629
    %8485 = vmatprep.subr.mxu0 %v7623
    %8486 = vmatpush2.msra.mxu0 %v7622
    %8487 = vmatprep.mubr.f32.mxu0 %v6832
    %8488 = vmatmul.mubr.f32.gmra.mxu0 %v6831
    %v8489 = vpop.f32.mrf.mxu0
    %v8490 = vadd.f32 %v8419, %v8489
    %v8491 = vpop.f32.mrf.mxu0
    %v8492 = vadd.f32 %v8421, %v8491
    %8493 = vdwg.mxu0
    %8494 = vmatprep.subr.mxu0 %v7840
    %8495 = vmatpush1.msra.mxu0 %v7839
    %8496 = vmatprep.subr.mxu0 %v7833
    %8497 = vmatpush1.msra.mxu0 %v7832
    %8498 = vmatprep.subr.mxu0 %v7826
    %8499 = vmatpush1.msra.mxu0 %v7825
    %8500 = vmatprep.subr.mxu0 %v7819
    %8501 = vmatpush1.msra.mxu0 %v7818
    %8502 = vmatprep.subr.mxu0 %v7812
    %8503 = vmatpush1.msra.mxu0 %v7811
    %8504 = vmatprep.subr.mxu0 %v7805
    %8505 = vmatpush1.msra.mxu0 %v7804
    %8506 = vmatprep.subr.mxu0 %v7798
    %8507 = vmatpush1.msra.mxu0 %v7797
    %8508 = vmatprep.subr.mxu0 %v7791
    %8509 = vmatpush1.msra.mxu0 %v7790
    %8510 = vmatprep.subr.mxu0 %v7784
    %8511 = vmatpush1.msra.mxu0 %v7783
    %8512 = vmatprep.subr.mxu0 %v7777
    %8513 = vmatpush1.msra.mxu0 %v7776
    %8514 = vmatprep.subr.mxu0 %v7770
    %8515 = vmatpush1.msra.mxu0 %v7769
    %8516 = vmatprep.subr.mxu0 %v7763
    %8517 = vmatpush1.msra.mxu0 %v7762
    %8518 = vmatprep.subr.mxu0 %v7756
    %8519 = vmatpush1.msra.mxu0 %v7755
    %8520 = vmatprep.subr.mxu0 %v7749
    %8521 = vmatpush1.msra.mxu0 %v7748
    %8522 = vmatprep.subr.mxu0 %v7742
    %8523 = vmatpush1.msra.mxu0 %v7741
    %8524 = vmatprep.subr.mxu0 %v7735
    %8525 = vmatpush1.msra.mxu0 %v7734
    %8526 = vmatprep.subr.mxu0 %v7952
    %8527 = vmatpush2.msra.mxu0 %v7951
    %8528 = vmatprep.subr.mxu0 %v7945
    %8529 = vmatpush2.msra.mxu0 %v7944
    %8530 = vmatprep.subr.mxu0 %v7938
    %8531 = vmatpush2.msra.mxu0 %v7937
    %8532 = vmatprep.subr.mxu0 %v7931
    %8533 = vmatpush2.msra.mxu0 %v7930
    %8534 = vmatprep.subr.mxu0 %v7924
    %8535 = vmatpush2.msra.mxu0 %v7923
    %8536 = vmatprep.subr.mxu0 %v7917
    %8537 = vmatpush2.msra.mxu0 %v7916
    %8538 = vmatprep.subr.mxu0 %v7910
    %8539 = vmatpush2.msra.mxu0 %v7909
    %8540 = vmatprep.subr.mxu0 %v7903
    %8541 = vmatpush2.msra.mxu0 %v7902
    %8542 = vmatprep.subr.mxu0 %v7896
    %8543 = vmatpush2.msra.mxu0 %v7895
    %8544 = vmatprep.subr.mxu0 %v7889
    %8545 = vmatpush2.msra.mxu0 %v7888
    %8546 = vmatprep.subr.mxu0 %v7882
    %8547 = vmatpush2.msra.mxu0 %v7881
    %8548 = vmatprep.subr.mxu0 %v7875
    %8549 = vmatpush2.msra.mxu0 %v7874
    %8550 = vmatprep.subr.mxu0 %v7868
    %8551 = vmatpush2.msra.mxu0 %v7867
    %8552 = vmatprep.subr.mxu0 %v7861
    %8553 = vmatpush2.msra.mxu0 %v7860
    %8554 = vmatprep.subr.mxu0 %v7854
    %8555 = vmatpush2.msra.mxu0 %v7853
    %8556 = vmatprep.subr.mxu0 %v7847
    %8557 = vmatpush2.msra.mxu0 %v7846
    %8558 = vmatprep.mubr.f32.mxu0 %v6834
    %8559 = vmatmul.mubr.f32.gmra.mxu0 %v6833
    %v8560 = vpop.f32.mrf.mxu0
    %v8561 = vadd.f32 %v8490, %v8560
    %v8562 = vpop.f32.mrf.mxu0
    %v8563 = vadd.f32 %v8492, %v8562
    %8564 = vdwg.mxu0
    %8565 = vmatprep.subr.mxu0 %v8064
    %8566 = vmatpush1.msra.mxu0 %v8063
    %8567 = vmatprep.subr.mxu0 %v8057
    %8568 = vmatpush1.msra.mxu0 %v8056
    %8569 = vmatprep.subr.mxu0 %v8050
    %8570 = vmatpush1.msra.mxu0 %v8049
    %8571 = vmatprep.subr.mxu0 %v8043
    %8572 = vmatpush1.msra.mxu0 %v8042
    %8573 = vmatprep.subr.mxu0 %v8036
    %8574 = vmatpush1.msra.mxu0 %v8035
    %8575 = vmatprep.subr.mxu0 %v8029
    %8576 = vmatpush1.msra.mxu0 %v8028
    %8577 = vmatprep.subr.mxu0 %v8022
    %8578 = vmatpush1.msra.mxu0 %v8021
    %8579 = vmatprep.subr.mxu0 %v8015
    %8580 = vmatpush1.msra.mxu0 %v8014
    %8581 = vmatprep.subr.mxu0 %v8008
    %8582 = vmatpush1.msra.mxu0 %v8007
    %8583 = vmatprep.subr.mxu0 %v8001
    %8584 = vmatpush1.msra.mxu0 %v8000
    %8585 = vmatprep.subr.mxu0 %v7994
    %8586 = vmatpush1.msra.mxu0 %v7993
    %8587 = vmatprep.subr.mxu0 %v7987
    %8588 = vmatpush1.msra.mxu0 %v7986
    %8589 = vmatprep.subr.mxu0 %v7980
    %8590 = vmatpush1.msra.mxu0 %v7979
    %8591 = vmatprep.subr.mxu0 %v7973
    %8592 = vmatpush1.msra.mxu0 %v7972
    %8593 = vmatprep.subr.mxu0 %v7966
    %8594 = vmatpush1.msra.mxu0 %v7965
    %8595 = vmatprep.subr.mxu0 %v7959
    %8596 = vmatpush1.msra.mxu0 %v7958
    %8597 = vmatprep.subr.mxu0 0.0
    %8598 = vmatpush2.msra.mxu0 0.0
    %8599 = vmatprep.subr.mxu0 0.0
    %8600 = vmatpush2.msra.mxu0 0.0
    %8601 = vmatprep.subr.mxu0 0.0
    %8602 = vmatpush2.msra.mxu0 0.0
    %8603 = vmatprep.subr.mxu0 0.0
    %8604 = vmatpush2.msra.mxu0 0.0
    %8605 = vmatprep.subr.mxu0 0.0
    %8606 = vmatpush2.msra.mxu0 0.0
    %8607 = vmatprep.subr.mxu0 0.0
    %8608 = vmatpush2.msra.mxu0 0.0
    %8609 = vmatprep.subr.mxu0 0.0
    %8610 = vmatpush2.msra.mxu0 0.0
    %8611 = vmatprep.subr.mxu0 0.0
    %8612 = vmatpush2.msra.mxu0 0.0
    %8613 = vmatprep.subr.mxu0 0.0
    %8614 = vmatpush2.msra.mxu0 0.0
    %8615 = vmatprep.subr.mxu0 0.0
    %8616 = vmatpush2.msra.mxu0 0.0
    %8617 = vmatprep.subr.mxu0 0.0
    %8618 = vmatpush2.msra.mxu0 0.0
    %8619 = vmatprep.subr.mxu0 0.0
    %8620 = vmatpush2.msra.mxu0 0.0
    %8621 = vmatprep.subr.mxu0 0.0
    %8622 = vmatpush2.msra.mxu0 0.0
    %8623 = vmatprep.subr.mxu0 0.0
    %8624 = vmatpush2.msra.mxu0 0.0
    %8625 = vmatprep.subr.mxu0 0.0
    %8626 = vmatpush2.msra.mxu0 0.0
    %8627 = vmatprep.subr.mxu0 0.0
    %8628 = vmatpush2.msra.mxu0 0.0
    %8629 = vmatprep.mubr.f32.mxu0 0.0
    %8630 = vmatmul.mubr.f32.gmra.mxu0 %v6835
    %v8631 = vpop.f32.mrf.mxu0
    %v8632 = vadd.f32 %v8561, %v8631
    %v8633 = vpop.f32.mrf.mxu0
    %v8634 = vadd.f32 %v8563, %v8633
    %8635 = vdwg.mxu0
    %8636 = vmatprep.subr.mxu0 %v7394
    %8637 = vmatpush1.msra.mxu0 %v7393
    %8638 = vmatprep.subr.mxu0 %v7387
    %8639 = vmatpush1.msra.mxu0 %v7386
    %8640 = vmatprep.subr.mxu0 %v7380
    %8641 = vmatpush1.msra.mxu0 %v7379
    %8642 = vmatprep.subr.mxu0 %v7373
    %8643 = vmatpush1.msra.mxu0 %v7372
    %8644 = vmatprep.subr.mxu0 %v7366
    %8645 = vmatpush1.msra.mxu0 %v7365
    %8646 = vmatprep.subr.mxu0 %v7359
    %8647 = vmatpush1.msra.mxu0 %v7358
    %8648 = vmatprep.subr.mxu0 %v7352
    %8649 = vmatpush1.msra.mxu0 %v7351
    %8650 = vmatprep.subr.mxu0 %v7345
    %8651 = vmatpush1.msra.mxu0 %v7344
    %8652 = vmatprep.subr.mxu0 %v7338
    %8653 = vmatpush1.msra.mxu0 %v7337
    %8654 = vmatprep.subr.mxu0 %v7331
    %8655 = vmatpush1.msra.mxu0 %v7330
    %8656 = vmatprep.subr.mxu0 %v7324
    %8657 = vmatpush1.msra.mxu0 %v7323
    %8658 = vmatprep.subr.mxu0 %v7317
    %8659 = vmatpush1.msra.mxu0 %v7316
    %8660 = vmatprep.subr.mxu0 %v7310
    %8661 = vmatpush1.msra.mxu0 %v7309
    %8662 = vmatprep.subr.mxu0 %v7303
    %8663 = vmatpush1.msra.mxu0 %v7302
    %8664 = vmatprep.subr.mxu0 %v7296
    %8665 = vmatpush1.msra.mxu0 %v7295
    %8666 = vmatprep.subr.mxu0 %v7289
    %8667 = vmatpush1.msra.mxu0 %v7288
    %8668 = vmatprep.subr.mxu0 %v7506
    %8669 = vmatpush2.msra.mxu0 %v7505
    %8670 = vmatprep.subr.mxu0 %v7499
    %8671 = vmatpush2.msra.mxu0 %v7498
    %8672 = vmatprep.subr.mxu0 %v7492
    %8673 = vmatpush2.msra.mxu0 %v7491
    %8674 = vmatprep.subr.mxu0 %v7485
    %8675 = vmatpush2.msra.mxu0 %v7484
    %8676 = vmatprep.subr.mxu0 %v7478
    %8677 = vmatpush2.msra.mxu0 %v7477
    %8678 = vmatprep.subr.mxu0 %v7471
    %8679 = vmatpush2.msra.mxu0 %v7470
    %8680 = vmatprep.subr.mxu0 %v7464
    %8681 = vmatpush2.msra.mxu0 %v7463
    %8682 = vmatprep.subr.mxu0 %v7457
    %8683 = vmatpush2.msra.mxu0 %v7456
    %8684 = vmatprep.subr.mxu0 %v7450
    %8685 = vmatpush2.msra.mxu0 %v7449
    %8686 = vmatprep.subr.mxu0 %v7443
    %8687 = vmatpush2.msra.mxu0 %v7442
    %8688 = vmatprep.subr.mxu0 %v7436
    %8689 = vmatpush2.msra.mxu0 %v7435
    %8690 = vmatprep.subr.mxu0 %v7429
    %8691 = vmatpush2.msra.mxu0 %v7428
    %8692 = vmatprep.subr.mxu0 %v7422
    %8693 = vmatpush2.msra.mxu0 %v7421
    %8694 = vmatprep.subr.mxu0 %v7415
    %8695 = vmatpush2.msra.mxu0 %v7414
    %8696 = vmatprep.subr.mxu0 %v7408
    %8697 = vmatpush2.msra.mxu0 %v7407
    %8698 = vmatprep.subr.mxu0 %v7401
    %8699 = vmatpush2.msra.mxu0 %v7400
    %8700 = vmatprep.mubr.f32.mxu0 %v6830
    %8701 = vmatmul.mubr.f32.gmra.mxu0 %v6829
    %v8702 = vpop.f32.mrf.mxu0
    %v8703 = vadd.f32 0.0, %v8702
    %v8704 = vpop.f32.mrf.mxu0
    %v8705 = vadd.f32 0.0, %v8704
    %8706 = vdwg.mxu0
    %8707 = vmatprep.subr.mxu0 %v7618
    %8708 = vmatpush1.msra.mxu0 %v7617
    %8709 = vmatprep.subr.mxu0 %v7611
    %8710 = vmatpush1.msra.mxu0 %v7610
    %8711 = vmatprep.subr.mxu0 %v7604
    %8712 = vmatpush1.msra.mxu0 %v7603
    %8713 = vmatprep.subr.mxu0 %v7597
    %8714 = vmatpush1.msra.mxu0 %v7596
    %8715 = vmatprep.subr.mxu0 %v7590
    %8716 = vmatpush1.msra.mxu0 %v7589
    %8717 = vmatprep.subr.mxu0 %v7583
    %8718 = vmatpush1.msra.mxu0 %v7582
    %8719 = vmatprep.subr.mxu0 %v7576
    %8720 = vmatpush1.msra.mxu0 %v7575
    %8721 = vmatprep.subr.mxu0 %v7569
    %8722 = vmatpush1.msra.mxu0 %v7568
    %8723 = vmatprep.subr.mxu0 %v7562
    %8724 = vmatpush1.msra.mxu0 %v7561
    %8725 = vmatprep.subr.mxu0 %v7555
    %8726 = vmatpush1.msra.mxu0 %v7554
    %8727 = vmatprep.subr.mxu0 %v7548
    %8728 = vmatpush1.msra.mxu0 %v7547
    %8729 = vmatprep.subr.mxu0 %v7541
    %8730 = vmatpush1.msra.mxu0 %v7540
    %8731 = vmatprep.subr.mxu0 %v7534
    %8732 = vmatpush1.msra.mxu0 %v7533
    %8733 = vmatprep.subr.mxu0 %v7527
    %8734 = vmatpush1.msra.mxu0 %v7526
    %8735 = vmatprep.subr.mxu0 %v7520
    %8736 = vmatpush1.msra.mxu0 %v7519
    %8737 = vmatprep.subr.mxu0 %v7513
    %8738 = vmatpush1.msra.mxu0 %v7512
    %8739 = vmatprep.subr.mxu0 %v7730
    %8740 = vmatpush2.msra.mxu0 %v7729
    %8741 = vmatprep.subr.mxu0 %v7723
    %8742 = vmatpush2.msra.mxu0 %v7722
    %8743 = vmatprep.subr.mxu0 %v7716
    %8744 = vmatpush2.msra.mxu0 %v7715
    %8745 = vmatprep.subr.mxu0 %v7709
    %8746 = vmatpush2.msra.mxu0 %v7708
    %8747 = vmatprep.subr.mxu0 %v7702
    %8748 = vmatpush2.msra.mxu0 %v7701
    %8749 = vmatprep.subr.mxu0 %v7695
    %8750 = vmatpush2.msra.mxu0 %v7694
    %8751 = vmatprep.subr.mxu0 %v7688
    %8752 = vmatpush2.msra.mxu0 %v7687
    %8753 = vmatprep.subr.mxu0 %v7681
    %8754 = vmatpush2.msra.mxu0 %v7680
    %8755 = vmatprep.subr.mxu0 %v7674
    %8756 = vmatpush2.msra.mxu0 %v7673
    %8757 = vmatprep.subr.mxu0 %v7667
    %8758 = vmatpush2.msra.mxu0 %v7666
    %8759 = vmatprep.subr.mxu0 %v7660
    %8760 = vmatpush2.msra.mxu0 %v7659
    %8761 = vmatprep.subr.mxu0 %v7653
    %8762 = vmatpush2.msra.mxu0 %v7652
    %8763 = vmatprep.subr.mxu0 %v7646
    %8764 = vmatpush2.msra.mxu0 %v7645
    %8765 = vmatprep.subr.mxu0 %v7639
    %8766 = vmatpush2.msra.mxu0 %v7638
    %8767 = vmatprep.subr.mxu0 %v7632
    %8768 = vmatpush2.msra.mxu0 %v7631
    %8769 = vmatprep.subr.mxu0 %v7625
    %8770 = vmatpush2.msra.mxu0 %v7624
    %8771 = vmatprep.mubr.f32.mxu0 %v6832
    %8772 = vmatmul.mubr.f32.gmra.mxu0 %v6831
    %v8773 = vpop.f32.mrf.mxu0
    %v8774 = vadd.f32 %v8703, %v8773
    %v8775 = vpop.f32.mrf.mxu0
    %v8776 = vadd.f32 %v8705, %v8775
    %8777 = vdwg.mxu0
    %8778 = vmatprep.subr.mxu0 %v7842
    %8779 = vmatpush1.msra.mxu0 %v7841
    %8780 = vmatprep.subr.mxu0 %v7835
    %8781 = vmatpush1.msra.mxu0 %v7834
    %8782 = vmatprep.subr.mxu0 %v7828
    %8783 = vmatpush1.msra.mxu0 %v7827
    %8784 = vmatprep.subr.mxu0 %v7821
    %8785 = vmatpush1.msra.mxu0 %v7820
    %8786 = vmatprep.subr.mxu0 %v7814
    %8787 = vmatpush1.msra.mxu0 %v7813
    %8788 = vmatprep.subr.mxu0 %v7807
    %8789 = vmatpush1.msra.mxu0 %v7806
    %8790 = vmatprep.subr.mxu0 %v7800
    %8791 = vmatpush1.msra.mxu0 %v7799
    %8792 = vmatprep.subr.mxu0 %v7793
    %8793 = vmatpush1.msra.mxu0 %v7792
    %8794 = vmatprep.subr.mxu0 %v7786
    %8795 = vmatpush1.msra.mxu0 %v7785
    %8796 = vmatprep.subr.mxu0 %v7779
    %8797 = vmatpush1.msra.mxu0 %v7778
    %8798 = vmatprep.subr.mxu0 %v7772
    %8799 = vmatpush1.msra.mxu0 %v7771
    %8800 = vmatprep.subr.mxu0 %v7765
    %8801 = vmatpush1.msra.mxu0 %v7764
    %8802 = vmatprep.subr.mxu0 %v7758
    %8803 = vmatpush1.msra.mxu0 %v7757
    %8804 = vmatprep.subr.mxu0 %v7751
    %8805 = vmatpush1.msra.mxu0 %v7750
    %8806 = vmatprep.subr.mxu0 %v7744
    %8807 = vmatpush1.msra.mxu0 %v7743
    %8808 = vmatprep.subr.mxu0 %v7737
    %8809 = vmatpush1.msra.mxu0 %v7736
    %8810 = vmatprep.subr.mxu0 %v7954
    %8811 = vmatpush2.msra.mxu0 %v7953
    %8812 = vmatprep.subr.mxu0 %v7947
    %8813 = vmatpush2.msra.mxu0 %v7946
    %8814 = vmatprep.subr.mxu0 %v7940
    %8815 = vmatpush2.msra.mxu0 %v7939
    %8816 = vmatprep.subr.mxu0 %v7933
    %8817 = vmatpush2.msra.mxu0 %v7932
    %8818 = vmatprep.subr.mxu0 %v7926
    %8819 = vmatpush2.msra.mxu0 %v7925
    %8820 = vmatprep.subr.mxu0 %v7919
    %8821 = vmatpush2.msra.mxu0 %v7918
    %8822 = vmatprep.subr.mxu0 %v7912
    %8823 = vmatpush2.msra.mxu0 %v7911
    %8824 = vmatprep.subr.mxu0 %v7905
    %8825 = vmatpush2.msra.mxu0 %v7904
    %8826 = vmatprep.subr.mxu0 %v7898
    %8827 = vmatpush2.msra.mxu0 %v7897
    %8828 = vmatprep.subr.mxu0 %v7891
    %8829 = vmatpush2.msra.mxu0 %v7890
    %8830 = vmatprep.subr.mxu0 %v7884
    %8831 = vmatpush2.msra.mxu0 %v7883
    %8832 = vmatprep.subr.mxu0 %v7877
    %8833 = vmatpush2.msra.mxu0 %v7876
    %8834 = vmatprep.subr.mxu0 %v7870
    %8835 = vmatpush2.msra.mxu0 %v7869
    %8836 = vmatprep.subr.mxu0 %v7863
    %8837 = vmatpush2.msra.mxu0 %v7862
    %8838 = vmatprep.subr.mxu0 %v7856
    %8839 = vmatpush2.msra.mxu0 %v7855
    %8840 = vmatprep.subr.mxu0 %v7849
    %8841 = vmatpush2.msra.mxu0 %v7848
    %8842 = vmatprep.mubr.f32.mxu0 %v6834
    %8843 = vmatmul.mubr.f32.gmra.mxu0 %v6833
    %v8844 = vpop.f32.mrf.mxu0
    %v8845 = vadd.f32 %v8774, %v8844
    %v8846 = vpop.f32.mrf.mxu0
    %v8847 = vadd.f32 %v8776, %v8846
    %8848 = vdwg.mxu0
    %8849 = vmatprep.subr.mxu0 %v8066
    %8850 = vmatpush1.msra.mxu0 %v8065
    %8851 = vmatprep.subr.mxu0 %v8059
    %8852 = vmatpush1.msra.mxu0 %v8058
    %8853 = vmatprep.subr.mxu0 %v8052
    %8854 = vmatpush1.msra.mxu0 %v8051
    %8855 = vmatprep.subr.mxu0 %v8045
    %8856 = vmatpush1.msra.mxu0 %v8044
    %8857 = vmatprep.subr.mxu0 %v8038
    %8858 = vmatpush1.msra.mxu0 %v8037
    %8859 = vmatprep.subr.mxu0 %v8031
    %8860 = vmatpush1.msra.mxu0 %v8030
    %8861 = vmatprep.subr.mxu0 %v8024
    %8862 = vmatpush1.msra.mxu0 %v8023
    %8863 = vmatprep.subr.mxu0 %v8017
    %8864 = vmatpush1.msra.mxu0 %v8016
    %8865 = vmatprep.subr.mxu0 %v8010
    %8866 = vmatpush1.msra.mxu0 %v8009
    %8867 = vmatprep.subr.mxu0 %v8003
    %8868 = vmatpush1.msra.mxu0 %v8002
    %8869 = vmatprep.subr.mxu0 %v7996
    %8870 = vmatpush1.msra.mxu0 %v7995
    %8871 = vmatprep.subr.mxu0 %v7989
    %8872 = vmatpush1.msra.mxu0 %v7988
    %8873 = vmatprep.subr.mxu0 %v7982
    %8874 = vmatpush1.msra.mxu0 %v7981
    %8875 = vmatprep.subr.mxu0 %v7975
    %8876 = vmatpush1.msra.mxu0 %v7974
    %8877 = vmatprep.subr.mxu0 %v7968
    %8878 = vmatpush1.msra.mxu0 %v7967
    %8879 = vmatprep.subr.mxu0 %v7961
    %8880 = vmatpush1.msra.mxu0 %v7960
    %8881 = vmatprep.subr.mxu0 0.0
    %8882 = vmatpush2.msra.mxu0 0.0
    %8883 = vmatprep.subr.mxu0 0.0
    %8884 = vmatpush2.msra.mxu0 0.0
    %8885 = vmatprep.subr.mxu0 0.0
    %8886 = vmatpush2.msra.mxu0 0.0
    %8887 = vmatprep.subr.mxu0 0.0
    %8888 = vmatpush2.msra.mxu0 0.0
    %8889 = vmatprep.subr.mxu0 0.0
    %8890 = vmatpush2.msra.mxu0 0.0
    %8891 = vmatprep.subr.mxu0 0.0
    %8892 = vmatpush2.msra.mxu0 0.0
    %8893 = vmatprep.subr.mxu0 0.0
    %8894 = vmatpush2.msra.mxu0 0.0
    %8895 = vmatprep.subr.mxu0 0.0
    %8896 = vmatpush2.msra.mxu0 0.0
    %8897 = vmatprep.subr.mxu0 0.0
    %8898 = vmatpush2.msra.mxu0 0.0
    %8899 = vmatprep.subr.mxu0 0.0
    %8900 = vmatpush2.msra.mxu0 0.0
    %8901 = vmatprep.subr.mxu0 0.0
    %8902 = vmatpush2.msra.mxu0 0.0
    %8903 = vmatprep.subr.mxu0 0.0
    %8904 = vmatpush2.msra.mxu0 0.0
    %8905 = vmatprep.subr.mxu0 0.0
    %8906 = vmatpush2.msra.mxu0 0.0
    %8907 = vmatprep.subr.mxu0 0.0
    %8908 = vmatpush2.msra.mxu0 0.0
    %8909 = vmatprep.subr.mxu0 0.0
    %8910 = vmatpush2.msra.mxu0 0.0
    %8911 = vmatprep.subr.mxu0 0.0
    %8912 = vmatpush2.msra.mxu0 0.0
    %8913 = vmatprep.mubr.f32.mxu0 0.0
    %8914 = vmatmul.mubr.f32.gmra.mxu0 %v6835
    %v8915 = vpop.f32.mrf.mxu0
    %v8916 = vadd.f32 %v8845, %v8915
    %v8917 = vpop.f32.mrf.mxu0
    %v8918 = vadd.f32 %v8847, %v8917
    %8919 = vdwg.mxu0
    %8920 = vmatprep.subr.mxu0 0.0
    %8921 = vmatpush1.msra.mxu0 %v7395
    %8922 = vmatprep.subr.mxu0 0.0
    %8923 = vmatpush1.msra.mxu0 %v7388
    %8924 = vmatprep.subr.mxu0 0.0
    %8925 = vmatpush1.msra.mxu0 %v7381
    %8926 = vmatprep.subr.mxu0 0.0
    %8927 = vmatpush1.msra.mxu0 %v7374
    %8928 = vmatprep.subr.mxu0 0.0
    %8929 = vmatpush1.msra.mxu0 %v7367
    %8930 = vmatprep.subr.mxu0 0.0
    %8931 = vmatpush1.msra.mxu0 %v7360
    %8932 = vmatprep.subr.mxu0 0.0
    %8933 = vmatpush1.msra.mxu0 %v7353
    %8934 = vmatprep.subr.mxu0 0.0
    %8935 = vmatpush1.msra.mxu0 %v7346
    %8936 = vmatprep.subr.mxu0 0.0
    %8937 = vmatpush1.msra.mxu0 %v7339
    %8938 = vmatprep.subr.mxu0 0.0
    %8939 = vmatpush1.msra.mxu0 %v7332
    %8940 = vmatprep.subr.mxu0 0.0
    %8941 = vmatpush1.msra.mxu0 %v7325
    %8942 = vmatprep.subr.mxu0 0.0
    %8943 = vmatpush1.msra.mxu0 %v7318
    %8944 = vmatprep.subr.mxu0 0.0
    %8945 = vmatpush1.msra.mxu0 %v7311
    %8946 = vmatprep.subr.mxu0 0.0
    %8947 = vmatpush1.msra.mxu0 %v7304
    %8948 = vmatprep.subr.mxu0 0.0
    %8949 = vmatpush1.msra.mxu0 %v7297
    %8950 = vmatprep.subr.mxu0 0.0
    %8951 = vmatpush1.msra.mxu0 %v7290
    %8952 = vmatprep.subr.mxu0 0.0
    %8953 = vmatpush2.msra.mxu0 %v7507
    %8954 = vmatprep.subr.mxu0 0.0
    %8955 = vmatpush2.msra.mxu0 %v7500
    %8956 = vmatprep.subr.mxu0 0.0
    %8957 = vmatpush2.msra.mxu0 %v7493
    %8958 = vmatprep.subr.mxu0 0.0
    %8959 = vmatpush2.msra.mxu0 %v7486
    %8960 = vmatprep.subr.mxu0 0.0
    %8961 = vmatpush2.msra.mxu0 %v7479
    %8962 = vmatprep.subr.mxu0 0.0
    %8963 = vmatpush2.msra.mxu0 %v7472
    %8964 = vmatprep.subr.mxu0 0.0
    %8965 = vmatpush2.msra.mxu0 %v7465
    %8966 = vmatprep.subr.mxu0 0.0
    %8967 = vmatpush2.msra.mxu0 %v7458
    %8968 = vmatprep.subr.mxu0 0.0
    %8969 = vmatpush2.msra.mxu0 %v7451
    %8970 = vmatprep.subr.mxu0 0.0
    %8971 = vmatpush2.msra.mxu0 %v7444
    %8972 = vmatprep.subr.mxu0 0.0
    %8973 = vmatpush2.msra.mxu0 %v7437
    %8974 = vmatprep.subr.mxu0 0.0
    %8975 = vmatpush2.msra.mxu0 %v7430
    %8976 = vmatprep.subr.mxu0 0.0
    %8977 = vmatpush2.msra.mxu0 %v7423
    %8978 = vmatprep.subr.mxu0 0.0
    %8979 = vmatpush2.msra.mxu0 %v7416
    %8980 = vmatprep.subr.mxu0 0.0
    %8981 = vmatpush2.msra.mxu0 %v7409
    %8982 = vmatprep.subr.mxu0 0.0
    %8983 = vmatpush2.msra.mxu0 %v7402
    %8984 = vmatprep.mubr.f32.mxu0 %v6830
    %8985 = vmatmul.mubr.f32.gmra.mxu0 %v6829
    %v8986 = vpop.f32.mrf.mxu0
    %v8987 = vadd.f32 0.0, %v8986
    %v8988 = vpop.f32.mrf.mxu0
    %8989 = vdwg.mxu0
    %8990 = vmatprep.subr.mxu0 0.0
    %8991 = vmatpush1.msra.mxu0 %v7619
    %8992 = vmatprep.subr.mxu0 0.0
    %8993 = vmatpush1.msra.mxu0 %v7612
    %8994 = vmatprep.subr.mxu0 0.0
    %8995 = vmatpush1.msra.mxu0 %v7605
    %8996 = vmatprep.subr.mxu0 0.0
    %8997 = vmatpush1.msra.mxu0 %v7598
    %8998 = vmatprep.subr.mxu0 0.0
    %8999 = vmatpush1.msra.mxu0 %v7591
    %9000 = vmatprep.subr.mxu0 0.0
    %9001 = vmatpush1.msra.mxu0 %v7584
    %9002 = vmatprep.subr.mxu0 0.0
    %9003 = vmatpush1.msra.mxu0 %v7577
    %9004 = vmatprep.subr.mxu0 0.0
    %9005 = vmatpush1.msra.mxu0 %v7570
    %9006 = vmatprep.subr.mxu0 0.0
    %9007 = vmatpush1.msra.mxu0 %v7563
    %9008 = vmatprep.subr.mxu0 0.0
    %9009 = vmatpush1.msra.mxu0 %v7556
    %9010 = vmatprep.subr.mxu0 0.0
    %9011 = vmatpush1.msra.mxu0 %v7549
    %9012 = vmatprep.subr.mxu0 0.0
    %9013 = vmatpush1.msra.mxu0 %v7542
    %9014 = vmatprep.subr.mxu0 0.0
    %9015 = vmatpush1.msra.mxu0 %v7535
    %9016 = vmatprep.subr.mxu0 0.0
    %9017 = vmatpush1.msra.mxu0 %v7528
    %9018 = vmatprep.subr.mxu0 0.0
    %9019 = vmatpush1.msra.mxu0 %v7521
    %9020 = vmatprep.subr.mxu0 0.0
    %9021 = vmatpush1.msra.mxu0 %v7514
    %9022 = vmatprep.subr.mxu0 0.0
    %9023 = vmatpush2.msra.mxu0 %v7731
    %9024 = vmatprep.subr.mxu0 0.0
    %9025 = vmatpush2.msra.mxu0 %v7724
    %9026 = vmatprep.subr.mxu0 0.0
    %9027 = vmatpush2.msra.mxu0 %v7717
    %9028 = vmatprep.subr.mxu0 0.0
    %9029 = vmatpush2.msra.mxu0 %v7710
    %9030 = vmatprep.subr.mxu0 0.0
    %9031 = vmatpush2.msra.mxu0 %v7703
    %9032 = vmatprep.subr.mxu0 0.0
    %9033 = vmatpush2.msra.mxu0 %v7696
    %9034 = vmatprep.subr.mxu0 0.0
    %9035 = vmatpush2.msra.mxu0 %v7689
    %9036 = vmatprep.subr.mxu0 0.0
    %9037 = vmatpush2.msra.mxu0 %v7682
    %9038 = vmatprep.subr.mxu0 0.0
    %9039 = vmatpush2.msra.mxu0 %v7675
    %9040 = vmatprep.subr.mxu0 0.0
    %9041 = vmatpush2.msra.mxu0 %v7668
    %9042 = vmatprep.subr.mxu0 0.0
    %9043 = vmatpush2.msra.mxu0 %v7661
    %9044 = vmatprep.subr.mxu0 0.0
    %9045 = vmatpush2.msra.mxu0 %v7654
    %9046 = vmatprep.subr.mxu0 0.0
    %9047 = vmatpush2.msra.mxu0 %v7647
    %9048 = vmatprep.subr.mxu0 0.0
    %9049 = vmatpush2.msra.mxu0 %v7640
    %9050 = vmatprep.subr.mxu0 0.0
    %9051 = vmatpush2.msra.mxu0 %v7633
    %9052 = vmatprep.subr.mxu0 0.0
    %9053 = vmatpush2.msra.mxu0 %v7626
    %9054 = vmatprep.mubr.f32.mxu0 %v6832
    %9055 = vmatmul.mubr.f32.gmra.mxu0 %v6831
    %v9056 = vpop.f32.mrf.mxu0
    %v9057 = vadd.f32 %v8987, %v9056
    %v9058 = vpop.f32.mrf.mxu0
    %9059 = vdwg.mxu0
    %9060 = vmatprep.subr.mxu0 0.0
    %9061 = vmatpush1.msra.mxu0 %v7843
    %9062 = vmatprep.subr.mxu0 0.0
    %9063 = vmatpush1.msra.mxu0 %v7836
    %9064 = vmatprep.subr.mxu0 0.0
    %9065 = vmatpush1.msra.mxu0 %v7829
    %9066 = vmatprep.subr.mxu0 0.0
    %9067 = vmatpush1.msra.mxu0 %v7822
    %9068 = vmatprep.subr.mxu0 0.0
    %9069 = vmatpush1.msra.mxu0 %v7815
    %9070 = vmatprep.subr.mxu0 0.0
    %9071 = vmatpush1.msra.mxu0 %v7808
    %9072 = vmatprep.subr.mxu0 0.0
    %9073 = vmatpush1.msra.mxu0 %v7801
    %9074 = vmatprep.subr.mxu0 0.0
    %9075 = vmatpush1.msra.mxu0 %v7794
    %9076 = vmatprep.subr.mxu0 0.0
    %9077 = vmatpush1.msra.mxu0 %v7787
    %9078 = vmatprep.subr.mxu0 0.0
    %9079 = vmatpush1.msra.mxu0 %v7780
    %9080 = vmatprep.subr.mxu0 0.0
    %9081 = vmatpush1.msra.mxu0 %v7773
    %9082 = vmatprep.subr.mxu0 0.0
    %9083 = vmatpush1.msra.mxu0 %v7766
    %9084 = vmatprep.subr.mxu0 0.0
    %9085 = vmatpush1.msra.mxu0 %v7759
    %9086 = vmatprep.subr.mxu0 0.0
    %9087 = vmatpush1.msra.mxu0 %v7752
    %9088 = vmatprep.subr.mxu0 0.0
    %9089 = vmatpush1.msra.mxu0 %v7745
    %9090 = vmatprep.subr.mxu0 0.0
    %9091 = vmatpush1.msra.mxu0 %v7738
    %9092 = vmatprep.subr.mxu0 0.0
    %9093 = vmatpush2.msra.mxu0 %v7955
    %9094 = vmatprep.subr.mxu0 0.0
    %9095 = vmatpush2.msra.mxu0 %v7948
    %9096 = vmatprep.subr.mxu0 0.0
    %9097 = vmatpush2.msra.mxu0 %v7941
    %9098 = vmatprep.subr.mxu0 0.0
    %9099 = vmatpush2.msra.mxu0 %v7934
    %9100 = vmatprep.subr.mxu0 0.0
    %9101 = vmatpush2.msra.mxu0 %v7927
    %9102 = vmatprep.subr.mxu0 0.0
    %9103 = vmatpush2.msra.mxu0 %v7920
    %9104 = vmatprep.subr.mxu0 0.0
    %9105 = vmatpush2.msra.mxu0 %v7913
    %9106 = vmatprep.subr.mxu0 0.0
    %9107 = vmatpush2.msra.mxu0 %v7906
    %9108 = vmatprep.subr.mxu0 0.0
    %9109 = vmatpush2.msra.mxu0 %v7899
    %9110 = vmatprep.subr.mxu0 0.0
    %9111 = vmatpush2.msra.mxu0 %v7892
    %9112 = vmatprep.subr.mxu0 0.0
    %9113 = vmatpush2.msra.mxu0 %v7885
    %9114 = vmatprep.subr.mxu0 0.0
    %9115 = vmatpush2.msra.mxu0 %v7878
    %9116 = vmatprep.subr.mxu0 0.0
    %9117 = vmatpush2.msra.mxu0 %v7871
    %9118 = vmatprep.subr.mxu0 0.0
    %9119 = vmatpush2.msra.mxu0 %v7864
    %9120 = vmatprep.subr.mxu0 0.0
    %9121 = vmatpush2.msra.mxu0 %v7857
    %9122 = vmatprep.subr.mxu0 0.0
    %9123 = vmatpush2.msra.mxu0 %v7850
    %9124 = vmatprep.mubr.f32.mxu0 %v6834
    %9125 = vmatmul.mubr.f32.gmra.mxu0 %v6833
    %v9126 = vpop.f32.mrf.mxu0
    %v9127 = vadd.f32 %v9057, %v9126
    %v9128 = vpop.f32.mrf.mxu0
    %9129 = vdwg.mxu0
    %9130 = vmatprep.subr.mxu0 0.0
    %9131 = vmatpush1.msra.mxu0 %v8067
    %9132 = vmatprep.subr.mxu0 0.0
    %9133 = vmatpush1.msra.mxu0 %v8060
    %9134 = vmatprep.subr.mxu0 0.0
    %9135 = vmatpush1.msra.mxu0 %v8053
    %9136 = vmatprep.subr.mxu0 0.0
    %9137 = vmatpush1.msra.mxu0 %v8046
    %9138 = vmatprep.subr.mxu0 0.0
    %9139 = vmatpush1.msra.mxu0 %v8039
    %9140 = vmatprep.subr.mxu0 0.0
    %9141 = vmatpush1.msra.mxu0 %v8032
    %9142 = vmatprep.subr.mxu0 0.0
    %9143 = vmatpush1.msra.mxu0 %v8025
    %9144 = vmatprep.subr.mxu0 0.0
    %9145 = vmatpush1.msra.mxu0 %v8018
    %9146 = vmatprep.subr.mxu0 0.0
    %9147 = vmatpush1.msra.mxu0 %v8011
    %9148 = vmatprep.subr.mxu0 0.0
    %9149 = vmatpush1.msra.mxu0 %v8004
    %9150 = vmatprep.subr.mxu0 0.0
    %9151 = vmatpush1.msra.mxu0 %v7997
    %9152 = vmatprep.subr.mxu0 0.0
    %9153 = vmatpush1.msra.mxu0 %v7990
    %9154 = vmatprep.subr.mxu0 0.0
    %9155 = vmatpush1.msra.mxu0 %v7983
    %9156 = vmatprep.subr.mxu0 0.0
    %9157 = vmatpush1.msra.mxu0 %v7976
    %9158 = vmatprep.subr.mxu0 0.0
    %9159 = vmatpush1.msra.mxu0 %v7969
    %9160 = vmatprep.subr.mxu0 0.0
    %9161 = vmatpush1.msra.mxu0 %v7962
    %9162 = vmatprep.subr.mxu0 0.0
    %9163 = vmatpush2.msra.mxu0 0.0
    %9164 = vmatprep.subr.mxu0 0.0
    %9165 = vmatpush2.msra.mxu0 0.0
    %9166 = vmatprep.subr.mxu0 0.0
    %9167 = vmatpush2.msra.mxu0 0.0
    %9168 = vmatprep.subr.mxu0 0.0
    %9169 = vmatpush2.msra.mxu0 0.0
    %9170 = vmatprep.subr.mxu0 0.0
    %9171 = vmatpush2.msra.mxu0 0.0
    %9172 = vmatprep.subr.mxu0 0.0
    %9173 = vmatpush2.msra.mxu0 0.0
    %9174 = vmatprep.subr.mxu0 0.0
    %9175 = vmatpush2.msra.mxu0 0.0
    %9176 = vmatprep.subr.mxu0 0.0
    %9177 = vmatpush2.msra.mxu0 0.0
    %9178 = vmatprep.subr.mxu0 0.0
    %9179 = vmatpush2.msra.mxu0 0.0
    %9180 = vmatprep.subr.mxu0 0.0
    %9181 = vmatpush2.msra.mxu0 0.0
    %9182 = vmatprep.subr.mxu0 0.0
    %9183 = vmatpush2.msra.mxu0 0.0
    %9184 = vmatprep.subr.mxu0 0.0
    %9185 = vmatpush2.msra.mxu0 0.0
    %9186 = vmatprep.subr.mxu0 0.0
    %9187 = vmatpush2.msra.mxu0 0.0
    %9188 = vmatprep.subr.mxu0 0.0
    %9189 = vmatpush2.msra.mxu0 0.0
    %9190 = vmatprep.subr.mxu0 0.0
    %9191 = vmatpush2.msra.mxu0 0.0
    %9192 = vmatprep.subr.mxu0 0.0
    %9193 = vmatpush2.msra.mxu0 0.0
    %9194 = vmatprep.mubr.f32.mxu0 0.0
    %9195 = vmatmul.mubr.f32.gmra.mxu0 %v6835
    %v9196 = vpop.f32.mrf.mxu0
    %v9197 = vadd.f32 %v9127, %v9196
    %v9198 = vpop.f32.mrf.mxu0
    %9199 = vdwg.mxu0
    %v9200 = vld [vmem:[#allocation10] sm:$0xff]
    %v9201 = vld [vmem:[#allocation12] sm:$0xff]
    %v9202 = vrot.slane %v8348, 4
    %v9203 = vadd.f32 %v8348, %v9202
    %v9204 = vrot.slane %v9203, 2
    %v9205 = vadd.f32 %v9203, %v9204
    %v9206 = vrot.slane %v9205, 1
    %v9207 = vadd.f32 %v9205, %v9206
    %v9208 = vrot.slane %v8350, 4
    %v9209 = vadd.f32 %v8350, %v9208
    %v9210 = vrot.slane %v9209, 2
    %v9211 = vadd.f32 %v9209, %v9210
    %v9212 = vrot.slane %v9211, 1
    %v9213 = vadd.f32 %v9211, %v9212
    %v9214 = vrot.slane %v8632, 4
    %v9215 = vadd.f32 %v8632, %v9214
    %v9216 = vrot.slane %v9215, 2
    %v9217 = vadd.f32 %v9215, %v9216
    %v9218 = vrot.slane %v9217, 1
    %v9219 = vadd.f32 %v9217, %v9218
    %v9220 = vrot.slane %v8634, 4
    %v9221 = vadd.f32 %v8634, %v9220
    %v9222 = vrot.slane %v9221, 2
    %v9223 = vadd.f32 %v9221, %v9222
    %v9224 = vrot.slane %v9223, 1
    %v9225 = vadd.f32 %v9223, %v9224
    %v9226 = vrot.slane %v8916, 4
    %v9227 = vadd.f32 %v8916, %v9226
    %v9228 = vrot.slane %v9227, 2
    %v9229 = vadd.f32 %v9227, %v9228
    %v9230 = vrot.slane %v9229, 1
    %v9231 = vadd.f32 %v9229, %v9230
    %v9232 = vrot.slane %v8918, 4
    %v9233 = vadd.f32 %v8918, %v9232
    %v9234 = vrot.slane %v9233, 2
    %v9235 = vadd.f32 %v9233, %v9234
    %v9236 = vrot.slane %v9235, 1
    %v9237 = vadd.f32 %v9235, %v9236
    %v9238 = vrot.slane %v9197, 4
    %v9239 = vadd.f32 %v9197, %v9238
    %v9240 = vrot.slane %v9239, 2
    %v9241 = vadd.f32 %v9239, %v9240
    %v9242 = vrot.slane %v9241, 1
    %v9243 = vadd.f32 %v9241, %v9242
    %v9244 = vmul.f32 %v9207, %v6537
    %v9245 = vmul.f32 %v9213, %v6537
    %v9246 = vmul.f32 %v9219, %v6537
    %v9247 = vmul.f32 %v9225, %v6537
    %v9248 = vmul.f32 %v9231, %v6537
    %v9249 = vmul.f32 %v9237, %v6537
    %v9250 = vmul.f32 %v9243, %v6537
    %v9251 = vsub.f32 %v8348, %v9244
    %v9252 = vsub.f32 %v8350, %v9245
    %v9253 = vsub.f32 %v8632, %v9246
    %v9254 = vsub.f32 %v8634, %v9247
    %v9255 = vsub.f32 %v8916, %v9248
    %v9256 = vsub.f32 %v8918, %v9249
    %v9257 = vsub.f32 %v9197, %v9250
    %v9258 = vmul.f32 %v9251, %v9251
    %v9259 = vmul.f32 %v9252, %v9252
    %v9260 = vmul.f32 %v9253, %v9253
    %v9261 = vmul.f32 %v9254, %v9254
    %v9262 = vmul.f32 %v9255, %v9255
    %v9263 = vmul.f32 %v9256, %v9256
    %v9264 = vmul.f32 %v9257, %v9257
    %v9265 = vrot.slane %v9258, 4
    %v9266 = vadd.f32 %v9258, %v9265
    %v9267 = vrot.slane %v9266, 2
    %v9268 = vadd.f32 %v9266, %v9267
    %v9269 = vrot.slane %v9268, 1
    %v9270 = vadd.f32 %v9268, %v9269
    %v9271 = vrot.slane %v9259, 4
    %v9272 = vadd.f32 %v9259, %v9271
    %v9273 = vrot.slane %v9272, 2
    %v9274 = vadd.f32 %v9272, %v9273
    %v9275 = vrot.slane %v9274, 1
    %v9276 = vadd.f32 %v9274, %v9275
    %v9277 = vrot.slane %v9260, 4
    %v9278 = vadd.f32 %v9260, %v9277
    %v9279 = vrot.slane %v9278, 2
    %v9280 = vadd.f32 %v9278, %v9279
    %v9281 = vrot.slane %v9280, 1
    %v9282 = vadd.f32 %v9280, %v9281
    %v9283 = vrot.slane %v9261, 4
    %v9284 = vadd.f32 %v9261, %v9283
    %v9285 = vrot.slane %v9284, 2
    %v9286 = vadd.f32 %v9284, %v9285
    %v9287 = vrot.slane %v9286, 1
    %v9288 = vadd.f32 %v9286, %v9287
    %v9289 = vrot.slane %v9262, 4
    %v9290 = vadd.f32 %v9262, %v9289
    %v9291 = vrot.slane %v9290, 2
    %v9292 = vadd.f32 %v9290, %v9291
    %v9293 = vrot.slane %v9292, 1
    %v9294 = vadd.f32 %v9292, %v9293
    %v9295 = vrot.slane %v9263, 4
    %v9296 = vadd.f32 %v9263, %v9295
    %v9297 = vrot.slane %v9296, 2
    %v9298 = vadd.f32 %v9296, %v9297
    %v9299 = vrot.slane %v9298, 1
    %v9300 = vadd.f32 %v9298, %v9299
    %v9301 = vrot.slane %v9264, 4
    %v9302 = vadd.f32 %v9264, %v9301
    %v9303 = vrot.slane %v9302, 2
    %v9304 = vadd.f32 %v9302, %v9303
    %v9305 = vrot.slane %v9304, 1
    %v9306 = vadd.f32 %v9304, %v9305
    %v9307 = vmul.f32 %v9270, %v6537
    %v9308 = vmul.f32 %v9276, %v6537
    %v9309 = vmul.f32 %v9282, %v6537
    %v9310 = vmul.f32 %v9288, %v6537
    %v9311 = vmul.f32 %v9294, %v6537
    %v9312 = vmul.f32 %v9300, %v6537
    %v9313 = vmul.f32 %v9306, %v6537
    %v9314 = vadd.f32 %v9307, 1e-05
    %v9315 = vadd.f32 %v9308, 1e-05
    %v9316 = vadd.f32 %v9309, 1e-05
    %v9317 = vadd.f32 %v9310, 1e-05
    %v9318 = vadd.f32 %v9311, 1e-05
    %v9319 = vadd.f32 %v9312, 1e-05
    %v9320 = vadd.f32 %v9313, 1e-05
    %v9321 = vrsqrt.pop %v9314
    %v9322 = vrsqrt.pop %v9315
    %v9323 = vrsqrt.pop %v9316
    %v9324 = vrsqrt.pop %v9317
    %v9325 = vrsqrt.pop %v9318
    %v9326 = vrsqrt.pop %v9319
    %v9327 = vrsqrt.pop %v9320
    %v9335 = vcombine.low %v9321, %v9322
    %v9336 = vcombine.low %v9323, %v9324
    %v9337 = vcombine.low %v9325, %v9326
    %v9339 = vunpack.c.l.s4 1966171168
    %v9340 = vunpack.c.0.s8 %v9339
    %v9341 = vlaneseq
    %v9342 = vshrl.u32 %v9341, 7
    %v9343 = vsub.s32 %v9340, %v9342
    %v9344 = vrot.slane %v9335, %v9343
    %v9346 = vunpack.c.l.s4 1966171168
    %v9347 = vunpack.c.0.s8 %v9346
    %v9348 = vlaneseq
    %v9349 = vshrl.u32 %v9348, 7
    %v9350 = vsub.s32 %v9347, %v9349
    %v9351 = vrot.slane %v9336, %v9350
    %v9353 = vunpack.c.l.s4 1966171168
    %v9354 = vunpack.c.0.s8 %v9353
    %v9355 = vlaneseq
    %v9356 = vshrl.u32 %v9355, 7
    %v9357 = vsub.s32 %v9354, %v9356
    %v9358 = vrot.slane %v9337, %v9357
    %v9360 = vunpack.c.l.s4 1966171168
    %v9361 = vunpack.c.0.s8 %v9360
    %v9362 = vlaneseq
    %v9363 = vshrl.u32 %v9362, 7
    %v9364 = vsub.s32 %v9361, %v9363
    %v9365 = vrot.slane %v9327, %v9364
    %v9366 = vcombine.low %v9344, %v9351
    %v9367 = vcombine.low %v9358, %v9365
    %v9369 = vunpack.c.l.s4 1966171168
    %v9370 = vunpack.c.0.s8 %v9369
    %v9371 = vlaneseq
    %v9372 = vshrl.u32 %v9371, 7
    %v9373 = vsub.s32 %v9370, %v9372
    %v9374 = vrot.slane %v9366, %v9373
    %v9376 = vunpack.c.l.s4 1966171168
    %v9377 = vunpack.c.0.s8 %v9376
    %v9378 = vlaneseq
    %v9379 = vshrl.u32 %v9378, 7
    %v9380 = vsub.s32 %v9377, %v9379
    %v9381 = vrot.slane %v9367, %v9380
    %v9382 = vcombine.low %v9374, %v9381
    %v9384 = vmul.f32 %v9200, %v9382
    %v9386 = vlaneseq
    %v9387 = vshrl.u32 %v9386, 7
    %v9388 = vsub.s32 0, %v9387
    %v9389 = vrot.slane %v9384, %v9388
    %v9390 = vlaneseq
    %v9391 = vshrl.u32 %v9390, 7
    %v9392 = vsub.s32 1, %v9391
    %v9393 = vrot.slane %v9384, %v9392
    %v9394 = vlaneseq
    %v9395 = vshrl.u32 %v9394, 7
    %v9396 = vsub.s32 2, %v9395
    %v9397 = vrot.slane %v9384, %v9396
    %v9398 = vlaneseq
    %v9399 = vshrl.u32 %v9398, 7
    %v9400 = vsub.s32 3, %v9399
    %v9401 = vrot.slane %v9384, %v9400
    %v9402 = vlaneseq
    %v9403 = vshrl.u32 %v9402, 7
    %v9404 = vsub.s32 4, %v9403
    %v9405 = vrot.slane %v9384, %v9404
    %v9406 = vlaneseq
    %v9407 = vshrl.u32 %v9406, 7
    %v9408 = vsub.s32 5, %v9407
    %v9409 = vrot.slane %v9384, %v9408
    %v9410 = vlaneseq
    %v9411 = vshrl.u32 %v9410, 7
    %v9412 = vsub.s32 6, %v9411
    %v9413 = vrot.slane %v9384, %v9412
    %v9421 = vmul.f32 %v9244, %v9389
    %v9422 = vmul.f32 %v9245, %v9393
    %v9423 = vmul.f32 %v9246, %v9397
    %v9424 = vmul.f32 %v9247, %v9401
    %v9425 = vmul.f32 %v9248, %v9405
    %v9426 = vmul.f32 %v9249, %v9409
    %v9427 = vmul.f32 %v9250, %v9413
    %v9435 = vcombine.low %v9421, %v9422
    %v9436 = vcombine.low %v9423, %v9424
    %v9437 = vcombine.low %v9425, %v9426
    %v9439 = vunpack.c.l.s4 1966171168
    %v9440 = vunpack.c.0.s8 %v9439
    %v9441 = vlaneseq
    %v9442 = vshrl.u32 %v9441, 7
    %v9443 = vsub.s32 %v9440, %v9442
    %v9444 = vrot.slane %v9435, %v9443
    %v9446 = vunpack.c.l.s4 1966171168
    %v9447 = vunpack.c.0.s8 %v9446
    %v9448 = vlaneseq
    %v9449 = vshrl.u32 %v9448, 7
    %v9450 = vsub.s32 %v9447, %v9449
    %v9451 = vrot.slane %v9436, %v9450
    %v9453 = vunpack.c.l.s4 1966171168
    %v9454 = vunpack.c.0.s8 %v9453
    %v9455 = vlaneseq
    %v9456 = vshrl.u32 %v9455, 7
    %v9457 = vsub.s32 %v9454, %v9456
    %v9458 = vrot.slane %v9437, %v9457
    %v9460 = vunpack.c.l.s4 1966171168
    %v9461 = vunpack.c.0.s8 %v9460
    %v9462 = vlaneseq
    %v9463 = vshrl.u32 %v9462, 7
    %v9464 = vsub.s32 %v9461, %v9463
    %v9465 = vrot.slane %v9427, %v9464
    %v9466 = vcombine.low %v9444, %v9451
    %v9467 = vcombine.low %v9458, %v9465
    %v9469 = vunpack.c.l.s4 1966171168
    %v9470 = vunpack.c.0.s8 %v9469
    %v9471 = vlaneseq
    %v9472 = vshrl.u32 %v9471, 7
    %v9473 = vsub.s32 %v9470, %v9472
    %v9474 = vrot.slane %v9466, %v9473
    %v9476 = vunpack.c.l.s4 1966171168
    %v9477 = vunpack.c.0.s8 %v9476
    %v9478 = vlaneseq
    %v9479 = vshrl.u32 %v9478, 7
    %v9480 = vsub.s32 %v9477, %v9479
    %v9481 = vrot.slane %v9467, %v9480
    %v9482 = vcombine.low %v9474, %v9481
    %v9484 = vsub.f32 %v9201, %v9482
    %v9485 = vmul.f32 %v8348, %v9389
    %v9486 = vmul.f32 %v8350, %v9393
    %v9487 = vmul.f32 %v8632, %v9397
    %v9488 = vmul.f32 %v8634, %v9401
    %v9489 = vmul.f32 %v8916, %v9405
    %v9490 = vmul.f32 %v8918, %v9409
    %v9491 = vmul.f32 %v9197, %v9413
    %v9493 = vlaneseq
    %v9494 = vshrl.u32 %v9493, 7
    %v9495 = vsub.s32 0, %v9494
    %v9496 = vrot.slane %v9484, %v9495
    %v9497 = vlaneseq
    %v9498 = vshrl.u32 %v9497, 7
    %v9499 = vsub.s32 1, %v9498
    %v9500 = vrot.slane %v9484, %v9499
    %v9501 = vlaneseq
    %v9502 = vshrl.u32 %v9501, 7
    %v9503 = vsub.s32 2, %v9502
    %v9504 = vrot.slane %v9484, %v9503
    %v9505 = vlaneseq
    %v9506 = vshrl.u32 %v9505, 7
    %v9507 = vsub.s32 3, %v9506
    %v9508 = vrot.slane %v9484, %v9507
    %v9509 = vlaneseq
    %v9510 = vshrl.u32 %v9509, 7
    %v9511 = vsub.s32 4, %v9510
    %v9512 = vrot.slane %v9484, %v9511
    %v9513 = vlaneseq
    %v9514 = vshrl.u32 %v9513, 7
    %v9515 = vsub.s32 5, %v9514
    %v9516 = vrot.slane %v9484, %v9515
    %v9517 = vlaneseq
    %v9518 = vshrl.u32 %v9517, 7
    %v9519 = vsub.s32 6, %v9518
    %v9520 = vrot.slane %v9484, %v9519
    %v9528 = vadd.f32 %v9485, %v9496
    %v9529 = vadd.f32 %v9486, %v9500
    %v9530 = vadd.f32 %v9487, %v9504
    %v9531 = vadd.f32 %v9488, %v9508
    %v9532 = vadd.f32 %v9489, %v9512
    %v9533 = vadd.f32 %v9490, %v9516
    %v9534 = vadd.f32 %v9491, %v9520
    %v9535 = vmax.f32 %v9528, 0.0
    %v9536 = vmax.f32 %v9529, 0.0
    %v9537 = vmax.f32 %v9530, 0.0
    %v9538 = vmax.f32 %v9531, 0.0
    %v9539 = vmax.f32 %v9532, 0.0
    %v9540 = vmax.f32 %v9533, 0.0
    %v9541 = vmax.f32 %v9534, 0.0
    %v9542 = vld [vmem:[#allocation13] sm:$0xff]
    %v9543 = vld [vmem:[#allocation13 + $0x8] sm:$0xff]
    %v9544 = vld [vmem:[#allocation13 + $0x10] sm:$0xff]
    %v9545 = vld [vmem:[#allocation13 + $0x18] sm:$0xff]
    %v9546 = vld [vmem:[#allocation13 + $0x20] sm:$0xff]
    %v9547 = vld [vmem:[#allocation13 + $0x28] sm:$0xff]
    %v9548 = vld [vmem:[#allocation13 + $0x30] sm:$0xff]
    %v9549 = vld [vmem:[#allocation13 + $0x38] sm:$0xff]
    %v9550 = vld [vmem:[#allocation13 + $0x40] sm:$0xff]
    %v9551 = vld [vmem:[#allocation13 + $0x48] sm:$0xff]
    %v9552 = vld [vmem:[#allocation13 + $0x50] sm:$0xff]
    %v9553 = vld [vmem:[#allocation13 + $0x58] sm:$0xff]
    %v9554 = vld [vmem:[#allocation13 + $0x60] sm:$0xff]
    %v9555 = vld [vmem:[#allocation13 + $0x68] sm:$0xff]
    %v9556 = vld [vmem:[#allocation13 + $0x70] sm:$0xff]
    %v9557 = vld [vmem:[#allocation13 + $0x78] sm:$0xff]
    %v9558 = vld [vmem:[#allocation13 + $0x80] sm:$0xff]
    %v9559 = vld [vmem:[#allocation13 + $0x88] sm:$0xff]
    %v9560 = vld [vmem:[#allocation13 + $0x90] sm:$0xff]
    %v9561 = vld [vmem:[#allocation13 + $0x98] sm:$0xff]
    %v9562 = vld [vmem:[#allocation13 + $0xa0] sm:$0xff]
    %v9563 = vld [vmem:[#allocation13 + $0xa8] sm:$0xff]
    %v9564 = vld [vmem:[#allocation13 + $0xb0] sm:$0xff]
    %v9565 = vld [vmem:[#allocation13 + $0xb8] sm:$0xff]
    %v9566 = vld [vmem:[#allocation13 + $0xc0] sm:$0xff]
    %v9567 = vld [vmem:[#allocation13 + $0xc8] sm:$0xff]
    %v9568 = vld [vmem:[#allocation13 + $0xd0] sm:$0xff]
    %v9569 = vld [vmem:[#allocation13 + $0xd8] sm:$0xff]
    %v9570 = vld [vmem:[#allocation13 + $0xe0] sm:$0xff]
    %v9571 = vld [vmem:[#allocation13 + $0xe8] sm:$0xff]
    %v9572 = vld [vmem:[#allocation13 + $0xf0] sm:$0xff]
    %v9573 = vld [vmem:[#allocation13 + $0xf8] sm:$0xff]
    %v9574 = vld [vmem:[#allocation13 + $0x100] sm:$0xff]
    %v9575 = vld [vmem:[#allocation13 + $0x108] sm:$0xff]
    %v9576 = vld [vmem:[#allocation13 + $0x110] sm:$0xff]
    %v9577 = vld [vmem:[#allocation13 + $0x118] sm:$0xff]
    %v9578 = vld [vmem:[#allocation13 + $0x120] sm:$0xff]
    %v9579 = vld [vmem:[#allocation13 + $0x128] sm:$0xff]
    %v9580 = vld [vmem:[#allocation13 + $0x130] sm:$0xff]
    %v9581 = vld [vmem:[#allocation13 + $0x138] sm:$0xff]
    %v9582 = vld [vmem:[#allocation13 + $0x140] sm:$0xff]
    %v9583 = vld [vmem:[#allocation13 + $0x148] sm:$0xff]
    %v9584 = vld [vmem:[#allocation13 + $0x150] sm:$0xff]
    %v9585 = vld [vmem:[#allocation13 + $0x158] sm:$0xff]
    %v9586 = vld [vmem:[#allocation13 + $0x160] sm:$0xff]
    %v9587 = vld [vmem:[#allocation13 + $0x168] sm:$0xff]
    %v9588 = vld [vmem:[#allocation13 + $0x170] sm:$0xff]
    %v9589 = vld [vmem:[#allocation13 + $0x178] sm:$0xff]
    %v9590 = vld [vmem:[#allocation13 + $0x180] sm:$0xff]
    %v9591 = vld [vmem:[#allocation13 + $0x188] sm:$0xff]
    %v9592 = vld [vmem:[#allocation13 + $0x190] sm:$0xff]
    %v9593 = vld [vmem:[#allocation13 + $0x198] sm:$0xff]
    %v9594 = vld [vmem:[#allocation13 + $0x1a0] sm:$0xff]
    %v9595 = vld [vmem:[#allocation13 + $0x1a8] sm:$0xff]
    %v9596 = vld [vmem:[#allocation13 + $0x1b0] sm:$0xff]
    %v9597 = vld [vmem:[#allocation13 + $0x1b8] sm:$0xff]
    %v9598 = vld [vmem:[#allocation13 + $0x1c0] sm:$0xff]
    %v9599 = vld [vmem:[#allocation13 + $0x1c8] sm:$0xff]
    %v9600 = vld [vmem:[#allocation13 + $0x1d0] sm:$0xff]
    %v9601 = vld [vmem:[#allocation13 + $0x1d8] sm:$0xff]
    %v9602 = vld [vmem:[#allocation13 + $0x1e0] sm:$0xff]
    %v9603 = vld [vmem:[#allocation13 + $0x1e8] sm:$0xff]
    %v9604 = vld [vmem:[#allocation13 + $0x1f0] sm:$0xff]
    %v9605 = vld [vmem:[#allocation13 + $0x1f8] sm:$0xff]
    %v9606 = vld [vmem:[#allocation13 + $0x200] sm:$0xff]
    %v9607 = vld [vmem:[#allocation13 + $0x208] sm:$0xff]
    %v9608 = vld [vmem:[#allocation13 + $0x210] sm:$0xff]
    %v9609 = vld [vmem:[#allocation13 + $0x218] sm:$0xff]
    %v9610 = vld [vmem:[#allocation13 + $0x220] sm:$0xff]
    %v9611 = vld [vmem:[#allocation13 + $0x228] sm:$0xff]
    %v9612 = vld [vmem:[#allocation13 + $0x230] sm:$0xff]
    %v9613 = vld [vmem:[#allocation13 + $0x238] sm:$0xff]
    %v9614 = vld [vmem:[#allocation13 + $0x240] sm:$0xff]
    %v9615 = vld [vmem:[#allocation13 + $0x248] sm:$0xff]
    %v9616 = vld [vmem:[#allocation13 + $0x250] sm:$0xff]
    %v9617 = vld [vmem:[#allocation13 + $0x258] sm:$0xff]
    %v9618 = vld [vmem:[#allocation13 + $0x260] sm:$0xff]
    %v9619 = vld [vmem:[#allocation13 + $0x268] sm:$0xff]
    %v9620 = vld [vmem:[#allocation13 + $0x270] sm:$0xff]
    %v9621 = vld [vmem:[#allocation13 + $0x278] sm:$0xff]
    %v9622 = vld [vmem:[#allocation13 + $0x280] sm:$0xff]
    %v9623 = vld [vmem:[#allocation13 + $0x288] sm:$0xff]
    %v9624 = vld [vmem:[#allocation13 + $0x290] sm:$0xff]
    %v9625 = vld [vmem:[#allocation13 + $0x298] sm:$0xff]
    %v9626 = vld [vmem:[#allocation13 + $0x2a0] sm:$0xff]
    %v9627 = vld [vmem:[#allocation13 + $0x2a8] sm:$0xff]
    %v9628 = vld [vmem:[#allocation13 + $0x2b0] sm:$0xff]
    %v9629 = vld [vmem:[#allocation13 + $0x2b8] sm:$0xff]
    %v9630 = vld [vmem:[#allocation13 + $0x2c0] sm:$0xff]
    %v9631 = vld [vmem:[#allocation13 + $0x2c8] sm:$0xff]
    %v9632 = vld [vmem:[#allocation13 + $0x2d0] sm:$0xff]
    %v9633 = vld [vmem:[#allocation13 + $0x2d8] sm:$0xff]
    %v9634 = vld [vmem:[#allocation13 + $0x2e0] sm:$0xff]
    %v9635 = vld [vmem:[#allocation13 + $0x2e8] sm:$0xff]
    %v9636 = vld [vmem:[#allocation13 + $0x2f0] sm:$0xff]
    %v9637 = vld [vmem:[#allocation13 + $0x2f8] sm:$0xff]
    %v9638 = vld [vmem:[#allocation13 + $0x300] sm:$0xff]
    %v9639 = vld [vmem:[#allocation13 + $0x308] sm:$0xff]
    %v9640 = vld [vmem:[#allocation13 + $0x310] sm:$0xff]
    %v9641 = vld [vmem:[#allocation13 + $0x318] sm:$0xff]
    %v9642 = vld [vmem:[#allocation13 + $0x320] sm:$0xff]
    %v9643 = vld [vmem:[#allocation13 + $0x328] sm:$0xff]
    %v9644 = vld [vmem:[#allocation13 + $0x330] sm:$0xff]
    %v9645 = vld [vmem:[#allocation13 + $0x338] sm:$0xff]
    %v9646 = vld [vmem:[#allocation13 + $0x340] sm:$0xff]
    %v9647 = vld [vmem:[#allocation13 + $0x348] sm:$0xff]
    %v9648 = vld [vmem:[#allocation13 + $0x350] sm:$0xff]
    %v9649 = vld [vmem:[#allocation13 + $0x358] sm:$0xff]
    %v9650 = vld [vmem:[#allocation13 + $0x360] sm:$0xff]
    %v9651 = vld [vmem:[#allocation13 + $0x368] sm:$0xff]
    %v9652 = vld [vmem:[#allocation13 + $0x370] sm:$0xff]
    %v9653 = vld [vmem:[#allocation13 + $0x378] sm:$0xff]
    %v9654 = vld [vmem:[#allocation13 + $0x380] sm:$0xff]
    %v9655 = vld [vmem:[#allocation13 + $0x388] sm:$0xff]
    %v9656 = vld [vmem:[#allocation13 + $0x390] sm:$0xff]
    %v9657 = vld [vmem:[#allocation13 + $0x398] sm:$0xff]
    %v9658 = vld [vmem:[#allocation13 + $0x3a0] sm:$0xff]
    %v9659 = vld [vmem:[#allocation13 + $0x3a8] sm:$0xff]
    %v9660 = vld [vmem:[#allocation13 + $0x3b0] sm:$0xff]
    %v9661 = vld [vmem:[#allocation13 + $0x3b8] sm:$0xff]
    %v9662 = vld [vmem:[#allocation13 + $0x3c0] sm:$0xff]
    %v9663 = vld [vmem:[#allocation13 + $0x3c8] sm:$0xff]
    %v9664 = vld [vmem:[#allocation13 + $0x3d0] sm:$0xff]
    %v9665 = vld [vmem:[#allocation13 + $0x3d8] sm:$0xff]
    %v9666 = vld [vmem:[#allocation13 + $0x3e0] sm:$0xff]
    %v9667 = vld [vmem:[#allocation13 + $0x3e8] sm:$0xff]
    %v9668 = vld [vmem:[#allocation13 + $0x3f0] sm:$0xff]
    %v9669 = vld [vmem:[#allocation13 + $0x3f8] sm:$0xff]
    %v9670 = vld [vmem:[#allocation13 + $0x400] sm:$0xff]
    %v9671 = vld [vmem:[#allocation13 + $0x408] sm:$0xff]
    %v9672 = vld [vmem:[#allocation13 + $0x410] sm:$0xff]
    %v9673 = vld [vmem:[#allocation13 + $0x418] sm:$0xff]
    %v9674 = vld [vmem:[#allocation13 + $0x420] sm:$0xff]
    %v9675 = vld [vmem:[#allocation13 + $0x428] sm:$0xff]
    %v9676 = vld [vmem:[#allocation13 + $0x430] sm:$0xff]
    %v9677 = vld [vmem:[#allocation13 + $0x438] sm:$0xff]
    %v9678 = vld [vmem:[#allocation13 + $0x440] sm:$0xff]
    %v9679 = vld [vmem:[#allocation13 + $0x448] sm:$0xff]
    %v9680 = vld [vmem:[#allocation13 + $0x450] sm:$0xff]
    %v9681 = vld [vmem:[#allocation13 + $0x458] sm:$0xff]
    %v9682 = vld [vmem:[#allocation13 + $0x460] sm:$0xff]
    %v9683 = vld [vmem:[#allocation13 + $0x468] sm:$0xff]
    %v9684 = vld [vmem:[#allocation13 + $0x470] sm:$0xff]
    %v9685 = vld [vmem:[#allocation13 + $0x478] sm:$0xff]
    %v9686 = vld [vmem:[#allocation13 + $0x480] sm:$0xff]
    %v9687 = vld [vmem:[#allocation13 + $0x488] sm:$0xff]
    %v9688 = vld [vmem:[#allocation13 + $0x490] sm:$0xff]
    %v9689 = vld [vmem:[#allocation13 + $0x498] sm:$0xff]
    %v9690 = vld [vmem:[#allocation13 + $0x4a0] sm:$0xff]
    %v9691 = vld [vmem:[#allocation13 + $0x4a8] sm:$0xff]
    %v9692 = vld [vmem:[#allocation13 + $0x4b0] sm:$0xff]
    %v9693 = vld [vmem:[#allocation13 + $0x4b8] sm:$0xff]
    %v9694 = vld [vmem:[#allocation13 + $0x4c0] sm:$0xff]
    %v9695 = vld [vmem:[#allocation13 + $0x4c8] sm:$0xff]
    %v9696 = vld [vmem:[#allocation13 + $0x4d0] sm:$0xff]
    %v9697 = vld [vmem:[#allocation13 + $0x4d8] sm:$0xff]
    %v9698 = vld [vmem:[#allocation13 + $0x4e0] sm:$0xff]
    %v9699 = vld [vmem:[#allocation13 + $0x4e8] sm:$0xff]
    %v9700 = vld [vmem:[#allocation13 + $0x4f0] sm:$0xff]
    %v9701 = vld [vmem:[#allocation13 + $0x4f8] sm:$0xff]
    %v9702 = vld [vmem:[#allocation13 + $0x500] sm:$0xff]
    %v9703 = vld [vmem:[#allocation13 + $0x508] sm:$0xff]
    %v9704 = vld [vmem:[#allocation13 + $0x510] sm:$0xff]
    %v9705 = vld [vmem:[#allocation13 + $0x518] sm:$0xff]
    %v9706 = vld [vmem:[#allocation13 + $0x520] sm:$0xff]
    %v9707 = vld [vmem:[#allocation13 + $0x528] sm:$0xff]
    %v9708 = vld [vmem:[#allocation13 + $0x530] sm:$0xff]
    %v9709 = vld [vmem:[#allocation13 + $0x538] sm:$0xff]
    %v9710 = vld [vmem:[#allocation13 + $0x540] sm:$0xff]
    %v9711 = vld [vmem:[#allocation13 + $0x548] sm:$0xff]
    %v9712 = vld [vmem:[#allocation13 + $0x550] sm:$0xff]
    %v9713 = vld [vmem:[#allocation13 + $0x558] sm:$0xff]
    %v9714 = vld [vmem:[#allocation13 + $0x560] sm:$0xff]
    %v9715 = vld [vmem:[#allocation13 + $0x568] sm:$0xff]
    %v9716 = vld [vmem:[#allocation13 + $0x570] sm:$0xff]
    %v9717 = vld [vmem:[#allocation13 + $0x578] sm:$0xff]
    %v9718 = vld [vmem:[#allocation13 + $0x580] sm:$0xff]
    %v9719 = vld [vmem:[#allocation13 + $0x588] sm:$0xff]
    %v9720 = vld [vmem:[#allocation13 + $0x590] sm:$0xff]
    %v9721 = vld [vmem:[#allocation13 + $0x598] sm:$0xff]
    %v9722 = vld [vmem:[#allocation13 + $0x5a0] sm:$0xff]
    %v9723 = vld [vmem:[#allocation13 + $0x5a8] sm:$0xff]
    %v9724 = vld [vmem:[#allocation13 + $0x5b0] sm:$0xff]
    %v9725 = vld [vmem:[#allocation13 + $0x5b8] sm:$0xff]
    %v9726 = vld [vmem:[#allocation13 + $0x5c0] sm:$0xff]
    %v9727 = vld [vmem:[#allocation13 + $0x5c8] sm:$0xff]
    %v9728 = vld [vmem:[#allocation13 + $0x5d0] sm:$0xff]
    %v9729 = vld [vmem:[#allocation13 + $0x5d8] sm:$0xff]
    %v9730 = vld [vmem:[#allocation13 + $0x5e0] sm:$0xff]
    %v9731 = vld [vmem:[#allocation13 + $0x5e8] sm:$0xff]
    %v9732 = vld [vmem:[#allocation13 + $0x5f0] sm:$0xff]
    %v9733 = vld [vmem:[#allocation13 + $0x5f8] sm:$0xff]
    %v9734 = vld [vmem:[#allocation13 + $0x600] sm:$0xff]
    %v9735 = vld [vmem:[#allocation13 + $0x608] sm:$0xff]
    %v9736 = vld [vmem:[#allocation13 + $0x610] sm:$0xff]
    %v9737 = vld [vmem:[#allocation13 + $0x618] sm:$0xff]
    %v9738 = vld [vmem:[#allocation13 + $0x620] sm:$0xff]
    %v9739 = vld [vmem:[#allocation13 + $0x628] sm:$0xff]
    %v9740 = vld [vmem:[#allocation13 + $0x630] sm:$0xff]
    %v9741 = vld [vmem:[#allocation13 + $0x638] sm:$0xff]
    %v9742 = vld [vmem:[#allocation13 + $0x640] sm:$0xff]
    %v9743 = vld [vmem:[#allocation13 + $0x648] sm:$0xff]
    %v9744 = vld [vmem:[#allocation13 + $0x650] sm:$0xff]
    %v9745 = vld [vmem:[#allocation13 + $0x658] sm:$0xff]
    %v9746 = vld [vmem:[#allocation13 + $0x660] sm:$0xff]
    %v9747 = vld [vmem:[#allocation13 + $0x668] sm:$0xff]
    %v9748 = vld [vmem:[#allocation13 + $0x670] sm:$0xff]
    %v9749 = vld [vmem:[#allocation13 + $0x678] sm:$0xff]
    %v9750 = vld [vmem:[#allocation13 + $0x680] sm:$0xff]
    %v9751 = vld [vmem:[#allocation13 + $0x688] sm:$0xff]
    %v9752 = vld [vmem:[#allocation13 + $0x690] sm:$0xff]
    %v9753 = vld [vmem:[#allocation13 + $0x698] sm:$0xff]
    %v9754 = vld [vmem:[#allocation13 + $0x6a0] sm:$0xff]
    %v9755 = vld [vmem:[#allocation13 + $0x6a8] sm:$0xff]
    %v9756 = vld [vmem:[#allocation13 + $0x6b0] sm:$0xff]
    %v9757 = vld [vmem:[#allocation13 + $0x6b8] sm:$0xff]
    %v9758 = vld [vmem:[#allocation13 + $0x6c0] sm:$0xff]
    %v9759 = vld [vmem:[#allocation13 + $0x6c8] sm:$0xff]
    %v9760 = vld [vmem:[#allocation13 + $0x6d0] sm:$0xff]
    %v9761 = vld [vmem:[#allocation13 + $0x6d8] sm:$0xff]
    %v9762 = vld [vmem:[#allocation13 + $0x6e0] sm:$0xff]
    %v9763 = vld [vmem:[#allocation13 + $0x6e8] sm:$0xff]
    %v9764 = vld [vmem:[#allocation13 + $0x6f0] sm:$0xff]
    %v9765 = vld [vmem:[#allocation13 + $0x6f8] sm:$0xff]
    %v9766 = vunpack.c.l.bf16 %v9542
    %v9767 = vunpack.c.h.bf16 %v9542
    %v9768 = vunpack.c.l.bf16 %v9543
    %v9769 = vunpack.c.h.bf16 %v9543
    %v9770 = vunpack.c.l.bf16 %v9544
    %v9771 = vunpack.c.h.bf16 %v9544
    %v9772 = vunpack.c.l.bf16 %v9545
    %v9773 = vunpack.c.h.bf16 %v9545
    %v9774 = vunpack.c.l.bf16 %v9546
    %v9775 = vunpack.c.h.bf16 %v9546
    %v9776 = vunpack.c.l.bf16 %v9547
    %v9777 = vunpack.c.h.bf16 %v9547
    %v9778 = vunpack.c.l.bf16 %v9548
    %v9779 = vunpack.c.h.bf16 %v9548
    %v9780 = vunpack.c.l.bf16 %v9549
    %v9781 = vunpack.c.h.bf16 %v9549
    %v9782 = vunpack.c.l.bf16 %v9550
    %v9783 = vunpack.c.h.bf16 %v9550
    %v9784 = vunpack.c.l.bf16 %v9551
    %v9785 = vunpack.c.h.bf16 %v9551
    %v9786 = vunpack.c.l.bf16 %v9552
    %v9787 = vunpack.c.h.bf16 %v9552
    %v9788 = vunpack.c.l.bf16 %v9553
    %v9789 = vunpack.c.h.bf16 %v9553
    %v9790 = vunpack.c.l.bf16 %v9554
    %v9791 = vunpack.c.h.bf16 %v9554
    %v9792 = vunpack.c.l.bf16 %v9555
    %v9793 = vunpack.c.h.bf16 %v9555
    %v9794 = vunpack.c.l.bf16 %v9556
    %v9795 = vunpack.c.h.bf16 %v9556
    %v9796 = vunpack.c.l.bf16 %v9557
    %v9797 = vunpack.c.h.bf16 %v9557
    %v9798 = vunpack.c.l.bf16 %v9558
    %v9799 = vunpack.c.h.bf16 %v9558
    %v9800 = vunpack.c.l.bf16 %v9559
    %v9801 = vunpack.c.h.bf16 %v9559
    %v9802 = vunpack.c.l.bf16 %v9560
    %v9803 = vunpack.c.h.bf16 %v9560
    %v9804 = vunpack.c.l.bf16 %v9561
    %v9805 = vunpack.c.h.bf16 %v9561
    %v9806 = vunpack.c.l.bf16 %v9562
    %v9807 = vunpack.c.h.bf16 %v9562
    %v9808 = vunpack.c.l.bf16 %v9563
    %v9809 = vunpack.c.h.bf16 %v9563
    %v9810 = vunpack.c.l.bf16 %v9564
    %v9811 = vunpack.c.h.bf16 %v9564
    %v9812 = vunpack.c.l.bf16 %v9565
    %v9813 = vunpack.c.h.bf16 %v9565
    %v9814 = vunpack.c.l.bf16 %v9566
    %v9815 = vunpack.c.h.bf16 %v9566
    %v9816 = vunpack.c.l.bf16 %v9567
    %v9817 = vunpack.c.h.bf16 %v9567
    %v9818 = vunpack.c.l.bf16 %v9568
    %v9819 = vunpack.c.h.bf16 %v9568
    %v9820 = vunpack.c.l.bf16 %v9569
    %v9821 = vunpack.c.h.bf16 %v9569
    %v9822 = vunpack.c.l.bf16 %v9570
    %v9823 = vunpack.c.h.bf16 %v9570
    %v9824 = vunpack.c.l.bf16 %v9571
    %v9825 = vunpack.c.h.bf16 %v9571
    %v9826 = vunpack.c.l.bf16 %v9572
    %v9827 = vunpack.c.h.bf16 %v9572
    %v9828 = vunpack.c.l.bf16 %v9573
    %v9829 = vunpack.c.h.bf16 %v9573
    %v9830 = vunpack.c.l.bf16 %v9574
    %v9831 = vunpack.c.h.bf16 %v9574
    %v9832 = vunpack.c.l.bf16 %v9575
    %v9833 = vunpack.c.h.bf16 %v9575
    %v9834 = vunpack.c.l.bf16 %v9576
    %v9835 = vunpack.c.h.bf16 %v9576
    %v9836 = vunpack.c.l.bf16 %v9577
    %v9837 = vunpack.c.h.bf16 %v9577
    %v9838 = vunpack.c.l.bf16 %v9578
    %v9839 = vunpack.c.h.bf16 %v9578
    %v9840 = vunpack.c.l.bf16 %v9579
    %v9841 = vunpack.c.h.bf16 %v9579
    %v9842 = vunpack.c.l.bf16 %v9580
    %v9843 = vunpack.c.h.bf16 %v9580
    %v9844 = vunpack.c.l.bf16 %v9581
    %v9845 = vunpack.c.h.bf16 %v9581
    %v9846 = vunpack.c.l.bf16 %v9582
    %v9847 = vunpack.c.h.bf16 %v9582
    %v9848 = vunpack.c.l.bf16 %v9583
    %v9849 = vunpack.c.h.bf16 %v9583
    %v9850 = vunpack.c.l.bf16 %v9584
    %v9851 = vunpack.c.h.bf16 %v9584
    %v9852 = vunpack.c.l.bf16 %v9585
    %v9853 = vunpack.c.h.bf16 %v9585
    %v9854 = vunpack.c.l.bf16 %v9586
    %v9855 = vunpack.c.h.bf16 %v9586
    %v9856 = vunpack.c.l.bf16 %v9587
    %v9857 = vunpack.c.h.bf16 %v9587
    %v9858 = vunpack.c.l.bf16 %v9588
    %v9859 = vunpack.c.h.bf16 %v9588
    %v9860 = vunpack.c.l.bf16 %v9589
    %v9861 = vunpack.c.h.bf16 %v9589
    %v9862 = vunpack.c.l.bf16 %v9590
    %v9863 = vunpack.c.h.bf16 %v9590
    %v9864 = vunpack.c.l.bf16 %v9591
    %v9865 = vunpack.c.h.bf16 %v9591
    %v9866 = vunpack.c.l.bf16 %v9592
    %v9867 = vunpack.c.h.bf16 %v9592
    %v9868 = vunpack.c.l.bf16 %v9593
    %v9869 = vunpack.c.h.bf16 %v9593
    %v9870 = vunpack.c.l.bf16 %v9594
    %v9871 = vunpack.c.h.bf16 %v9594
    %v9872 = vunpack.c.l.bf16 %v9595
    %v9873 = vunpack.c.h.bf16 %v9595
    %v9874 = vunpack.c.l.bf16 %v9596
    %v9875 = vunpack.c.h.bf16 %v9596
    %v9876 = vunpack.c.l.bf16 %v9597
    %v9877 = vunpack.c.h.bf16 %v9597
    %v9878 = vunpack.c.l.bf16 %v9598
    %v9879 = vunpack.c.h.bf16 %v9598
    %v9880 = vunpack.c.l.bf16 %v9599
    %v9881 = vunpack.c.h.bf16 %v9599
    %v9882 = vunpack.c.l.bf16 %v9600
    %v9883 = vunpack.c.h.bf16 %v9600
    %v9884 = vunpack.c.l.bf16 %v9601
    %v9885 = vunpack.c.h.bf16 %v9601
    %v9886 = vunpack.c.l.bf16 %v9602
    %v9887 = vunpack.c.h.bf16 %v9602
    %v9888 = vunpack.c.l.bf16 %v9603
    %v9889 = vunpack.c.h.bf16 %v9603
    %v9890 = vunpack.c.l.bf16 %v9604
    %v9891 = vunpack.c.h.bf16 %v9604
    %v9892 = vunpack.c.l.bf16 %v9605
    %v9893 = vunpack.c.h.bf16 %v9605
    %v9894 = vunpack.c.l.bf16 %v9606
    %v9895 = vunpack.c.h.bf16 %v9606
    %v9896 = vunpack.c.l.bf16 %v9607
    %v9897 = vunpack.c.h.bf16 %v9607
    %v9898 = vunpack.c.l.bf16 %v9608
    %v9899 = vunpack.c.h.bf16 %v9608
    %v9900 = vunpack.c.l.bf16 %v9609
    %v9901 = vunpack.c.h.bf16 %v9609
    %v9902 = vunpack.c.l.bf16 %v9610
    %v9903 = vunpack.c.h.bf16 %v9610
    %v9904 = vunpack.c.l.bf16 %v9611
    %v9905 = vunpack.c.h.bf16 %v9611
    %v9906 = vunpack.c.l.bf16 %v9612
    %v9907 = vunpack.c.h.bf16 %v9612
    %v9908 = vunpack.c.l.bf16 %v9613
    %v9909 = vunpack.c.h.bf16 %v9613
    %v9910 = vunpack.c.l.bf16 %v9614
    %v9911 = vunpack.c.h.bf16 %v9614
    %v9912 = vunpack.c.l.bf16 %v9615
    %v9913 = vunpack.c.h.bf16 %v9615
    %v9914 = vunpack.c.l.bf16 %v9616
    %v9915 = vunpack.c.h.bf16 %v9616
    %v9916 = vunpack.c.l.bf16 %v9617
    %v9917 = vunpack.c.h.bf16 %v9617
    %v9918 = vunpack.c.l.bf16 %v9618
    %v9919 = vunpack.c.h.bf16 %v9618
    %v9920 = vunpack.c.l.bf16 %v9619
    %v9921 = vunpack.c.h.bf16 %v9619
    %v9922 = vunpack.c.l.bf16 %v9620
    %v9923 = vunpack.c.h.bf16 %v9620
    %v9924 = vunpack.c.l.bf16 %v9621
    %v9925 = vunpack.c.h.bf16 %v9621
    %v9926 = vunpack.c.l.bf16 %v9622
    %v9927 = vunpack.c.h.bf16 %v9622
    %v9928 = vunpack.c.l.bf16 %v9623
    %v9929 = vunpack.c.h.bf16 %v9623
    %v9930 = vunpack.c.l.bf16 %v9624
    %v9931 = vunpack.c.h.bf16 %v9624
    %v9932 = vunpack.c.l.bf16 %v9625
    %v9933 = vunpack.c.h.bf16 %v9625
    %v9934 = vunpack.c.l.bf16 %v9626
    %v9935 = vunpack.c.h.bf16 %v9626
    %v9936 = vunpack.c.l.bf16 %v9627
    %v9937 = vunpack.c.h.bf16 %v9627
    %v9938 = vunpack.c.l.bf16 %v9628
    %v9939 = vunpack.c.h.bf16 %v9628
    %v9940 = vunpack.c.l.bf16 %v9629
    %v9941 = vunpack.c.h.bf16 %v9629
    %v9942 = vunpack.c.l.bf16 %v9630
    %v9943 = vunpack.c.h.bf16 %v9630
    %v9944 = vunpack.c.l.bf16 %v9631
    %v9945 = vunpack.c.h.bf16 %v9631
    %v9946 = vunpack.c.l.bf16 %v9632
    %v9947 = vunpack.c.h.bf16 %v9632
    %v9948 = vunpack.c.l.bf16 %v9633
    %v9949 = vunpack.c.h.bf16 %v9633
    %v9950 = vunpack.c.l.bf16 %v9634
    %v9951 = vunpack.c.h.bf16 %v9634
    %v9952 = vunpack.c.l.bf16 %v9635
    %v9953 = vunpack.c.h.bf16 %v9635
    %v9954 = vunpack.c.l.bf16 %v9636
    %v9955 = vunpack.c.h.bf16 %v9636
    %v9956 = vunpack.c.l.bf16 %v9637
    %v9957 = vunpack.c.h.bf16 %v9637
    %v9958 = vunpack.c.l.bf16 %v9638
    %v9959 = vunpack.c.h.bf16 %v9638
    %v9960 = vunpack.c.l.bf16 %v9639
    %v9961 = vunpack.c.h.bf16 %v9639
    %v9962 = vunpack.c.l.bf16 %v9640
    %v9963 = vunpack.c.h.bf16 %v9640
    %v9964 = vunpack.c.l.bf16 %v9641
    %v9965 = vunpack.c.h.bf16 %v9641
    %v9966 = vunpack.c.l.bf16 %v9642
    %v9967 = vunpack.c.h.bf16 %v9642
    %v9968 = vunpack.c.l.bf16 %v9643
    %v9969 = vunpack.c.h.bf16 %v9643
    %v9970 = vunpack.c.l.bf16 %v9644
    %v9971 = vunpack.c.h.bf16 %v9644
    %v9972 = vunpack.c.l.bf16 %v9645
    %v9973 = vunpack.c.h.bf16 %v9645
    %v9974 = vunpack.c.l.bf16 %v9646
    %v9975 = vunpack.c.h.bf16 %v9646
    %v9976 = vunpack.c.l.bf16 %v9647
    %v9977 = vunpack.c.h.bf16 %v9647
    %v9978 = vunpack.c.l.bf16 %v9648
    %v9979 = vunpack.c.h.bf16 %v9648
    %v9980 = vunpack.c.l.bf16 %v9649
    %v9981 = vunpack.c.h.bf16 %v9649
    %v9982 = vunpack.c.l.bf16 %v9650
    %v9983 = vunpack.c.h.bf16 %v9650
    %v9984 = vunpack.c.l.bf16 %v9651
    %v9985 = vunpack.c.h.bf16 %v9651
    %v9986 = vunpack.c.l.bf16 %v9652
    %v9987 = vunpack.c.h.bf16 %v9652
    %v9988 = vunpack.c.l.bf16 %v9653
    %v9989 = vunpack.c.h.bf16 %v9653
    %v9990 = vunpack.c.l.bf16 %v9654
    %v9991 = vunpack.c.h.bf16 %v9654
    %v9992 = vunpack.c.l.bf16 %v9655
    %v9993 = vunpack.c.h.bf16 %v9655
    %v9994 = vunpack.c.l.bf16 %v9656
    %v9995 = vunpack.c.h.bf16 %v9656
    %v9996 = vunpack.c.l.bf16 %v9657
    %v9997 = vunpack.c.h.bf16 %v9657
    %v9998 = vunpack.c.l.bf16 %v9658
    %v9999 = vunpack.c.h.bf16 %v9658
    %v10000 = vunpack.c.l.bf16 %v9659
    %v10001 = vunpack.c.h.bf16 %v9659
    %v10002 = vunpack.c.l.bf16 %v9660
    %v10003 = vunpack.c.h.bf16 %v9660
    %v10004 = vunpack.c.l.bf16 %v9661
    %v10005 = vunpack.c.h.bf16 %v9661
    %v10006 = vunpack.c.l.bf16 %v9662
    %v10007 = vunpack.c.h.bf16 %v9662
    %v10008 = vunpack.c.l.bf16 %v9663
    %v10009 = vunpack.c.h.bf16 %v9663
    %v10010 = vunpack.c.l.bf16 %v9664
    %v10011 = vunpack.c.h.bf16 %v9664
    %v10012 = vunpack.c.l.bf16 %v9665
    %v10013 = vunpack.c.h.bf16 %v9665
    %v10014 = vunpack.c.l.bf16 %v9666
    %v10015 = vunpack.c.h.bf16 %v9666
    %v10016 = vunpack.c.l.bf16 %v9667
    %v10017 = vunpack.c.h.bf16 %v9667
    %v10018 = vunpack.c.l.bf16 %v9668
    %v10019 = vunpack.c.h.bf16 %v9668
    %v10020 = vunpack.c.l.bf16 %v9669
    %v10021 = vunpack.c.h.bf16 %v9669
    %v10022 = vunpack.c.l.bf16 %v9670
    %v10023 = vunpack.c.h.bf16 %v9670
    %v10024 = vunpack.c.l.bf16 %v9671
    %v10025 = vunpack.c.h.bf16 %v9671
    %v10026 = vunpack.c.l.bf16 %v9672
    %v10027 = vunpack.c.h.bf16 %v9672
    %v10028 = vunpack.c.l.bf16 %v9673
    %v10029 = vunpack.c.h.bf16 %v9673
    %v10030 = vunpack.c.l.bf16 %v9674
    %v10031 = vunpack.c.h.bf16 %v9674
    %v10032 = vunpack.c.l.bf16 %v9675
    %v10033 = vunpack.c.h.bf16 %v9675
    %v10034 = vunpack.c.l.bf16 %v9676
    %v10035 = vunpack.c.h.bf16 %v9676
    %v10036 = vunpack.c.l.bf16 %v9677
    %v10037 = vunpack.c.h.bf16 %v9677
    %v10038 = vunpack.c.l.bf16 %v9678
    %v10039 = vunpack.c.h.bf16 %v9678
    %v10040 = vunpack.c.l.bf16 %v9679
    %v10041 = vunpack.c.h.bf16 %v9679
    %v10042 = vunpack.c.l.bf16 %v9680
    %v10043 = vunpack.c.h.bf16 %v9680
    %v10044 = vunpack.c.l.bf16 %v9681
    %v10045 = vunpack.c.h.bf16 %v9681
    %v10046 = vunpack.c.l.bf16 %v9682
    %v10047 = vunpack.c.h.bf16 %v9682
    %v10048 = vunpack.c.l.bf16 %v9683
    %v10049 = vunpack.c.h.bf16 %v9683
    %v10050 = vunpack.c.l.bf16 %v9684
    %v10051 = vunpack.c.h.bf16 %v9684
    %v10052 = vunpack.c.l.bf16 %v9685
    %v10053 = vunpack.c.h.bf16 %v9685
    %v10054 = vunpack.c.l.bf16 %v9686
    %v10055 = vunpack.c.h.bf16 %v9686
    %v10056 = vunpack.c.l.bf16 %v9687
    %v10057 = vunpack.c.h.bf16 %v9687
    %v10058 = vunpack.c.l.bf16 %v9688
    %v10059 = vunpack.c.h.bf16 %v9688
    %v10060 = vunpack.c.l.bf16 %v9689
    %v10061 = vunpack.c.h.bf16 %v9689
    %v10062 = vunpack.c.l.bf16 %v9690
    %v10063 = vunpack.c.h.bf16 %v9690
    %v10064 = vunpack.c.l.bf16 %v9691
    %v10065 = vunpack.c.h.bf16 %v9691
    %v10066 = vunpack.c.l.bf16 %v9692
    %v10067 = vunpack.c.h.bf16 %v9692
    %v10068 = vunpack.c.l.bf16 %v9693
    %v10069 = vunpack.c.h.bf16 %v9693
    %v10070 = vunpack.c.l.bf16 %v9694
    %v10071 = vunpack.c.h.bf16 %v9694
    %v10072 = vunpack.c.l.bf16 %v9695
    %v10073 = vunpack.c.h.bf16 %v9695
    %v10074 = vunpack.c.l.bf16 %v9696
    %v10075 = vunpack.c.h.bf16 %v9696
    %v10076 = vunpack.c.l.bf16 %v9697
    %v10077 = vunpack.c.h.bf16 %v9697
    %v10078 = vunpack.c.l.bf16 %v9698
    %v10079 = vunpack.c.h.bf16 %v9698
    %v10080 = vunpack.c.l.bf16 %v9699
    %v10081 = vunpack.c.h.bf16 %v9699
    %v10082 = vunpack.c.l.bf16 %v9700
    %v10083 = vunpack.c.h.bf16 %v9700
    %v10084 = vunpack.c.l.bf16 %v9701
    %v10085 = vunpack.c.h.bf16 %v9701
    %v10086 = vunpack.c.l.bf16 %v9702
    %v10087 = vunpack.c.h.bf16 %v9702
    %v10088 = vunpack.c.l.bf16 %v9703
    %v10089 = vunpack.c.h.bf16 %v9703
    %v10090 = vunpack.c.l.bf16 %v9704
    %v10091 = vunpack.c.h.bf16 %v9704
    %v10092 = vunpack.c.l.bf16 %v9705
    %v10093 = vunpack.c.h.bf16 %v9705
    %v10094 = vunpack.c.l.bf16 %v9706
    %v10095 = vunpack.c.h.bf16 %v9706
    %v10096 = vunpack.c.l.bf16 %v9707
    %v10097 = vunpack.c.h.bf16 %v9707
    %v10098 = vunpack.c.l.bf16 %v9708
    %v10099 = vunpack.c.h.bf16 %v9708
    %v10100 = vunpack.c.l.bf16 %v9709
    %v10101 = vunpack.c.h.bf16 %v9709
    %v10102 = vunpack.c.l.bf16 %v9710
    %v10103 = vunpack.c.h.bf16 %v9710
    %v10104 = vunpack.c.l.bf16 %v9711
    %v10105 = vunpack.c.h.bf16 %v9711
    %v10106 = vunpack.c.l.bf16 %v9712
    %v10107 = vunpack.c.h.bf16 %v9712
    %v10108 = vunpack.c.l.bf16 %v9713
    %v10109 = vunpack.c.h.bf16 %v9713
    %v10110 = vunpack.c.l.bf16 %v9714
    %v10111 = vunpack.c.h.bf16 %v9714
    %v10112 = vunpack.c.l.bf16 %v9715
    %v10113 = vunpack.c.h.bf16 %v9715
    %v10114 = vunpack.c.l.bf16 %v9716
    %v10115 = vunpack.c.h.bf16 %v9716
    %v10116 = vunpack.c.l.bf16 %v9717
    %v10117 = vunpack.c.h.bf16 %v9717
    %v10118 = vunpack.c.l.bf16 %v9718
    %v10119 = vunpack.c.h.bf16 %v9718
    %v10120 = vunpack.c.l.bf16 %v9719
    %v10121 = vunpack.c.h.bf16 %v9719
    %v10122 = vunpack.c.l.bf16 %v9720
    %v10123 = vunpack.c.h.bf16 %v9720
    %v10124 = vunpack.c.l.bf16 %v9721
    %v10125 = vunpack.c.h.bf16 %v9721
    %v10126 = vunpack.c.l.bf16 %v9722
    %v10127 = vunpack.c.h.bf16 %v9722
    %v10128 = vunpack.c.l.bf16 %v9723
    %v10129 = vunpack.c.h.bf16 %v9723
    %v10130 = vunpack.c.l.bf16 %v9724
    %v10131 = vunpack.c.h.bf16 %v9724
    %v10132 = vunpack.c.l.bf16 %v9725
    %v10133 = vunpack.c.h.bf16 %v9725
    %v10134 = vunpack.c.l.bf16 %v9726
    %v10135 = vunpack.c.h.bf16 %v9726
    %v10136 = vunpack.c.l.bf16 %v9727
    %v10137 = vunpack.c.h.bf16 %v9727
    %v10138 = vunpack.c.l.bf16 %v9728
    %v10139 = vunpack.c.h.bf16 %v9728
    %v10140 = vunpack.c.l.bf16 %v9729
    %v10141 = vunpack.c.h.bf16 %v9729
    %v10142 = vunpack.c.l.bf16 %v9730
    %v10143 = vunpack.c.h.bf16 %v9730
    %v10144 = vunpack.c.l.bf16 %v9731
    %v10145 = vunpack.c.h.bf16 %v9731
    %v10146 = vunpack.c.l.bf16 %v9732
    %v10147 = vunpack.c.h.bf16 %v9732
    %v10148 = vunpack.c.l.bf16 %v9733
    %v10149 = vunpack.c.h.bf16 %v9733
    %v10150 = vunpack.c.l.bf16 %v9734
    %v10151 = vunpack.c.h.bf16 %v9734
    %v10152 = vunpack.c.l.bf16 %v9735
    %v10153 = vunpack.c.h.bf16 %v9735
    %v10154 = vunpack.c.l.bf16 %v9736
    %v10155 = vunpack.c.h.bf16 %v9736
    %v10156 = vunpack.c.l.bf16 %v9737
    %v10157 = vunpack.c.h.bf16 %v9737
    %v10158 = vunpack.c.l.bf16 %v9738
    %v10159 = vunpack.c.h.bf16 %v9738
    %v10160 = vunpack.c.l.bf16 %v9739
    %v10161 = vunpack.c.h.bf16 %v9739
    %v10162 = vunpack.c.l.bf16 %v9740
    %v10163 = vunpack.c.h.bf16 %v9740
    %v10164 = vunpack.c.l.bf16 %v9741
    %v10165 = vunpack.c.h.bf16 %v9741
    %v10166 = vunpack.c.l.bf16 %v9742
    %v10167 = vunpack.c.h.bf16 %v9742
    %v10168 = vunpack.c.l.bf16 %v9743
    %v10169 = vunpack.c.h.bf16 %v9743
    %v10170 = vunpack.c.l.bf16 %v9744
    %v10171 = vunpack.c.h.bf16 %v9744
    %v10172 = vunpack.c.l.bf16 %v9745
    %v10173 = vunpack.c.h.bf16 %v9745
    %v10174 = vunpack.c.l.bf16 %v9746
    %v10175 = vunpack.c.h.bf16 %v9746
    %v10176 = vunpack.c.l.bf16 %v9747
    %v10177 = vunpack.c.h.bf16 %v9747
    %v10178 = vunpack.c.l.bf16 %v9748
    %v10179 = vunpack.c.h.bf16 %v9748
    %v10180 = vunpack.c.l.bf16 %v9749
    %v10181 = vunpack.c.h.bf16 %v9749
    %v10182 = vunpack.c.l.bf16 %v9750
    %v10183 = vunpack.c.h.bf16 %v9750
    %v10184 = vunpack.c.l.bf16 %v9751
    %v10185 = vunpack.c.h.bf16 %v9751
    %v10186 = vunpack.c.l.bf16 %v9752
    %v10187 = vunpack.c.h.bf16 %v9752
    %v10188 = vunpack.c.l.bf16 %v9753
    %v10189 = vunpack.c.h.bf16 %v9753
    %v10190 = vunpack.c.l.bf16 %v9754
    %v10191 = vunpack.c.h.bf16 %v9754
    %v10192 = vunpack.c.l.bf16 %v9755
    %v10193 = vunpack.c.h.bf16 %v9755
    %v10194 = vunpack.c.l.bf16 %v9756
    %v10195 = vunpack.c.h.bf16 %v9756
    %v10196 = vunpack.c.l.bf16 %v9757
    %v10197 = vunpack.c.h.bf16 %v9757
    %v10198 = vunpack.c.l.bf16 %v9758
    %v10199 = vunpack.c.h.bf16 %v9758
    %v10200 = vunpack.c.l.bf16 %v9759
    %v10201 = vunpack.c.h.bf16 %v9759
    %v10202 = vunpack.c.l.bf16 %v9760
    %v10203 = vunpack.c.h.bf16 %v9760
    %v10204 = vunpack.c.l.bf16 %v9761
    %v10205 = vunpack.c.h.bf16 %v9761
    %v10206 = vunpack.c.l.bf16 %v9762
    %v10207 = vunpack.c.h.bf16 %v9762
    %v10208 = vunpack.c.l.bf16 %v9763
    %v10209 = vunpack.c.h.bf16 %v9763
    %v10210 = vunpack.c.l.bf16 %v9764
    %v10211 = vunpack.c.h.bf16 %v9764
    %v10212 = vunpack.c.l.bf16 %v9765
    %v10213 = vunpack.c.h.bf16 %v9765
    %10214 = vmatprep.subr.mxu0 %v9827
    %10215 = vmatpush1.msra.mxu0 %v9826
    %10216 = vmatprep.subr.mxu0 %v9823
    %10217 = vmatpush1.msra.mxu0 %v9822
    %10218 = vmatprep.subr.mxu0 %v9819
    %10219 = vmatpush1.msra.mxu0 %v9818
    %10220 = vmatprep.subr.mxu0 %v9815
    %10221 = vmatpush1.msra.mxu0 %v9814
    %10222 = vmatprep.subr.mxu0 %v9811
    %10223 = vmatpush1.msra.mxu0 %v9810
    %10224 = vmatprep.subr.mxu0 %v9807
    %10225 = vmatpush1.msra.mxu0 %v9806
    %10226 = vmatprep.subr.mxu0 %v9803
    %10227 = vmatpush1.msra.mxu0 %v9802
    %10228 = vmatprep.subr.mxu0 %v9799
    %10229 = vmatpush1.msra.mxu0 %v9798
    %10230 = vmatprep.subr.mxu0 %v9795
    %10231 = vmatpush1.msra.mxu0 %v9794
    %10232 = vmatprep.subr.mxu0 %v9791
    %10233 = vmatpush1.msra.mxu0 %v9790
    %10234 = vmatprep.subr.mxu0 %v9787
    %10235 = vmatpush1.msra.mxu0 %v9786
    %10236 = vmatprep.subr.mxu0 %v9783
    %10237 = vmatpush1.msra.mxu0 %v9782
    %10238 = vmatprep.subr.mxu0 %v9779
    %10239 = vmatpush1.msra.mxu0 %v9778
    %10240 = vmatprep.subr.mxu0 %v9775
    %10241 = vmatpush1.msra.mxu0 %v9774
    %10242 = vmatprep.subr.mxu0 %v9771
    %10243 = vmatpush1.msra.mxu0 %v9770
    %10244 = vmatprep.subr.mxu0 %v9767
    %10245 = vmatpush1.msra.mxu0 %v9766
    %10246 = vmatprep.subr.mxu0 %v9891
    %10247 = vmatpush2.msra.mxu0 %v9890
    %10248 = vmatprep.subr.mxu0 %v9887
    %10249 = vmatpush2.msra.mxu0 %v9886
    %10250 = vmatprep.subr.mxu0 %v9883
    %10251 = vmatpush2.msra.mxu0 %v9882
    %10252 = vmatprep.subr.mxu0 %v9879
    %10253 = vmatpush2.msra.mxu0 %v9878
    %10254 = vmatprep.subr.mxu0 %v9875
    %10255 = vmatpush2.msra.mxu0 %v9874
    %10256 = vmatprep.subr.mxu0 %v9871
    %10257 = vmatpush2.msra.mxu0 %v9870
    %10258 = vmatprep.subr.mxu0 %v9867
    %10259 = vmatpush2.msra.mxu0 %v9866
    %10260 = vmatprep.subr.mxu0 %v9863
    %10261 = vmatpush2.msra.mxu0 %v9862
    %10262 = vmatprep.subr.mxu0 %v9859
    %10263 = vmatpush2.msra.mxu0 %v9858
    %10264 = vmatprep.subr.mxu0 %v9855
    %10265 = vmatpush2.msra.mxu0 %v9854
    %10266 = vmatprep.subr.mxu0 %v9851
    %10267 = vmatpush2.msra.mxu0 %v9850
    %10268 = vmatprep.subr.mxu0 %v9847
    %10269 = vmatpush2.msra.mxu0 %v9846
    %10270 = vmatprep.subr.mxu0 %v9843
    %10271 = vmatpush2.msra.mxu0 %v9842
    %10272 = vmatprep.subr.mxu0 %v9839
    %10273 = vmatpush2.msra.mxu0 %v9838
    %10274 = vmatprep.subr.mxu0 %v9835
    %10275 = vmatpush2.msra.mxu0 %v9834
    %10276 = vmatprep.subr.mxu0 %v9831
    %10277 = vmatpush2.msra.mxu0 %v9830
    %10278 = vmatprep.mubr.f32.mxu0 %v9536
    %10279 = vmatmul.mubr.f32.gmra.mxu0 %v9535
    %v10280 = vpop.f32.mrf.mxu0
    %v10281 = vadd.f32 0.0, %v10280
    %v10282 = vpop.f32.mrf.mxu0
    %v10283 = vadd.f32 0.0, %v10282
    %10284 = vdwg.mxu0
    %10285 = vmatprep.subr.mxu0 %v9955
    %10286 = vmatpush1.msra.mxu0 %v9954
    %10287 = vmatprep.subr.mxu0 %v9951
    %10288 = vmatpush1.msra.mxu0 %v9950
    %10289 = vmatprep.subr.mxu0 %v9947
    %10290 = vmatpush1.msra.mxu0 %v9946
    %10291 = vmatprep.subr.mxu0 %v9943
    %10292 = vmatpush1.msra.mxu0 %v9942
    %10293 = vmatprep.subr.mxu0 %v9939
    %10294 = vmatpush1.msra.mxu0 %v9938
    %10295 = vmatprep.subr.mxu0 %v9935
    %10296 = vmatpush1.msra.mxu0 %v9934
    %10297 = vmatprep.subr.mxu0 %v9931
    %10298 = vmatpush1.msra.mxu0 %v9930
    %10299 = vmatprep.subr.mxu0 %v9927
    %10300 = vmatpush1.msra.mxu0 %v9926
    %10301 = vmatprep.subr.mxu0 %v9923
    %10302 = vmatpush1.msra.mxu0 %v9922
    %10303 = vmatprep.subr.mxu0 %v9919
    %10304 = vmatpush1.msra.mxu0 %v9918
    %10305 = vmatprep.subr.mxu0 %v9915
    %10306 = vmatpush1.msra.mxu0 %v9914
    %10307 = vmatprep.subr.mxu0 %v9911
    %10308 = vmatpush1.msra.mxu0 %v9910
    %10309 = vmatprep.subr.mxu0 %v9907
    %10310 = vmatpush1.msra.mxu0 %v9906
    %10311 = vmatprep.subr.mxu0 %v9903
    %10312 = vmatpush1.msra.mxu0 %v9902
    %10313 = vmatprep.subr.mxu0 %v9899
    %10314 = vmatpush1.msra.mxu0 %v9898
    %10315 = vmatprep.subr.mxu0 %v9895
    %10316 = vmatpush1.msra.mxu0 %v9894
    %10317 = vmatprep.subr.mxu0 %v10019
    %10318 = vmatpush2.msra.mxu0 %v10018
    %10319 = vmatprep.subr.mxu0 %v10015
    %10320 = vmatpush2.msra.mxu0 %v10014
    %10321 = vmatprep.subr.mxu0 %v10011
    %10322 = vmatpush2.msra.mxu0 %v10010
    %10323 = vmatprep.subr.mxu0 %v10007
    %10324 = vmatpush2.msra.mxu0 %v10006
    %10325 = vmatprep.subr.mxu0 %v10003
    %10326 = vmatpush2.msra.mxu0 %v10002
    %10327 = vmatprep.subr.mxu0 %v9999
    %10328 = vmatpush2.msra.mxu0 %v9998
    %10329 = vmatprep.subr.mxu0 %v9995
    %10330 = vmatpush2.msra.mxu0 %v9994
    %10331 = vmatprep.subr.mxu0 %v9991
    %10332 = vmatpush2.msra.mxu0 %v9990
    %10333 = vmatprep.subr.mxu0 %v9987
    %10334 = vmatpush2.msra.mxu0 %v9986
    %10335 = vmatprep.subr.mxu0 %v9983
    %10336 = vmatpush2.msra.mxu0 %v9982
    %10337 = vmatprep.subr.mxu0 %v9979
    %10338 = vmatpush2.msra.mxu0 %v9978
    %10339 = vmatprep.subr.mxu0 %v9975
    %10340 = vmatpush2.msra.mxu0 %v9974
    %10341 = vmatprep.subr.mxu0 %v9971
    %10342 = vmatpush2.msra.mxu0 %v9970
    %10343 = vmatprep.subr.mxu0 %v9967
    %10344 = vmatpush2.msra.mxu0 %v9966
    %10345 = vmatprep.subr.mxu0 %v9963
    %10346 = vmatpush2.msra.mxu0 %v9962
    %10347 = vmatprep.subr.mxu0 %v9959
    %10348 = vmatpush2.msra.mxu0 %v9958
    %10349 = vmatprep.mubr.f32.mxu0 %v9538
    %10350 = vmatmul.mubr.f32.gmra.mxu0 %v9537
    %v10351 = vpop.f32.mrf.mxu0
    %v10352 = vadd.f32 %v10281, %v10351
    %v10353 = vpop.f32.mrf.mxu0
    %v10354 = vadd.f32 %v10283, %v10353
    %10355 = vdwg.mxu0
    %10356 = vmatprep.subr.mxu0 %v10083
    %10357 = vmatpush1.msra.mxu0 %v10082
    %10358 = vmatprep.subr.mxu0 %v10079
    %10359 = vmatpush1.msra.mxu0 %v10078
    %10360 = vmatprep.subr.mxu0 %v10075
    %10361 = vmatpush1.msra.mxu0 %v10074
    %10362 = vmatprep.subr.mxu0 %v10071
    %10363 = vmatpush1.msra.mxu0 %v10070
    %10364 = vmatprep.subr.mxu0 %v10067
    %10365 = vmatpush1.msra.mxu0 %v10066
    %10366 = vmatprep.subr.mxu0 %v10063
    %10367 = vmatpush1.msra.mxu0 %v10062
    %10368 = vmatprep.subr.mxu0 %v10059
    %10369 = vmatpush1.msra.mxu0 %v10058
    %10370 = vmatprep.subr.mxu0 %v10055
    %10371 = vmatpush1.msra.mxu0 %v10054
    %10372 = vmatprep.subr.mxu0 %v10051
    %10373 = vmatpush1.msra.mxu0 %v10050
    %10374 = vmatprep.subr.mxu0 %v10047
    %10375 = vmatpush1.msra.mxu0 %v10046
    %10376 = vmatprep.subr.mxu0 %v10043
    %10377 = vmatpush1.msra.mxu0 %v10042
    %10378 = vmatprep.subr.mxu0 %v10039
    %10379 = vmatpush1.msra.mxu0 %v10038
    %10380 = vmatprep.subr.mxu0 %v10035
    %10381 = vmatpush1.msra.mxu0 %v10034
    %10382 = vmatprep.subr.mxu0 %v10031
    %10383 = vmatpush1.msra.mxu0 %v10030
    %10384 = vmatprep.subr.mxu0 %v10027
    %10385 = vmatpush1.msra.mxu0 %v10026
    %10386 = vmatprep.subr.mxu0 %v10023
    %10387 = vmatpush1.msra.mxu0 %v10022
    %10388 = vmatprep.subr.mxu0 %v10147
    %10389 = vmatpush2.msra.mxu0 %v10146
    %10390 = vmatprep.subr.mxu0 %v10143
    %10391 = vmatpush2.msra.mxu0 %v10142
    %10392 = vmatprep.subr.mxu0 %v10139
    %10393 = vmatpush2.msra.mxu0 %v10138
    %10394 = vmatprep.subr.mxu0 %v10135
    %10395 = vmatpush2.msra.mxu0 %v10134
    %10396 = vmatprep.subr.mxu0 %v10131
    %10397 = vmatpush2.msra.mxu0 %v10130
    %10398 = vmatprep.subr.mxu0 %v10127
    %10399 = vmatpush2.msra.mxu0 %v10126
    %10400 = vmatprep.subr.mxu0 %v10123
    %10401 = vmatpush2.msra.mxu0 %v10122
    %10402 = vmatprep.subr.mxu0 %v10119
    %10403 = vmatpush2.msra.mxu0 %v10118
    %10404 = vmatprep.subr.mxu0 %v10115
    %10405 = vmatpush2.msra.mxu0 %v10114
    %10406 = vmatprep.subr.mxu0 %v10111
    %10407 = vmatpush2.msra.mxu0 %v10110
    %10408 = vmatprep.subr.mxu0 %v10107
    %10409 = vmatpush2.msra.mxu0 %v10106
    %10410 = vmatprep.subr.mxu0 %v10103
    %10411 = vmatpush2.msra.mxu0 %v10102
    %10412 = vmatprep.subr.mxu0 %v10099
    %10413 = vmatpush2.msra.mxu0 %v10098
    %10414 = vmatprep.subr.mxu0 %v10095
    %10415 = vmatpush2.msra.mxu0 %v10094
    %10416 = vmatprep.subr.mxu0 %v10091
    %10417 = vmatpush2.msra.mxu0 %v10090
    %10418 = vmatprep.subr.mxu0 %v10087
    %10419 = vmatpush2.msra.mxu0 %v10086
    %10420 = vmatprep.mubr.f32.mxu0 %v9540
    %10421 = vmatmul.mubr.f32.gmra.mxu0 %v9539
    %v10422 = vpop.f32.mrf.mxu0
    %v10423 = vadd.f32 %v10352, %v10422
    %v10424 = vpop.f32.mrf.mxu0
    %v10425 = vadd.f32 %v10354, %v10424
    %10426 = vdwg.mxu0
    %10427 = vmatprep.subr.mxu0 %v10211
    %10428 = vmatpush1.msra.mxu0 %v10210
    %10429 = vmatprep.subr.mxu0 %v10207
    %10430 = vmatpush1.msra.mxu0 %v10206
    %10431 = vmatprep.subr.mxu0 %v10203
    %10432 = vmatpush1.msra.mxu0 %v10202
    %10433 = vmatprep.subr.mxu0 %v10199
    %10434 = vmatpush1.msra.mxu0 %v10198
    %10435 = vmatprep.subr.mxu0 %v10195
    %10436 = vmatpush1.msra.mxu0 %v10194
    %10437 = vmatprep.subr.mxu0 %v10191
    %10438 = vmatpush1.msra.mxu0 %v10190
    %10439 = vmatprep.subr.mxu0 %v10187
    %10440 = vmatpush1.msra.mxu0 %v10186
    %10441 = vmatprep.subr.mxu0 %v10183
    %10442 = vmatpush1.msra.mxu0 %v10182
    %10443 = vmatprep.subr.mxu0 %v10179
    %10444 = vmatpush1.msra.mxu0 %v10178
    %10445 = vmatprep.subr.mxu0 %v10175
    %10446 = vmatpush1.msra.mxu0 %v10174
    %10447 = vmatprep.subr.mxu0 %v10171
    %10448 = vmatpush1.msra.mxu0 %v10170
    %10449 = vmatprep.subr.mxu0 %v10167
    %10450 = vmatpush1.msra.mxu0 %v10166
    %10451 = vmatprep.subr.mxu0 %v10163
    %10452 = vmatpush1.msra.mxu0 %v10162
    %10453 = vmatprep.subr.mxu0 %v10159
    %10454 = vmatpush1.msra.mxu0 %v10158
    %10455 = vmatprep.subr.mxu0 %v10155
    %10456 = vmatpush1.msra.mxu0 %v10154
    %10457 = vmatprep.subr.mxu0 %v10151
    %10458 = vmatpush1.msra.mxu0 %v10150
    %10459 = vmatprep.subr.mxu0 0.0
    %10460 = vmatpush2.msra.mxu0 0.0
    %10461 = vmatprep.subr.mxu0 0.0
    %10462 = vmatpush2.msra.mxu0 0.0
    %10463 = vmatprep.subr.mxu0 0.0
    %10464 = vmatpush2.msra.mxu0 0.0
    %10465 = vmatprep.subr.mxu0 0.0
    %10466 = vmatpush2.msra.mxu0 0.0
    %10467 = vmatprep.subr.mxu0 0.0
    %10468 = vmatpush2.msra.mxu0 0.0
    %10469 = vmatprep.subr.mxu0 0.0
    %10470 = vmatpush2.msra.mxu0 0.0
    %10471 = vmatprep.subr.mxu0 0.0
    %10472 = vmatpush2.msra.mxu0 0.0
    %10473 = vmatprep.subr.mxu0 0.0
    %10474 = vmatpush2.msra.mxu0 0.0
    %10475 = vmatprep.subr.mxu0 0.0
    %10476 = vmatpush2.msra.mxu0 0.0
    %10477 = vmatprep.subr.mxu0 0.0
    %10478 = vmatpush2.msra.mxu0 0.0
    %10479 = vmatprep.subr.mxu0 0.0
    %10480 = vmatpush2.msra.mxu0 0.0
    %10481 = vmatprep.subr.mxu0 0.0
    %10482 = vmatpush2.msra.mxu0 0.0
    %10483 = vmatprep.subr.mxu0 0.0
    %10484 = vmatpush2.msra.mxu0 0.0
    %10485 = vmatprep.subr.mxu0 0.0
    %10486 = vmatpush2.msra.mxu0 0.0
    %10487 = vmatprep.subr.mxu0 0.0
    %10488 = vmatpush2.msra.mxu0 0.0
    %10489 = vmatprep.subr.mxu0 0.0
    %10490 = vmatpush2.msra.mxu0 0.0
    %10491 = vmatprep.mubr.f32.mxu0 0.0
    %10492 = vmatmul.mubr.f32.gmra.mxu0 %v9541
    %v10493 = vpop.f32.mrf.mxu0
    %v10494 = vadd.f32 %v10423, %v10493
    %v10495 = vpop.f32.mrf.mxu0
    %v10496 = vadd.f32 %v10425, %v10495
    %10497 = vdwg.mxu0
    %10498 = vmatprep.subr.mxu0 %v9829
    %10499 = vmatpush1.msra.mxu0 %v9828
    %10500 = vmatprep.subr.mxu0 %v9825
    %10501 = vmatpush1.msra.mxu0 %v9824
    %10502 = vmatprep.subr.mxu0 %v9821
    %10503 = vmatpush1.msra.mxu0 %v9820
    %10504 = vmatprep.subr.mxu0 %v9817
    %10505 = vmatpush1.msra.mxu0 %v9816
    %10506 = vmatprep.subr.mxu0 %v9813
    %10507 = vmatpush1.msra.mxu0 %v9812
    %10508 = vmatprep.subr.mxu0 %v9809
    %10509 = vmatpush1.msra.mxu0 %v9808
    %10510 = vmatprep.subr.mxu0 %v9805
    %10511 = vmatpush1.msra.mxu0 %v9804
    %10512 = vmatprep.subr.mxu0 %v9801
    %10513 = vmatpush1.msra.mxu0 %v9800
    %10514 = vmatprep.subr.mxu0 %v9797
    %10515 = vmatpush1.msra.mxu0 %v9796
    %10516 = vmatprep.subr.mxu0 %v9793
    %10517 = vmatpush1.msra.mxu0 %v9792
    %10518 = vmatprep.subr.mxu0 %v9789
    %10519 = vmatpush1.msra.mxu0 %v9788
    %10520 = vmatprep.subr.mxu0 %v9785
    %10521 = vmatpush1.msra.mxu0 %v9784
    %10522 = vmatprep.subr.mxu0 %v9781
    %10523 = vmatpush1.msra.mxu0 %v9780
    %10524 = vmatprep.subr.mxu0 %v9777
    %10525 = vmatpush1.msra.mxu0 %v9776
    %10526 = vmatprep.subr.mxu0 %v9773
    %10527 = vmatpush1.msra.mxu0 %v9772
    %10528 = vmatprep.subr.mxu0 %v9769
    %10529 = vmatpush1.msra.mxu0 %v9768
    %10530 = vmatprep.subr.mxu0 %v9893
    %10531 = vmatpush2.msra.mxu0 %v9892
    %10532 = vmatprep.subr.mxu0 %v9889
    %10533 = vmatpush2.msra.mxu0 %v9888
    %10534 = vmatprep.subr.mxu0 %v9885
    %10535 = vmatpush2.msra.mxu0 %v9884
    %10536 = vmatprep.subr.mxu0 %v9881
    %10537 = vmatpush2.msra.mxu0 %v9880
    %10538 = vmatprep.subr.mxu0 %v9877
    %10539 = vmatpush2.msra.mxu0 %v9876
    %10540 = vmatprep.subr.mxu0 %v9873
    %10541 = vmatpush2.msra.mxu0 %v9872
    %10542 = vmatprep.subr.mxu0 %v9869
    %10543 = vmatpush2.msra.mxu0 %v9868
    %10544 = vmatprep.subr.mxu0 %v9865
    %10545 = vmatpush2.msra.mxu0 %v9864
    %10546 = vmatprep.subr.mxu0 %v9861
    %10547 = vmatpush2.msra.mxu0 %v9860
    %10548 = vmatprep.subr.mxu0 %v9857
    %10549 = vmatpush2.msra.mxu0 %v9856
    %10550 = vmatprep.subr.mxu0 %v9853
    %10551 = vmatpush2.msra.mxu0 %v9852
    %10552 = vmatprep.subr.mxu0 %v9849
    %10553 = vmatpush2.msra.mxu0 %v9848
    %10554 = vmatprep.subr.mxu0 %v9845
    %10555 = vmatpush2.msra.mxu0 %v9844
    %10556 = vmatprep.subr.mxu0 %v9841
    %10557 = vmatpush2.msra.mxu0 %v9840
    %10558 = vmatprep.subr.mxu0 %v9837
    %10559 = vmatpush2.msra.mxu0 %v9836
    %10560 = vmatprep.subr.mxu0 %v9833
    %10561 = vmatpush2.msra.mxu0 %v9832
    %10562 = vmatprep.mubr.f32.mxu0 %v9536
    %10563 = vmatmul.mubr.f32.gmra.mxu0 %v9535
    %v10564 = vpop.f32.mrf.mxu0
    %v10565 = vadd.f32 0.0, %v10564
    %v10566 = vpop.f32.mrf.mxu0
    %v10567 = vadd.f32 0.0, %v10566
    %10568 = vdwg.mxu0
    %10569 = vmatprep.subr.mxu0 %v9957
    %10570 = vmatpush1.msra.mxu0 %v9956
    %10571 = vmatprep.subr.mxu0 %v9953
    %10572 = vmatpush1.msra.mxu0 %v9952
    %10573 = vmatprep.subr.mxu0 %v9949
    %10574 = vmatpush1.msra.mxu0 %v9948
    %10575 = vmatprep.subr.mxu0 %v9945
    %10576 = vmatpush1.msra.mxu0 %v9944
    %10577 = vmatprep.subr.mxu0 %v9941
    %10578 = vmatpush1.msra.mxu0 %v9940
    %10579 = vmatprep.subr.mxu0 %v9937
    %10580 = vmatpush1.msra.mxu0 %v9936
    %10581 = vmatprep.subr.mxu0 %v9933
    %10582 = vmatpush1.msra.mxu0 %v9932
    %10583 = vmatprep.subr.mxu0 %v9929
    %10584 = vmatpush1.msra.mxu0 %v9928
    %10585 = vmatprep.subr.mxu0 %v9925
    %10586 = vmatpush1.msra.mxu0 %v9924
    %10587 = vmatprep.subr.mxu0 %v9921
    %10588 = vmatpush1.msra.mxu0 %v9920
    %10589 = vmatprep.subr.mxu0 %v9917
    %10590 = vmatpush1.msra.mxu0 %v9916
    %10591 = vmatprep.subr.mxu0 %v9913
    %10592 = vmatpush1.msra.mxu0 %v9912
    %10593 = vmatprep.subr.mxu0 %v9909
    %10594 = vmatpush1.msra.mxu0 %v9908
    %10595 = vmatprep.subr.mxu0 %v9905
    %10596 = vmatpush1.msra.mxu0 %v9904
    %10597 = vmatprep.subr.mxu0 %v9901
    %10598 = vmatpush1.msra.mxu0 %v9900
    %10599 = vmatprep.subr.mxu0 %v9897
    %10600 = vmatpush1.msra.mxu0 %v9896
    %10601 = vmatprep.subr.mxu0 %v10021
    %10602 = vmatpush2.msra.mxu0 %v10020
    %10603 = vmatprep.subr.mxu0 %v10017
    %10604 = vmatpush2.msra.mxu0 %v10016
    %10605 = vmatprep.subr.mxu0 %v10013
    %10606 = vmatpush2.msra.mxu0 %v10012
    %10607 = vmatprep.subr.mxu0 %v10009
    %10608 = vmatpush2.msra.mxu0 %v10008
    %10609 = vmatprep.subr.mxu0 %v10005
    %10610 = vmatpush2.msra.mxu0 %v10004
    %10611 = vmatprep.subr.mxu0 %v10001
    %10612 = vmatpush2.msra.mxu0 %v10000
    %10613 = vmatprep.subr.mxu0 %v9997
    %10614 = vmatpush2.msra.mxu0 %v9996
    %10615 = vmatprep.subr.mxu0 %v9993
    %10616 = vmatpush2.msra.mxu0 %v9992
    %10617 = vmatprep.subr.mxu0 %v9989
    %10618 = vmatpush2.msra.mxu0 %v9988
    %10619 = vmatprep.subr.mxu0 %v9985
    %10620 = vmatpush2.msra.mxu0 %v9984
    %10621 = vmatprep.subr.mxu0 %v9981
    %10622 = vmatpush2.msra.mxu0 %v9980
    %10623 = vmatprep.subr.mxu0 %v9977
    %10624 = vmatpush2.msra.mxu0 %v9976
    %10625 = vmatprep.subr.mxu0 %v9973
    %10626 = vmatpush2.msra.mxu0 %v9972
    %10627 = vmatprep.subr.mxu0 %v9969
    %10628 = vmatpush2.msra.mxu0 %v9968
    %10629 = vmatprep.subr.mxu0 %v9965
    %10630 = vmatpush2.msra.mxu0 %v9964
    %10631 = vmatprep.subr.mxu0 %v9961
    %10632 = vmatpush2.msra.mxu0 %v9960
    %10633 = vmatprep.mubr.f32.mxu0 %v9538
    %10634 = vmatmul.mubr.f32.gmra.mxu0 %v9537
    %v10635 = vpop.f32.mrf.mxu0
    %v10636 = vadd.f32 %v10565, %v10635
    %v10637 = vpop.f32.mrf.mxu0
    %v10638 = vadd.f32 %v10567, %v10637
    %10639 = vdwg.mxu0
    %10640 = vmatprep.subr.mxu0 %v10085
    %10641 = vmatpush1.msra.mxu0 %v10084
    %10642 = vmatprep.subr.mxu0 %v10081
    %10643 = vmatpush1.msra.mxu0 %v10080
    %10644 = vmatprep.subr.mxu0 %v10077
    %10645 = vmatpush1.msra.mxu0 %v10076
    %10646 = vmatprep.subr.mxu0 %v10073
    %10647 = vmatpush1.msra.mxu0 %v10072
    %10648 = vmatprep.subr.mxu0 %v10069
    %10649 = vmatpush1.msra.mxu0 %v10068
    %10650 = vmatprep.subr.mxu0 %v10065
    %10651 = vmatpush1.msra.mxu0 %v10064
    %10652 = vmatprep.subr.mxu0 %v10061
    %10653 = vmatpush1.msra.mxu0 %v10060
    %10654 = vmatprep.subr.mxu0 %v10057
    %10655 = vmatpush1.msra.mxu0 %v10056
    %10656 = vmatprep.subr.mxu0 %v10053
    %10657 = vmatpush1.msra.mxu0 %v10052
    %10658 = vmatprep.subr.mxu0 %v10049
    %10659 = vmatpush1.msra.mxu0 %v10048
    %10660 = vmatprep.subr.mxu0 %v10045
    %10661 = vmatpush1.msra.mxu0 %v10044
    %10662 = vmatprep.subr.mxu0 %v10041
    %10663 = vmatpush1.msra.mxu0 %v10040
    %10664 = vmatprep.subr.mxu0 %v10037
    %10665 = vmatpush1.msra.mxu0 %v10036
    %10666 = vmatprep.subr.mxu0 %v10033
    %10667 = vmatpush1.msra.mxu0 %v10032
    %10668 = vmatprep.subr.mxu0 %v10029
    %10669 = vmatpush1.msra.mxu0 %v10028
    %10670 = vmatprep.subr.mxu0 %v10025
    %10671 = vmatpush1.msra.mxu0 %v10024
    %10672 = vmatprep.subr.mxu0 %v10149
    %10673 = vmatpush2.msra.mxu0 %v10148
    %10674 = vmatprep.subr.mxu0 %v10145
    %10675 = vmatpush2.msra.mxu0 %v10144
    %10676 = vmatprep.subr.mxu0 %v10141
    %10677 = vmatpush2.msra.mxu0 %v10140
    %10678 = vmatprep.subr.mxu0 %v10137
    %10679 = vmatpush2.msra.mxu0 %v10136
    %10680 = vmatprep.subr.mxu0 %v10133
    %10681 = vmatpush2.msra.mxu0 %v10132
    %10682 = vmatprep.subr.mxu0 %v10129
    %10683 = vmatpush2.msra.mxu0 %v10128
    %10684 = vmatprep.subr.mxu0 %v10125
    %10685 = vmatpush2.msra.mxu0 %v10124
    %10686 = vmatprep.subr.mxu0 %v10121
    %10687 = vmatpush2.msra.mxu0 %v10120
    %10688 = vmatprep.subr.mxu0 %v10117
    %10689 = vmatpush2.msra.mxu0 %v10116
    %10690 = vmatprep.subr.mxu0 %v10113
    %10691 = vmatpush2.msra.mxu0 %v10112
    %10692 = vmatprep.subr.mxu0 %v10109
    %10693 = vmatpush2.msra.mxu0 %v10108
    %10694 = vmatprep.subr.mxu0 %v10105
    %10695 = vmatpush2.msra.mxu0 %v10104
    %10696 = vmatprep.subr.mxu0 %v10101
    %10697 = vmatpush2.msra.mxu0 %v10100
    %10698 = vmatprep.subr.mxu0 %v10097
    %10699 = vmatpush2.msra.mxu0 %v10096
    %10700 = vmatprep.subr.mxu0 %v10093
    %10701 = vmatpush2.msra.mxu0 %v10092
    %10702 = vmatprep.subr.mxu0 %v10089
    %10703 = vmatpush2.msra.mxu0 %v10088
    %10704 = vmatprep.mubr.f32.mxu0 %v9540
    %10705 = vmatmul.mubr.f32.gmra.mxu0 %v9539
    %v10706 = vpop.f32.mrf.mxu0
    %v10707 = vadd.f32 %v10636, %v10706
    %v10708 = vpop.f32.mrf.mxu0
    %v10709 = vadd.f32 %v10638, %v10708
    %10710 = vdwg.mxu0
    %10711 = vmatprep.subr.mxu0 %v10213
    %10712 = vmatpush1.msra.mxu0 %v10212
    %10713 = vmatprep.subr.mxu0 %v10209
    %10714 = vmatpush1.msra.mxu0 %v10208
    %10715 = vmatprep.subr.mxu0 %v10205
    %10716 = vmatpush1.msra.mxu0 %v10204
    %10717 = vmatprep.subr.mxu0 %v10201
    %10718 = vmatpush1.msra.mxu0 %v10200
    %10719 = vmatprep.subr.mxu0 %v10197
    %10720 = vmatpush1.msra.mxu0 %v10196
    %10721 = vmatprep.subr.mxu0 %v10193
    %10722 = vmatpush1.msra.mxu0 %v10192
    %10723 = vmatprep.subr.mxu0 %v10189
    %10724 = vmatpush1.msra.mxu0 %v10188
    %10725 = vmatprep.subr.mxu0 %v10185
    %10726 = vmatpush1.msra.mxu0 %v10184
    %10727 = vmatprep.subr.mxu0 %v10181
    %10728 = vmatpush1.msra.mxu0 %v10180
    %10729 = vmatprep.subr.mxu0 %v10177
    %10730 = vmatpush1.msra.mxu0 %v10176
    %10731 = vmatprep.subr.mxu0 %v10173
    %10732 = vmatpush1.msra.mxu0 %v10172
    %10733 = vmatprep.subr.mxu0 %v10169
    %10734 = vmatpush1.msra.mxu0 %v10168
    %10735 = vmatprep.subr.mxu0 %v10165
    %10736 = vmatpush1.msra.mxu0 %v10164
    %10737 = vmatprep.subr.mxu0 %v10161
    %10738 = vmatpush1.msra.mxu0 %v10160
    %10739 = vmatprep.subr.mxu0 %v10157
    %10740 = vmatpush1.msra.mxu0 %v10156
    %10741 = vmatprep.subr.mxu0 %v10153
    %10742 = vmatpush1.msra.mxu0 %v10152
    %10743 = vmatprep.subr.mxu0 0.0
    %10744 = vmatpush2.msra.mxu0 0.0
    %10745 = vmatprep.subr.mxu0 0.0
    %10746 = vmatpush2.msra.mxu0 0.0
    %10747 = vmatprep.subr.mxu0 0.0
    %10748 = vmatpush2.msra.mxu0 0.0
    %10749 = vmatprep.subr.mxu0 0.0
    %10750 = vmatpush2.msra.mxu0 0.0
    %10751 = vmatprep.subr.mxu0 0.0
    %10752 = vmatpush2.msra.mxu0 0.0
    %10753 = vmatprep.subr.mxu0 0.0
    %10754 = vmatpush2.msra.mxu0 0.0
    %10755 = vmatprep.subr.mxu0 0.0
    %10756 = vmatpush2.msra.mxu0 0.0
    %10757 = vmatprep.subr.mxu0 0.0
    %10758 = vmatpush2.msra.mxu0 0.0
    %10759 = vmatprep.subr.mxu0 0.0
    %10760 = vmatpush2.msra.mxu0 0.0
    %10761 = vmatprep.subr.mxu0 0.0
    %10762 = vmatpush2.msra.mxu0 0.0
    %10763 = vmatprep.subr.mxu0 0.0
    %10764 = vmatpush2.msra.mxu0 0.0
    %10765 = vmatprep.subr.mxu0 0.0
    %10766 = vmatpush2.msra.mxu0 0.0
    %10767 = vmatprep.subr.mxu0 0.0
    %10768 = vmatpush2.msra.mxu0 0.0
    %10769 = vmatprep.subr.mxu0 0.0
    %10770 = vmatpush2.msra.mxu0 0.0
    %10771 = vmatprep.subr.mxu0 0.0
    %10772 = vmatpush2.msra.mxu0 0.0
    %10773 = vmatprep.subr.mxu0 0.0
    %10774 = vmatpush2.msra.mxu0 0.0
    %10775 = vmatprep.mubr.f32.mxu0 0.0
    %10776 = vmatmul.mubr.f32.gmra.mxu0 %v9541
    %v10777 = vpop.f32.mrf.mxu0
    %v10778 = vadd.f32 %v10707, %v10777
    %v10779 = vpop.f32.mrf.mxu0
    %v10780 = vadd.f32 %v10709, %v10779
    %10781 = vdwg.mxu0
    %v10782 = vld [vmem:[#allocation15] sm:$0xf]
    %v10783 = vld [vmem:[#allocation16] sm:$0xf]
    %v10784 = vrot.slane %v10494, 4
    %v10785 = vadd.f32 %v10494, %v10784
    %v10786 = vrot.slane %v10785, 2
    %v10787 = vadd.f32 %v10785, %v10786
    %v10788 = vrot.slane %v10787, 1
    %v10789 = vadd.f32 %v10787, %v10788
    %v10790 = vrot.slane %v10496, 4
    %v10791 = vadd.f32 %v10496, %v10790
    %v10792 = vrot.slane %v10791, 2
    %v10793 = vadd.f32 %v10791, %v10792
    %v10794 = vrot.slane %v10793, 1
    %v10795 = vadd.f32 %v10793, %v10794
    %v10796 = vrot.slane %v10778, 4
    %v10797 = vadd.f32 %v10778, %v10796
    %v10798 = vrot.slane %v10797, 2
    %v10799 = vadd.f32 %v10797, %v10798
    %v10800 = vrot.slane %v10799, 1
    %v10801 = vadd.f32 %v10799, %v10800
    %v10802 = vrot.slane %v10780, 4
    %v10803 = vadd.f32 %v10780, %v10802
    %v10804 = vrot.slane %v10803, 2
    %v10805 = vadd.f32 %v10803, %v10804
    %v10806 = vrot.slane %v10805, 1
    %v10807 = vadd.f32 %v10805, %v10806
    %v10808 = vmul.f32 %v10789, %v6537
    %v10809 = vmul.f32 %v10795, %v6537
    %v10810 = vmul.f32 %v10801, %v6537
    %v10811 = vmul.f32 %v10807, %v6537
    %v10812 = vsub.f32 %v10494, %v10808
    %v10813 = vsub.f32 %v10496, %v10809
    %v10814 = vsub.f32 %v10778, %v10810
    %v10815 = vsub.f32 %v10780, %v10811
    %v10816 = vmul.f32 %v10812, %v10812
    %v10817 = vmul.f32 %v10813, %v10813
    %v10818 = vmul.f32 %v10814, %v10814
    %v10819 = vmul.f32 %v10815, %v10815
    %v10820 = vrot.slane %v10816, 4
    %v10821 = vadd.f32 %v10816, %v10820
    %v10822 = vrot.slane %v10821, 2
    %v10823 = vadd.f32 %v10821, %v10822
    %v10824 = vrot.slane %v10823, 1
    %v10825 = vadd.f32 %v10823, %v10824
    %v10826 = vrot.slane %v10817, 4
    %v10827 = vadd.f32 %v10817, %v10826
    %v10828 = vrot.slane %v10827, 2
    %v10829 = vadd.f32 %v10827, %v10828
    %v10830 = vrot.slane %v10829, 1
    %v10831 = vadd.f32 %v10829, %v10830
    %v10832 = vrot.slane %v10818, 4
    %v10833 = vadd.f32 %v10818, %v10832
    %v10834 = vrot.slane %v10833, 2
    %v10835 = vadd.f32 %v10833, %v10834
    %v10836 = vrot.slane %v10835, 1
    %v10837 = vadd.f32 %v10835, %v10836
    %v10838 = vrot.slane %v10819, 4
    %v10839 = vadd.f32 %v10819, %v10838
    %v10840 = vrot.slane %v10839, 2
    %v10841 = vadd.f32 %v10839, %v10840
    %v10842 = vrot.slane %v10841, 1
    %v10843 = vadd.f32 %v10841, %v10842
    %v10844 = vmul.f32 %v10825, %v6537
    %v10845 = vmul.f32 %v10831, %v6537
    %v10846 = vmul.f32 %v10837, %v6537
    %v10847 = vmul.f32 %v10843, %v6537
    %v10848 = vadd.f32 %v10844, 1e-05
    %v10849 = vadd.f32 %v10845, 1e-05
    %v10850 = vadd.f32 %v10846, 1e-05
    %v10851 = vadd.f32 %v10847, 1e-05
    %v10852 = vrsqrt.pop %v10848
    %v10853 = vrsqrt.pop %v10849
    %v10854 = vrsqrt.pop %v10850
    %v10855 = vrsqrt.pop %v10851
    %v10860 = vcombine.low %v10852, %v10853
    %v10861 = vcombine.low %v10854, %v10855
    %v10863 = vunpack.c.l.s4 1966171168
    %v10864 = vunpack.c.0.s8 %v10863
    %v10865 = vlaneseq
    %v10866 = vshrl.u32 %v10865, 7
    %v10867 = vsub.s32 %v10864, %v10866
    %v10868 = vrot.slane %v10860, %v10867
    %v10870 = vunpack.c.l.s4 1966171168
    %v10871 = vunpack.c.0.s8 %v10870
    %v10872 = vlaneseq
    %v10873 = vshrl.u32 %v10872, 7
    %v10874 = vsub.s32 %v10871, %v10873
    %v10875 = vrot.slane %v10861, %v10874
    %v10876 = vcombine.low %v10868, %v10875
    %v10878 = vunpack.c.l.s4 1966171168
    %v10879 = vunpack.c.0.s8 %v10878
    %v10880 = vlaneseq
    %v10881 = vshrl.u32 %v10880, 7
    %v10882 = vsub.s32 %v10879, %v10881
    %v10883 = vrot.slane %v10876, %v10882
    %v10885 = vmul.f32 %v10782, %v10883
    %v10887 = vlaneseq
    %v10888 = vshrl.u32 %v10887, 7
    %v10889 = vsub.s32 0, %v10888
    %v10890 = vrot.slane %v10885, %v10889
    %v10891 = vlaneseq
    %v10892 = vshrl.u32 %v10891, 7
    %v10893 = vsub.s32 1, %v10892
    %v10894 = vrot.slane %v10885, %v10893
    %v10895 = vlaneseq
    %v10896 = vshrl.u32 %v10895, 7
    %v10897 = vsub.s32 2, %v10896
    %v10898 = vrot.slane %v10885, %v10897
    %v10899 = vlaneseq
    %v10900 = vshrl.u32 %v10899, 7
    %v10901 = vsub.s32 3, %v10900
    %v10902 = vrot.slane %v10885, %v10901
    %v10907 = vmul.f32 %v10808, %v10890
    %v10908 = vmul.f32 %v10809, %v10894
    %v10909 = vmul.f32 %v10810, %v10898
    %v10910 = vmul.f32 %v10811, %v10902
    %v10915 = vcombine.low %v10907, %v10908
    %v10916 = vcombine.low %v10909, %v10910
    %v10918 = vunpack.c.l.s4 1966171168
    %v10919 = vunpack.c.0.s8 %v10918
    %v10920 = vlaneseq
    %v10921 = vshrl.u32 %v10920, 7
    %v10922 = vsub.s32 %v10919, %v10921
    %v10923 = vrot.slane %v10915, %v10922
    %v10925 = vunpack.c.l.s4 1966171168
    %v10926 = vunpack.c.0.s8 %v10925
    %v10927 = vlaneseq
    %v10928 = vshrl.u32 %v10927, 7
    %v10929 = vsub.s32 %v10926, %v10928
    %v10930 = vrot.slane %v10916, %v10929
    %v10931 = vcombine.low %v10923, %v10930
    %v10933 = vunpack.c.l.s4 1966171168
    %v10934 = vunpack.c.0.s8 %v10933
    %v10935 = vlaneseq
    %v10936 = vshrl.u32 %v10935, 7
    %v10937 = vsub.s32 %v10934, %v10936
    %v10938 = vrot.slane %v10931, %v10937
    %v10940 = vsub.f32 %v10783, %v10938
    %v10941 = vmul.f32 %v10494, %v10890
    %v10942 = vmul.f32 %v10496, %v10894
    %v10943 = vmul.f32 %v10778, %v10898
    %v10944 = vmul.f32 %v10780, %v10902
    %v10946 = vlaneseq
    %v10947 = vshrl.u32 %v10946, 7
    %v10948 = vsub.s32 0, %v10947
    %v10949 = vrot.slane %v10940, %v10948
    %v10950 = vlaneseq
    %v10951 = vshrl.u32 %v10950, 7
    %v10952 = vsub.s32 1, %v10951
    %v10953 = vrot.slane %v10940, %v10952
    %v10954 = vlaneseq
    %v10955 = vshrl.u32 %v10954, 7
    %v10956 = vsub.s32 2, %v10955
    %v10957 = vrot.slane %v10940, %v10956
    %v10958 = vlaneseq
    %v10959 = vshrl.u32 %v10958, 7
    %v10960 = vsub.s32 3, %v10959
    %v10961 = vrot.slane %v10940, %v10960
    %v10966 = vadd.f32 %v10941, %v10949
    %v10967 = vadd.f32 %v10942, %v10953
    %v10968 = vadd.f32 %v10943, %v10957
    %v10969 = vadd.f32 %v10944, %v10961
    %v10970 = vmax.f32 %v10966, 0.0
    %v10971 = vmax.f32 %v10967, 0.0
    %v10972 = vmax.f32 %v10968, 0.0
    %v10973 = vmax.f32 %v10969, 0.0
    %v10974 = vld [vmem:[%s10] sm:$0xf]
    %v10975 = vld [vmem:[%s10 + $0x4] sm:$0xf]
    %v10976 = vld [vmem:[%s10 + $0x8] sm:$0xf]
    %v10977 = vld [vmem:[%s10 + $0xc] sm:$0xf]
    %v10978 = vld [vmem:[%s10 + $0x10] sm:$0xf]
    %v10979 = vld [vmem:[%s10 + $0x14] sm:$0xf]
    %v10980 = vld [vmem:[%s10 + $0x18] sm:$0xf]
    %v10981 = vld [vmem:[%s10 + $0x1c] sm:$0xf]
    %v10982 = vld [vmem:[%s10 + $0x20] sm:$0xf]
    %v10983 = vld [vmem:[%s10 + $0x24] sm:$0xf]
    %v10984 = vld [vmem:[%s10 + $0x28] sm:$0xf]
    %v10985 = vld [vmem:[%s10 + $0x2c] sm:$0xf]
    %v10986 = vld [vmem:[%s10 + $0x30] sm:$0xf]
    %v10987 = vld [vmem:[%s10 + $0x34] sm:$0xf]
    %v10988 = vld [vmem:[%s10 + $0x38] sm:$0xf]
    %v10989 = vld [vmem:[%s10 + $0x3c] sm:$0xf]
    %v10990 = vld [vmem:[%s10 + $0x40] sm:$0xf]
    %v10991 = vld [vmem:[%s10 + $0x44] sm:$0xf]
    %v10992 = vld [vmem:[%s10 + $0x48] sm:$0xf]
    %v10993 = vld [vmem:[%s10 + $0x4c] sm:$0xf]
    %v10994 = vld [vmem:[%s10 + $0x50] sm:$0xf]
    %v10995 = vld [vmem:[%s10 + $0x54] sm:$0xf]
    %v10996 = vld [vmem:[%s10 + $0x58] sm:$0xf]
    %v10997 = vld [vmem:[%s10 + $0x5c] sm:$0xf]
    %v10998 = vld [vmem:[%s10 + $0x60] sm:$0xf]
    %v10999 = vld [vmem:[%s10 + $0x64] sm:$0xf]
    %v11000 = vld [vmem:[%s10 + $0x68] sm:$0xf]
    %v11001 = vld [vmem:[%s10 + $0x6c] sm:$0xf]
    %v11002 = vld [vmem:[%s10 + $0x70] sm:$0xf]
    %v11003 = vld [vmem:[%s10 + $0x74] sm:$0xf]
    %v11004 = vld [vmem:[%s10 + $0x78] sm:$0xf]
    %v11005 = vld [vmem:[%s10 + $0x7c] sm:$0xf]
    %v11006 = vld [vmem:[%s10 + $0x80] sm:$0xf]
    %v11007 = vld [vmem:[%s10 + $0x84] sm:$0xf]
    %v11008 = vld [vmem:[%s10 + $0x88] sm:$0xf]
    %v11009 = vld [vmem:[%s10 + $0x8c] sm:$0xf]
    %v11010 = vld [vmem:[%s10 + $0x90] sm:$0xf]
    %v11011 = vld [vmem:[%s10 + $0x94] sm:$0xf]
    %v11012 = vld [vmem:[%s10 + $0x98] sm:$0xf]
    %v11013 = vld [vmem:[%s10 + $0x9c] sm:$0xf]
    %v11014 = vld [vmem:[%s10 + $0xa0] sm:$0xf]
    %v11015 = vld [vmem:[%s10 + $0xa4] sm:$0xf]
    %v11016 = vld [vmem:[%s10 + $0xa8] sm:$0xf]
    %v11017 = vld [vmem:[%s10 + $0xac] sm:$0xf]
    %v11018 = vld [vmem:[%s10 + $0xb0] sm:$0xf]
    %v11019 = vld [vmem:[%s10 + $0xb4] sm:$0xf]
    %v11020 = vld [vmem:[%s10 + $0xb8] sm:$0xf]
    %v11021 = vld [vmem:[%s10 + $0xbc] sm:$0xf]
    %v11022 = vld [vmem:[%s10 + $0xc0] sm:$0xf]
    %v11023 = vld [vmem:[%s10 + $0xc4] sm:$0xf]
    %v11024 = vld [vmem:[%s10 + $0xc8] sm:$0xf]
    %v11025 = vld [vmem:[%s10 + $0xcc] sm:$0xf]
    %v11026 = vld [vmem:[%s10 + $0xd0] sm:$0xf]
    %v11027 = vld [vmem:[%s10 + $0xd4] sm:$0xf]
    %v11028 = vld [vmem:[%s10 + $0xd8] sm:$0xf]
    %v11029 = vld [vmem:[%s10 + $0xdc] sm:$0xf]
    %v11030 = vld [vmem:[%s10 + $0xe0] sm:$0xf]
    %v11031 = vld [vmem:[%s10 + $0xe4] sm:$0xf]
    %v11032 = vld [vmem:[%s10 + $0xe8] sm:$0xf]
    %v11033 = vld [vmem:[%s10 + $0xec] sm:$0xf]
    %v11034 = vld [vmem:[%s10 + $0xf0] sm:$0xf]
    %v11035 = vld [vmem:[%s10 + $0xf4] sm:$0xf]
    %v11036 = vld [vmem:[%s10 + $0xf8] sm:$0xf]
    %v11037 = vld [vmem:[%s10 + $0xfc] sm:$0xf]
    %v11038 = vunpack.c.l.bf16 %v10974
    %v11039 = vunpack.c.l.bf16 %v10975
    %v11040 = vunpack.c.l.bf16 %v10976
    %v11041 = vunpack.c.l.bf16 %v10977
    %v11042 = vunpack.c.l.bf16 %v10978
    %v11043 = vunpack.c.l.bf16 %v10979
    %v11044 = vunpack.c.l.bf16 %v10980
    %v11045 = vunpack.c.l.bf16 %v10981
    %v11046 = vunpack.c.l.bf16 %v10982
    %v11047 = vunpack.c.l.bf16 %v10983
    %v11048 = vunpack.c.l.bf16 %v10984
    %v11049 = vunpack.c.l.bf16 %v10985
    %v11050 = vunpack.c.l.bf16 %v10986
    %v11051 = vunpack.c.l.bf16 %v10987
    %v11052 = vunpack.c.l.bf16 %v10988
    %v11053 = vunpack.c.l.bf16 %v10989
    %v11054 = vunpack.c.l.bf16 %v10990
    %v11055 = vunpack.c.l.bf16 %v10991
    %v11056 = vunpack.c.l.bf16 %v10992
    %v11057 = vunpack.c.l.bf16 %v10993
    %v11058 = vunpack.c.l.bf16 %v10994
    %v11059 = vunpack.c.l.bf16 %v10995
    %v11060 = vunpack.c.l.bf16 %v10996
    %v11061 = vunpack.c.l.bf16 %v10997
    %v11062 = vunpack.c.l.bf16 %v10998
    %v11063 = vunpack.c.l.bf16 %v10999
    %v11064 = vunpack.c.l.bf16 %v11000
    %v11065 = vunpack.c.l.bf16 %v11001
    %v11066 = vunpack.c.l.bf16 %v11002
    %v11067 = vunpack.c.l.bf16 %v11003
    %v11068 = vunpack.c.l.bf16 %v11004
    %v11069 = vunpack.c.l.bf16 %v11005
    %v11070 = vunpack.c.l.bf16 %v11006
    %v11071 = vunpack.c.l.bf16 %v11007
    %v11072 = vunpack.c.l.bf16 %v11008
    %v11073 = vunpack.c.l.bf16 %v11009
    %v11074 = vunpack.c.l.bf16 %v11010
    %v11075 = vunpack.c.l.bf16 %v11011
    %v11076 = vunpack.c.l.bf16 %v11012
    %v11077 = vunpack.c.l.bf16 %v11013
    %v11078 = vunpack.c.l.bf16 %v11014
    %v11079 = vunpack.c.l.bf16 %v11015
    %v11080 = vunpack.c.l.bf16 %v11016
    %v11081 = vunpack.c.l.bf16 %v11017
    %v11082 = vunpack.c.l.bf16 %v11018
    %v11083 = vunpack.c.l.bf16 %v11019
    %v11084 = vunpack.c.l.bf16 %v11020
    %v11085 = vunpack.c.l.bf16 %v11021
    %v11086 = vunpack.c.l.bf16 %v11022
    %v11087 = vunpack.c.l.bf16 %v11023
    %v11088 = vunpack.c.l.bf16 %v11024
    %v11089 = vunpack.c.l.bf16 %v11025
    %v11090 = vunpack.c.l.bf16 %v11026
    %v11091 = vunpack.c.l.bf16 %v11027
    %v11092 = vunpack.c.l.bf16 %v11028
    %v11093 = vunpack.c.l.bf16 %v11029
    %v11094 = vunpack.c.l.bf16 %v11030
    %v11095 = vunpack.c.l.bf16 %v11031
    %v11096 = vunpack.c.l.bf16 %v11032
    %v11097 = vunpack.c.l.bf16 %v11033
    %v11098 = vunpack.c.l.bf16 %v11034
    %v11099 = vunpack.c.l.bf16 %v11035
    %v11100 = vunpack.c.l.bf16 %v11036
    %v11101 = vunpack.c.l.bf16 %v11037
    %v11102 = vld [vmem:[#allocation18] sm:$0x1]
    %v11104 = vlaneseq
    %v11105 = vshrl.u32 %v11104, 7
    %v11106 = vsub.s32 0, %v11105
    %v11107 = vrot.slane %v11102, %v11106
    %11109 = vmatprep.subr.mxu0 0.0
    %11110 = vmatpush1.msra.mxu0 %v11053
    %11111 = vmatprep.subr.mxu0 0.0
    %11112 = vmatpush1.msra.mxu0 %v11052
    %11113 = vmatprep.subr.mxu0 0.0
    %11114 = vmatpush1.msra.mxu0 %v11051
    %11115 = vmatprep.subr.mxu0 0.0
    %11116 = vmatpush1.msra.mxu0 %v11050
    %11117 = vmatprep.subr.mxu0 0.0
    %11118 = vmatpush1.msra.mxu0 %v11049
    %11119 = vmatprep.subr.mxu0 0.0
    %11120 = vmatpush1.msra.mxu0 %v11048
    %11121 = vmatprep.subr.mxu0 0.0
    %11122 = vmatpush1.msra.mxu0 %v11047
    %11123 = vmatprep.subr.mxu0 0.0
    %11124 = vmatpush1.msra.mxu0 %v11046
    %11125 = vmatprep.subr.mxu0 0.0
    %11126 = vmatpush1.msra.mxu0 %v11045
    %11127 = vmatprep.subr.mxu0 0.0
    %11128 = vmatpush1.msra.mxu0 %v11044
    %11129 = vmatprep.subr.mxu0 0.0
    %11130 = vmatpush1.msra.mxu0 %v11043
    %11131 = vmatprep.subr.mxu0 0.0
    %11132 = vmatpush1.msra.mxu0 %v11042
    %11133 = vmatprep.subr.mxu0 0.0
    %11134 = vmatpush1.msra.mxu0 %v11041
    %11135 = vmatprep.subr.mxu0 0.0
    %11136 = vmatpush1.msra.mxu0 %v11040
    %11137 = vmatprep.subr.mxu0 0.0
    %11138 = vmatpush1.msra.mxu0 %v11039
    %11139 = vmatprep.subr.mxu0 0.0
    %11140 = vmatpush1.msra.mxu0 %v11038
    %11141 = vmatprep.subr.mxu0 0.0
    %11142 = vmatpush2.msra.mxu0 %v11069
    %11143 = vmatprep.subr.mxu0 0.0
    %11144 = vmatpush2.msra.mxu0 %v11068
    %11145 = vmatprep.subr.mxu0 0.0
    %11146 = vmatpush2.msra.mxu0 %v11067
    %11147 = vmatprep.subr.mxu0 0.0
    %11148 = vmatpush2.msra.mxu0 %v11066
    %11149 = vmatprep.subr.mxu0 0.0
    %11150 = vmatpush2.msra.mxu0 %v11065
    %11151 = vmatprep.subr.mxu0 0.0
    %11152 = vmatpush2.msra.mxu0 %v11064
    %11153 = vmatprep.subr.mxu0 0.0
    %11154 = vmatpush2.msra.mxu0 %v11063
    %11155 = vmatprep.subr.mxu0 0.0
    %11156 = vmatpush2.msra.mxu0 %v11062
    %11157 = vmatprep.subr.mxu0 0.0
    %11158 = vmatpush2.msra.mxu0 %v11061
    %11159 = vmatprep.subr.mxu0 0.0
    %11160 = vmatpush2.msra.mxu0 %v11060
    %11161 = vmatprep.subr.mxu0 0.0
    %11162 = vmatpush2.msra.mxu0 %v11059
    %11163 = vmatprep.subr.mxu0 0.0
    %11164 = vmatpush2.msra.mxu0 %v11058
    %11165 = vmatprep.subr.mxu0 0.0
    %11166 = vmatpush2.msra.mxu0 %v11057
    %11167 = vmatprep.subr.mxu0 0.0
    %11168 = vmatpush2.msra.mxu0 %v11056
    %11169 = vmatprep.subr.mxu0 0.0
    %11170 = vmatpush2.msra.mxu0 %v11055
    %11171 = vmatprep.subr.mxu0 0.0
    %11172 = vmatpush2.msra.mxu0 %v11054
    %11173 = vmatprep.mubr.f32.mxu0 %v10971
    %11174 = vmatmul.mubr.f32.gmra.mxu0 %v10970
    %v11175 = vpop.f32.mrf.mxu0
    %v11176 = vadd.f32 %v11107, %v11175
    %v11177 = vpop.f32.mrf.mxu0
    %11178 = vdwg.mxu0
    %11179 = vmatprep.subr.mxu0 0.0
    %11180 = vmatpush1.msra.mxu0 %v11085
    %11181 = vmatprep.subr.mxu0 0.0
    %11182 = vmatpush1.msra.mxu0 %v11084
    %11183 = vmatprep.subr.mxu0 0.0
    %11184 = vmatpush1.msra.mxu0 %v11083
    %11185 = vmatprep.subr.mxu0 0.0
    %11186 = vmatpush1.msra.mxu0 %v11082
    %11187 = vmatprep.subr.mxu0 0.0
    %11188 = vmatpush1.msra.mxu0 %v11081
    %11189 = vmatprep.subr.mxu0 0.0
    %11190 = vmatpush1.msra.mxu0 %v11080
    %11191 = vmatprep.subr.mxu0 0.0
    %11192 = vmatpush1.msra.mxu0 %v11079
    %11193 = vmatprep.subr.mxu0 0.0
    %11194 = vmatpush1.msra.mxu0 %v11078
    %11195 = vmatprep.subr.mxu0 0.0
    %11196 = vmatpush1.msra.mxu0 %v11077
    %11197 = vmatprep.subr.mxu0 0.0
    %11198 = vmatpush1.msra.mxu0 %v11076
    %11199 = vmatprep.subr.mxu0 0.0
    %11200 = vmatpush1.msra.mxu0 %v11075
    %11201 = vmatprep.subr.mxu0 0.0
    %11202 = vmatpush1.msra.mxu0 %v11074
    %11203 = vmatprep.subr.mxu0 0.0
    %11204 = vmatpush1.msra.mxu0 %v11073
    %11205 = vmatprep.subr.mxu0 0.0
    %11206 = vmatpush1.msra.mxu0 %v11072
    %11207 = vmatprep.subr.mxu0 0.0
    %11208 = vmatpush1.msra.mxu0 %v11071
    %11209 = vmatprep.subr.mxu0 0.0
    %11210 = vmatpush1.msra.mxu0 %v11070
    %11211 = vmatprep.subr.mxu0 0.0
    %11212 = vmatpush2.msra.mxu0 %v11101
    %11213 = vmatprep.subr.mxu0 0.0
    %11214 = vmatpush2.msra.mxu0 %v11100
    %11215 = vmatprep.subr.mxu0 0.0
    %11216 = vmatpush2.msra.mxu0 %v11099
    %11217 = vmatprep.subr.mxu0 0.0
    %11218 = vmatpush2.msra.mxu0 %v11098
    %11219 = vmatprep.subr.mxu0 0.0
    %11220 = vmatpush2.msra.mxu0 %v11097
    %11221 = vmatprep.subr.mxu0 0.0
    %11222 = vmatpush2.msra.mxu0 %v11096
    %11223 = vmatprep.subr.mxu0 0.0
    %11224 = vmatpush2.msra.mxu0 %v11095
    %11225 = vmatprep.subr.mxu0 0.0
    %11226 = vmatpush2.msra.mxu0 %v11094
    %11227 = vmatprep.subr.mxu0 0.0
    %11228 = vmatpush2.msra.mxu0 %v11093
    %11229 = vmatprep.subr.mxu0 0.0
    %11230 = vmatpush2.msra.mxu0 %v11092
    %11231 = vmatprep.subr.mxu0 0.0
    %11232 = vmatpush2.msra.mxu0 %v11091
    %11233 = vmatprep.subr.mxu0 0.0
    %11234 = vmatpush2.msra.mxu0 %v11090
    %11235 = vmatprep.subr.mxu0 0.0
    %11236 = vmatpush2.msra.mxu0 %v11089
    %11237 = vmatprep.subr.mxu0 0.0
    %11238 = vmatpush2.msra.mxu0 %v11088
    %11239 = vmatprep.subr.mxu0 0.0
    %11240 = vmatpush2.msra.mxu0 %v11087
    %11241 = vmatprep.subr.mxu0 0.0
    %11242 = vmatpush2.msra.mxu0 %v11086
    %11243 = vmatprep.mubr.f32.mxu0 %v10973
    %11244 = vmatmul.mubr.f32.gmra.mxu0 %v10972
    %v11245 = vpop.f32.mrf.mxu0
    %v11246 = vadd.f32 %v11176, %v11245
    %v11247 = vpop.f32.mrf.mxu0
    %11248 = vdwg.mxu0
    %vm11249 = vcmask 23552
    %v11250 = vsel %vm11249, %v11246, -inf
    %11251 = vmax.xlane.f32.xlu0 %v11250
    %v11252 = vpop.xlane.xlu0 %11251
    %v11253 = vsub.f32 %v11246, %v11252
    %v11254 = vmul.f32 %v11253, 1.442695
    %v11255 = vpow.pop %v11254
    %v11256 = vsel %vm11249, %v11255, 0.0
    %11257 = vadd.xlane.f32.xlu0 %v11256
    %v11258 = vpop.xlane.xlu0 %11257
    %v11259 = vlog2.pop %v11258
    %v11260 = vmul.f32 %v11259, 0.6931472
    %v11261 = vsub.f32 %v11253, %v11260
    %11262 = vst.msk [vmem:[%s12] sm:$0xff] %vm11249, %v11261
    // Predicated region
    $region94: #{mlp_forward.1} parent=1 // pred_check
      _
    $region95: #{mlp_forward.1} parent=1 // pred_check_branch
      %11264 = sbr.rel (0) target = $region97
    $region96: #{mlp_forward.1} parent=1 // pred_region
      _
    $region97: #{mlp_forward.1} parent=1 // pred_fallthru
      _
    // Predicated region
    $region98: #{mlp_forward.1} parent=1 // pred_check
      _
    $region99: #{mlp_forward.1} parent=1 // pred_check_branch
      %11266 = sbr.rel (0) target = $region101
    $region100: #{mlp_forward.1} parent=1 // pred_region
      _
    $region101: #{mlp_forward.1} parent=1 // pred_fallthru
      _
    %11267 = vsyncpa [#allocation3], 1
    %11268 = vsyncpa [#allocation5], 1
    %11269 = vsyncpa [#allocation8], 1
    %11270 = vsyncpa [#allocation11], 1
    %11271 = vsyncpa [#allocation14], 1
    %11272 = vsyncpa [#allocation17], 1

</llo_original>
